<compile_context>
chip_gen: v5e
topology: v5e:2x2
jax: 0.10.0
libtpu: 0.0.40
codegen_flags: <defaults>
</compile_context>

<pallas_src>
import math
import functools

import jax
import jax.numpy as jnp
from jax.experimental import pallas as pl
from jax.experimental.pallas import tpu as pltpu

# TODO(synk): `TOKENS` is undefined in the source module; assume PAD token index 0.
PAD_ID = 0
NEG_INF = -1e9          # finite large-negative mask (no NaN for fully masked rows)
LN_EPS = 1e-5
_VMEM_LIMIT = 32 * 1024 * 1024


def _cparams(n_parallel):
    return pltpu.CompilerParams(
        dimension_semantics=("parallel",) * n_parallel,
        vmem_limit_bytes=_VMEM_LIMIT,
    )


# ------------------------- in-kernel building blocks -------------------------


def _layernorm(x, g, b):
    mu = jnp.mean(x, axis=-1, keepdims=True)
    xc = x - mu
    var = jnp.mean(xc * xc, axis=-1, keepdims=True)   # biased, like torch LayerNorm
    return xc * jax.lax.rsqrt(var + LN_EPS) * g + b


def _proj(x, w_ref, b_ref):
    # bf16 matmul operands, f32 accumulation + f32 bias add.
    return jnp.dot(x.astype(jnp.bfloat16), w_ref[...],
                   preferred_element_type=jnp.float32) + b_ref[...]


def _mha(q2d, k2d, v2d, add_mask, nhead, scale):
    """Multi-head attention on 2-D operands (one batch).

    q2d: (Sq, E), k2d/v2d: (Sk, E).  Heads are split with static lane slices
    (no reshapes/transposes through HBM); the per-head outputs are concatenated
    back to a lane-dense (Sq, E) tile.  add_mask: None, (1, Sk) or (Sq, Sk).
    """
    E = q2d.shape[-1]
    Dh = E // nhead
    outs = []
    for h in range(nhead):
        sl = slice(h * Dh, (h + 1) * Dh)
        qh, kh, vh = q2d[:, sl], k2d[:, sl], v2d[:, sl]
        # q @ k^T without materializing the transpose (MXU trans_b form).
        s = jax.lax.dot_general(qh, kh, (((1,), (1,)), ((), ())),
                                preferred_element_type=jnp.float32) * scale
        if add_mask is not None:
            s = s + add_mask
        s = s - jnp.max(s, axis=-1, keepdims=True)
        p = jnp.exp(s)
        inv = pl.reciprocal(jnp.sum(p, axis=-1, keepdims=True), approx=True)
        outs.append(jnp.dot(p * inv, vh, preferred_element_type=jnp.float32))
    return jnp.concatenate(outs, axis=-1)          # (Sq, E) lane-dense


# ------------------------------ fused layer kernels ---------------------------


def _encoder_layer_kernel(x_ref, pad_ref,
                          w_qkv_ref, b_qkv_ref, wo_ref, bo_ref, g1_ref, bb1_ref,
                          w1_ref, b1_ref, w2_ref, b2_ref, g2_ref, bb2_ref,
                          o_ref, *, nhead):
    E = x_ref.shape[-1]
    scale = 1.0 / math.sqrt(E // nhead)
    x = x_ref[0]                                        # (S, E) f32
    # fused QKV projection; heads split via lane slices inside _mha.
    qkv = _proj(x, w_qkv_ref, b_qkv_ref)                # (S, 3E)
    ctx = _mha(qkv[:, :E], qkv[:, E:2 * E], qkv[:, 2 * E:],
               pad_ref[0], nhead, scale)                # (S, E)
    x = _layernorm(x + _proj(ctx, wo_ref, bo_ref), g1_ref[...], bb1_ref[...])
    # FFN: F zero-padded to 128 lanes (exact, relu(0)=0) -> two full-width MXU matmuls.
    h = jnp.maximum(_proj(x, w1_ref, b1_ref), 0.0)
    x = _layernorm(x + _proj(h, w2_ref, b2_ref), g2_ref[...], bb2_ref[...])
    o_ref[0] = x


def _decoder_layer_kernel(y_ref, mem_ref, causal_ref, pad_ref,
                          sa_w_qkv_ref, sa_b_qkv_ref, sa_wo_ref, sa_bo_ref,
                          g1_ref, bb1_ref,
                          ca_wq_ref, ca_bq_ref, ca_w_kv_ref, ca_b_kv_ref,
                          ca_wo_ref, ca_bo_ref, g2_ref, bb2_ref,
                          w1_ref, b1_ref, w2_ref, b2_ref, g3_ref, bb3_ref,
                          o_ref, *, nhead):
    E = y_ref.shape[-1]
    scale = 1.0 / math.sqrt(E // nhead)
    y = y_ref[0]                                        # (Sy, E)
    # --- masked self-attention (fused QKV) ---
    qkv = _proj(y, sa_w_qkv_ref, sa_b_qkv_ref)
    self_mask = causal_ref[...] + pad_ref[0]            # (Sy, Sy): causal + key padding
    ctx = _mha(qkv[:, :E], qkv[:, E:2 * E], qkv[:, 2 * E:], self_mask, nhead, scale)
    y = _layernorm(y + _proj(ctx, sa_wo_ref, sa_bo_ref), g1_ref[...], bb1_ref[...])
    # --- cross-attention on encoder memory (fused KV, unmasked) ---
    m = mem_ref[0]                                      # (Sx, E)
    q2d = _proj(y, ca_wq_ref, ca_bq_ref)
    kv = _proj(m, ca_w_kv_ref, ca_b_kv_ref)             # (Sx, 2E)
    ctx = _mha(q2d, kv[:, :E], kv[:, E:], None, nhead, scale)
    y = _layernorm(y + _proj(ctx, ca_wo_ref, ca_bo_ref), g2_ref[...], bb2_ref[...])
    # --- FFN (padded to full lanes) ---
    h = jnp.maximum(_proj(y, w1_ref, b1_ref), 0.0)
    y = _layernorm(y + _proj(h, w2_ref, b2_ref), g3_ref[...], bb3_ref[...])
    o_ref[0] = y


def _fc_kernel(x_ref, w_ref, b_ref, o_ref):
    o_ref[...] = jnp.dot(x_ref[...].astype(jnp.bfloat16), w_ref[...],
                         preferred_element_type=jnp.float32) + b_ref[...]


# --------------------------------- wrappers ----------------------------------


def encoder_layer(p, x, pad_mask, nhead):
    """x: (B, S, E) f32, pad_mask: (B, 1, S) additive f32."""
    B, S, E = x.shape
    Fp = p["w1"].shape[1]

    def w_spec(shape):
        return pl.BlockSpec(shape, lambda b: (0,) * len(shape))

    return pl.pallas_call(
        functools.partial(_encoder_layer_kernel, nhead=nhead),
        out_shape=jax.ShapeDtypeStruct((B, S, E), jnp.float32),
        grid=(B,),
        in_specs=[
            pl.BlockSpec((1, S, E), lambda b: (b, 0, 0)),
            pl.BlockSpec((1, 1, S), lambda b: (b, 0, 0)),
            w_spec((E, 3 * E)), w_spec((1, 3 * E)),
            w_spec((E, E)), w_spec((1, E)),
            w_spec((1, E)), w_spec((1, E)),
            w_spec((E, Fp)), w_spec((1, Fp)),
            w_spec((Fp, E)), w_spec((1, E)),
            w_spec((1, E)), w_spec((1, E)),
        ],
        out_specs=pl.BlockSpec((1, S, E), lambda b: (b, 0, 0)),
        compiler_params=_cparams(1),
    )(x, pad_mask,
      p["sa_w_qkv"], p["sa_b_qkv"], p["sa_wo"], p["sa_bo"],
      p["norm1_g"], p["norm1_b"],
      p["w1"], p["b1"], p["w2"], p["b2"], p["norm2_g"], p["norm2_b"])


def decoder_layer(p, y, memory, causal, pad_mask, nhead):
    """y: (B, Sy, E), memory: (B, Sx, E), causal: (Sy, Sy), pad_mask: (B, 1, Sy)."""
    B, Sy, E = y.shape
    Sx = memory.shape[1]
    Fp = p["w1"].shape[1]

    def w_spec(shape):
        return pl.BlockSpec(shape, lambda b: (0,) * len(shape))

    return pl.pallas_call(
        functools.partial(_decoder_layer_kernel, nhead=nhead),
        out_shape=jax.ShapeDtypeStruct((B, Sy, E), jnp.float32),
        grid=(B,),
        in_specs=[
            pl.BlockSpec((1, Sy, E), lambda b: (b, 0, 0)),
            pl.BlockSpec((1, Sx, E), lambda b: (b, 0, 0)),
            w_spec((Sy, Sy)),                       # causal mask: constant index_map
            pl.BlockSpec((1, 1, Sy), lambda b: (b, 0, 0)),
            w_spec((E, 3 * E)), w_spec((1, 3 * E)),
            w_spec((E, E)), w_spec((1, E)),
            w_spec((1, E)), w_spec((1, E)),
            w_spec((E, E)), w_spec((1, E)),
            w_spec((E, 2 * E)), w_spec((1, 2 * E)),
            w_spec((E, E)), w_spec((1, E)),
            w_spec((1, E)), w_spec((1, E)),
            w_spec((E, Fp)), w_spec((1, Fp)),
            w_spec((Fp, E)), w_spec((1, E)),
            w_spec((1, E)), w_spec((1, E)),
        ],
        out_specs=pl.BlockSpec((1, Sy, E), lambda b: (b, 0, 0)),
        compiler_params=_cparams(1),
    )(y, memory, causal, pad_mask,
      p["sa_w_qkv"], p["sa_b_qkv"], p["sa_wo"], p["sa_bo"],
      p["norm1_g"], p["norm1_b"],
      p["ca_wq"], p["ca_bq"], p["ca_w_kv"], p["ca_b_kv"],
      p["ca_wo"], p["ca_bo"], p["norm2_g"], p["norm2_b"],
      p["w1"], p["b1"], p["w2"], p["b2"], p["norm3_g"], p["norm3_b"])


def pallas_fc(x2d, w, b):
    """x2d: (M, E) f32, w: (E, Cp) bf16 (zero-padded), b: (1, Cp) f32."""
    M, E = x2d.shape
    Cp = w.shape[1]
    return pl.pallas_call(
        _fc_kernel,
        out_shape=jax.ShapeDtypeStruct((M, Cp), jnp.float32),
        grid=(1,),
        in_specs=[
            pl.BlockSpec((M, E), lambda i: (0, 0)),
            pl.BlockSpec((E, Cp), lambda i: (0, 0)),
            pl.BlockSpec((1, Cp), lambda i: (0, 0)),
        ],
        out_specs=pl.BlockSpec((M, Cp), lambda i: (0, 0)),
        compiler_params=_cparams(1),
    )(x2d, w, b)


# -------------------------------- model pieces --------------------------------


def _causal_additive_mask(S):
    i = jnp.arange(S)[:, None]
    j = jnp.arange(S)[None, :]
    return jnp.where(j <= i, 0.0, NEG_INF).astype(jnp.float32)       # (S, S)


def _padding_additive(tokens):
    # (B, S) -> (B, 1, S); large negative where token == PAD (key positions).
    return jnp.where(tokens == PAD_ID, NEG_INF, 0.0).astype(jnp.float32)[:, None, :]


def _embed_pos(params, tokens):
    """tokens (B, S) -> (B, S, E) = embedding * sqrt(E) + positional encoding."""
    E = params["embedding"].shape[1]
    x = jnp.take(params["embedding"], tokens, axis=0) * math.sqrt(E)  # (B, S, E)
    return x + params["pe"][: tokens.shape[1]][None, :, :]            # dropout: identity


def encode(params, x_tok, nhead):
    pad = _padding_additive(x_tok)                   # (B, 1, Sx)
    x = _embed_pos(params, x_tok)
    for lp in params["enc_layers"]:
        x = encoder_layer(lp, x, pad, nhead)
    return x                                          # (B, Sx, E)


def decode(params, y_tok, memory, nhead, num_classes):
    B, Sy = y_tok.shape
    pad = _padding_additive(y_tok)                    # (B, 1, Sy)
    causal = _causal_additive_mask(Sy)                # (Sy, Sy)
    y = _embed_pos(params, y_tok)
    # Cross-attention is unmasked (memory_mask=None, no memory key-padding mask).
    for lp in params["dec_layers"]:
        y = decoder_layer(lp, y, memory, causal, pad, nhead)
    E = y.shape[-1]
    logits = pallas_fc(y.reshape(B * Sy, E), params["fc_w"], params["fc_b"])
    return logits[:, :num_classes].reshape(B, Sy, num_classes)        # drop lane padding


def transformer_forward(params, x_tok, y_tok, *, nhead, num_classes):
    memory = encode(params, x_tok, nhead)
    logits = decode(params, y_tok, memory, nhead, num_classes)
    return jnp.transpose(logits, (0, 2, 1))           # (B, C, Sy)


# ----------------------------- parameter creation ------------------------------


def _uniform(key, shape, a):
    return jax.random.uniform(key, shape, jnp.float32, -a, a)


def _init_ffn(k1, k2, E, F, Fp):
    # Zero-padded FFN weights: exact (relu(0)=0 contributes nothing).
    w1 = jnp.zeros((E, Fp), jnp.float32).at[:, :F].set(_uniform(k1, (E, F), 1.0 / math.sqrt(E)))
    w2 = jnp.zeros((Fp, E), jnp.float32).at[:F, :].set(_uniform(k2, (F, E), 1.0 / math.sqrt(F)))
    return {
        "w1": w1.astype(jnp.bfloat16), "b1": jnp.zeros((1, Fp), jnp.float32),
        "w2": w2.astype(jnp.bfloat16), "b2": jnp.zeros((1, E), jnp.float32),
    }


def _init_enc_layer(key, E, F, Fp):
    k1, k2, k3, k4 = jax.random.split(key, 4)
    a = 1.0 / math.sqrt(E)
    p = {
        "sa_w_qkv": _uniform(k1, (E, 3 * E), a).astype(jnp.bfloat16),
        "sa_b_qkv": jnp.zeros((1, 3 * E), jnp.float32),
        "sa_wo": _uniform(k2, (E, E), a).astype(jnp.bfloat16),
        "sa_bo": jnp.zeros((1, E), jnp.float32),
        "norm1_g": jnp.ones((1, E), jnp.float32), "norm1_b": jnp.zeros((1, E), jnp.float32),
        "norm2_g": jnp.ones((1, E), jnp.float32), "norm2_b": jnp.zeros((1, E), jnp.float32),
    }
    p.update(_init_ffn(k3, k4, E, F, Fp))
    return p


def _init_dec_layer(key, E, F, Fp):
    k1, k2, k3, k4, k5, k6, k7 = jax.random.split(key, 7)
    a = 1.0 / math.sqrt(E)
    p = {
        "sa_w_qkv": _uniform(k1, (E, 3 * E), a).astype(jnp.bfloat16),
        "sa_b_qkv": jnp.zeros((1, 3 * E), jnp.float32),
        "sa_wo": _uniform(k2, (E, E), a).astype(jnp.bfloat16),
        "sa_bo": jnp.zeros((1, E), jnp.float32),
        "ca_wq": _uniform(k3, (E, E), a).astype(jnp.bfloat16),
        "ca_bq": jnp.zeros((1, E), jnp.float32),
        "ca_w_kv": _uniform(k4, (E, 2 * E), a).astype(jnp.bfloat16),
        "ca_b_kv": jnp.zeros((1, 2 * E), jnp.float32),
        "ca_wo": _uniform(k5, (E, E), a).astype(jnp.bfloat16),
        "ca_bo": jnp.zeros((1, E), jnp.float32),
    }
    for n in ("norm1", "norm2", "norm3"):
        p[n + "_g"] = jnp.ones((1, E), jnp.float32)
        p[n + "_b"] = jnp.zeros((1, E), jnp.float32)
    p.update(_init_ffn(k6, k7, E, F, Fp))
    return p


def make_positional_encoding(max_len, d_model):
    position = jnp.arange(max_len, dtype=jnp.float32)[:, None]
    div_term = jnp.exp(jnp.arange(0, d_model, 2, dtype=jnp.float32)
                       * (-math.log(10000.0) / d_model))
    pe = jnp.zeros((max_len, d_model), jnp.float32)
    pe = pe.at[:, 0::2].set(jnp.sin(position * div_term))
    pe = pe.at[:, 1::2].set(jnp.cos(position * div_term))
    return pe                                            # (max_len, d_model)


def init_params(key, num_classes, d_model, nhead, num_layers, dim_feedforward,
                max_len=512):
    E, F = d_model, dim_feedforward
    Fp = max(128, ((F + 127) // 128) * 128)              # lane-padded FFN width
    Cp = ((num_classes + 127) // 128) * 128              # lane-padded classifier width
    keys = jax.random.split(key, 2 + 2 * num_layers)
    fc_w = jnp.zeros((E, Cp), jnp.float32).at[:, :num_classes].set(
        _uniform(keys[1], (E, num_classes), 0.1))
    return {
        "embedding": _uniform(keys[0], (num_classes, E), 0.1),
        "fc_w": fc_w.astype(jnp.bfloat16),
        "fc_b": jnp.zeros((1, Cp), jnp.float32),
        "pe": make_positional_encoding(max_len, E),
        "enc_layers": [_init_enc_layer(keys[2 + i], E, F, Fp) for i in range(num_layers)],
        "dec_layers": [_init_dec_layer(keys[2 + num_layers + i], E, F, Fp)
                       for i in range(num_layers)],
    }


# ------------------------------------ main -------------------------------------


if __name__ == "__main__":
    num_classes = 16
    d_model = 128
    nhead = 4
    num_layers = 2
    dim_feedforward = 4       # module default
    B, Sx, Sy = 2, 12, 8

    key = jax.random.PRNGKey(0)
    pkey, xkey, ykey = jax.random.split(key, 3)
    params = init_params(pkey, num_classes, d_model, nhead, num_layers, dim_feedforward)

    # Tokens in [1, C); last position set to PAD to exercise key-padding masks.
    x_tok = jax.random.randint(xkey, (B, Sx), 1, num_classes, dtype=jnp.int32)
    y_tok = jax.random.randint(ykey, (B, Sy), 1, num_classes, dtype=jnp.int32)
    x_tok = x_tok.at[:, -1].set(PAD_ID)
    y_tok = y_tok.at[:, -1].set(PAD_ID)

    fwd = jax.jit(functools.partial(transformer_forward, nhead=nhead,
                                    num_classes=num_classes))
    out = fwd(params, x_tok, y_tok)
    out = jax.block_until_ready(out)

    assert out.shape == (B, num_classes, Sy), out.shape
    assert out.dtype == jnp.float32
    assert bool(jnp.all(jnp.isfinite(out)))
    print("KERNEL_OK")
</pallas_src>

<mosaic_0001>
module attributes {stable_mosaic.version = 11 : i64} {
  func.func @_encoder_layer_kernel(%arg0: i32, %arg1: memref<1x12x128xf32, #tpu.memory_space<vmem>>, %arg2: memref<1x1x12xf32, #tpu.memory_space<vmem>>, %arg3: memref<128x384xbf16, #tpu.memory_space<vmem>>, %arg4: memref<1x384xf32, #tpu.memory_space<vmem>>, %arg5: memref<128x128xbf16, #tpu.memory_space<vmem>>, %arg6: memref<1x128xf32, #tpu.memory_space<vmem>>, %arg7: memref<1x128xf32, #tpu.memory_space<vmem>>, %arg8: memref<1x128xf32, #tpu.memory_space<vmem>>, %arg9: memref<128x128xbf16, #tpu.memory_space<vmem>>, %arg10: memref<1x128xf32, #tpu.memory_space<vmem>>, %arg11: memref<128x128xbf16, #tpu.memory_space<vmem>>, %arg12: memref<1x128xf32, #tpu.memory_space<vmem>>, %arg13: memref<1x128xf32, #tpu.memory_space<vmem>>, %arg14: memref<1x128xf32, #tpu.memory_space<vmem>>, %arg15: memref<1x12x128xf32, #tpu.memory_space<vmem>>) attributes {dimension_semantics = [#tpu.dimension_semantics<parallel>], iteration_bounds = array<i64: 2>, scalar_prefetch = 0 : i64, scratch_operands = 0 : i64, tpu.core_type = #tpu.core_type<tc>, window_params = [{transform_indices = @transform_0, window_bounds = array<i64: 1, 12, 128>}, {transform_indices = @transform_1, window_bounds = array<i64: 1, 1, 12>}, {pipeline_mode = #tpu.pipeline_mode<synchronous>, transform_indices = @transform_2, window_bounds = array<i64: 128, 384>}, {pipeline_mode = #tpu.pipeline_mode<synchronous>, transform_indices = @transform_3, window_bounds = array<i64: 1, 384>}, {pipeline_mode = #tpu.pipeline_mode<synchronous>, transform_indices = @transform_4, window_bounds = array<i64: 128, 128>}, {pipeline_mode = #tpu.pipeline_mode<synchronous>, transform_indices = @transform_5, window_bounds = array<i64: 1, 128>}, {pipeline_mode = #tpu.pipeline_mode<synchronous>, transform_indices = @transform_6, window_bounds = array<i64: 1, 128>}, {pipeline_mode = #tpu.pipeline_mode<synchronous>, transform_indices = @transform_7, window_bounds = array<i64: 1, 128>}, {pipeline_mode = #tpu.pipeline_mode<synchronous>, transform_indices = @transform_8, window_bounds = array<i64: 128, 128>}, {pipeline_mode = #tpu.pipeline_mode<synchronous>, transform_indices = @transform_9, window_bounds = array<i64: 1, 128>}, {pipeline_mode = #tpu.pipeline_mode<synchronous>, transform_indices = @transform_10, window_bounds = array<i64: 128, 128>}, {pipeline_mode = #tpu.pipeline_mode<synchronous>, transform_indices = @transform_11, window_bounds = array<i64: 1, 128>}, {pipeline_mode = #tpu.pipeline_mode<synchronous>, transform_indices = @transform_12, window_bounds = array<i64: 1, 128>}, {pipeline_mode = #tpu.pipeline_mode<synchronous>, transform_indices = @transform_13, window_bounds = array<i64: 1, 128>}, {transform_indices = @transform_14, window_bounds = array<i64: 1, 12, 128>}]} {
    %c0 = arith.constant 0 : index
    %c0_0 = arith.constant 0 : index
    %c0_1 = arith.constant 0 : index
    %0 = vector.load %arg1[%c0, %c0_0, %c0_1] : memref<1x12x128xf32, #tpu.memory_space<vmem>>, vector<1x12x128xf32>
    %1 = vector.shape_cast %0 : vector<1x12x128xf32> to vector<12x128xf32>
    %2 = arith.truncf %1 : vector<12x128xf32> to vector<12x128xbf16>
    %c0_2 = arith.constant 0 : index
    %c0_3 = arith.constant 0 : index
    %3 = vector.load %arg3[%c0_2, %c0_3] : memref<128x384xbf16, #tpu.memory_space<vmem>>, vector<128x384xbf16>
    %cst = arith.constant dense<0.000000e+00> : vector<12x384xf32>
    %4 = tpu.matmul %2, %3, %cst {dimension_numbers = #tpu.dot_dimension_numbers<[1], [0], [0], [1], [0, 0, 1, 1], [], []>} : vector<12x128xbf16>, vector<128x384xbf16>, vector<12x384xf32> -> vector<12x384xf32>
    %c0_4 = arith.constant 0 : index
    %c0_5 = arith.constant 0 : index
    %5 = vector.load %arg4[%c0_4, %c0_5] : memref<1x384xf32, #tpu.memory_space<vmem>>, vector<1x384xf32>
    %6 = vector.broadcast %5 : vector<1x384xf32> to vector<12x384xf32>
    %7 = arith.addf %4, %6 : vector<12x384xf32>
    %8 = vector.extract_strided_slice %7 {offsets = [0, 0], sizes = [12, 128], strides = [1, 1]} : vector<12x384xf32> to vector<12x128xf32>
    %9 = vector.extract_strided_slice %7 {offsets = [0, 128], sizes = [12, 128], strides = [1, 1]} : vector<12x384xf32> to vector<12x128xf32>
    %10 = vector.extract_strided_slice %7 {offsets = [0, 256], sizes = [12, 128], strides = [1, 1]} : vector<12x384xf32> to vector<12x128xf32>
    %c0_6 = arith.constant 0 : index
    %c0_7 = arith.constant 0 : index
    %c0_8 = arith.constant 0 : index
    %11 = vector.load %arg2[%c0_6, %c0_7, %c0_8] : memref<1x1x12xf32, #tpu.memory_space<vmem>>, vector<1x1x12xf32>
    %12 = vector.shape_cast %11 : vector<1x1x12xf32> to vector<1x12xf32>
    %13 = vector.extract_strided_slice %8 {offsets = [0, 0], sizes = [12, 32], strides = [1, 1]} : vector<12x128xf32> to vector<12x32xf32>
    %14 = vector.extract_strided_slice %9 {offsets = [0, 0], sizes = [12, 32], strides = [1, 1]} : vector<12x128xf32> to vector<12x32xf32>
    %15 = vector.extract_strided_slice %10 {offsets = [0, 0], sizes = [12, 32], strides = [1, 1]} : vector<12x128xf32> to vector<12x32xf32>
    %cst_9 = arith.constant dense<0.000000e+00> : vector<12x12xf32>
    %16 = tpu.matmul %13, %14, %cst_9 {dimension_numbers = #tpu.dot_dimension_numbers<[1], [1], [0], [0], [0, 0, 1, 0], [], []>} : vector<12x32xf32>, vector<12x32xf32>, vector<12x12xf32> -> vector<12x12xf32>
    %cst_10 = arith.constant 0.176776692 : f32
    %17 = vector.broadcast %cst_10 : f32 to vector<12x12xf32>
    %18 = arith.mulf %16, %17 : vector<12x12xf32>
    %19 = vector.broadcast %12 : vector<1x12xf32> to vector<12x12xf32>
    %20 = arith.addf %18, %19 : vector<12x12xf32>
    %cst_11 = arith.constant dense<0xFF800000> : vector<12xf32>
    %21 = vector.multi_reduction <maximumf>, %20, %cst_11 [1] : vector<12x12xf32> to vector<12xf32>
    %22 = vector.shape_cast %21 : vector<12xf32> to vector<12x1xf32>
    %23 = vector.broadcast %22 : vector<12x1xf32> to vector<12x12xf32>
    %24 = arith.subf %20, %23 : vector<12x12xf32>
    %25 = math.exp %24 : vector<12x12xf32>
    %cst_12 = arith.constant dense<0.000000e+00> : vector<12xf32>
    %26 = vector.multi_reduction <add>, %25, %cst_12 [1] : vector<12x12xf32> to vector<12xf32>
    %27 = vector.shape_cast %26 : vector<12xf32> to vector<12x1xf32>
    %28 = tpu.reciprocal %27 {approx = true} : vector<12x1xf32> -> vector<12x1xf32>
    %29 = vector.broadcast %28 : vector<12x1xf32> to vector<12x12xf32>
    %30 = arith.mulf %25, %29 : vector<12x12xf32>
    %cst_13 = arith.constant dense<0.000000e+00> : vector<12x32xf32>
    %31 = tpu.matmul %30, %15, %cst_13 {dimension_numbers = #tpu.dot_dimension_numbers<[1], [0], [0], [1], [0, 0, 1, 1], [], []>} : vector<12x12xf32>, vector<12x32xf32>, vector<12x32xf32> -> vector<12x32xf32>
    %32 = vector.extract_strided_slice %8 {offsets = [0, 32], sizes = [12, 32], strides = [1, 1]} : vector<12x128xf32> to vector<12x32xf32>
    %33 = vector.extract_strided_slice %9 {offsets = [0, 32], sizes = [12, 32], strides = [1, 1]} : vector<12x128xf32> to vector<12x32xf32>
    %34 = vector.extract_strided_slice %10 {offsets = [0, 32], sizes = [12, 32], strides = [1, 1]} : vector<12x128xf32> to vector<12x32xf32>
    %cst_14 = arith.constant dense<0.000000e+00> : vector<12x12xf32>
    %35 = tpu.matmul %32, %33, %cst_14 {dimension_numbers = #tpu.dot_dimension_numbers<[1], [1], [0], [0], [0, 0, 1, 0], [], []>} : vector<12x32xf32>, vector<12x32xf32>, vector<12x12xf32> -> vector<12x12xf32>
    %cst_15 = arith.constant 0.176776692 : f32
    %36 = vector.broadcast %cst_15 : f32 to vector<12x12xf32>
    %37 = arith.mulf %35, %36 : vector<12x12xf32>
    %38 = vector.broadcast %12 : vector<1x12xf32> to vector<12x12xf32>
    %39 = arith.addf %37, %38 : vector<12x12xf32>
    %cst_16 = arith.constant dense<0xFF800000> : vector<12xf32>
    %40 = vector.multi_reduction <maximumf>, %39, %cst_16 [1] : vector<12x12xf32> to vector<12xf32>
    %41 = vector.shape_cast %40 : vector<12xf32> to vector<12x1xf32>
    %42 = vector.broadcast %41 : vector<12x1xf32> to vector<12x12xf32>
    %43 = arith.subf %39, %42 : vector<12x12xf32>
    %44 = math.exp %43 : vector<12x12xf32>
    %cst_17 = arith.constant dense<0.000000e+00> : vector<12xf32>
    %45 = vector.multi_reduction <add>, %44, %cst_17 [1] : vector<12x12xf32> to vector<12xf32>
    %46 = vector.shape_cast %45 : vector<12xf32> to vector<12x1xf32>
    %47 = tpu.reciprocal %46 {approx = true} : vector<12x1xf32> -> vector<12x1xf32>
    %48 = vector.broadcast %47 : vector<12x1xf32> to vector<12x12xf32>
    %49 = arith.mulf %44, %48 : vector<12x12xf32>
    %cst_18 = arith.constant dense<0.000000e+00> : vector<12x32xf32>
    %50 = tpu.matmul %49, %34, %cst_18 {dimension_numbers = #tpu.dot_dimension_numbers<[1], [0], [0], [1], [0, 0, 1, 1], [], []>} : vector<12x12xf32>, vector<12x32xf32>, vector<12x32xf32> -> vector<12x32xf32>
    %51 = vector.extract_strided_slice %8 {offsets = [0, 64], sizes = [12, 32], strides = [1, 1]} : vector<12x128xf32> to vector<12x32xf32>
    %52 = vector.extract_strided_slice %9 {offsets = [0, 64], sizes = [12, 32], strides = [1, 1]} : vector<12x128xf32> to vector<12x32xf32>
    %53 = vector.extract_strided_slice %10 {offsets = [0, 64], sizes = [12, 32], strides = [1, 1]} : vector<12x128xf32> to vector<12x32xf32>
    %cst_19 = arith.constant dense<0.000000e+00> : vector<12x12xf32>
    %54 = tpu.matmul %51, %52, %cst_19 {dimension_numbers = #tpu.dot_dimension_numbers<[1], [1], [0], [0], [0, 0, 1, 0], [], []>} : vector<12x32xf32>, vector<12x32xf32>, vector<12x12xf32> -> vector<12x12xf32>
    %cst_20 = arith.constant 0.176776692 : f32
    %55 = vector.broadcast %cst_20 : f32 to vector<12x12xf32>
    %56 = arith.mulf %54, %55 : vector<12x12xf32>
    %57 = vector.broadcast %12 : vector<1x12xf32> to vector<12x12xf32>
    %58 = arith.addf %56, %57 : vector<12x12xf32>
    %cst_21 = arith.constant dense<0xFF800000> : vector<12xf32>
    %59 = vector.multi_reduction <maximumf>, %58, %cst_21 [1] : vector<12x12xf32> to vector<12xf32>
    %60 = vector.shape_cast %59 : vector<12xf32> to vector<12x1xf32>
    %61 = vector.broadcast %60 : vector<12x1xf32> to vector<12x12xf32>
    %62 = arith.subf %58, %61 : vector<12x12xf32>
    %63 = math.exp %62 : vector<12x12xf32>
    %cst_22 = arith.constant dense<0.000000e+00> : vector<12xf32>
    %64 = vector.multi_reduction <add>, %63, %cst_22 [1] : vector<12x12xf32> to vector<12xf32>
    %65 = vector.shape_cast %64 : vector<12xf32> to vector<12x1xf32>
    %66 = tpu.reciprocal %65 {approx = true} : vector<12x1xf32> -> vector<12x1xf32>
    %67 = vector.broadcast %66 : vector<12x1xf32> to vector<12x12xf32>
    %68 = arith.mulf %63, %67 : vector<12x12xf32>
    %cst_23 = arith.constant dense<0.000000e+00> : vector<12x32xf32>
    %69 = tpu.matmul %68, %53, %cst_23 {dimension_numbers = #tpu.dot_dimension_numbers<[1], [0], [0], [1], [0, 0, 1, 1], [], []>} : vector<12x12xf32>, vector<12x32xf32>, vector<12x32xf32> -> vector<12x32xf32>
    %70 = vector.extract_strided_slice %8 {offsets = [0, 96], sizes = [12, 32], strides = [1, 1]} : vector<12x128xf32> to vector<12x32xf32>
    %71 = vector.extract_strided_slice %9 {offsets = [0, 96], sizes = [12, 32], strides = [1, 1]} : vector<12x128xf32> to vector<12x32xf32>
    %72 = vector.extract_strided_slice %10 {offsets = [0, 96], sizes = [12, 32], strides = [1, 1]} : vector<12x128xf32> to vector<12x32xf32>
    %cst_24 = arith.constant dense<0.000000e+00> : vector<12x12xf32>
    %73 = tpu.matmul %70, %71, %cst_24 {dimension_numbers = #tpu.dot_dimension_numbers<[1], [1], [0], [0], [0, 0, 1, 0], [], []>} : vector<12x32xf32>, vector<12x32xf32>, vector<12x12xf32> -> vector<12x12xf32>
    %cst_25 = arith.constant 0.176776692 : f32
    %74 = vector.broadcast %cst_25 : f32 to vector<12x12xf32>
    %75 = arith.mulf %73, %74 : vector<12x12xf32>
    %76 = vector.broadcast %12 : vector<1x12xf32> to vector<12x12xf32>
    %77 = arith.addf %75, %76 : vector<12x12xf32>
    %cst_26 = arith.constant dense<0xFF800000> : vector<12xf32>
    %78 = vector.multi_reduction <maximumf>, %77, %cst_26 [1] : vector<12x12xf32> to vector<12xf32>
    %79 = vector.shape_cast %78 : vector<12xf32> to vector<12x1xf32>
    %80 = vector.broadcast %79 : vector<12x1xf32> to vector<12x12xf32>
    %81 = arith.subf %77, %80 : vector<12x12xf32>
    %82 = math.exp %81 : vector<12x12xf32>
    %cst_27 = arith.constant dense<0.000000e+00> : vector<12xf32>
    %83 = vector.multi_reduction <add>, %82, %cst_27 [1] : vector<12x12xf32> to vector<12xf32>
    %84 = vector.shape_cast %83 : vector<12xf32> to vector<12x1xf32>
    %85 = tpu.reciprocal %84 {approx = true} : vector<12x1xf32> -> vector<12x1xf32>
    %86 = vector.broadcast %85 : vector<12x1xf32> to vector<12x12xf32>
    %87 = arith.mulf %82, %86 : vector<12x12xf32>
    %cst_28 = arith.constant dense<0.000000e+00> : vector<12x32xf32>
    %88 = tpu.matmul %87, %72, %cst_28 {dimension_numbers = #tpu.dot_dimension_numbers<[1], [0], [0], [1], [0, 0, 1, 1], [], []>} : vector<12x12xf32>, vector<12x32xf32>, vector<12x32xf32> -> vector<12x32xf32>
    %89 = tpu.concatenate %31, %50, %69, %88 in 1 : vector<12x32xf32>, vector<12x32xf32>, vector<12x32xf32>, vector<12x32xf32> -> vector<12x128xf32>
    %90 = arith.truncf %89 : vector<12x128xf32> to vector<12x128xbf16>
    %c0_29 = arith.constant 0 : index
    %c0_30 = arith.constant 0 : index
    %91 = vector.load %arg5[%c0_29, %c0_30] : memref<128x128xbf16, #tpu.memory_space<vmem>>, vector<128x128xbf16>
    %cst_31 = arith.constant dense<0.000000e+00> : vector<12x128xf32>
    %92 = tpu.matmul %90, %91, %cst_31 {dimension_numbers = #tpu.dot_dimension_numbers<[1], [0], [0], [1], [0, 0, 1, 1], [], []>} : vector<12x128xbf16>, vector<128x128xbf16>, vector<12x128xf32> -> vector<12x128xf32>
    %c0_32 = arith.constant 0 : index
    %c0_33 = arith.constant 0 : index
    %93 = vector.load %arg6[%c0_32, %c0_33] : memref<1x128xf32, #tpu.memory_space<vmem>>, vector<1x128xf32>
    %94 = vector.broadcast %93 : vector<1x128xf32> to vector<12x128xf32>
    %95 = arith.addf %92, %94 : vector<12x128xf32>
    %96 = arith.addf %1, %95 : vector<12x128xf32>
    %c0_34 = arith.constant 0 : index
    %c0_35 = arith.constant 0 : index
    %97 = vector.load %arg7[%c0_34, %c0_35] : memref<1x128xf32, #tpu.memory_space<vmem>>, vector<1x128xf32>
    %c0_36 = arith.constant 0 : index
    %c0_37 = arith.constant 0 : index
    %98 = vector.load %arg8[%c0_36, %c0_37] : memref<1x128xf32, #tpu.memory_space<vmem>>, vector<1x128xf32>
    %cst_38 = arith.constant dense<0.000000e+00> : vector<12xf32>
    %99 = vector.multi_reduction <add>, %96, %cst_38 [1] : vector<12x128xf32> to vector<12xf32>
    %100 = vector.shape_cast %99 : vector<12xf32> to vector<12x1xf32>
    %cst_39 = arith.constant 1.280000e+02 : f32
    %101 = vector.broadcast %cst_39 : f32 to vector<12x1xf32>
    %102 = arith.divf %100, %101 : vector<12x1xf32>
    %103 = vector.broadcast %102 : vector<12x1xf32> to vector<12x128xf32>
    %104 = arith.subf %96, %103 : vector<12x128xf32>
    %105 = arith.mulf %104, %104 : vector<12x128xf32>
    %cst_40 = arith.constant dense<0.000000e+00> : vector<12xf32>
    %106 = vector.multi_reduction <add>, %105, %cst_40 [1] : vector<12x128xf32> to vector<12xf32>
    %107 = vector.shape_cast %106 : vector<12xf32> to vector<12x1xf32>
    %cst_41 = arith.constant 1.280000e+02 : f32
    %108 = vector.broadcast %cst_41 : f32 to vector<12x1xf32>
    %109 = arith.divf %107, %108 : vector<12x1xf32>
    %cst_42 = arith.constant 9.99999974E-6 : f32
    %110 = vector.broadcast %cst_42 : f32 to vector<12x1xf32>
    %111 = arith.addf %109, %110 : vector<12x1xf32>
    %112 = math.rsqrt %111 : vector<12x1xf32>
    %113 = vector.broadcast %112 : vector<12x1xf32> to vector<12x128xf32>
    %114 = arith.mulf %104, %113 : vector<12x128xf32>
    %115 = vector.broadcast %97 : vector<1x128xf32> to vector<12x128xf32>
    %116 = arith.mulf %114, %115 : vector<12x128xf32>
    %117 = vector.broadcast %98 : vector<1x128xf32> to vector<12x128xf32>
    %118 = arith.addf %116, %117 : vector<12x128xf32>
    %119 = arith.truncf %118 : vector<12x128xf32> to vector<12x128xbf16>
    %c0_43 = arith.constant 0 : index
    %c0_44 = arith.constant 0 : index
    %120 = vector.load %arg9[%c0_43, %c0_44] : memref<128x128xbf16, #tpu.memory_space<vmem>>, vector<128x128xbf16>
    %cst_45 = arith.constant dense<0.000000e+00> : vector<12x128xf32>
    %121 = tpu.matmul %119, %120, %cst_45 {dimension_numbers = #tpu.dot_dimension_numbers<[1], [0], [0], [1], [0, 0, 1, 1], [], []>} : vector<12x128xbf16>, vector<128x128xbf16>, vector<12x128xf32> -> vector<12x128xf32>
    %c0_46 = arith.constant 0 : index
    %c0_47 = arith.constant 0 : index
    %122 = vector.load %arg10[%c0_46, %c0_47] : memref<1x128xf32, #tpu.memory_space<vmem>>, vector<1x128xf32>
    %123 = vector.broadcast %122 : vector<1x128xf32> to vector<12x128xf32>
    %124 = arith.addf %121, %123 : vector<12x128xf32>
    %cst_48 = arith.constant 0.000000e+00 : f32
    %125 = vector.broadcast %cst_48 : f32 to vector<12x128xf32>
    %126 = arith.maximumf %124, %125 : vector<12x128xf32>
    %127 = arith.truncf %126 : vector<12x128xf32> to vector<12x128xbf16>
    %c0_49 = arith.constant 0 : index
    %c0_50 = arith.constant 0 : index
    %128 = vector.load %arg11[%c0_49, %c0_50] : memref<128x128xbf16, #tpu.memory_space<vmem>>, vector<128x128xbf16>
    %cst_51 = arith.constant dense<0.000000e+00> : vector<12x128xf32>
    %129 = tpu.matmul %127, %128, %cst_51 {dimension_numbers = #tpu.dot_dimension_numbers<[1], [0], [0], [1], [0, 0, 1, 1], [], []>} : vector<12x128xbf16>, vector<128x128xbf16>, vector<12x128xf32> -> vector<12x128xf32>
    %c0_52 = arith.constant 0 : index
    %c0_53 = arith.constant 0 : index
    %130 = vector.load %arg12[%c0_52, %c0_53] : memref<1x128xf32, #tpu.memory_space<vmem>>, vector<1x128xf32>
    %131 = vector.broadcast %130 : vector<1x128xf32> to vector<12x128xf32>
    %132 = arith.addf %129, %131 : vector<12x128xf32>
    %133 = arith.addf %118, %132 : vector<12x128xf32>
    %c0_54 = arith.constant 0 : index
    %c0_55 = arith.constant 0 : index
    %134 = vector.load %arg13[%c0_54, %c0_55] : memref<1x128xf32, #tpu.memory_space<vmem>>, vector<1x128xf32>
    %c0_56 = arith.constant 0 : index
    %c0_57 = arith.constant 0 : index
    %135 = vector.load %arg14[%c0_56, %c0_57] : memref<1x128xf32, #tpu.memory_space<vmem>>, vector<1x128xf32>
    %cst_58 = arith.constant dense<0.000000e+00> : vector<12xf32>
    %136 = vector.multi_reduction <add>, %133, %cst_58 [1] : vector<12x128xf32> to vector<12xf32>
    %137 = vector.shape_cast %136 : vector<12xf32> to vector<12x1xf32>
    %cst_59 = arith.constant 1.280000e+02 : f32
    %138 = vector.broadcast %cst_59 : f32 to vector<12x1xf32>
    %139 = arith.divf %137, %138 : vector<12x1xf32>
    %140 = vector.broadcast %139 : vector<12x1xf32> to vector<12x128xf32>
    %141 = arith.subf %133, %140 : vector<12x128xf32>
    %142 = arith.mulf %141, %141 : vector<12x128xf32>
    %cst_60 = arith.constant dense<0.000000e+00> : vector<12xf32>
    %143 = vector.multi_reduction <add>, %142, %cst_60 [1] : vector<12x128xf32> to vector<12xf32>
    %144 = vector.shape_cast %143 : vector<12xf32> to vector<12x1xf32>
    %cst_61 = arith.constant 1.280000e+02 : f32
    %145 = vector.broadcast %cst_61 : f32 to vector<12x1xf32>
    %146 = arith.divf %144, %145 : vector<12x1xf32>
    %cst_62 = arith.constant 9.99999974E-6 : f32
    %147 = vector.broadcast %cst_62 : f32 to vector<12x1xf32>
    %148 = arith.addf %146, %147 : vector<12x1xf32>
    %149 = math.rsqrt %148 : vector<12x1xf32>
    %150 = vector.broadcast %149 : vector<12x1xf32> to vector<12x128xf32>
    %151 = arith.mulf %141, %150 : vector<12x128xf32>
    %152 = vector.broadcast %134 : vector<1x128xf32> to vector<12x128xf32>
    %153 = arith.mulf %151, %152 : vector<12x128xf32>
    %154 = vector.broadcast %135 : vector<1x128xf32> to vector<12x128xf32>
    %155 = arith.addf %153, %154 : vector<12x128xf32>
    %c0_63 = arith.constant 0 : index
    %c0_64 = arith.constant 0 : index
    %c0_65 = arith.constant 0 : index
    %156 = vector.load %arg15[%c0_63, %c0_64, %c0_65] : memref<1x12x128xf32, #tpu.memory_space<vmem>>, vector<1x12x128xf32>
    %157 = vector.shape_cast %156 : vector<1x12x128xf32> to vector<12x128xf32>
    %158 = vector.shape_cast %155 : vector<12x128xf32> to vector<1x12x128xf32>
    tpu.vector_store %arg15[%c0_63, %c0_64, %c0_65], %158 {strides = array<i32>} : memref<1x12x128xf32, #tpu.memory_space<vmem>>, vector<1x12x128xf32>,
    return
  }
  func.func @transform_0(%arg0: i32) -> (i32, i32, i32) {
    %c0_i32 = arith.constant 0 : i32
    %c0_i32_0 = arith.constant 0 : i32
    %c0_i32_1 = arith.constant 0 : i32
    return %arg0, %c0_i32, %c0_i32_0 : i32, i32, i32
  }
  func.func @transform_1(%arg0: i32) -> (i32, i32, i32) {
    %c0_i32 = arith.constant 0 : i32
    %c0_i32_0 = arith.constant 0 : i32
    %c0_i32_1 = arith.constant 0 : i32
    return %arg0, %c0_i32, %c0_i32_0 : i32, i32, i32
  }
  func.func @transform_2(%arg0: i32) -> (i32, i32) {
    %c0_i32 = arith.constant 0 : i32
    %c0_i32_0 = arith.constant 0 : i32
    %c0_i32_1 = arith.constant 0 : i32
    return %c0_i32, %c0_i32_0 : i32, i32
  }
  func.func @transform_3(%arg0: i32) -> (i32, i32) {
    %c0_i32 = arith.constant 0 : i32
    %c0_i32_0 = arith.constant 0 : i32
    %c0_i32_1 = arith.constant 0 : i32
    return %c0_i32, %c0_i32_0 : i32, i32
  }
  func.func @transform_4(%arg0: i32) -> (i32, i32) {
    %c0_i32 = arith.constant 0 : i32
    %c0_i32_0 = arith.constant 0 : i32
    %c0_i32_1 = arith.constant 0 : i32
    return %c0_i32, %c0_i32_0 : i32, i32
  }
  func.func @transform_5(%arg0: i32) -> (i32, i32) {
    %c0_i32 = arith.constant 0 : i32
    %c0_i32_0 = arith.constant 0 : i32
    %c0_i32_1 = arith.constant 0 : i32
    return %c0_i32, %c0_i32_0 : i32, i32
  }
  func.func @transform_6(%arg0: i32) -> (i32, i32) {
    %c0_i32 = arith.constant 0 : i32
    %c0_i32_0 = arith.constant 0 : i32
    %c0_i32_1 = arith.constant 0 : i32
    return %c0_i32, %c0_i32_0 : i32, i32
  }
  func.func @transform_7(%arg0: i32) -> (i32, i32) {
    %c0_i32 = arith.constant 0 : i32
    %c0_i32_0 = arith.constant 0 : i32
    %c0_i32_1 = arith.constant 0 : i32
    return %c0_i32, %c0_i32_0 : i32, i32
  }
  func.func @transform_8(%arg0: i32) -> (i32, i32) {
    %c0_i32 = arith.constant 0 : i32
    %c0_i32_0 = arith.constant 0 : i32
    %c0_i32_1 = arith.constant 0 : i32
    return %c0_i32, %c0_i32_0 : i32, i32
  }
  func.func @transform_9(%arg0: i32) -> (i32, i32) {
    %c0_i32 = arith.constant 0 : i32
    %c0_i32_0 = arith.constant 0 : i32
    %c0_i32_1 = arith.constant 0 : i32
    return %c0_i32, %c0_i32_0 : i32, i32
  }
  func.func @transform_10(%arg0: i32) -> (i32, i32) {
    %c0_i32 = arith.constant 0 : i32
    %c0_i32_0 = arith.constant 0 : i32
    %c0_i32_1 = arith.constant 0 : i32
    return %c0_i32, %c0_i32_0 : i32, i32
  }
  func.func @transform_11(%arg0: i32) -> (i32, i32) {
    %c0_i32 = arith.constant 0 : i32
    %c0_i32_0 = arith.constant 0 : i32
    %c0_i32_1 = arith.constant 0 : i32
    return %c0_i32, %c0_i32_0 : i32, i32
  }
  func.func @transform_12(%arg0: i32) -> (i32, i32) {
    %c0_i32 = arith.constant 0 : i32
    %c0_i32_0 = arith.constant 0 : i32
    %c0_i32_1 = arith.constant 0 : i32
    return %c0_i32, %c0_i32_0 : i32, i32
  }
  func.func @transform_13(%arg0: i32) -> (i32, i32) {
    %c0_i32 = arith.constant 0 : i32
    %c0_i32_0 = arith.constant 0 : i32
    %c0_i32_1 = arith.constant 0 : i32
    return %c0_i32, %c0_i32_0 : i32, i32
  }
  func.func @transform_14(%arg0: i32) -> (i32, i32, i32) {
    %c0_i32 = arith.constant 0 : i32
    %c0_i32_0 = arith.constant 0 : i32
    %c0_i32_1 = arith.constant 0 : i32
    return %arg0, %c0_i32, %c0_i32_0 : i32, i32, i32
  }
}

module attributes {stable_mosaic.version = 11 : i64} {
  func.func @_encoder_layer_kernel(%arg0: i32, %arg1: memref<1x12x128xf32, #tpu.memory_space<vmem>>, %arg2: memref<1x1x12xf32, #tpu.memory_space<vmem>>, %arg3: memref<128x384xbf16, #tpu.memory_space<vmem>>, %arg4: memref<1x384xf32, #tpu.memory_space<vmem>>, %arg5: memref<128x128xbf16, #tpu.memory_space<vmem>>, %arg6: memref<1x128xf32, #tpu.memory_space<vmem>>, %arg7: memref<1x128xf32, #tpu.memory_space<vmem>>, %arg8: memref<1x128xf32, #tpu.memory_space<vmem>>, %arg9: memref<128x128xbf16, #tpu.memory_space<vmem>>, %arg10: memref<1x128xf32, #tpu.memory_space<vmem>>, %arg11: memref<128x128xbf16, #tpu.memory_space<vmem>>, %arg12: memref<1x128xf32, #tpu.memory_space<vmem>>, %arg13: memref<1x128xf32, #tpu.memory_space<vmem>>, %arg14: memref<1x128xf32, #tpu.memory_space<vmem>>, %arg15: memref<1x12x128xf32, #tpu.memory_space<vmem>>) attributes {dimension_semantics = [#tpu.dimension_semantics<parallel>], iteration_bounds = array<i64: 2>, scalar_prefetch = 0 : i64, scratch_operands = 0 : i64, tpu.core_type = #tpu.core_type<tc>, window_params = [{transform_indices = @transform_0, window_bounds = array<i64: 1, 12, 128>}, {transform_indices = @transform_1, window_bounds = array<i64: 1, 1, 12>}, {pipeline_mode = #tpu.pipeline_mode<synchronous>, transform_indices = @transform_2, window_bounds = array<i64: 128, 384>}, {pipeline_mode = #tpu.pipeline_mode<synchronous>, transform_indices = @transform_3, window_bounds = array<i64: 1, 384>}, {pipeline_mode = #tpu.pipeline_mode<synchronous>, transform_indices = @transform_4, window_bounds = array<i64: 128, 128>}, {pipeline_mode = #tpu.pipeline_mode<synchronous>, transform_indices = @transform_5, window_bounds = array<i64: 1, 128>}, {pipeline_mode = #tpu.pipeline_mode<synchronous>, transform_indices = @transform_6, window_bounds = array<i64: 1, 128>}, {pipeline_mode = #tpu.pipeline_mode<synchronous>, transform_indices = @transform_7, window_bounds = array<i64: 1, 128>}, {pipeline_mode = #tpu.pipeline_mode<synchronous>, transform_indices = @transform_8, window_bounds = array<i64: 128, 128>}, {pipeline_mode = #tpu.pipeline_mode<synchronous>, transform_indices = @transform_9, window_bounds = array<i64: 1, 128>}, {pipeline_mode = #tpu.pipeline_mode<synchronous>, transform_indices = @transform_10, window_bounds = array<i64: 128, 128>}, {pipeline_mode = #tpu.pipeline_mode<synchronous>, transform_indices = @transform_11, window_bounds = array<i64: 1, 128>}, {pipeline_mode = #tpu.pipeline_mode<synchronous>, transform_indices = @transform_12, window_bounds = array<i64: 1, 128>}, {pipeline_mode = #tpu.pipeline_mode<synchronous>, transform_indices = @transform_13, window_bounds = array<i64: 1, 128>}, {transform_indices = @transform_14, window_bounds = array<i64: 1, 12, 128>}]} {
    %c0 = arith.constant 0 : index
    %c0_0 = arith.constant 0 : index
    %c0_1 = arith.constant 0 : index
    %0 = vector.load %arg1[%c0, %c0_0, %c0_1] : memref<1x12x128xf32, #tpu.memory_space<vmem>>, vector<1x12x128xf32>
    %1 = vector.shape_cast %0 : vector<1x12x128xf32> to vector<12x128xf32>
    %2 = arith.truncf %1 : vector<12x128xf32> to vector<12x128xbf16>
    %c0_2 = arith.constant 0 : index
    %c0_3 = arith.constant 0 : index
    %3 = vector.load %arg3[%c0_2, %c0_3] : memref<128x384xbf16, #tpu.memory_space<vmem>>, vector<128x384xbf16>
    %cst = arith.constant dense<0.000000e+00> : vector<12x384xf32>
    %4 = tpu.matmul %2, %3, %cst {dimension_numbers = #tpu.dot_dimension_numbers<[1], [0], [0], [1], [0, 0, 1, 1], [], []>} : vector<12x128xbf16>, vector<128x384xbf16>, vector<12x384xf32> -> vector<12x384xf32>
    %c0_4 = arith.constant 0 : index
    %c0_5 = arith.constant 0 : index
    %5 = vector.load %arg4[%c0_4, %c0_5] : memref<1x384xf32, #tpu.memory_space<vmem>>, vector<1x384xf32>
    %6 = vector.broadcast %5 : vector<1x384xf32> to vector<12x384xf32>
    %7 = arith.addf %4, %6 : vector<12x384xf32>
    %8 = vector.extract_strided_slice %7 {offsets = [0, 0], sizes = [12, 128], strides = [1, 1]} : vector<12x384xf32> to vector<12x128xf32>
    %9 = vector.extract_strided_slice %7 {offsets = [0, 128], sizes = [12, 128], strides = [1, 1]} : vector<12x384xf32> to vector<12x128xf32>
    %10 = vector.extract_strided_slice %7 {offsets = [0, 256], sizes = [12, 128], strides = [1, 1]} : vector<12x384xf32> to vector<12x128xf32>
    %c0_6 = arith.constant 0 : index
    %c0_7 = arith.constant 0 : index
    %c0_8 = arith.constant 0 : index
    %11 = vector.load %arg2[%c0_6, %c0_7, %c0_8] : memref<1x1x12xf32, #tpu.memory_space<vmem>>, vector<1x1x12xf32>
    %12 = vector.shape_cast %11 : vector<1x1x12xf32> to vector<1x12xf32>
    %13 = vector.extract_strided_slice %8 {offsets = [0, 0], sizes = [12, 32], strides = [1, 1]} : vector<12x128xf32> to vector<12x32xf32>
    %14 = vector.extract_strided_slice %9 {offsets = [0, 0], sizes = [12, 32], strides = [1, 1]} : vector<12x128xf32> to vector<12x32xf32>
    %15 = vector.extract_strided_slice %10 {offsets = [0, 0], sizes = [12, 32], strides = [1, 1]} : vector<12x128xf32> to vector<12x32xf32>
    %cst_9 = arith.constant dense<0.000000e+00> : vector<12x12xf32>
    %16 = tpu.matmul %13, %14, %cst_9 {dimension_numbers = #tpu.dot_dimension_numbers<[1], [1], [0], [0], [0, 0, 1, 0], [], []>} : vector<12x32xf32>, vector<12x32xf32>, vector<12x12xf32> -> vector<12x12xf32>
    %cst_10 = arith.constant 0.176776692 : f32
    %17 = vector.broadcast %cst_10 : f32 to vector<12x12xf32>
    %18 = arith.mulf %16, %17 : vector<12x12xf32>
    %19 = vector.broadcast %12 : vector<1x12xf32> to vector<12x12xf32>
    %20 = arith.addf %18, %19 : vector<12x12xf32>
    %cst_11 = arith.constant dense<0xFF800000> : vector<12xf32>
    %21 = vector.multi_reduction <maximumf>, %20, %cst_11 [1] : vector<12x12xf32> to vector<12xf32>
    %22 = vector.shape_cast %21 : vector<12xf32> to vector<12x1xf32>
    %23 = vector.broadcast %22 : vector<12x1xf32> to vector<12x12xf32>
    %24 = arith.subf %20, %23 : vector<12x12xf32>
    %25 = math.exp %24 : vector<12x12xf32>
    %cst_12 = arith.constant dense<0.000000e+00> : vector<12xf32>
    %26 = vector.multi_reduction <add>, %25, %cst_12 [1] : vector<12x12xf32> to vector<12xf32>
    %27 = vector.shape_cast %26 : vector<12xf32> to vector<12x1xf32>
    %28 = tpu.reciprocal %27 {approx = true} : vector<12x1xf32> -> vector<12x1xf32>
    %29 = vector.broadcast %28 : vector<12x1xf32> to vector<12x12xf32>
    %30 = arith.mulf %25, %29 : vector<12x12xf32>
    %cst_13 = arith.constant dense<0.000000e+00> : vector<12x32xf32>
    %31 = tpu.matmul %30, %15, %cst_13 {dimension_numbers = #tpu.dot_dimension_numbers<[1], [0], [0], [1], [0, 0, 1, 1], [], []>} : vector<12x12xf32>, vector<12x32xf32>, vector<12x32xf32> -> vector<12x32xf32>
    %32 = vector.extract_strided_slice %8 {offsets = [0, 32], sizes = [12, 32], strides = [1, 1]} : vector<12x128xf32> to vector<12x32xf32>
    %33 = vector.extract_strided_slice %9 {offsets = [0, 32], sizes = [12, 32], strides = [1, 1]} : vector<12x128xf32> to vector<12x32xf32>
    %34 = vector.extract_strided_slice %10 {offsets = [0, 32], sizes = [12, 32], strides = [1, 1]} : vector<12x128xf32> to vector<12x32xf32>
    %cst_14 = arith.constant dense<0.000000e+00> : vector<12x12xf32>
    %35 = tpu.matmul %32, %33, %cst_14 {dimension_numbers = #tpu.dot_dimension_numbers<[1], [1], [0], [0], [0, 0, 1, 0], [], []>} : vector<12x32xf32>, vector<12x32xf32>, vector<12x12xf32> -> vector<12x12xf32>
    %cst_15 = arith.constant 0.176776692 : f32
    %36 = vector.broadcast %cst_15 : f32 to vector<12x12xf32>
    %37 = arith.mulf %35, %36 : vector<12x12xf32>
    %38 = vector.broadcast %12 : vector<1x12xf32> to vector<12x12xf32>
    %39 = arith.addf %37, %38 : vector<12x12xf32>
    %cst_16 = arith.constant dense<0xFF800000> : vector<12xf32>
    %40 = vector.multi_reduction <maximumf>, %39, %cst_16 [1] : vector<12x12xf32> to vector<12xf32>
    %41 = vector.shape_cast %40 : vector<12xf32> to vector<12x1xf32>
    %42 = vector.broadcast %41 : vector<12x1xf32> to vector<12x12xf32>
    %43 = arith.subf %39, %42 : vector<12x12xf32>
    %44 = math.exp %43 : vector<12x12xf32>
    %cst_17 = arith.constant dense<0.000000e+00> : vector<12xf32>
    %45 = vector.multi_reduction <add>, %44, %cst_17 [1] : vector<12x12xf32> to vector<12xf32>
    %46 = vector.shape_cast %45 : vector<12xf32> to vector<12x1xf32>
    %47 = tpu.reciprocal %46 {approx = true} : vector<12x1xf32> -> vector<12x1xf32>
    %48 = vector.broadcast %47 : vector<12x1xf32> to vector<12x12xf32>
    %49 = arith.mulf %44, %48 : vector<12x12xf32>
    %cst_18 = arith.constant dense<0.000000e+00> : vector<12x32xf32>
    %50 = tpu.matmul %49, %34, %cst_18 {dimension_numbers = #tpu.dot_dimension_numbers<[1], [0], [0], [1], [0, 0, 1, 1], [], []>} : vector<12x12xf32>, vector<12x32xf32>, vector<12x32xf32> -> vector<12x32xf32>
    %51 = vector.extract_strided_slice %8 {offsets = [0, 64], sizes = [12, 32], strides = [1, 1]} : vector<12x128xf32> to vector<12x32xf32>
    %52 = vector.extract_strided_slice %9 {offsets = [0, 64], sizes = [12, 32], strides = [1, 1]} : vector<12x128xf32> to vector<12x32xf32>
    %53 = vector.extract_strided_slice %10 {offsets = [0, 64], sizes = [12, 32], strides = [1, 1]} : vector<12x128xf32> to vector<12x32xf32>
    %cst_19 = arith.constant dense<0.000000e+00> : vector<12x12xf32>
    %54 = tpu.matmul %51, %52, %cst_19 {dimension_numbers = #tpu.dot_dimension_numbers<[1], [1], [0], [0], [0, 0, 1, 0], [], []>} : vector<12x32xf32>, vector<12x32xf32>, vector<12x12xf32> -> vector<12x12xf32>
    %cst_20 = arith.constant 0.176776692 : f32
    %55 = vector.broadcast %cst_20 : f32 to vector<12x12xf32>
    %56 = arith.mulf %54, %55 : vector<12x12xf32>
    %57 = vector.broadcast %12 : vector<1x12xf32> to vector<12x12xf32>
    %58 = arith.addf %56, %57 : vector<12x12xf32>
    %cst_21 = arith.constant dense<0xFF800000> : vector<12xf32>
    %59 = vector.multi_reduction <maximumf>, %58, %cst_21 [1] : vector<12x12xf32> to vector<12xf32>
    %60 = vector.shape_cast %59 : vector<12xf32> to vector<12x1xf32>
    %61 = vector.broadcast %60 : vector<12x1xf32> to vector<12x12xf32>
    %62 = arith.subf %58, %61 : vector<12x12xf32>
    %63 = math.exp %62 : vector<12x12xf32>
    %cst_22 = arith.constant dense<0.000000e+00> : vector<12xf32>
    %64 = vector.multi_reduction <add>, %63, %cst_22 [1] : vector<12x12xf32> to vector<12xf32>
    %65 = vector.shape_cast %64 : vector<12xf32> to vector<12x1xf32>
    %66 = tpu.reciprocal %65 {approx = true} : vector<12x1xf32> -> vector<12x1xf32>
    %67 = vector.broadcast %66 : vector<12x1xf32> to vector<12x12xf32>
    %68 = arith.mulf %63, %67 : vector<12x12xf32>
    %cst_23 = arith.constant dense<0.000000e+00> : vector<12x32xf32>
    %69 = tpu.matmul %68, %53, %cst_23 {dimension_numbers = #tpu.dot_dimension_numbers<[1], [0], [0], [1], [0, 0, 1, 1], [], []>} : vector<12x12xf32>, vector<12x32xf32>, vector<12x32xf32> -> vector<12x32xf32>
    %70 = vector.extract_strided_slice %8 {offsets = [0, 96], sizes = [12, 32], strides = [1, 1]} : vector<12x128xf32> to vector<12x32xf32>
    %71 = vector.extract_strided_slice %9 {offsets = [0, 96], sizes = [12, 32], strides = [1, 1]} : vector<12x128xf32> to vector<12x32xf32>
    %72 = vector.extract_strided_slice %10 {offsets = [0, 96], sizes = [12, 32], strides = [1, 1]} : vector<12x128xf32> to vector<12x32xf32>
    %cst_24 = arith.constant dense<0.000000e+00> : vector<12x12xf32>
    %73 = tpu.matmul %70, %71, %cst_24 {dimension_numbers = #tpu.dot_dimension_numbers<[1], [1], [0], [0], [0, 0, 1, 0], [], []>} : vector<12x32xf32>, vector<12x32xf32>, vector<12x12xf32> -> vector<12x12xf32>
    %cst_25 = arith.constant 0.176776692 : f32
    %74 = vector.broadcast %cst_25 : f32 to vector<12x12xf32>
    %75 = arith.mulf %73, %74 : vector<12x12xf32>
    %76 = vector.broadcast %12 : vector<1x12xf32> to vector<12x12xf32>
    %77 = arith.addf %75, %76 : vector<12x12xf32>
    %cst_26 = arith.constant dense<0xFF800000> : vector<12xf32>
    %78 = vector.multi_reduction <maximumf>, %77, %cst_26 [1] : vector<12x12xf32> to vector<12xf32>
    %79 = vector.shape_cast %78 : vector<12xf32> to vector<12x1xf32>
    %80 = vector.broadcast %79 : vector<12x1xf32> to vector<12x12xf32>
    %81 = arith.subf %77, %80 : vector<12x12xf32>
    %82 = math.exp %81 : vector<12x12xf32>
    %cst_27 = arith.constant dense<0.000000e+00> : vector<12xf32>
    %83 = vector.multi_reduction <add>, %82, %cst_27 [1] : vector<12x12xf32> to vector<12xf32>
    %84 = vector.shape_cast %83 : vector<12xf32> to vector<12x1xf32>
    %85 = tpu.reciprocal %84 {approx = true} : vector<12x1xf32> -> vector<12x1xf32>
    %86 = vector.broadcast %85 : vector<12x1xf32> to vector<12x12xf32>
    %87 = arith.mulf %82, %86 : vector<12x12xf32>
    %cst_28 = arith.constant dense<0.000000e+00> : vector<12x32xf32>
    %88 = tpu.matmul %87, %72, %cst_28 {dimension_numbers = #tpu.dot_dimension_numbers<[1], [0], [0], [1], [0, 0, 1, 1], [], []>} : vector<12x12xf32>, vector<12x32xf32>, vector<12x32xf32> -> vector<12x32xf32>
    %89 = tpu.concatenate %31, %50, %69, %88 in 1 : vector<12x32xf32>, vector<12x32xf32>, vector<12x32xf32>, vector<12x32xf32> -> vector<12x128xf32>
    %90 = arith.truncf %89 : vector<12x128xf32> to vector<12x128xbf16>
    %c0_29 = arith.constant 0 : index
    %c0_30 = arith.constant 0 : index
    %91 = vector.load %arg5[%c0_29, %c0_30] : memref<128x128xbf16, #tpu.memory_space<vmem>>, vector<128x128xbf16>
    %cst_31 = arith.constant dense<0.000000e+00> : vector<12x128xf32>
    %92 = tpu.matmul %90, %91, %cst_31 {dimension_numbers = #tpu.dot_dimension_numbers<[1], [0], [0], [1], [0, 0, 1, 1], [], []>} : vector<12x128xbf16>, vector<128x128xbf16>, vector<12x128xf32> -> vector<12x128xf32>
    %c0_32 = arith.constant 0 : index
    %c0_33 = arith.constant 0 : index
    %93 = vector.load %arg6[%c0_32, %c0_33] : memref<1x128xf32, #tpu.memory_space<vmem>>, vector<1x128xf32>
    %94 = vector.broadcast %93 : vector<1x128xf32> to vector<12x128xf32>
    %95 = arith.addf %92, %94 : vector<12x128xf32>
    %96 = arith.addf %1, %95 : vector<12x128xf32>
    %c0_34 = arith.constant 0 : index
    %c0_35 = arith.constant 0 : index
    %97 = vector.load %arg7[%c0_34, %c0_35] : memref<1x128xf32, #tpu.memory_space<vmem>>, vector<1x128xf32>
    %c0_36 = arith.constant 0 : index
    %c0_37 = arith.constant 0 : index
    %98 = vector.load %arg8[%c0_36, %c0_37] : memref<1x128xf32, #tpu.memory_space<vmem>>, vector<1x128xf32>
    %cst_38 = arith.constant dense<0.000000e+00> : vector<12xf32>
    %99 = vector.multi_reduction <add>, %96, %cst_38 [1] : vector<12x128xf32> to vector<12xf32>
    %100 = vector.shape_cast %99 : vector<12xf32> to vector<12x1xf32>
    %cst_39 = arith.constant 1.280000e+02 : f32
    %101 = vector.broadcast %cst_39 : f32 to vector<12x1xf32>
    %102 = arith.divf %100, %101 : vector<12x1xf32>
    %103 = vector.broadcast %102 : vector<12x1xf32> to vector<12x128xf32>
    %104 = arith.subf %96, %103 : vector<12x128xf32>
    %105 = arith.mulf %104, %104 : vector<12x128xf32>
    %cst_40 = arith.constant dense<0.000000e+00> : vector<12xf32>
    %106 = vector.multi_reduction <add>, %105, %cst_40 [1] : vector<12x128xf32> to vector<12xf32>
    %107 = vector.shape_cast %106 : vector<12xf32> to vector<12x1xf32>
    %cst_41 = arith.constant 1.280000e+02 : f32
    %108 = vector.broadcast %cst_41 : f32 to vector<12x1xf32>
    %109 = arith.divf %107, %108 : vector<12x1xf32>
    %cst_42 = arith.constant 9.99999974E-6 : f32
    %110 = vector.broadcast %cst_42 : f32 to vector<12x1xf32>
    %111 = arith.addf %109, %110 : vector<12x1xf32>
    %112 = math.rsqrt %111 : vector<12x1xf32>
    %113 = vector.broadcast %112 : vector<12x1xf32> to vector<12x128xf32>
    %114 = arith.mulf %104, %113 : vector<12x128xf32>
    %115 = vector.broadcast %97 : vector<1x128xf32> to vector<12x128xf32>
    %116 = arith.mulf %114, %115 : vector<12x128xf32>
    %117 = vector.broadcast %98 : vector<1x128xf32> to vector<12x128xf32>
    %118 = arith.addf %116, %117 : vector<12x128xf32>
    %119 = arith.truncf %118 : vector<12x128xf32> to vector<12x128xbf16>
    %c0_43 = arith.constant 0 : index
    %c0_44 = arith.constant 0 : index
    %120 = vector.load %arg9[%c0_43, %c0_44] : memref<128x128xbf16, #tpu.memory_space<vmem>>, vector<128x128xbf16>
    %cst_45 = arith.constant dense<0.000000e+00> : vector<12x128xf32>
    %121 = tpu.matmul %119, %120, %cst_45 {dimension_numbers = #tpu.dot_dimension_numbers<[1], [0], [0], [1], [0, 0, 1, 1], [], []>} : vector<12x128xbf16>, vector<128x128xbf16>, vector<12x128xf32> -> vector<12x128xf32>
    %c0_46 = arith.constant 0 : index
    %c0_47 = arith.constant 0 : index
    %122 = vector.load %arg10[%c0_46, %c0_47] : memref<1x128xf32, #tpu.memory_space<vmem>>, vector<1x128xf32>
    %123 = vector.broadcast %122 : vector<1x128xf32> to vector<12x128xf32>
    %124 = arith.addf %121, %123 : vector<12x128xf32>
    %cst_48 = arith.constant 0.000000e+00 : f32
    %125 = vector.broadcast %cst_48 : f32 to vector<12x128xf32>
    %126 = arith.maximumf %124, %125 : vector<12x128xf32>
    %127 = arith.truncf %126 : vector<12x128xf32> to vector<12x128xbf16>
    %c0_49 = arith.constant 0 : index
    %c0_50 = arith.constant 0 : index
    %128 = vector.load %arg11[%c0_49, %c0_50] : memref<128x128xbf16, #tpu.memory_space<vmem>>, vector<128x128xbf16>
    %cst_51 = arith.constant dense<0.000000e+00> : vector<12x128xf32>
    %129 = tpu.matmul %127, %128, %cst_51 {dimension_numbers = #tpu.dot_dimension_numbers<[1], [0], [0], [1], [0, 0, 1, 1], [], []>} : vector<12x128xbf16>, vector<128x128xbf16>, vector<12x128xf32> -> vector<12x128xf32>
    %c0_52 = arith.constant 0 : index
    %c0_53 = arith.constant 0 : index
    %130 = vector.load %arg12[%c0_52, %c0_53] : memref<1x128xf32, #tpu.memory_space<vmem>>, vector<1x128xf32>
    %131 = vector.broadcast %130 : vector<1x128xf32> to vector<12x128xf32>
    %132 = arith.addf %129, %131 : vector<12x128xf32>
    %133 = arith.addf %118, %132 : vector<12x128xf32>
    %c0_54 = arith.constant 0 : index
    %c0_55 = arith.constant 0 : index
    %134 = vector.load %arg13[%c0_54, %c0_55] : memref<1x128xf32, #tpu.memory_space<vmem>>, vector<1x128xf32>
    %c0_56 = arith.constant 0 : index
    %c0_57 = arith.constant 0 : index
    %135 = vector.load %arg14[%c0_56, %c0_57] : memref<1x128xf32, #tpu.memory_space<vmem>>, vector<1x128xf32>
    %cst_58 = arith.constant dense<0.000000e+00> : vector<12xf32>
    %136 = vector.multi_reduction <add>, %133, %cst_58 [1] : vector<12x128xf32> to vector<12xf32>
    %137 = vector.shape_cast %136 : vector<12xf32> to vector<12x1xf32>
    %cst_59 = arith.constant 1.280000e+02 : f32
    %138 = vector.broadcast %cst_59 : f32 to vector<12x1xf32>
    %139 = arith.divf %137, %138 : vector<12x1xf32>
    %140 = vector.broadcast %139 : vector<12x1xf32> to vector<12x128xf32>
    %141 = arith.subf %133, %140 : vector<12x128xf32>
    %142 = arith.mulf %141, %141 : vector<12x128xf32>
    %cst_60 = arith.constant dense<0.000000e+00> : vector<12xf32>
    %143 = vector.multi_reduction <add>, %142, %cst_60 [1] : vector<12x128xf32> to vector<12xf32>
    %144 = vector.shape_cast %143 : vector<12xf32> to vector<12x1xf32>
    %cst_61 = arith.constant 1.280000e+02 : f32
    %145 = vector.broadcast %cst_61 : f32 to vector<12x1xf32>
    %146 = arith.divf %144, %145 : vector<12x1xf32>
    %cst_62 = arith.constant 9.99999974E-6 : f32
    %147 = vector.broadcast %cst_62 : f32 to vector<12x1xf32>
    %148 = arith.addf %146, %147 : vector<12x1xf32>
    %149 = math.rsqrt %148 : vector<12x1xf32>
    %150 = vector.broadcast %149 : vector<12x1xf32> to vector<12x128xf32>
    %151 = arith.mulf %141, %150 : vector<12x128xf32>
    %152 = vector.broadcast %134 : vector<1x128xf32> to vector<12x128xf32>
    %153 = arith.mulf %151, %152 : vector<12x128xf32>
    %154 = vector.broadcast %135 : vector<1x128xf32> to vector<12x128xf32>
    %155 = arith.addf %153, %154 : vector<12x128xf32>
    %c0_63 = arith.constant 0 : index
    %c0_64 = arith.constant 0 : index
    %c0_65 = arith.constant 0 : index
    %156 = vector.load %arg15[%c0_63, %c0_64, %c0_65] : memref<1x12x128xf32, #tpu.memory_space<vmem>>, vector<1x12x128xf32>
    %157 = vector.shape_cast %156 : vector<1x12x128xf32> to vector<12x128xf32>
    %158 = vector.shape_cast %155 : vector<12x128xf32> to vector<1x12x128xf32>
    tpu.vector_store %arg15[%c0_63, %c0_64, %c0_65], %158 {strides = array<i32>} : memref<1x12x128xf32, #tpu.memory_space<vmem>>, vector<1x12x128xf32>,
    return
  }
  func.func @transform_0(%arg0: i32) -> (i32, i32, i32) {
    %c0_i32 = arith.constant 0 : i32
    %c0_i32_0 = arith.constant 0 : i32
    %c0_i32_1 = arith.constant 0 : i32
    return %arg0, %c0_i32, %c0_i32_0 : i32, i32, i32
  }
  func.func @transform_1(%arg0: i32) -> (i32, i32, i32) {
    %c0_i32 = arith.constant 0 : i32
    %c0_i32_0 = arith.constant 0 : i32
    %c0_i32_1 = arith.constant 0 : i32
    return %arg0, %c0_i32, %c0_i32_0 : i32, i32, i32
  }
  func.func @transform_2(%arg0: i32) -> (i32, i32) {
    %c0_i32 = arith.constant 0 : i32
    %c0_i32_0 = arith.constant 0 : i32
    %c0_i32_1 = arith.constant 0 : i32
    return %c0_i32, %c0_i32_0 : i32, i32
  }
  func.func @transform_3(%arg0: i32) -> (i32, i32) {
    %c0_i32 = arith.constant 0 : i32
    %c0_i32_0 = arith.constant 0 : i32
    %c0_i32_1 = arith.constant 0 : i32
    return %c0_i32, %c0_i32_0 : i32, i32
  }
  func.func @transform_4(%arg0: i32) -> (i32, i32) {
    %c0_i32 = arith.constant 0 : i32
    %c0_i32_0 = arith.constant 0 : i32
    %c0_i32_1 = arith.constant 0 : i32
    return %c0_i32, %c0_i32_0 : i32, i32
  }
  func.func @transform_5(%arg0: i32) -> (i32, i32) {
    %c0_i32 = arith.constant 0 : i32
    %c0_i32_0 = arith.constant 0 : i32
    %c0_i32_1 = arith.constant 0 : i32
    return %c0_i32, %c0_i32_0 : i32, i32
  }
  func.func @transform_6(%arg0: i32) -> (i32, i32) {
    %c0_i32 = arith.constant 0 : i32
    %c0_i32_0 = arith.constant 0 : i32
    %c0_i32_1 = arith.constant 0 : i32
    return %c0_i32, %c0_i32_0 : i32, i32
  }
  func.func @transform_7(%arg0: i32) -> (i32, i32) {
    %c0_i32 = arith.constant 0 : i32
    %c0_i32_0 = arith.constant 0 : i32
    %c0_i32_1 = arith.constant 0 : i32
    return %c0_i32, %c0_i32_0 : i32, i32
  }
  func.func @transform_8(%arg0: i32) -> (i32, i32) {
    %c0_i32 = arith.constant 0 : i32
    %c0_i32_0 = arith.constant 0 : i32
    %c0_i32_1 = arith.constant 0 : i32
    return %c0_i32, %c0_i32_0 : i32, i32
  }
  func.func @transform_9(%arg0: i32) -> (i32, i32) {
    %c0_i32 = arith.constant 0 : i32
    %c0_i32_0 = arith.constant 0 : i32
    %c0_i32_1 = arith.constant 0 : i32
    return %c0_i32, %c0_i32_0 : i32, i32
  }
  func.func @transform_10(%arg0: i32) -> (i32, i32) {
    %c0_i32 = arith.constant 0 : i32
    %c0_i32_0 = arith.constant 0 : i32
    %c0_i32_1 = arith.constant 0 : i32
    return %c0_i32, %c0_i32_0 : i32, i32
  }
  func.func @transform_11(%arg0: i32) -> (i32, i32) {
    %c0_i32 = arith.constant 0 : i32
    %c0_i32_0 = arith.constant 0 : i32
    %c0_i32_1 = arith.constant 0 : i32
    return %c0_i32, %c0_i32_0 : i32, i32
  }
  func.func @transform_12(%arg0: i32) -> (i32, i32) {
    %c0_i32 = arith.constant 0 : i32
    %c0_i32_0 = arith.constant 0 : i32
    %c0_i32_1 = arith.constant 0 : i32
    return %c0_i32, %c0_i32_0 : i32, i32
  }
  func.func @transform_13(%arg0: i32) -> (i32, i32) {
    %c0_i32 = arith.constant 0 : i32
    %c0_i32_0 = arith.constant 0 : i32
    %c0_i32_1 = arith.constant 0 : i32
    return %c0_i32, %c0_i32_0 : i32, i32
  }
  func.func @transform_14(%arg0: i32) -> (i32, i32, i32) {
    %c0_i32 = arith.constant 0 : i32
    %c0_i32_0 = arith.constant 0 : i32
    %c0_i32_1 = arith.constant 0 : i32
    return %arg0, %c0_i32, %c0_i32_0 : i32, i32, i32
  }
}

module attributes {stable_mosaic.version = 11 : i64} {
  func.func @_decoder_layer_kernel(%arg0: i32, %arg1: memref<1x8x128xf32, #tpu.memory_space<vmem>>, %arg2: memref<1x12x128xf32, #tpu.memory_space<vmem>>, %arg3: memref<8x8xf32, #tpu.memory_space<vmem>>, %arg4: memref<1x1x8xf32, #tpu.memory_space<vmem>>, %arg5: memref<128x384xbf16, #tpu.memory_space<vmem>>, %arg6: memref<1x384xf32, #tpu.memory_space<vmem>>, %arg7: memref<128x128xbf16, #tpu.memory_space<vmem>>, %arg8: memref<1x128xf32, #tpu.memory_space<vmem>>, %arg9: memref<1x128xf32, #tpu.memory_space<vmem>>, %arg10: memref<1x128xf32, #tpu.memory_space<vmem>>, %arg11: memref<128x128xbf16, #tpu.memory_space<vmem>>, %arg12: memref<1x128xf32, #tpu.memory_space<vmem>>, %arg13: memref<128x256xbf16, #tpu.memory_space<vmem>>, %arg14: memref<1x256xf32, #tpu.memory_space<vmem>>, %arg15: memref<128x128xbf16, #tpu.memory_space<vmem>>, %arg16: memref<1x128xf32, #tpu.memory_space<vmem>>, %arg17: memref<1x128xf32, #tpu.memory_space<vmem>>, %arg18: memref<1x128xf32, #tpu.memory_space<vmem>>, %arg19: memref<128x128xbf16, #tpu.memory_space<vmem>>, %arg20: memref<1x128xf32, #tpu.memory_space<vmem>>, %arg21: memref<128x128xbf16, #tpu.memory_space<vmem>>, %arg22: memref<1x128xf32, #tpu.memory_space<vmem>>, %arg23: memref<1x128xf32, #tpu.memory_space<vmem>>, %arg24: memref<1x128xf32, #tpu.memory_space<vmem>>, %arg25: memref<1x8x128xf32, #tpu.memory_space<vmem>>) attributes {dimension_semantics = [#tpu.dimension_semantics<parallel>], iteration_bounds = array<i64: 2>, scalar_prefetch = 0 : i64, scratch_operands = 0 : i64, tpu.core_type = #tpu.core_type<tc>, window_params = [{transform_indices = @transform_0, window_bounds = array<i64: 1, 8, 128>}, {transform_indices = @transform_1, window_bounds = array<i64: 1, 12, 128>}, {pipeline_mode = #tpu.pipeline_mode<synchronous>, transform_indices = @transform_2, window_bounds = array<i64: 8, 8>}, {transform_indices = @transform_3, window_bounds = array<i64: 1, 1, 8>}, {pipeline_mode = #tpu.pipeline_mode<synchronous>, transform_indices = @transform_4, window_bounds = array<i64: 128, 384>}, {pipeline_mode = #tpu.pipeline_mode<synchronous>, transform_indices = @transform_5, window_bounds = array<i64: 1, 384>}, {pipeline_mode = #tpu.pipeline_mode<synchronous>, transform_indices = @transform_6, window_bounds = array<i64: 128, 128>}, {pipeline_mode = #tpu.pipeline_mode<synchronous>, transform_indices = @transform_7, window_bounds = array<i64: 1, 128>}, {pipeline_mode = #tpu.pipeline_mode<synchronous>, transform_indices = @transform_8, window_bounds = array<i64: 1, 128>}, {pipeline_mode = #tpu.pipeline_mode<synchronous>, transform_indices = @transform_9, window_bounds = array<i64: 1, 128>}, {pipeline_mode = #tpu.pipeline_mode<synchronous>, transform_indices = @transform_10, window_bounds = array<i64: 128, 128>}, {pipeline_mode = #tpu.pipeline_mode<synchronous>, transform_indices = @transform_11, window_bounds = array<i64: 1, 128>}, {pipeline_mode = #tpu.pipeline_mode<synchronous>, transform_indices = @transform_12, window_bounds = array<i64: 128, 256>}, {pipeline_mode = #tpu.pipeline_mode<synchronous>, transform_indices = @transform_13, window_bounds = array<i64: 1, 256>}, {pipeline_mode = #tpu.pipeline_mode<synchronous>, transform_indices = @transform_14, window_bounds = array<i64: 128, 128>}, {pipeline_mode = #tpu.pipeline_mode<synchronous>, transform_indices = @transform_15, window_bounds = array<i64: 1, 128>}, {pipeline_mode = #tpu.pipeline_mode<synchronous>, transform_indices = @transform_16, window_bounds = array<i64: 1, 128>}, {pipeline_mode = #tpu.pipeline_mode<synchronous>, transform_indices = @transform_17, window_bounds = array<i64: 1, 128>}, {pipeline_mode = #tpu.pipeline_mode<synchronous>, transform_indices = @transform_18, window_bounds = array<i64: 128, 128>}, {pipeline_mode = #tpu.pipeline_mode<synchronous>, transform_indices = @transform_19, window_bounds = array<i64: 1, 128>}, {pipeline_mode = #tpu.pipeline_mode<synchronous>, transform_indices = @transform_20, window_bounds = array<i64: 128, 128>}, {pipeline_mode = #tpu.pipeline_mode<synchronous>, transform_indices = @transform_21, window_bounds = array<i64: 1, 128>}, {pipeline_mode = #tpu.pipeline_mode<synchronous>, transform_indices = @transform_22, window_bounds = array<i64: 1, 128>}, {pipeline_mode = #tpu.pipeline_mode<synchronous>, transform_indices = @transform_23, window_bounds = array<i64: 1, 128>}, {transform_indices = @transform_24, window_bounds = array<i64: 1, 8, 128>}]} {
    %c0 = arith.constant 0 : index
    %c0_0 = arith.constant 0 : index
    %c0_1 = arith.constant 0 : index
    %0 = vector.load %arg1[%c0, %c0_0, %c0_1] : memref<1x8x128xf32, #tpu.memory_space<vmem>>, vector<1x8x128xf32>
    %1 = vector.shape_cast %0 : vector<1x8x128xf32> to vector<8x128xf32>
    %2 = arith.truncf %1 : vector<8x128xf32> to vector<8x128xbf16>
    %c0_2 = arith.constant 0 : index
    %c0_3 = arith.constant 0 : index
    %3 = vector.load %arg5[%c0_2, %c0_3] : memref<128x384xbf16, #tpu.memory_space<vmem>>, vector<128x384xbf16>
    %cst = arith.constant dense<0.000000e+00> : vector<8x384xf32>
    %4 = tpu.matmul %2, %3, %cst {dimension_numbers = #tpu.dot_dimension_numbers<[1], [0], [0], [1], [0, 0, 1, 1], [], []>} : vector<8x128xbf16>, vector<128x384xbf16>, vector<8x384xf32> -> vector<8x384xf32>
    %c0_4 = arith.constant 0 : index
    %c0_5 = arith.constant 0 : index
    %5 = vector.load %arg6[%c0_4, %c0_5] : memref<1x384xf32, #tpu.memory_space<vmem>>, vector<1x384xf32>
    %6 = vector.broadcast %5 : vector<1x384xf32> to vector<8x384xf32>
    %7 = arith.addf %4, %6 : vector<8x384xf32>
    %c0_6 = arith.constant 0 : index
    %c0_7 = arith.constant 0 : index
    %8 = vector.load %arg3[%c0_6, %c0_7] : memref<8x8xf32, #tpu.memory_space<vmem>>, vector<8x8xf32>
    %c0_8 = arith.constant 0 : index
    %c0_9 = arith.constant 0 : index
    %c0_10 = arith.constant 0 : index
    %9 = vector.load %arg4[%c0_8, %c0_9, %c0_10] : memref<1x1x8xf32, #tpu.memory_space<vmem>>, vector<1x1x8xf32>
    %10 = vector.shape_cast %9 : vector<1x1x8xf32> to vector<1x8xf32>
    %11 = vector.broadcast %10 : vector<1x8xf32> to vector<8x8xf32>
    %12 = arith.addf %8, %11 : vector<8x8xf32>
    %13 = vector.extract_strided_slice %7 {offsets = [0, 0], sizes = [8, 128], strides = [1, 1]} : vector<8x384xf32> to vector<8x128xf32>
    %14 = vector.extract_strided_slice %7 {offsets = [0, 128], sizes = [8, 128], strides = [1, 1]} : vector<8x384xf32> to vector<8x128xf32>
    %15 = vector.extract_strided_slice %7 {offsets = [0, 256], sizes = [8, 128], strides = [1, 1]} : vector<8x384xf32> to vector<8x128xf32>
    %16 = vector.extract_strided_slice %13 {offsets = [0, 0], sizes = [8, 32], strides = [1, 1]} : vector<8x128xf32> to vector<8x32xf32>
    %17 = vector.extract_strided_slice %14 {offsets = [0, 0], sizes = [8, 32], strides = [1, 1]} : vector<8x128xf32> to vector<8x32xf32>
    %18 = vector.extract_strided_slice %15 {offsets = [0, 0], sizes = [8, 32], strides = [1, 1]} : vector<8x128xf32> to vector<8x32xf32>
    %cst_11 = arith.constant dense<0.000000e+00> : vector<8x8xf32>
    %19 = tpu.matmul %16, %17, %cst_11 {dimension_numbers = #tpu.dot_dimension_numbers<[1], [1], [0], [0], [0, 0, 1, 0], [], []>} : vector<8x32xf32>, vector<8x32xf32>, vector<8x8xf32> -> vector<8x8xf32>
    %cst_12 = arith.constant 0.176776692 : f32
    %20 = vector.broadcast %cst_12 : f32 to vector<8x8xf32>
    %21 = arith.mulf %19, %20 : vector<8x8xf32>
    %22 = arith.addf %21, %12 : vector<8x8xf32>
    %cst_13 = arith.constant dense<0xFF800000> : vector<8xf32>
    %23 = vector.multi_reduction <maximumf>, %22, %cst_13 [1] : vector<8x8xf32> to vector<8xf32>
    %24 = vector.shape_cast %23 : vector<8xf32> to vector<8x1xf32>
    %25 = vector.broadcast %24 : vector<8x1xf32> to vector<8x8xf32>
    %26 = arith.subf %22, %25 : vector<8x8xf32>
    %27 = math.exp %26 : vector<8x8xf32>
    %cst_14 = arith.constant dense<0.000000e+00> : vector<8xf32>
    %28 = vector.multi_reduction <add>, %27, %cst_14 [1] : vector<8x8xf32> to vector<8xf32>
    %29 = vector.shape_cast %28 : vector<8xf32> to vector<8x1xf32>
    %30 = tpu.reciprocal %29 {approx = true} : vector<8x1xf32> -> vector<8x1xf32>
    %31 = vector.broadcast %30 : vector<8x1xf32> to vector<8x8xf32>
    %32 = arith.mulf %27, %31 : vector<8x8xf32>
    %cst_15 = arith.constant dense<0.000000e+00> : vector<8x32xf32>
    %33 = tpu.matmul %32, %18, %cst_15 {dimension_numbers = #tpu.dot_dimension_numbers<[1], [0], [0], [1], [0, 0, 1, 1], [], []>} : vector<8x8xf32>, vector<8x32xf32>, vector<8x32xf32> -> vector<8x32xf32>
    %34 = vector.extract_strided_slice %13 {offsets = [0, 32], sizes = [8, 32], strides = [1, 1]} : vector<8x128xf32> to vector<8x32xf32>
    %35 = vector.extract_strided_slice %14 {offsets = [0, 32], sizes = [8, 32], strides = [1, 1]} : vector<8x128xf32> to vector<8x32xf32>
    %36 = vector.extract_strided_slice %15 {offsets = [0, 32], sizes = [8, 32], strides = [1, 1]} : vector<8x128xf32> to vector<8x32xf32>
    %cst_16 = arith.constant dense<0.000000e+00> : vector<8x8xf32>
    %37 = tpu.matmul %34, %35, %cst_16 {dimension_numbers = #tpu.dot_dimension_numbers<[1], [1], [0], [0], [0, 0, 1, 0], [], []>} : vector<8x32xf32>, vector<8x32xf32>, vector<8x8xf32> -> vector<8x8xf32>
    %cst_17 = arith.constant 0.176776692 : f32
    %38 = vector.broadcast %cst_17 : f32 to vector<8x8xf32>
    %39 = arith.mulf %37, %38 : vector<8x8xf32>
    %40 = arith.addf %39, %12 : vector<8x8xf32>
    %cst_18 = arith.constant dense<0xFF800000> : vector<8xf32>
    %41 = vector.multi_reduction <maximumf>, %40, %cst_18 [1] : vector<8x8xf32> to vector<8xf32>
    %42 = vector.shape_cast %41 : vector<8xf32> to vector<8x1xf32>
    %43 = vector.broadcast %42 : vector<8x1xf32> to vector<8x8xf32>
    %44 = arith.subf %40, %43 : vector<8x8xf32>
    %45 = math.exp %44 : vector<8x8xf32>
    %cst_19 = arith.constant dense<0.000000e+00> : vector<8xf32>
    %46 = vector.multi_reduction <add>, %45, %cst_19 [1] : vector<8x8xf32> to vector<8xf32>
    %47 = vector.shape_cast %46 : vector<8xf32> to vector<8x1xf32>
    %48 = tpu.reciprocal %47 {approx = true} : vector<8x1xf32> -> vector<8x1xf32>
    %49 = vector.broadcast %48 : vector<8x1xf32> to vector<8x8xf32>
    %50 = arith.mulf %45, %49 : vector<8x8xf32>
    %cst_20 = arith.constant dense<0.000000e+00> : vector<8x32xf32>
    %51 = tpu.matmul %50, %36, %cst_20 {dimension_numbers = #tpu.dot_dimension_numbers<[1], [0], [0], [1], [0, 0, 1, 1], [], []>} : vector<8x8xf32>, vector<8x32xf32>, vector<8x32xf32> -> vector<8x32xf32>
    %52 = vector.extract_strided_slice %13 {offsets = [0, 64], sizes = [8, 32], strides = [1, 1]} : vector<8x128xf32> to vector<8x32xf32>
    %53 = vector.extract_strided_slice %14 {offsets = [0, 64], sizes = [8, 32], strides = [1, 1]} : vector<8x128xf32> to vector<8x32xf32>
    %54 = vector.extract_strided_slice %15 {offsets = [0, 64], sizes = [8, 32], strides = [1, 1]} : vector<8x128xf32> to vector<8x32xf32>
    %cst_21 = arith.constant dense<0.000000e+00> : vector<8x8xf32>
    %55 = tpu.matmul %52, %53, %cst_21 {dimension_numbers = #tpu.dot_dimension_numbers<[1], [1], [0], [0], [0, 0, 1, 0], [], []>} : vector<8x32xf32>, vector<8x32xf32>, vector<8x8xf32> -> vector<8x8xf32>
    %cst_22 = arith.constant 0.176776692 : f32
    %56 = vector.broadcast %cst_22 : f32 to vector<8x8xf32>
    %57 = arith.mulf %55, %56 : vector<8x8xf32>
    %58 = arith.addf %57, %12 : vector<8x8xf32>
    %cst_23 = arith.constant dense<0xFF800000> : vector<8xf32>
    %59 = vector.multi_reduction <maximumf>, %58, %cst_23 [1] : vector<8x8xf32> to vector<8xf32>
    %60 = vector.shape_cast %59 : vector<8xf32> to vector<8x1xf32>
    %61 = vector.broadcast %60 : vector<8x1xf32> to vector<8x8xf32>
    %62 = arith.subf %58, %61 : vector<8x8xf32>
    %63 = math.exp %62 : vector<8x8xf32>
    %cst_24 = arith.constant dense<0.000000e+00> : vector<8xf32>
    %64 = vector.multi_reduction <add>, %63, %cst_24 [1] : vector<8x8xf32> to vector<8xf32>
    %65 = vector.shape_cast %64 : vector<8xf32> to vector<8x1xf32>
    %66 = tpu.reciprocal %65 {approx = true} : vector<8x1xf32> -> vector<8x1xf32>
    %67 = vector.broadcast %66 : vector<8x1xf32> to vector<8x8xf32>
    %68 = arith.mulf %63, %67 : vector<8x8xf32>
    %cst_25 = arith.constant dense<0.000000e+00> : vector<8x32xf32>
    %69 = tpu.matmul %68, %54, %cst_25 {dimension_numbers = #tpu.dot_dimension_numbers<[1], [0], [0], [1], [0, 0, 1, 1], [], []>} : vector<8x8xf32>, vector<8x32xf32>, vector<8x32xf32> -> vector<8x32xf32>
    %70 = vector.extract_strided_slice %13 {offsets = [0, 96], sizes = [8, 32], strides = [1, 1]} : vector<8x128xf32> to vector<8x32xf32>
    %71 = vector.extract_strided_slice %14 {offsets = [0, 96], sizes = [8, 32], strides = [1, 1]} : vector<8x128xf32> to vector<8x32xf32>
    %72 = vector.extract_strided_slice %15 {offsets = [0, 96], sizes = [8, 32], strides = [1, 1]} : vector<8x128xf32> to vector<8x32xf32>
    %cst_26 = arith.constant dense<0.000000e+00> : vector<8x8xf32>
    %73 = tpu.matmul %70, %71, %cst_26 {dimension_numbers = #tpu.dot_dimension_numbers<[1], [1], [0], [0], [0, 0, 1, 0], [], []>} : vector<8x32xf32>, vector<8x32xf32>, vector<8x8xf32> -> vector<8x8xf32>
    %cst_27 = arith.constant 0.176776692 : f32
    %74 = vector.broadcast %cst_27 : f32 to vector<8x8xf32>
    %75 = arith.mulf %73, %74 : vector<8x8xf32>
    %76 = arith.addf %75, %12 : vector<8x8xf32>
    %cst_28 = arith.constant dense<0xFF800000> : vector<8xf32>
    %77 = vector.multi_reduction <maximumf>, %76, %cst_28 [1] : vector<8x8xf32> to vector<8xf32>
    %78 = vector.shape_cast %77 : vector<8xf32> to vector<8x1xf32>
    %79 = vector.broadcast %78 : vector<8x1xf32> to vector<8x8xf32>
    %80 = arith.subf %76, %79 : vector<8x8xf32>
    %81 = math.exp %80 : vector<8x8xf32>
    %cst_29 = arith.constant dense<0.000000e+00> : vector<8xf32>
    %82 = vector.multi_reduction <add>, %81, %cst_29 [1] : vector<8x8xf32> to vector<8xf32>
    %83 = vector.shape_cast %82 : vector<8xf32> to vector<8x1xf32>
    %84 = tpu.reciprocal %83 {approx = true} : vector<8x1xf32> -> vector<8x1xf32>
    %85 = vector.broadcast %84 : vector<8x1xf32> to vector<8x8xf32>
    %86 = arith.mulf %81, %85 : vector<8x8xf32>
    %cst_30 = arith.constant dense<0.000000e+00> : vector<8x32xf32>
    %87 = tpu.matmul %86, %72, %cst_30 {dimension_numbers = #tpu.dot_dimension_numbers<[1], [0], [0], [1], [0, 0, 1, 1], [], []>} : vector<8x8xf32>, vector<8x32xf32>, vector<8x32xf32> -> vector<8x32xf32>
    %88 = tpu.concatenate %33, %51, %69, %87 in 1 : vector<8x32xf32>, vector<8x32xf32>, vector<8x32xf32>, vector<8x32xf32> -> vector<8x128xf32>
    %89 = arith.truncf %88 : vector<8x128xf32> to vector<8x128xbf16>
    %c0_31 = arith.constant 0 : index
    %c0_32 = arith.constant 0 : index
    %90 = vector.load %arg7[%c0_31, %c0_32] : memref<128x128xbf16, #tpu.memory_space<vmem>>, vector<128x128xbf16>
    %cst_33 = arith.constant dense<0.000000e+00> : vector<8x128xf32>
    %91 = tpu.matmul %89, %90, %cst_33 {dimension_numbers = #tpu.dot_dimension_numbers<[1], [0], [0], [1], [0, 0, 1, 1], [], []>} : vector<8x128xbf16>, vector<128x128xbf16>, vector<8x128xf32> -> vector<8x128xf32>
    %c0_34 = arith.constant 0 : index
    %c0_35 = arith.constant 0 : index
    %92 = vector.load %arg8[%c0_34, %c0_35] : memref<1x128xf32, #tpu.memory_space<vmem>>, vector<1x128xf32>
    %93 = vector.broadcast %92 : vector<1x128xf32> to vector<8x128xf32>
    %94 = arith.addf %91, %93 : vector<8x128xf32>
    %95 = arith.addf %1, %94 : vector<8x128xf32>
    %c0_36 = arith.constant 0 : index
    %c0_37 = arith.constant 0 : index
    %96 = vector.load %arg9[%c0_36, %c0_37] : memref<1x128xf32, #tpu.memory_space<vmem>>, vector<1x128xf32>
    %c0_38 = arith.constant 0 : index
    %c0_39 = arith.constant 0 : index
    %97 = vector.load %arg10[%c0_38, %c0_39] : memref<1x128xf32, #tpu.memory_space<vmem>>, vector<1x128xf32>
    %cst_40 = arith.constant dense<0.000000e+00> : vector<8xf32>
    %98 = vector.multi_reduction <add>, %95, %cst_40 [1] : vector<8x128xf32> to vector<8xf32>
    %99 = vector.shape_cast %98 : vector<8xf32> to vector<8x1xf32>
    %cst_41 = arith.constant 1.280000e+02 : f32
    %100 = vector.broadcast %cst_41 : f32 to vector<8x1xf32>
    %101 = arith.divf %99, %100 : vector<8x1xf32>
    %102 = vector.broadcast %101 : vector<8x1xf32> to vector<8x128xf32>
    %103 = arith.subf %95, %102 : vector<8x128xf32>
    %104 = arith.mulf %103, %103 : vector<8x128xf32>
    %cst_42 = arith.constant dense<0.000000e+00> : vector<8xf32>
    %105 = vector.multi_reduction <add>, %104, %cst_42 [1] : vector<8x128xf32> to vector<8xf32>
    %106 = vector.shape_cast %105 : vector<8xf32> to vector<8x1xf32>
    %cst_43 = arith.constant 1.280000e+02 : f32
    %107 = vector.broadcast %cst_43 : f32 to vector<8x1xf32>
    %108 = arith.divf %106, %107 : vector<8x1xf32>
    %cst_44 = arith.constant 9.99999974E-6 : f32
    %109 = vector.broadcast %cst_44 : f32 to vector<8x1xf32>
    %110 = arith.addf %108, %109 : vector<8x1xf32>
    %111 = math.rsqrt %110 : vector<8x1xf32>
    %112 = vector.broadcast %111 : vector<8x1xf32> to vector<8x128xf32>
    %113 = arith.mulf %103, %112 : vector<8x128xf32>
    %114 = vector.broadcast %96 : vector<1x128xf32> to vector<8x128xf32>
    %115 = arith.mulf %113, %114 : vector<8x128xf32>
    %116 = vector.broadcast %97 : vector<1x128xf32> to vector<8x128xf32>
    %117 = arith.addf %115, %116 : vector<8x128xf32>
    %c0_45 = arith.constant 0 : index
    %c0_46 = arith.constant 0 : index
    %c0_47 = arith.constant 0 : index
    %118 = vector.load %arg2[%c0_45, %c0_46, %c0_47] : memref<1x12x128xf32, #tpu.memory_space<vmem>>, vector<1x12x128xf32>
    %119 = vector.shape_cast %118 : vector<1x12x128xf32> to vector<12x128xf32>
    %120 = arith.truncf %117 : vector<8x128xf32> to vector<8x128xbf16>
    %c0_48 = arith.constant 0 : index
    %c0_49 = arith.constant 0 : index
    %121 = vector.load %arg11[%c0_48, %c0_49] : memref<128x128xbf16, #tpu.memory_space<vmem>>, vector<128x128xbf16>
    %cst_50 = arith.constant dense<0.000000e+00> : vector<8x128xf32>
    %122 = tpu.matmul %120, %121, %cst_50 {dimension_numbers = #tpu.dot_dimension_numbers<[1], [0], [0], [1], [0, 0, 1, 1], [], []>} : vector<8x128xbf16>, vector<128x128xbf16>, vector<8x128xf32> -> vector<8x128xf32>
    %c0_51 = arith.constant 0 : index
    %c0_52 = arith.constant 0 : index
    %123 = vector.load %arg12[%c0_51, %c0_52] : memref<1x128xf32, #tpu.memory_space<vmem>>, vector<1x128xf32>
    %124 = vector.broadcast %123 : vector<1x128xf32> to vector<8x128xf32>
    %125 = arith.addf %122, %124 : vector<8x128xf32>
    %126 = arith.truncf %119 : vector<12x128xf32> to vector<12x128xbf16>
    %c0_53 = arith.constant 0 : index
    %c0_54 = arith.constant 0 : index
    %127 = vector.load %arg13[%c0_53, %c0_54] : memref<128x256xbf16, #tpu.memory_space<vmem>>, vector<128x256xbf16>
    %cst_55 = arith.constant dense<0.000000e+00> : vector<12x256xf32>
    %128 = tpu.matmul %126, %127, %cst_55 {dimension_numbers = #tpu.dot_dimension_numbers<[1], [0], [0], [1], [0, 0, 1, 1], [], []>} : vector<12x128xbf16>, vector<128x256xbf16>, vector<12x256xf32> -> vector<12x256xf32>
    %c0_56 = arith.constant 0 : index
    %c0_57 = arith.constant 0 : index
    %129 = vector.load %arg14[%c0_56, %c0_57] : memref<1x256xf32, #tpu.memory_space<vmem>>, vector<1x256xf32>
    %130 = vector.broadcast %129 : vector<1x256xf32> to vector<12x256xf32>
    %131 = arith.addf %128, %130 : vector<12x256xf32>
    %132 = vector.extract_strided_slice %131 {offsets = [0, 0], sizes = [12, 128], strides = [1, 1]} : vector<12x256xf32> to vector<12x128xf32>
    %133 = vector.extract_strided_slice %131 {offsets = [0, 128], sizes = [12, 128], strides = [1, 1]} : vector<12x256xf32> to vector<12x128xf32>
    %134 = vector.extract_strided_slice %125 {offsets = [0, 0], sizes = [8, 32], strides = [1, 1]} : vector<8x128xf32> to vector<8x32xf32>
    %135 = vector.extract_strided_slice %132 {offsets = [0, 0], sizes = [12, 32], strides = [1, 1]} : vector<12x128xf32> to vector<12x32xf32>
    %136 = vector.extract_strided_slice %133 {offsets = [0, 0], sizes = [12, 32], strides = [1, 1]} : vector<12x128xf32> to vector<12x32xf32>
    %cst_58 = arith.constant dense<0.000000e+00> : vector<8x12xf32>
    %137 = tpu.matmul %134, %135, %cst_58 {dimension_numbers = #tpu.dot_dimension_numbers<[1], [1], [0], [0], [0, 0, 1, 0], [], []>} : vector<8x32xf32>, vector<12x32xf32>, vector<8x12xf32> -> vector<8x12xf32>
    %cst_59 = arith.constant 0.176776692 : f32
    %138 = vector.broadcast %cst_59 : f32 to vector<8x12xf32>
    %139 = arith.mulf %137, %138 : vector<8x12xf32>
    %cst_60 = arith.constant dense<0xFF800000> : vector<8xf32>
    %140 = vector.multi_reduction <maximumf>, %139, %cst_60 [1] : vector<8x12xf32> to vector<8xf32>
    %141 = vector.shape_cast %140 : vector<8xf32> to vector<8x1xf32>
    %142 = vector.broadcast %141 : vector<8x1xf32> to vector<8x12xf32>
    %143 = arith.subf %139, %142 : vector<8x12xf32>
    %144 = math.exp %143 : vector<8x12xf32>
    %cst_61 = arith.constant dense<0.000000e+00> : vector<8xf32>
    %145 = vector.multi_reduction <add>, %144, %cst_61 [1] : vector<8x12xf32> to vector<8xf32>
    %146 = vector.shape_cast %145 : vector<8xf32> to vector<8x1xf32>
    %147 = tpu.reciprocal %146 {approx = true} : vector<8x1xf32> -> vector<8x1xf32>
    %148 = vector.broadcast %147 : vector<8x1xf32> to vector<8x12xf32>
    %149 = arith.mulf %144, %148 : vector<8x12xf32>
    %cst_62 = arith.constant dense<0.000000e+00> : vector<8x32xf32>
    %150 = tpu.matmul %149, %136, %cst_62 {dimension_numbers = #tpu.dot_dimension_numbers<[1], [0], [0], [1], [0, 0, 1, 1], [], []>} : vector<8x12xf32>, vector<12x32xf32>, vector<8x32xf32> -> vector<8x32xf32>
    %151 = vector.extract_strided_slice %125 {offsets = [0, 32], sizes = [8, 32], strides = [1, 1]} : vector<8x128xf32> to vector<8x32xf32>
    %152 = vector.extract_strided_slice %132 {offsets = [0, 32], sizes = [12, 32], strides = [1, 1]} : vector<12x128xf32> to vector<12x32xf32>
    %153 = vector.extract_strided_slice %133 {offsets = [0, 32], sizes = [12, 32], strides = [1, 1]} : vector<12x128xf32> to vector<12x32xf32>
    %cst_63 = arith.constant dense<0.000000e+00> : vector<8x12xf32>
    %154 = tpu.matmul %151, %152, %cst_63 {dimension_numbers = #tpu.dot_dimension_numbers<[1], [1], [0], [0], [0, 0, 1, 0], [], []>} : vector<8x32xf32>, vector<12x32xf32>, vector<8x12xf32> -> vector<8x12xf32>
    %cst_64 = arith.constant 0.176776692 : f32
    %155 = vector.broadcast %cst_64 : f32 to vector<8x12xf32>
    %156 = arith.mulf %154, %155 : vector<8x12xf32>
    %cst_65 = arith.constant dense<0xFF800000> : vector<8xf32>
    %157 = vector.multi_reduction <maximumf>, %156, %cst_65 [1] : vector<8x12xf32> to vector<8xf32>
    %158 = vector.shape_cast %157 : vector<8xf32> to vector<8x1xf32>
    %159 = vector.broadcast %158 : vector<8x1xf32> to vector<8x12xf32>
    %160 = arith.subf %156, %159 : vector<8x12xf32>
    %161 = math.exp %160 : vector<8x12xf32>
    %cst_66 = arith.constant dense<0.000000e+00> : vector<8xf32>
    %162 = vector.multi_reduction <add>, %161, %cst_66 [1] : vector<8x12xf32> to vector<8xf32>
    %163 = vector.shape_cast %162 : vector<8xf32> to vector<8x1xf32>
    %164 = tpu.reciprocal %163 {approx = true} : vector<8x1xf32> -> vector<8x1xf32>
    %165 = vector.broadcast %164 : vector<8x1xf32> to vector<8x12xf32>
    %166 = arith.mulf %161, %165 : vector<8x12xf32>
    %cst_67 = arith.constant dense<0.000000e+00> : vector<8x32xf32>
    %167 = tpu.matmul %166, %153, %cst_67 {dimension_numbers = #tpu.dot_dimension_numbers<[1], [0], [0], [1], [0, 0, 1, 1], [], []>} : vector<8x12xf32>, vector<12x32xf32>, vector<8x32xf32> -> vector<8x32xf32>
    %168 = vector.extract_strided_slice %125 {offsets = [0, 64], sizes = [8, 32], strides = [1, 1]} : vector<8x128xf32> to vector<8x32xf32>
    %169 = vector.extract_strided_slice %132 {offsets = [0, 64], sizes = [12, 32], strides = [1, 1]} : vector<12x128xf32> to vector<12x32xf32>
    %170 = vector.extract_strided_slice %133 {offsets = [0, 64], sizes = [12, 32], strides = [1, 1]} : vector<12x128xf32> to vector<12x32xf32>
    %cst_68 = arith.constant dense<0.000000e+00> : vector<8x12xf32>
    %171 = tpu.matmul %168, %169, %cst_68 {dimension_numbers = #tpu.dot_dimension_numbers<[1], [1], [0], [0], [0, 0, 1, 0], [], []>} : vector<8x32xf32>, vector<12x32xf32>, vector<8x12xf32> -> vector<8x12xf32>
    %cst_69 = arith.constant 0.176776692 : f32
    %172 = vector.broadcast %cst_69 : f32 to vector<8x12xf32>
    %173 = arith.mulf %171, %172 : vector<8x12xf32>
    %cst_70 = arith.constant dense<0xFF800000> : vector<8xf32>
    %174 = vector.multi_reduction <maximumf>, %173, %cst_70 [1] : vector<8x12xf32> to vector<8xf32>
    %175 = vector.shape_cast %174 : vector<8xf32> to vector<8x1xf32>
    %176 = vector.broadcast %175 : vector<8x1xf32> to vector<8x12xf32>
    %177 = arith.subf %173, %176 : vector<8x12xf32>
    %178 = math.exp %177 : vector<8x12xf32>
    %cst_71 = arith.constant dense<0.000000e+00> : vector<8xf32>
    %179 = vector.multi_reduction <add>, %178, %cst_71 [1] : vector<8x12xf32> to vector<8xf32>
    %180 = vector.shape_cast %179 : vector<8xf32> to vector<8x1xf32>
    %181 = tpu.reciprocal %180 {approx = true} : vector<8x1xf32> -> vector<8x1xf32>
    %182 = vector.broadcast %181 : vector<8x1xf32> to vector<8x12xf32>
    %183 = arith.mulf %178, %182 : vector<8x12xf32>
    %cst_72 = arith.constant dense<0.000000e+00> : vector<8x32xf32>
    %184 = tpu.matmul %183, %170, %cst_72 {dimension_numbers = #tpu.dot_dimension_numbers<[1], [0], [0], [1], [0, 0, 1, 1], [], []>} : vector<8x12xf32>, vector<12x32xf32>, vector<8x32xf32> -> vector<8x32xf32>
    %185 = vector.extract_strided_slice %125 {offsets = [0, 96], sizes = [8, 32], strides = [1, 1]} : vector<8x128xf32> to vector<8x32xf32>
    %186 = vector.extract_strided_slice %132 {offsets = [0, 96], sizes = [12, 32], strides = [1, 1]} : vector<12x128xf32> to vector<12x32xf32>
    %187 = vector.extract_strided_slice %133 {offsets = [0, 96], sizes = [12, 32], strides = [1, 1]} : vector<12x128xf32> to vector<12x32xf32>
    %cst_73 = arith.constant dense<0.000000e+00> : vector<8x12xf32>
    %188 = tpu.matmul %185, %186, %cst_73 {dimension_numbers = #tpu.dot_dimension_numbers<[1], [1], [0], [0], [0, 0, 1, 0], [], []>} : vector<8x32xf32>, vector<12x32xf32>, vector<8x12xf32> -> vector<8x12xf32>
    %cst_74 = arith.constant 0.176776692 : f32
    %189 = vector.broadcast %cst_74 : f32 to vector<8x12xf32>
    %190 = arith.mulf %188, %189 : vector<8x12xf32>
    %cst_75 = arith.constant dense<0xFF800000> : vector<8xf32>
    %191 = vector.multi_reduction <maximumf>, %190, %cst_75 [1] : vector<8x12xf32> to vector<8xf32>
    %192 = vector.shape_cast %191 : vector<8xf32> to vector<8x1xf32>
    %193 = vector.broadcast %192 : vector<8x1xf32> to vector<8x12xf32>
    %194 = arith.subf %190, %193 : vector<8x12xf32>
    %195 = math.exp %194 : vector<8x12xf32>
    %cst_76 = arith.constant dense<0.000000e+00> : vector<8xf32>
    %196 = vector.multi_reduction <add>, %195, %cst_76 [1] : vector<8x12xf32> to vector<8xf32>
    %197 = vector.shape_cast %196 : vector<8xf32> to vector<8x1xf32>
    %198 = tpu.reciprocal %197 {approx = true} : vector<8x1xf32> -> vector<8x1xf32>
    %199 = vector.broadcast %198 : vector<8x1xf32> to vector<8x12xf32>
    %200 = arith.mulf %195, %199 : vector<8x12xf32>
    %cst_77 = arith.constant dense<0.000000e+00> : vector<8x32xf32>
    %201 = tpu.matmul %200, %187, %cst_77 {dimension_numbers = #tpu.dot_dimension_numbers<[1], [0], [0], [1], [0, 0, 1, 1], [], []>} : vector<8x12xf32>, vector<12x32xf32>, vector<8x32xf32> -> vector<8x32xf32>
    %202 = tpu.concatenate %150, %167, %184, %201 in 1 : vector<8x32xf32>, vector<8x32xf32>, vector<8x32xf32>, vector<8x32xf32> -> vector<8x128xf32>
    %203 = arith.truncf %202 : vector<8x128xf32> to vector<8x128xbf16>
    %c0_78 = arith.constant 0 : index
    %c0_79 = arith.constant 0 : index
    %204 = vector.load %arg15[%c0_78, %c0_79] : memref<128x128xbf16, #tpu.memory_space<vmem>>, vector<128x128xbf16>
    %cst_80 = arith.constant dense<0.000000e+00> : vector<8x128xf32>
    %205 = tpu.matmul %203, %204, %cst_80 {dimension_numbers = #tpu.dot_dimension_numbers<[1], [0], [0], [1], [0, 0, 1, 1], [], []>} : vector<8x128xbf16>, vector<128x128xbf16>, vector<8x128xf32> -> vector<8x128xf32>
    %c0_81 = arith.constant 0 : index
    %c0_82 = arith.constant 0 : index
    %206 = vector.load %arg16[%c0_81, %c0_82] : memref<1x128xf32, #tpu.memory_space<vmem>>, vector<1x128xf32>
    %207 = vector.broadcast %206 : vector<1x128xf32> to vector<8x128xf32>
    %208 = arith.addf %205, %207 : vector<8x128xf32>
    %209 = arith.addf %117, %208 : vector<8x128xf32>
    %c0_83 = arith.constant 0 : index
    %c0_84 = arith.constant 0 : index
    %210 = vector.load %arg17[%c0_83, %c0_84] : memref<1x128xf32, #tpu.memory_space<vmem>>, vector<1x128xf32>
    %c0_85 = arith.constant 0 : index
    %c0_86 = arith.constant 0 : index
    %211 = vector.load %arg18[%c0_85, %c0_86] : memref<1x128xf32, #tpu.memory_space<vmem>>, vector<1x128xf32>
    %cst_87 = arith.constant dense<0.000000e+00> : vector<8xf32>
    %212 = vector.multi_reduction <add>, %209, %cst_87 [1] : vector<8x128xf32> to vector<8xf32>
    %213 = vector.shape_cast %212 : vector<8xf32> to vector<8x1xf32>
    %cst_88 = arith.constant 1.280000e+02 : f32
    %214 = vector.broadcast %cst_88 : f32 to vector<8x1xf32>
    %215 = arith.divf %213, %214 : vector<8x1xf32>
    %216 = vector.broadcast %215 : vector<8x1xf32> to vector<8x128xf32>
    %217 = arith.subf %209, %216 : vector<8x128xf32>
    %218 = arith.mulf %217, %217 : vector<8x128xf32>
    %cst_89 = arith.constant dense<0.000000e+00> : vector<8xf32>
    %219 = vector.multi_reduction <add>, %218, %cst_89 [1] : vector<8x128xf32> to vector<8xf32>
    %220 = vector.shape_cast %219 : vector<8xf32> to vector<8x1xf32>
    %cst_90 = arith.constant 1.280000e+02 : f32
    %221 = vector.broadcast %cst_90 : f32 to vector<8x1xf32>
    %222 = arith.divf %220, %221 : vector<8x1xf32>
    %cst_91 = arith.constant 9.99999974E-6 : f32
    %223 = vector.broadcast %cst_91 : f32 to vector<8x1xf32>
    %224 = arith.addf %222, %223 : vector<8x1xf32>
    %225 = math.rsqrt %224 : vector<8x1xf32>
    %226 = vector.broadcast %225 : vector<8x1xf32> to vector<8x128xf32>
    %227 = arith.mulf %217, %226 : vector<8x128xf32>
    %228 = vector.broadcast %210 : vector<1x128xf32> to vector<8x128xf32>
    %229 = arith.mulf %227, %228 : vector<8x128xf32>
    %230 = vector.broadcast %211 : vector<1x128xf32> to vector<8x128xf32>
    %231 = arith.addf %229, %230 : vector<8x128xf32>
    %232 = arith.truncf %231 : vector<8x128xf32> to vector<8x128xbf16>
    %c0_92 = arith.constant 0 : index
    %c0_93 = arith.constant 0 : index
    %233 = vector.load %arg19[%c0_92, %c0_93] : memref<128x128xbf16, #tpu.memory_space<vmem>>, vector<128x128xbf16>
    %cst_94 = arith.constant dense<0.000000e+00> : vector<8x128xf32>
    %234 = tpu.matmul %232, %233, %cst_94 {dimension_numbers = #tpu.dot_dimension_numbers<[1], [0], [0], [1], [0, 0, 1, 1], [], []>} : vector<8x128xbf16>, vector<128x128xbf16>, vector<8x128xf32> -> vector<8x128xf32>
    %c0_95 = arith.constant 0 : index
    %c0_96 = arith.constant 0 : index
    %235 = vector.load %arg20[%c0_95, %c0_96] : memref<1x128xf32, #tpu.memory_space<vmem>>, vector<1x128xf32>
    %236 = vector.broadcast %235 : vector<1x128xf32> to vector<8x128xf32>
    %237 = arith.addf %234, %236 : vector<8x128xf32>
    %cst_97 = arith.constant 0.000000e+00 : f32
    %238 = vector.broadcast %cst_97 : f32 to vector<8x128xf32>
    %239 = arith.maximumf %237, %238 : vector<8x128xf32>
    %240 = arith.truncf %239 : vector<8x128xf32> to vector<8x128xbf16>
    %c0_98 = arith.constant 0 : index
    %c0_99 = arith.constant 0 : index
    %241 = vector.load %arg21[%c0_98, %c0_99] : memref<128x128xbf16, #tpu.memory_space<vmem>>, vector<128x128xbf16>
    %cst_100 = arith.constant dense<0.000000e+00> : vector<8x128xf32>
    %242 = tpu.matmul %240, %241, %cst_100 {dimension_numbers = #tpu.dot_dimension_numbers<[1], [0], [0], [1], [0, 0, 1, 1], [], []>} : vector<8x128xbf16>, vector<128x128xbf16>, vector<8x128xf32> -> vector<8x128xf32>
    %c0_101 = arith.constant 0 : index
    %c0_102 = arith.constant 0 : index
    %243 = vector.load %arg22[%c0_101, %c0_102] : memref<1x128xf32, #tpu.memory_space<vmem>>, vector<1x128xf32>
    %244 = vector.broadcast %243 : vector<1x128xf32> to vector<8x128xf32>
    %245 = arith.addf %242, %244 : vector<8x128xf32>
    %246 = arith.addf %231, %245 : vector<8x128xf32>
    %c0_103 = arith.constant 0 : index
    %c0_104 = arith.constant 0 : index
    %247 = vector.load %arg23[%c0_103, %c0_104] : memref<1x128xf32, #tpu.memory_space<vmem>>, vector<1x128xf32>
    %c0_105 = arith.constant 0 : index
    %c0_106 = arith.constant 0 : index
    %248 = vector.load %arg24[%c0_105, %c0_106] : memref<1x128xf32, #tpu.memory_space<vmem>>, vector<1x128xf32>
    %cst_107 = arith.constant dense<0.000000e+00> : vector<8xf32>
    %249 = vector.multi_reduction <add>, %246, %cst_107 [1] : vector<8x128xf32> to vector<8xf32>
    %250 = vector.shape_cast %249 : vector<8xf32> to vector<8x1xf32>
    %cst_108 = arith.constant 1.280000e+02 : f32
    %251 = vector.broadcast %cst_108 : f32 to vector<8x1xf32>
    %252 = arith.divf %250, %251 : vector<8x1xf32>
    %253 = vector.broadcast %252 : vector<8x1xf32> to vector<8x128xf32>
    %254 = arith.subf %246, %253 : vector<8x128xf32>
    %255 = arith.mulf %254, %254 : vector<8x128xf32>
    %cst_109 = arith.constant dense<0.000000e+00> : vector<8xf32>
    %256 = vector.multi_reduction <add>, %255, %cst_109 [1] : vector<8x128xf32> to vector<8xf32>
    %257 = vector.shape_cast %256 : vector<8xf32> to vector<8x1xf32>
    %cst_110 = arith.constant 1.280000e+02 : f32
    %258 = vector.broadcast %cst_110 : f32 to vector<8x1xf32>
    %259 = arith.divf %257, %258 : vector<8x1xf32>
    %cst_111 = arith.constant 9.99999974E-6 : f32
    %260 = vector.broadcast %cst_111 : f32 to vector<8x1xf32>
    %261 = arith.addf %259, %260 : vector<8x1xf32>
    %262 = math.rsqrt %261 : vector<8x1xf32>
    %263 = vector.broadcast %262 : vector<8x1xf32> to vector<8x128xf32>
    %264 = arith.mulf %254, %263 : vector<8x128xf32>
    %265 = vector.broadcast %247 : vector<1x128xf32> to vector<8x128xf32>
    %266 = arith.mulf %264, %265 : vector<8x128xf32>
    %267 = vector.broadcast %248 : vector<1x128xf32> to vector<8x128xf32>
    %268 = arith.addf %266, %267 : vector<8x128xf32>
    %c0_112 = arith.constant 0 : index
    %c0_113 = arith.constant 0 : index
    %c0_114 = arith.constant 0 : index
    %269 = vector.load %arg25[%c0_112, %c0_113, %c0_114] : memref<1x8x128xf32, #tpu.memory_space<vmem>>, vector<1x8x128xf32>
    %270 = vector.shape_cast %269 : vector<1x8x128xf32> to vector<8x128xf32>
    %271 = vector.shape_cast %268 : vector<8x128xf32> to vector<1x8x128xf32>
    tpu.vector_store %arg25[%c0_112, %c0_113, %c0_114], %271 {strides = array<i32>} : memref<1x8x128xf32, #tpu.memory_space<vmem>>, vector<1x8x128xf32>,
    return
  }
  func.func @transform_0(%arg0: i32) -> (i32, i32, i32) {
    %c0_i32 = arith.constant 0 : i32
    %c0_i32_0 = arith.constant 0 : i32
    %c0_i32_1 = arith.constant 0 : i32
    return %arg0, %c0_i32, %c0_i32_0 : i32, i32, i32
  }
  func.func @transform_1(%arg0: i32) -> (i32, i32, i32) {
    %c0_i32 = arith.constant 0 : i32
    %c0_i32_0 = arith.constant 0 : i32
    %c0_i32_1 = arith.constant 0 : i32
    return %arg0, %c0_i32, %c0_i32_0 : i32, i32, i32
  }
  func.func @transform_2(%arg0: i32) -> (i32, i32) {
    %c0_i32 = arith.constant 0 : i32
    %c0_i32_0 = arith.constant 0 : i32
    %c0_i32_1 = arith.constant 0 : i32
    return %c0_i32, %c0_i32_0 : i32, i32
  }
  func.func @transform_3(%arg0: i32) -> (i32, i32, i32) {
    %c0_i32 = arith.constant 0 : i32
    %c0_i32_0 = arith.constant 0 : i32
    %c0_i32_1 = arith.constant 0 : i32
    return %arg0, %c0_i32, %c0_i32_0 : i32, i32, i32
  }
  func.func @transform_4(%arg0: i32) -> (i32, i32) {
    %c0_i32 = arith.constant 0 : i32
    %c0_i32_0 = arith.constant 0 : i32
    %c0_i32_1 = arith.constant 0 : i32
    return %c0_i32, %c0_i32_0 : i32, i32
  }
  func.func @transform_5(%arg0: i32) -> (i32, i32) {
    %c0_i32 = arith.constant 0 : i32
    %c0_i32_0 = arith.constant 0 : i32
    %c0_i32_1 = arith.constant 0 : i32
    return %c0_i32, %c0_i32_0 : i32, i32
  }
  func.func @transform_6(%arg0: i32) -> (i32, i32) {
    %c0_i32 = arith.constant 0 : i32
    %c0_i32_0 = arith.constant 0 : i32
    %c0_i32_1 = arith.constant 0 : i32
    return %c0_i32, %c0_i32_0 : i32, i32
  }
  func.func @transform_7(%arg0: i32) -> (i32, i32) {
    %c0_i32 = arith.constant 0 : i32
    %c0_i32_0 = arith.constant 0 : i32
    %c0_i32_1 = arith.constant 0 : i32
    return %c0_i32, %c0_i32_0 : i32, i32
  }
  func.func @transform_8(%arg0: i32) -> (i32, i32) {
    %c0_i32 = arith.constant 0 : i32
    %c0_i32_0 = arith.constant 0 : i32
    %c0_i32_1 = arith.constant 0 : i32
    return %c0_i32, %c0_i32_0 : i32, i32
  }
  func.func @transform_9(%arg0: i32) -> (i32, i32) {
    %c0_i32 = arith.constant 0 : i32
    %c0_i32_0 = arith.constant 0 : i32
    %c0_i32_1 = arith.constant 0 : i32
    return %c0_i32, %c0_i32_0 : i32, i32
  }
  func.func @transform_10(%arg0: i32) -> (i32, i32) {
    %c0_i32 = arith.constant 0 : i32
    %c0_i32_0 = arith.constant 0 : i32
    %c0_i32_1 = arith.constant 0 : i32
    return %c0_i32, %c0_i32_0 : i32, i32
  }
  func.func @transform_11(%arg0: i32) -> (i32, i32) {
    %c0_i32 = arith.constant 0 : i32
    %c0_i32_0 = arith.constant 0 : i32
    %c0_i32_1 = arith.constant 0 : i32
    return %c0_i32, %c0_i32_0 : i32, i32
  }
  func.func @transform_12(%arg0: i32) -> (i32, i32) {
    %c0_i32 = arith.constant 0 : i32
    %c0_i32_0 = arith.constant 0 : i32
    %c0_i32_1 = arith.constant 0 : i32
    return %c0_i32, %c0_i32_0 : i32, i32
  }
  func.func @transform_13(%arg0: i32) -> (i32, i32) {
    %c0_i32 = arith.constant 0 : i32
    %c0_i32_0 = arith.constant 0 : i32
    %c0_i32_1 = arith.constant 0 : i32
    return %c0_i32, %c0_i32_0 : i32, i32
  }
  func.func @transform_14(%arg0: i32) -> (i32, i32) {
    %c0_i32 = arith.constant 0 : i32
    %c0_i32_0 = arith.constant 0 : i32
    %c0_i32_1 = arith.constant 0 : i32
    return %c0_i32, %c0_i32_0 : i32, i32
  }
  func.func @transform_15(%arg0: i32) -> (i32, i32) {
    %c0_i32 = arith.constant 0 : i32
    %c0_i32_0 = arith.constant 0 : i32
    %c0_i32_1 = arith.constant 0 : i32
    return %c0_i32, %c0_i32_0 : i32, i32
  }
  func.func @transform_16(%arg0: i32) -> (i32, i32) {
    %c0_i32 = arith.constant 0 : i32
    %c0_i32_0 = arith.constant 0 : i32
    %c0_i32_1 = arith.constant 0 : i32
    return %c0_i32, %c0_i32_0 : i32, i32
  }
  func.func @transform_17(%arg0: i32) -> (i32, i32) {
    %c0_i32 = arith.constant 0 : i32
    %c0_i32_0 = arith.constant 0 : i32
    %c0_i32_1 = arith.constant 0 : i32
    return %c0_i32, %c0_i32_0 : i32, i32
  }
  func.func @transform_18(%arg0: i32) -> (i32, i32) {
    %c0_i32 = arith.constant 0 : i32
    %c0_i32_0 = arith.constant 0 : i32
    %c0_i32_1 = arith.constant 0 : i32
    return %c0_i32, %c0_i32_0 : i32, i32
  }
  func.func @transform_19(%arg0: i32) -> (i32, i32) {
    %c0_i32 = arith.constant 0 : i32
    %c0_i32_0 = arith.constant 0 : i32
    %c0_i32_1 = arith.constant 0 : i32
    return %c0_i32, %c0_i32_0 : i32, i32
  }
  func.func @transform_20(%arg0: i32) -> (i32, i32) {
    %c0_i32 = arith.constant 0 : i32
    %c0_i32_0 = arith.constant 0 : i32
    %c0_i32_1 = arith.constant 0 : i32
    return %c0_i32, %c0_i32_0 : i32, i32
  }
  func.func @transform_21(%arg0: i32) -> (i32, i32) {
    %c0_i32 = arith.constant 0 : i32
    %c0_i32_0 = arith.constant 0 : i32
    %c0_i32_1 = arith.constant 0 : i32
    return %c0_i32, %c0_i32_0 : i32, i32
  }
  func.func @transform_22(%arg0: i32) -> (i32, i32) {
    %c0_i32 = arith.constant 0 : i32
    %c0_i32_0 = arith.constant 0 : i32
    %c0_i32_1 = arith.constant 0 : i32
    return %c0_i32, %c0_i32_0 : i32, i32
  }
  func.func @transform_23(%arg0: i32) -> (i32, i32) {
    %c0_i32 = arith.constant 0 : i32
    %c0_i32_0 = arith.constant 0 : i32
    %c0_i32_1 = arith.constant 0 : i32
    return %c0_i32, %c0_i32_0 : i32, i32
  }
  func.func @transform_24(%arg0: i32) -> (i32, i32, i32) {
    %c0_i32 = arith.constant 0 : i32
    %c0_i32_0 = arith.constant 0 : i32
    %c0_i32_1 = arith.constant 0 : i32
    return %arg0, %c0_i32, %c0_i32_0 : i32, i32, i32
  }
}

module attributes {stable_mosaic.version = 11 : i64} {
  func.func @_decoder_layer_kernel(%arg0: i32, %arg1: memref<1x8x128xf32, #tpu.memory_space<vmem>>, %arg2: memref<1x12x128xf32, #tpu.memory_space<vmem>>, %arg3: memref<8x8xf32, #tpu.memory_space<vmem>>, %arg4: memref<1x1x8xf32, #tpu.memory_space<vmem>>, %arg5: memref<128x384xbf16, #tpu.memory_space<vmem>>, %arg6: memref<1x384xf32, #tpu.memory_space<vmem>>, %arg7: memref<128x128xbf16, #tpu.memory_space<vmem>>, %arg8: memref<1x128xf32, #tpu.memory_space<vmem>>, %arg9: memref<1x128xf32, #tpu.memory_space<vmem>>, %arg10: memref<1x128xf32, #tpu.memory_space<vmem>>, %arg11: memref<128x128xbf16, #tpu.memory_space<vmem>>, %arg12: memref<1x128xf32, #tpu.memory_space<vmem>>, %arg13: memref<128x256xbf16, #tpu.memory_space<vmem>>, %arg14: memref<1x256xf32, #tpu.memory_space<vmem>>, %arg15: memref<128x128xbf16, #tpu.memory_space<vmem>>, %arg16: memref<1x128xf32, #tpu.memory_space<vmem>>, %arg17: memref<1x128xf32, #tpu.memory_space<vmem>>, %arg18: memref<1x128xf32, #tpu.memory_space<vmem>>, %arg19: memref<128x128xbf16, #tpu.memory_space<vmem>>, %arg20: memref<1x128xf32, #tpu.memory_space<vmem>>, %arg21: memref<128x128xbf16, #tpu.memory_space<vmem>>, %arg22: memref<1x128xf32, #tpu.memory_space<vmem>>, %arg23: memref<1x128xf32, #tpu.memory_space<vmem>>, %arg24: memref<1x128xf32, #tpu.memory_space<vmem>>, %arg25: memref<1x8x128xf32, #tpu.memory_space<vmem>>) attributes {dimension_semantics = [#tpu.dimension_semantics<parallel>], iteration_bounds = array<i64: 2>, scalar_prefetch = 0 : i64, scratch_operands = 0 : i64, tpu.core_type = #tpu.core_type<tc>, window_params = [{transform_indices = @transform_0, window_bounds = array<i64: 1, 8, 128>}, {transform_indices = @transform_1, window_bounds = array<i64: 1, 12, 128>}, {pipeline_mode = #tpu.pipeline_mode<synchronous>, transform_indices = @transform_2, window_bounds = array<i64: 8, 8>}, {transform_indices = @transform_3, window_bounds = array<i64: 1, 1, 8>}, {pipeline_mode = #tpu.pipeline_mode<synchronous>, transform_indices = @transform_4, window_bounds = array<i64: 128, 384>}, {pipeline_mode = #tpu.pipeline_mode<synchronous>, transform_indices = @transform_5, window_bounds = array<i64: 1, 384>}, {pipeline_mode = #tpu.pipeline_mode<synchronous>, transform_indices = @transform_6, window_bounds = array<i64: 128, 128>}, {pipeline_mode = #tpu.pipeline_mode<synchronous>, transform_indices = @transform_7, window_bounds = array<i64: 1, 128>}, {pipeline_mode = #tpu.pipeline_mode<synchronous>, transform_indices = @transform_8, window_bounds = array<i64: 1, 128>}, {pipeline_mode = #tpu.pipeline_mode<synchronous>, transform_indices = @transform_9, window_bounds = array<i64: 1, 128>}, {pipeline_mode = #tpu.pipeline_mode<synchronous>, transform_indices = @transform_10, window_bounds = array<i64: 128, 128>}, {pipeline_mode = #tpu.pipeline_mode<synchronous>, transform_indices = @transform_11, window_bounds = array<i64: 1, 128>}, {pipeline_mode = #tpu.pipeline_mode<synchronous>, transform_indices = @transform_12, window_bounds = array<i64: 128, 256>}, {pipeline_mode = #tpu.pipeline_mode<synchronous>, transform_indices = @transform_13, window_bounds = array<i64: 1, 256>}, {pipeline_mode = #tpu.pipeline_mode<synchronous>, transform_indices = @transform_14, window_bounds = array<i64: 128, 128>}, {pipeline_mode = #tpu.pipeline_mode<synchronous>, transform_indices = @transform_15, window_bounds = array<i64: 1, 128>}, {pipeline_mode = #tpu.pipeline_mode<synchronous>, transform_indices = @transform_16, window_bounds = array<i64: 1, 128>}, {pipeline_mode = #tpu.pipeline_mode<synchronous>, transform_indices = @transform_17, window_bounds = array<i64: 1, 128>}, {pipeline_mode = #tpu.pipeline_mode<synchronous>, transform_indices = @transform_18, window_bounds = array<i64: 128, 128>}, {pipeline_mode = #tpu.pipeline_mode<synchronous>, transform_indices = @transform_19, window_bounds = array<i64: 1, 128>}, {pipeline_mode = #tpu.pipeline_mode<synchronous>, transform_indices = @transform_20, window_bounds = array<i64: 128, 128>}, {pipeline_mode = #tpu.pipeline_mode<synchronous>, transform_indices = @transform_21, window_bounds = array<i64: 1, 128>}, {pipeline_mode = #tpu.pipeline_mode<synchronous>, transform_indices = @transform_22, window_bounds = array<i64: 1, 128>}, {pipeline_mode = #tpu.pipeline_mode<synchronous>, transform_indices = @transform_23, window_bounds = array<i64: 1, 128>}, {transform_indices = @transform_24, window_bounds = array<i64: 1, 8, 128>}]} {
    %c0 = arith.constant 0 : index
    %c0_0 = arith.constant 0 : index
    %c0_1 = arith.constant 0 : index
    %0 = vector.load %arg1[%c0, %c0_0, %c0_1] : memref<1x8x128xf32, #tpu.memory_space<vmem>>, vector<1x8x128xf32>
    %1 = vector.shape_cast %0 : vector<1x8x128xf32> to vector<8x128xf32>
    %2 = arith.truncf %1 : vector<8x128xf32> to vector<8x128xbf16>
    %c0_2 = arith.constant 0 : index
    %c0_3 = arith.constant 0 : index
    %3 = vector.load %arg5[%c0_2, %c0_3] : memref<128x384xbf16, #tpu.memory_space<vmem>>, vector<128x384xbf16>
    %cst = arith.constant dense<0.000000e+00> : vector<8x384xf32>
    %4 = tpu.matmul %2, %3, %cst {dimension_numbers = #tpu.dot_dimension_numbers<[1], [0], [0], [1], [0, 0, 1, 1], [], []>} : vector<8x128xbf16>, vector<128x384xbf16>, vector<8x384xf32> -> vector<8x384xf32>
    %c0_4 = arith.constant 0 : index
    %c0_5 = arith.constant 0 : index
    %5 = vector.load %arg6[%c0_4, %c0_5] : memref<1x384xf32, #tpu.memory_space<vmem>>, vector<1x384xf32>
    %6 = vector.broadcast %5 : vector<1x384xf32> to vector<8x384xf32>
    %7 = arith.addf %4, %6 : vector<8x384xf32>
    %c0_6 = arith.constant 0 : index
    %c0_7 = arith.constant 0 : index
    %8 = vector.load %arg3[%c0_6, %c0_7] : memref<8x8xf32, #tpu.memory_space<vmem>>, vector<8x8xf32>
    %c0_8 = arith.constant 0 : index
    %c0_9 = arith.constant 0 : index
    %c0_10 = arith.constant 0 : index
    %9 = vector.load %arg4[%c0_8, %c0_9, %c0_10] : memref<1x1x8xf32, #tpu.memory_space<vmem>>, vector<1x1x8xf32>
    %10 = vector.shape_cast %9 : vector<1x1x8xf32> to vector<1x8xf32>
    %11 = vector.broadcast %10 : vector<1x8xf32> to vector<8x8xf32>
    %12 = arith.addf %8, %11 : vector<8x8xf32>
    %13 = vector.extract_strided_slice %7 {offsets = [0, 0], sizes = [8, 128], strides = [1, 1]} : vector<8x384xf32> to vector<8x128xf32>
    %14 = vector.extract_strided_slice %7 {offsets = [0, 128], sizes = [8, 128], strides = [1, 1]} : vector<8x384xf32> to vector<8x128xf32>
    %15 = vector.extract_strided_slice %7 {offsets = [0, 256], sizes = [8, 128], strides = [1, 1]} : vector<8x384xf32> to vector<8x128xf32>
    %16 = vector.extract_strided_slice %13 {offsets = [0, 0], sizes = [8, 32], strides = [1, 1]} : vector<8x128xf32> to vector<8x32xf32>
    %17 = vector.extract_strided_slice %14 {offsets = [0, 0], sizes = [8, 32], strides = [1, 1]} : vector<8x128xf32> to vector<8x32xf32>
    %18 = vector.extract_strided_slice %15 {offsets = [0, 0], sizes = [8, 32], strides = [1, 1]} : vector<8x128xf32> to vector<8x32xf32>
    %cst_11 = arith.constant dense<0.000000e+00> : vector<8x8xf32>
    %19 = tpu.matmul %16, %17, %cst_11 {dimension_numbers = #tpu.dot_dimension_numbers<[1], [1], [0], [0], [0, 0, 1, 0], [], []>} : vector<8x32xf32>, vector<8x32xf32>, vector<8x8xf32> -> vector<8x8xf32>
    %cst_12 = arith.constant 0.176776692 : f32
    %20 = vector.broadcast %cst_12 : f32 to vector<8x8xf32>
    %21 = arith.mulf %19, %20 : vector<8x8xf32>
    %22 = arith.addf %21, %12 : vector<8x8xf32>
    %cst_13 = arith.constant dense<0xFF800000> : vector<8xf32>
    %23 = vector.multi_reduction <maximumf>, %22, %cst_13 [1] : vector<8x8xf32> to vector<8xf32>
    %24 = vector.shape_cast %23 : vector<8xf32> to vector<8x1xf32>
    %25 = vector.broadcast %24 : vector<8x1xf32> to vector<8x8xf32>
    %26 = arith.subf %22, %25 : vector<8x8xf32>
    %27 = math.exp %26 : vector<8x8xf32>
    %cst_14 = arith.constant dense<0.000000e+00> : vector<8xf32>
    %28 = vector.multi_reduction <add>, %27, %cst_14 [1] : vector<8x8xf32> to vector<8xf32>
    %29 = vector.shape_cast %28 : vector<8xf32> to vector<8x1xf32>
    %30 = tpu.reciprocal %29 {approx = true} : vector<8x1xf32> -> vector<8x1xf32>
    %31 = vector.broadcast %30 : vector<8x1xf32> to vector<8x8xf32>
    %32 = arith.mulf %27, %31 : vector<8x8xf32>
    %cst_15 = arith.constant dense<0.000000e+00> : vector<8x32xf32>
    %33 = tpu.matmul %32, %18, %cst_15 {dimension_numbers = #tpu.dot_dimension_numbers<[1], [0], [0], [1], [0, 0, 1, 1], [], []>} : vector<8x8xf32>, vector<8x32xf32>, vector<8x32xf32> -> vector<8x32xf32>
    %34 = vector.extract_strided_slice %13 {offsets = [0, 32], sizes = [8, 32], strides = [1, 1]} : vector<8x128xf32> to vector<8x32xf32>
    %35 = vector.extract_strided_slice %14 {offsets = [0, 32], sizes = [8, 32], strides = [1, 1]} : vector<8x128xf32> to vector<8x32xf32>
    %36 = vector.extract_strided_slice %15 {offsets = [0, 32], sizes = [8, 32], strides = [1, 1]} : vector<8x128xf32> to vector<8x32xf32>
    %cst_16 = arith.constant dense<0.000000e+00> : vector<8x8xf32>
    %37 = tpu.matmul %34, %35, %cst_16 {dimension_numbers = #tpu.dot_dimension_numbers<[1], [1], [0], [0], [0, 0, 1, 0], [], []>} : vector<8x32xf32>, vector<8x32xf32>, vector<8x8xf32> -> vector<8x8xf32>
    %cst_17 = arith.constant 0.176776692 : f32
    %38 = vector.broadcast %cst_17 : f32 to vector<8x8xf32>
    %39 = arith.mulf %37, %38 : vector<8x8xf32>
    %40 = arith.addf %39, %12 : vector<8x8xf32>
    %cst_18 = arith.constant dense<0xFF800000> : vector<8xf32>
    %41 = vector.multi_reduction <maximumf>, %40, %cst_18 [1] : vector<8x8xf32> to vector<8xf32>
    %42 = vector.shape_cast %41 : vector<8xf32> to vector<8x1xf32>
    %43 = vector.broadcast %42 : vector<8x1xf32> to vector<8x8xf32>
    %44 = arith.subf %40, %43 : vector<8x8xf32>
    %45 = math.exp %44 : vector<8x8xf32>
    %cst_19 = arith.constant dense<0.000000e+00> : vector<8xf32>
    %46 = vector.multi_reduction <add>, %45, %cst_19 [1] : vector<8x8xf32> to vector<8xf32>
    %47 = vector.shape_cast %46 : vector<8xf32> to vector<8x1xf32>
    %48 = tpu.reciprocal %47 {approx = true} : vector<8x1xf32> -> vector<8x1xf32>
    %49 = vector.broadcast %48 : vector<8x1xf32> to vector<8x8xf32>
    %50 = arith.mulf %45, %49 : vector<8x8xf32>
    %cst_20 = arith.constant dense<0.000000e+00> : vector<8x32xf32>
    %51 = tpu.matmul %50, %36, %cst_20 {dimension_numbers = #tpu.dot_dimension_numbers<[1], [0], [0], [1], [0, 0, 1, 1], [], []>} : vector<8x8xf32>, vector<8x32xf32>, vector<8x32xf32> -> vector<8x32xf32>
    %52 = vector.extract_strided_slice %13 {offsets = [0, 64], sizes = [8, 32], strides = [1, 1]} : vector<8x128xf32> to vector<8x32xf32>
    %53 = vector.extract_strided_slice %14 {offsets = [0, 64], sizes = [8, 32], strides = [1, 1]} : vector<8x128xf32> to vector<8x32xf32>
    %54 = vector.extract_strided_slice %15 {offsets = [0, 64], sizes = [8, 32], strides = [1, 1]} : vector<8x128xf32> to vector<8x32xf32>
    %cst_21 = arith.constant dense<0.000000e+00> : vector<8x8xf32>
    %55 = tpu.matmul %52, %53, %cst_21 {dimension_numbers = #tpu.dot_dimension_numbers<[1], [1], [0], [0], [0, 0, 1, 0], [], []>} : vector<8x32xf32>, vector<8x32xf32>, vector<8x8xf32> -> vector<8x8xf32>
    %cst_22 = arith.constant 0.176776692 : f32
    %56 = vector.broadcast %cst_22 : f32 to vector<8x8xf32>
    %57 = arith.mulf %55, %56 : vector<8x8xf32>
    %58 = arith.addf %57, %12 : vector<8x8xf32>
    %cst_23 = arith.constant dense<0xFF800000> : vector<8xf32>
    %59 = vector.multi_reduction <maximumf>, %58, %cst_23 [1] : vector<8x8xf32> to vector<8xf32>
    %60 = vector.shape_cast %59 : vector<8xf32> to vector<8x1xf32>
    %61 = vector.broadcast %60 : vector<8x1xf32> to vector<8x8xf32>
    %62 = arith.subf %58, %61 : vector<8x8xf32>
    %63 = math.exp %62 : vector<8x8xf32>
    %cst_24 = arith.constant dense<0.000000e+00> : vector<8xf32>
    %64 = vector.multi_reduction <add>, %63, %cst_24 [1] : vector<8x8xf32> to vector<8xf32>
    %65 = vector.shape_cast %64 : vector<8xf32> to vector<8x1xf32>
    %66 = tpu.reciprocal %65 {approx = true} : vector<8x1xf32> -> vector<8x1xf32>
    %67 = vector.broadcast %66 : vector<8x1xf32> to vector<8x8xf32>
    %68 = arith.mulf %63, %67 : vector<8x8xf32>
    %cst_25 = arith.constant dense<0.000000e+00> : vector<8x32xf32>
    %69 = tpu.matmul %68, %54, %cst_25 {dimension_numbers = #tpu.dot_dimension_numbers<[1], [0], [0], [1], [0, 0, 1, 1], [], []>} : vector<8x8xf32>, vector<8x32xf32>, vector<8x32xf32> -> vector<8x32xf32>
    %70 = vector.extract_strided_slice %13 {offsets = [0, 96], sizes = [8, 32], strides = [1, 1]} : vector<8x128xf32> to vector<8x32xf32>
    %71 = vector.extract_strided_slice %14 {offsets = [0, 96], sizes = [8, 32], strides = [1, 1]} : vector<8x128xf32> to vector<8x32xf32>
    %72 = vector.extract_strided_slice %15 {offsets = [0, 96], sizes = [8, 32], strides = [1, 1]} : vector<8x128xf32> to vector<8x32xf32>
    %cst_26 = arith.constant dense<0.000000e+00> : vector<8x8xf32>
    %73 = tpu.matmul %70, %71, %cst_26 {dimension_numbers = #tpu.dot_dimension_numbers<[1], [1], [0], [0], [0, 0, 1, 0], [], []>} : vector<8x32xf32>, vector<8x32xf32>, vector<8x8xf32> -> vector<8x8xf32>
    %cst_27 = arith.constant 0.176776692 : f32
    %74 = vector.broadcast %cst_27 : f32 to vector<8x8xf32>
    %75 = arith.mulf %73, %74 : vector<8x8xf32>
    %76 = arith.addf %75, %12 : vector<8x8xf32>
    %cst_28 = arith.constant dense<0xFF800000> : vector<8xf32>
    %77 = vector.multi_reduction <maximumf>, %76, %cst_28 [1] : vector<8x8xf32> to vector<8xf32>
    %78 = vector.shape_cast %77 : vector<8xf32> to vector<8x1xf32>
    %79 = vector.broadcast %78 : vector<8x1xf32> to vector<8x8xf32>
    %80 = arith.subf %76, %79 : vector<8x8xf32>
    %81 = math.exp %80 : vector<8x8xf32>
    %cst_29 = arith.constant dense<0.000000e+00> : vector<8xf32>
    %82 = vector.multi_reduction <add>, %81, %cst_29 [1] : vector<8x8xf32> to vector<8xf32>
    %83 = vector.shape_cast %82 : vector<8xf32> to vector<8x1xf32>
    %84 = tpu.reciprocal %83 {approx = true} : vector<8x1xf32> -> vector<8x1xf32>
    %85 = vector.broadcast %84 : vector<8x1xf32> to vector<8x8xf32>
    %86 = arith.mulf %81, %85 : vector<8x8xf32>
    %cst_30 = arith.constant dense<0.000000e+00> : vector<8x32xf32>
    %87 = tpu.matmul %86, %72, %cst_30 {dimension_numbers = #tpu.dot_dimension_numbers<[1], [0], [0], [1], [0, 0, 1, 1], [], []>} : vector<8x8xf32>, vector<8x32xf32>, vector<8x32xf32> -> vector<8x32xf32>
    %88 = tpu.concatenate %33, %51, %69, %87 in 1 : vector<8x32xf32>, vector<8x32xf32>, vector<8x32xf32>, vector<8x32xf32> -> vector<8x128xf32>
    %89 = arith.truncf %88 : vector<8x128xf32> to vector<8x128xbf16>
    %c0_31 = arith.constant 0 : index
    %c0_32 = arith.constant 0 : index
    %90 = vector.load %arg7[%c0_31, %c0_32] : memref<128x128xbf16, #tpu.memory_space<vmem>>, vector<128x128xbf16>
    %cst_33 = arith.constant dense<0.000000e+00> : vector<8x128xf32>
    %91 = tpu.matmul %89, %90, %cst_33 {dimension_numbers = #tpu.dot_dimension_numbers<[1], [0], [0], [1], [0, 0, 1, 1], [], []>} : vector<8x128xbf16>, vector<128x128xbf16>, vector<8x128xf32> -> vector<8x128xf32>
    %c0_34 = arith.constant 0 : index
    %c0_35 = arith.constant 0 : index
    %92 = vector.load %arg8[%c0_34, %c0_35] : memref<1x128xf32, #tpu.memory_space<vmem>>, vector<1x128xf32>
    %93 = vector.broadcast %92 : vector<1x128xf32> to vector<8x128xf32>
    %94 = arith.addf %91, %93 : vector<8x128xf32>
    %95 = arith.addf %1, %94 : vector<8x128xf32>
    %c0_36 = arith.constant 0 : index
    %c0_37 = arith.constant 0 : index
    %96 = vector.load %arg9[%c0_36, %c0_37] : memref<1x128xf32, #tpu.memory_space<vmem>>, vector<1x128xf32>
    %c0_38 = arith.constant 0 : index
    %c0_39 = arith.constant 0 : index
    %97 = vector.load %arg10[%c0_38, %c0_39] : memref<1x128xf32, #tpu.memory_space<vmem>>, vector<1x128xf32>
    %cst_40 = arith.constant dense<0.000000e+00> : vector<8xf32>
    %98 = vector.multi_reduction <add>, %95, %cst_40 [1] : vector<8x128xf32> to vector<8xf32>
    %99 = vector.shape_cast %98 : vector<8xf32> to vector<8x1xf32>
    %cst_41 = arith.constant 1.280000e+02 : f32
    %100 = vector.broadcast %cst_41 : f32 to vector<8x1xf32>
    %101 = arith.divf %99, %100 : vector<8x1xf32>
    %102 = vector.broadcast %101 : vector<8x1xf32> to vector<8x128xf32>
    %103 = arith.subf %95, %102 : vector<8x128xf32>
    %104 = arith.mulf %103, %103 : vector<8x128xf32>
    %cst_42 = arith.constant dense<0.000000e+00> : vector<8xf32>
    %105 = vector.multi_reduction <add>, %104, %cst_42 [1] : vector<8x128xf32> to vector<8xf32>
    %106 = vector.shape_cast %105 : vector<8xf32> to vector<8x1xf32>
    %cst_43 = arith.constant 1.280000e+02 : f32
    %107 = vector.broadcast %cst_43 : f32 to vector<8x1xf32>
    %108 = arith.divf %106, %107 : vector<8x1xf32>
    %cst_44 = arith.constant 9.99999974E-6 : f32
    %109 = vector.broadcast %cst_44 : f32 to vector<8x1xf32>
    %110 = arith.addf %108, %109 : vector<8x1xf32>
    %111 = math.rsqrt %110 : vector<8x1xf32>
    %112 = vector.broadcast %111 : vector<8x1xf32> to vector<8x128xf32>
    %113 = arith.mulf %103, %112 : vector<8x128xf32>
    %114 = vector.broadcast %96 : vector<1x128xf32> to vector<8x128xf32>
    %115 = arith.mulf %113, %114 : vector<8x128xf32>
    %116 = vector.broadcast %97 : vector<1x128xf32> to vector<8x128xf32>
    %117 = arith.addf %115, %116 : vector<8x128xf32>
    %c0_45 = arith.constant 0 : index
    %c0_46 = arith.constant 0 : index
    %c0_47 = arith.constant 0 : index
    %118 = vector.load %arg2[%c0_45, %c0_46, %c0_47] : memref<1x12x128xf32, #tpu.memory_space<vmem>>, vector<1x12x128xf32>
    %119 = vector.shape_cast %118 : vector<1x12x128xf32> to vector<12x128xf32>
    %120 = arith.truncf %117 : vector<8x128xf32> to vector<8x128xbf16>
    %c0_48 = arith.constant 0 : index
    %c0_49 = arith.constant 0 : index
    %121 = vector.load %arg11[%c0_48, %c0_49] : memref<128x128xbf16, #tpu.memory_space<vmem>>, vector<128x128xbf16>
    %cst_50 = arith.constant dense<0.000000e+00> : vector<8x128xf32>
    %122 = tpu.matmul %120, %121, %cst_50 {dimension_numbers = #tpu.dot_dimension_numbers<[1], [0], [0], [1], [0, 0, 1, 1], [], []>} : vector<8x128xbf16>, vector<128x128xbf16>, vector<8x128xf32> -> vector<8x128xf32>
    %c0_51 = arith.constant 0 : index
    %c0_52 = arith.constant 0 : index
    %123 = vector.load %arg12[%c0_51, %c0_52] : memref<1x128xf32, #tpu.memory_space<vmem>>, vector<1x128xf32>
    %124 = vector.broadcast %123 : vector<1x128xf32> to vector<8x128xf32>
    %125 = arith.addf %122, %124 : vector<8x128xf32>
    %126 = arith.truncf %119 : vector<12x128xf32> to vector<12x128xbf16>
    %c0_53 = arith.constant 0 : index
    %c0_54 = arith.constant 0 : index
    %127 = vector.load %arg13[%c0_53, %c0_54] : memref<128x256xbf16, #tpu.memory_space<vmem>>, vector<128x256xbf16>
    %cst_55 = arith.constant dense<0.000000e+00> : vector<12x256xf32>
    %128 = tpu.matmul %126, %127, %cst_55 {dimension_numbers = #tpu.dot_dimension_numbers<[1], [0], [0], [1], [0, 0, 1, 1], [], []>} : vector<12x128xbf16>, vector<128x256xbf16>, vector<12x256xf32> -> vector<12x256xf32>
    %c0_56 = arith.constant 0 : index
    %c0_57 = arith.constant 0 : index
    %129 = vector.load %arg14[%c0_56, %c0_57] : memref<1x256xf32, #tpu.memory_space<vmem>>, vector<1x256xf32>
    %130 = vector.broadcast %129 : vector<1x256xf32> to vector<12x256xf32>
    %131 = arith.addf %128, %130 : vector<12x256xf32>
    %132 = vector.extract_strided_slice %131 {offsets = [0, 0], sizes = [12, 128], strides = [1, 1]} : vector<12x256xf32> to vector<12x128xf32>
    %133 = vector.extract_strided_slice %131 {offsets = [0, 128], sizes = [12, 128], strides = [1, 1]} : vector<12x256xf32> to vector<12x128xf32>
    %134 = vector.extract_strided_slice %125 {offsets = [0, 0], sizes = [8, 32], strides = [1, 1]} : vector<8x128xf32> to vector<8x32xf32>
    %135 = vector.extract_strided_slice %132 {offsets = [0, 0], sizes = [12, 32], strides = [1, 1]} : vector<12x128xf32> to vector<12x32xf32>
    %136 = vector.extract_strided_slice %133 {offsets = [0, 0], sizes = [12, 32], strides = [1, 1]} : vector<12x128xf32> to vector<12x32xf32>
    %cst_58 = arith.constant dense<0.000000e+00> : vector<8x12xf32>
    %137 = tpu.matmul %134, %135, %cst_58 {dimension_numbers = #tpu.dot_dimension_numbers<[1], [1], [0], [0], [0, 0, 1, 0], [], []>} : vector<8x32xf32>, vector<12x32xf32>, vector<8x12xf32> -> vector<8x12xf32>
    %cst_59 = arith.constant 0.176776692 : f32
    %138 = vector.broadcast %cst_59 : f32 to vector<8x12xf32>
    %139 = arith.mulf %137, %138 : vector<8x12xf32>
    %cst_60 = arith.constant dense<0xFF800000> : vector<8xf32>
    %140 = vector.multi_reduction <maximumf>, %139, %cst_60 [1] : vector<8x12xf32> to vector<8xf32>
    %141 = vector.shape_cast %140 : vector<8xf32> to vector<8x1xf32>
    %142 = vector.broadcast %141 : vector<8x1xf32> to vector<8x12xf32>
    %143 = arith.subf %139, %142 : vector<8x12xf32>
    %144 = math.exp %143 : vector<8x12xf32>
    %cst_61 = arith.constant dense<0.000000e+00> : vector<8xf32>
    %145 = vector.multi_reduction <add>, %144, %cst_61 [1] : vector<8x12xf32> to vector<8xf32>
    %146 = vector.shape_cast %145 : vector<8xf32> to vector<8x1xf32>
    %147 = tpu.reciprocal %146 {approx = true} : vector<8x1xf32> -> vector<8x1xf32>
    %148 = vector.broadcast %147 : vector<8x1xf32> to vector<8x12xf32>
    %149 = arith.mulf %144, %148 : vector<8x12xf32>
    %cst_62 = arith.constant dense<0.000000e+00> : vector<8x32xf32>
    %150 = tpu.matmul %149, %136, %cst_62 {dimension_numbers = #tpu.dot_dimension_numbers<[1], [0], [0], [1], [0, 0, 1, 1], [], []>} : vector<8x12xf32>, vector<12x32xf32>, vector<8x32xf32> -> vector<8x32xf32>
    %151 = vector.extract_strided_slice %125 {offsets = [0, 32], sizes = [8, 32], strides = [1, 1]} : vector<8x128xf32> to vector<8x32xf32>
    %152 = vector.extract_strided_slice %132 {offsets = [0, 32], sizes = [12, 32], strides = [1, 1]} : vector<12x128xf32> to vector<12x32xf32>
    %153 = vector.extract_strided_slice %133 {offsets = [0, 32], sizes = [12, 32], strides = [1, 1]} : vector<12x128xf32> to vector<12x32xf32>
    %cst_63 = arith.constant dense<0.000000e+00> : vector<8x12xf32>
    %154 = tpu.matmul %151, %152, %cst_63 {dimension_numbers = #tpu.dot_dimension_numbers<[1], [1], [0], [0], [0, 0, 1, 0], [], []>} : vector<8x32xf32>, vector<12x32xf32>, vector<8x12xf32> -> vector<8x12xf32>
    %cst_64 = arith.constant 0.176776692 : f32
    %155 = vector.broadcast %cst_64 : f32 to vector<8x12xf32>
    %156 = arith.mulf %154, %155 : vector<8x12xf32>
    %cst_65 = arith.constant dense<0xFF800000> : vector<8xf32>
    %157 = vector.multi_reduction <maximumf>, %156, %cst_65 [1] : vector<8x12xf32> to vector<8xf32>
    %158 = vector.shape_cast %157 : vector<8xf32> to vector<8x1xf32>
    %159 = vector.broadcast %158 : vector<8x1xf32> to vector<8x12xf32>
    %160 = arith.subf %156, %159 : vector<8x12xf32>
    %161 = math.exp %160 : vector<8x12xf32>
    %cst_66 = arith.constant dense<0.000000e+00> : vector<8xf32>
    %162 = vector.multi_reduction <add>, %161, %cst_66 [1] : vector<8x12xf32> to vector<8xf32>
    %163 = vector.shape_cast %162 : vector<8xf32> to vector<8x1xf32>
    %164 = tpu.reciprocal %163 {approx = true} : vector<8x1xf32> -> vector<8x1xf32>
    %165 = vector.broadcast %164 : vector<8x1xf32> to vector<8x12xf32>
    %166 = arith.mulf %161, %165 : vector<8x12xf32>
    %cst_67 = arith.constant dense<0.000000e+00> : vector<8x32xf32>
    %167 = tpu.matmul %166, %153, %cst_67 {dimension_numbers = #tpu.dot_dimension_numbers<[1], [0], [0], [1], [0, 0, 1, 1], [], []>} : vector<8x12xf32>, vector<12x32xf32>, vector<8x32xf32> -> vector<8x32xf32>
    %168 = vector.extract_strided_slice %125 {offsets = [0, 64], sizes = [8, 32], strides = [1, 1]} : vector<8x128xf32> to vector<8x32xf32>
    %169 = vector.extract_strided_slice %132 {offsets = [0, 64], sizes = [12, 32], strides = [1, 1]} : vector<12x128xf32> to vector<12x32xf32>
    %170 = vector.extract_strided_slice %133 {offsets = [0, 64], sizes = [12, 32], strides = [1, 1]} : vector<12x128xf32> to vector<12x32xf32>
    %cst_68 = arith.constant dense<0.000000e+00> : vector<8x12xf32>
    %171 = tpu.matmul %168, %169, %cst_68 {dimension_numbers = #tpu.dot_dimension_numbers<[1], [1], [0], [0], [0, 0, 1, 0], [], []>} : vector<8x32xf32>, vector<12x32xf32>, vector<8x12xf32> -> vector<8x12xf32>
    %cst_69 = arith.constant 0.176776692 : f32
    %172 = vector.broadcast %cst_69 : f32 to vector<8x12xf32>
    %173 = arith.mulf %171, %172 : vector<8x12xf32>
    %cst_70 = arith.constant dense<0xFF800000> : vector<8xf32>
    %174 = vector.multi_reduction <maximumf>, %173, %cst_70 [1] : vector<8x12xf32> to vector<8xf32>
    %175 = vector.shape_cast %174 : vector<8xf32> to vector<8x1xf32>
    %176 = vector.broadcast %175 : vector<8x1xf32> to vector<8x12xf32>
    %177 = arith.subf %173, %176 : vector<8x12xf32>
    %178 = math.exp %177 : vector<8x12xf32>
    %cst_71 = arith.constant dense<0.000000e+00> : vector<8xf32>
    %179 = vector.multi_reduction <add>, %178, %cst_71 [1] : vector<8x12xf32> to vector<8xf32>
    %180 = vector.shape_cast %179 : vector<8xf32> to vector<8x1xf32>
    %181 = tpu.reciprocal %180 {approx = true} : vector<8x1xf32> -> vector<8x1xf32>
    %182 = vector.broadcast %181 : vector<8x1xf32> to vector<8x12xf32>
    %183 = arith.mulf %178, %182 : vector<8x12xf32>
    %cst_72 = arith.constant dense<0.000000e+00> : vector<8x32xf32>
    %184 = tpu.matmul %183, %170, %cst_72 {dimension_numbers = #tpu.dot_dimension_numbers<[1], [0], [0], [1], [0, 0, 1, 1], [], []>} : vector<8x12xf32>, vector<12x32xf32>, vector<8x32xf32> -> vector<8x32xf32>
    %185 = vector.extract_strided_slice %125 {offsets = [0, 96], sizes = [8, 32], strides = [1, 1]} : vector<8x128xf32> to vector<8x32xf32>
    %186 = vector.extract_strided_slice %132 {offsets = [0, 96], sizes = [12, 32], strides = [1, 1]} : vector<12x128xf32> to vector<12x32xf32>
    %187 = vector.extract_strided_slice %133 {offsets = [0, 96], sizes = [12, 32], strides = [1, 1]} : vector<12x128xf32> to vector<12x32xf32>
    %cst_73 = arith.constant dense<0.000000e+00> : vector<8x12xf32>
    %188 = tpu.matmul %185, %186, %cst_73 {dimension_numbers = #tpu.dot_dimension_numbers<[1], [1], [0], [0], [0, 0, 1, 0], [], []>} : vector<8x32xf32>, vector<12x32xf32>, vector<8x12xf32> -> vector<8x12xf32>
    %cst_74 = arith.constant 0.176776692 : f32
    %189 = vector.broadcast %cst_74 : f32 to vector<8x12xf32>
    %190 = arith.mulf %188, %189 : vector<8x12xf32>
    %cst_75 = arith.constant dense<0xFF800000> : vector<8xf32>
    %191 = vector.multi_reduction <maximumf>, %190, %cst_75 [1] : vector<8x12xf32> to vector<8xf32>
    %192 = vector.shape_cast %191 : vector<8xf32> to vector<8x1xf32>
    %193 = vector.broadcast %192 : vector<8x1xf32> to vector<8x12xf32>
    %194 = arith.subf %190, %193 : vector<8x12xf32>
    %195 = math.exp %194 : vector<8x12xf32>
    %cst_76 = arith.constant dense<0.000000e+00> : vector<8xf32>
    %196 = vector.multi_reduction <add>, %195, %cst_76 [1] : vector<8x12xf32> to vector<8xf32>
    %197 = vector.shape_cast %196 : vector<8xf32> to vector<8x1xf32>
    %198 = tpu.reciprocal %197 {approx = true} : vector<8x1xf32> -> vector<8x1xf32>
    %199 = vector.broadcast %198 : vector<8x1xf32> to vector<8x12xf32>
    %200 = arith.mulf %195, %199 : vector<8x12xf32>
    %cst_77 = arith.constant dense<0.000000e+00> : vector<8x32xf32>
    %201 = tpu.matmul %200, %187, %cst_77 {dimension_numbers = #tpu.dot_dimension_numbers<[1], [0], [0], [1], [0, 0, 1, 1], [], []>} : vector<8x12xf32>, vector<12x32xf32>, vector<8x32xf32> -> vector<8x32xf32>
    %202 = tpu.concatenate %150, %167, %184, %201 in 1 : vector<8x32xf32>, vector<8x32xf32>, vector<8x32xf32>, vector<8x32xf32> -> vector<8x128xf32>
    %203 = arith.truncf %202 : vector<8x128xf32> to vector<8x128xbf16>
    %c0_78 = arith.constant 0 : index
    %c0_79 = arith.constant 0 : index
    %204 = vector.load %arg15[%c0_78, %c0_79] : memref<128x128xbf16, #tpu.memory_space<vmem>>, vector<128x128xbf16>
    %cst_80 = arith.constant dense<0.000000e+00> : vector<8x128xf32>
    %205 = tpu.matmul %203, %204, %cst_80 {dimension_numbers = #tpu.dot_dimension_numbers<[1], [0], [0], [1], [0, 0, 1, 1], [], []>} : vector<8x128xbf16>, vector<128x128xbf16>, vector<8x128xf32> -> vector<8x128xf32>
    %c0_81 = arith.constant 0 : index
    %c0_82 = arith.constant 0 : index
    %206 = vector.load %arg16[%c0_81, %c0_82] : memref<1x128xf32, #tpu.memory_space<vmem>>, vector<1x128xf32>
    %207 = vector.broadcast %206 : vector<1x128xf32> to vector<8x128xf32>
    %208 = arith.addf %205, %207 : vector<8x128xf32>
    %209 = arith.addf %117, %208 : vector<8x128xf32>
    %c0_83 = arith.constant 0 : index
    %c0_84 = arith.constant 0 : index
    %210 = vector.load %arg17[%c0_83, %c0_84] : memref<1x128xf32, #tpu.memory_space<vmem>>, vector<1x128xf32>
    %c0_85 = arith.constant 0 : index
    %c0_86 = arith.constant 0 : index
    %211 = vector.load %arg18[%c0_85, %c0_86] : memref<1x128xf32, #tpu.memory_space<vmem>>, vector<1x128xf32>
    %cst_87 = arith.constant dense<0.000000e+00> : vector<8xf32>
    %212 = vector.multi_reduction <add>, %209, %cst_87 [1] : vector<8x128xf32> to vector<8xf32>
    %213 = vector.shape_cast %212 : vector<8xf32> to vector<8x1xf32>
    %cst_88 = arith.constant 1.280000e+02 : f32
    %214 = vector.broadcast %cst_88 : f32 to vector<8x1xf32>
    %215 = arith.divf %213, %214 : vector<8x1xf32>
    %216 = vector.broadcast %215 : vector<8x1xf32> to vector<8x128xf32>
    %217 = arith.subf %209, %216 : vector<8x128xf32>
    %218 = arith.mulf %217, %217 : vector<8x128xf32>
    %cst_89 = arith.constant dense<0.000000e+00> : vector<8xf32>
    %219 = vector.multi_reduction <add>, %218, %cst_89 [1] : vector<8x128xf32> to vector<8xf32>
    %220 = vector.shape_cast %219 : vector<8xf32> to vector<8x1xf32>
    %cst_90 = arith.constant 1.280000e+02 : f32
    %221 = vector.broadcast %cst_90 : f32 to vector<8x1xf32>
    %222 = arith.divf %220, %221 : vector<8x1xf32>
    %cst_91 = arith.constant 9.99999974E-6 : f32
    %223 = vector.broadcast %cst_91 : f32 to vector<8x1xf32>
    %224 = arith.addf %222, %223 : vector<8x1xf32>
    %225 = math.rsqrt %224 : vector<8x1xf32>
    %226 = vector.broadcast %225 : vector<8x1xf32> to vector<8x128xf32>
    %227 = arith.mulf %217, %226 : vector<8x128xf32>
    %228 = vector.broadcast %210 : vector<1x128xf32> to vector<8x128xf32>
    %229 = arith.mulf %227, %228 : vector<8x128xf32>
    %230 = vector.broadcast %211 : vector<1x128xf32> to vector<8x128xf32>
    %231 = arith.addf %229, %230 : vector<8x128xf32>
    %232 = arith.truncf %231 : vector<8x128xf32> to vector<8x128xbf16>
    %c0_92 = arith.constant 0 : index
    %c0_93 = arith.constant 0 : index
    %233 = vector.load %arg19[%c0_92, %c0_93] : memref<128x128xbf16, #tpu.memory_space<vmem>>, vector<128x128xbf16>
    %cst_94 = arith.constant dense<0.000000e+00> : vector<8x128xf32>
    %234 = tpu.matmul %232, %233, %cst_94 {dimension_numbers = #tpu.dot_dimension_numbers<[1], [0], [0], [1], [0, 0, 1, 1], [], []>} : vector<8x128xbf16>, vector<128x128xbf16>, vector<8x128xf32> -> vector<8x128xf32>
    %c0_95 = arith.constant 0 : index
    %c0_96 = arith.constant 0 : index
    %235 = vector.load %arg20[%c0_95, %c0_96] : memref<1x128xf32, #tpu.memory_space<vmem>>, vector<1x128xf32>
    %236 = vector.broadcast %235 : vector<1x128xf32> to vector<8x128xf32>
    %237 = arith.addf %234, %236 : vector<8x128xf32>
    %cst_97 = arith.constant 0.000000e+00 : f32
    %238 = vector.broadcast %cst_97 : f32 to vector<8x128xf32>
    %239 = arith.maximumf %237, %238 : vector<8x128xf32>
    %240 = arith.truncf %239 : vector<8x128xf32> to vector<8x128xbf16>
    %c0_98 = arith.constant 0 : index
    %c0_99 = arith.constant 0 : index
    %241 = vector.load %arg21[%c0_98, %c0_99] : memref<128x128xbf16, #tpu.memory_space<vmem>>, vector<128x128xbf16>
    %cst_100 = arith.constant dense<0.000000e+00> : vector<8x128xf32>
    %242 = tpu.matmul %240, %241, %cst_100 {dimension_numbers = #tpu.dot_dimension_numbers<[1], [0], [0], [1], [0, 0, 1, 1], [], []>} : vector<8x128xbf16>, vector<128x128xbf16>, vector<8x128xf32> -> vector<8x128xf32>
    %c0_101 = arith.constant 0 : index
    %c0_102 = arith.constant 0 : index
    %243 = vector.load %arg22[%c0_101, %c0_102] : memref<1x128xf32, #tpu.memory_space<vmem>>, vector<1x128xf32>
    %244 = vector.broadcast %243 : vector<1x128xf32> to vector<8x128xf32>
    %245 = arith.addf %242, %244 : vector<8x128xf32>
    %246 = arith.addf %231, %245 : vector<8x128xf32>
    %c0_103 = arith.constant 0 : index
    %c0_104 = arith.constant 0 : index
    %247 = vector.load %arg23[%c0_103, %c0_104] : memref<1x128xf32, #tpu.memory_space<vmem>>, vector<1x128xf32>
    %c0_105 = arith.constant 0 : index
    %c0_106 = arith.constant 0 : index
    %248 = vector.load %arg24[%c0_105, %c0_106] : memref<1x128xf32, #tpu.memory_space<vmem>>, vector<1x128xf32>
    %cst_107 = arith.constant dense<0.000000e+00> : vector<8xf32>
    %249 = vector.multi_reduction <add>, %246, %cst_107 [1] : vector<8x128xf32> to vector<8xf32>
    %250 = vector.shape_cast %249 : vector<8xf32> to vector<8x1xf32>
    %cst_108 = arith.constant 1.280000e+02 : f32
    %251 = vector.broadcast %cst_108 : f32 to vector<8x1xf32>
    %252 = arith.divf %250, %251 : vector<8x1xf32>
    %253 = vector.broadcast %252 : vector<8x1xf32> to vector<8x128xf32>
    %254 = arith.subf %246, %253 : vector<8x128xf32>
    %255 = arith.mulf %254, %254 : vector<8x128xf32>
    %cst_109 = arith.constant dense<0.000000e+00> : vector<8xf32>
    %256 = vector.multi_reduction <add>, %255, %cst_109 [1] : vector<8x128xf32> to vector<8xf32>
    %257 = vector.shape_cast %256 : vector<8xf32> to vector<8x1xf32>
    %cst_110 = arith.constant 1.280000e+02 : f32
    %258 = vector.broadcast %cst_110 : f32 to vector<8x1xf32>
    %259 = arith.divf %257, %258 : vector<8x1xf32>
    %cst_111 = arith.constant 9.99999974E-6 : f32
    %260 = vector.broadcast %cst_111 : f32 to vector<8x1xf32>
    %261 = arith.addf %259, %260 : vector<8x1xf32>
    %262 = math.rsqrt %261 : vector<8x1xf32>
    %263 = vector.broadcast %262 : vector<8x1xf32> to vector<8x128xf32>
    %264 = arith.mulf %254, %263 : vector<8x128xf32>
    %265 = vector.broadcast %247 : vector<1x128xf32> to vector<8x128xf32>
    %266 = arith.mulf %264, %265 : vector<8x128xf32>
    %267 = vector.broadcast %248 : vector<1x128xf32> to vector<8x128xf32>
    %268 = arith.addf %266, %267 : vector<8x128xf32>
    %c0_112 = arith.constant 0 : index
    %c0_113 = arith.constant 0 : index
    %c0_114 = arith.constant 0 : index
    %269 = vector.load %arg25[%c0_112, %c0_113, %c0_114] : memref<1x8x128xf32, #tpu.memory_space<vmem>>, vector<1x8x128xf32>
    %270 = vector.shape_cast %269 : vector<1x8x128xf32> to vector<8x128xf32>
    %271 = vector.shape_cast %268 : vector<8x128xf32> to vector<1x8x128xf32>
    tpu.vector_store %arg25[%c0_112, %c0_113, %c0_114], %271 {strides = array<i32>} : memref<1x8x128xf32, #tpu.memory_space<vmem>>, vector<1x8x128xf32>,
    return
  }
  func.func @transform_0(%arg0: i32) -> (i32, i32, i32) {
    %c0_i32 = arith.constant 0 : i32
    %c0_i32_0 = arith.constant 0 : i32
    %c0_i32_1 = arith.constant 0 : i32
    return %arg0, %c0_i32, %c0_i32_0 : i32, i32, i32
  }
  func.func @transform_1(%arg0: i32) -> (i32, i32, i32) {
    %c0_i32 = arith.constant 0 : i32
    %c0_i32_0 = arith.constant 0 : i32
    %c0_i32_1 = arith.constant 0 : i32
    return %arg0, %c0_i32, %c0_i32_0 : i32, i32, i32
  }
  func.func @transform_2(%arg0: i32) -> (i32, i32) {
    %c0_i32 = arith.constant 0 : i32
    %c0_i32_0 = arith.constant 0 : i32
    %c0_i32_1 = arith.constant 0 : i32
    return %c0_i32, %c0_i32_0 : i32, i32
  }
  func.func @transform_3(%arg0: i32) -> (i32, i32, i32) {
    %c0_i32 = arith.constant 0 : i32
    %c0_i32_0 = arith.constant 0 : i32
    %c0_i32_1 = arith.constant 0 : i32
    return %arg0, %c0_i32, %c0_i32_0 : i32, i32, i32
  }
  func.func @transform_4(%arg0: i32) -> (i32, i32) {
    %c0_i32 = arith.constant 0 : i32
    %c0_i32_0 = arith.constant 0 : i32
    %c0_i32_1 = arith.constant 0 : i32
    return %c0_i32, %c0_i32_0 : i32, i32
  }
  func.func @transform_5(%arg0: i32) -> (i32, i32) {
    %c0_i32 = arith.constant 0 : i32
    %c0_i32_0 = arith.constant 0 : i32
    %c0_i32_1 = arith.constant 0 : i32
    return %c0_i32, %c0_i32_0 : i32, i32
  }
  func.func @transform_6(%arg0: i32) -> (i32, i32) {
    %c0_i32 = arith.constant 0 : i32
    %c0_i32_0 = arith.constant 0 : i32
    %c0_i32_1 = arith.constant 0 : i32
    return %c0_i32, %c0_i32_0 : i32, i32
  }
  func.func @transform_7(%arg0: i32) -> (i32, i32) {
    %c0_i32 = arith.constant 0 : i32
    %c0_i32_0 = arith.constant 0 : i32
    %c0_i32_1 = arith.constant 0 : i32
    return %c0_i32, %c0_i32_0 : i32, i32
  }
  func.func @transform_8(%arg0: i32) -> (i32, i32) {
    %c0_i32 = arith.constant 0 : i32
    %c0_i32_0 = arith.constant 0 : i32
    %c0_i32_1 = arith.constant 0 : i32
    return %c0_i32, %c0_i32_0 : i32, i32
  }
  func.func @transform_9(%arg0: i32) -> (i32, i32) {
    %c0_i32 = arith.constant 0 : i32
    %c0_i32_0 = arith.constant 0 : i32
    %c0_i32_1 = arith.constant 0 : i32
    return %c0_i32, %c0_i32_0 : i32, i32
  }
  func.func @transform_10(%arg0: i32) -> (i32, i32) {
    %c0_i32 = arith.constant 0 : i32
    %c0_i32_0 = arith.constant 0 : i32
    %c0_i32_1 = arith.constant 0 : i32
    return %c0_i32, %c0_i32_0 : i32, i32
  }
  func.func @transform_11(%arg0: i32) -> (i32, i32) {
    %c0_i32 = arith.constant 0 : i32
    %c0_i32_0 = arith.constant 0 : i32
    %c0_i32_1 = arith.constant 0 : i32
    return %c0_i32, %c0_i32_0 : i32, i32
  }
  func.func @transform_12(%arg0: i32) -> (i32, i32) {
    %c0_i32 = arith.constant 0 : i32
    %c0_i32_0 = arith.constant 0 : i32
    %c0_i32_1 = arith.constant 0 : i32
    return %c0_i32, %c0_i32_0 : i32, i32
  }
  func.func @transform_13(%arg0: i32) -> (i32, i32) {
    %c0_i32 = arith.constant 0 : i32
    %c0_i32_0 = arith.constant 0 : i32
    %c0_i32_1 = arith.constant 0 : i32
    return %c0_i32, %c0_i32_0 : i32, i32
  }
  func.func @transform_14(%arg0: i32) -> (i32, i32) {
    %c0_i32 = arith.constant 0 : i32
    %c0_i32_0 = arith.constant 0 : i32
    %c0_i32_1 = arith.constant 0 : i32
    return %c0_i32, %c0_i32_0 : i32, i32
  }
  func.func @transform_15(%arg0: i32) -> (i32, i32) {
    %c0_i32 = arith.constant 0 : i32
    %c0_i32_0 = arith.constant 0 : i32
    %c0_i32_1 = arith.constant 0 : i32
    return %c0_i32, %c0_i32_0 : i32, i32
  }
  func.func @transform_16(%arg0: i32) -> (i32, i32) {
    %c0_i32 = arith.constant 0 : i32
    %c0_i32_0 = arith.constant 0 : i32
    %c0_i32_1 = arith.constant 0 : i32
    return %c0_i32, %c0_i32_0 : i32, i32
  }
  func.func @transform_17(%arg0: i32) -> (i32, i32) {
    %c0_i32 = arith.constant 0 : i32
    %c0_i32_0 = arith.constant 0 : i32
    %c0_i32_1 = arith.constant 0 : i32
    return %c0_i32, %c0_i32_0 : i32, i32
  }
  func.func @transform_18(%arg0: i32) -> (i32, i32) {
    %c0_i32 = arith.constant 0 : i32
    %c0_i32_0 = arith.constant 0 : i32
    %c0_i32_1 = arith.constant 0 : i32
    return %c0_i32, %c0_i32_0 : i32, i32
  }
  func.func @transform_19(%arg0: i32) -> (i32, i32) {
    %c0_i32 = arith.constant 0 : i32
    %c0_i32_0 = arith.constant 0 : i32
    %c0_i32_1 = arith.constant 0 : i32
    return %c0_i32, %c0_i32_0 : i32, i32
  }
  func.func @transform_20(%arg0: i32) -> (i32, i32) {
    %c0_i32 = arith.constant 0 : i32
    %c0_i32_0 = arith.constant 0 : i32
    %c0_i32_1 = arith.constant 0 : i32
    return %c0_i32, %c0_i32_0 : i32, i32
  }
  func.func @transform_21(%arg0: i32) -> (i32, i32) {
    %c0_i32 = arith.constant 0 : i32
    %c0_i32_0 = arith.constant 0 : i32
    %c0_i32_1 = arith.constant 0 : i32
    return %c0_i32, %c0_i32_0 : i32, i32
  }
  func.func @transform_22(%arg0: i32) -> (i32, i32) {
    %c0_i32 = arith.constant 0 : i32
    %c0_i32_0 = arith.constant 0 : i32
    %c0_i32_1 = arith.constant 0 : i32
    return %c0_i32, %c0_i32_0 : i32, i32
  }
  func.func @transform_23(%arg0: i32) -> (i32, i32) {
    %c0_i32 = arith.constant 0 : i32
    %c0_i32_0 = arith.constant 0 : i32
    %c0_i32_1 = arith.constant 0 : i32
    return %c0_i32, %c0_i32_0 : i32, i32
  }
  func.func @transform_24(%arg0: i32) -> (i32, i32, i32) {
    %c0_i32 = arith.constant 0 : i32
    %c0_i32_0 = arith.constant 0 : i32
    %c0_i32_1 = arith.constant 0 : i32
    return %arg0, %c0_i32, %c0_i32_0 : i32, i32, i32
  }
}

module attributes {stable_mosaic.version = 11 : i64} {
  func.func @_fc_kernel(%arg0: i32, %arg1: memref<16x128xf32, #tpu.memory_space<vmem>>, %arg2: memref<128x128xbf16, #tpu.memory_space<vmem>>, %arg3: memref<1x128xf32, #tpu.memory_space<vmem>>, %arg4: memref<16x128xf32, #tpu.memory_space<vmem>>) attributes {dimension_semantics = [#tpu.dimension_semantics<parallel>], iteration_bounds = array<i64: 1>, scalar_prefetch = 0 : i64, scratch_operands = 0 : i64, tpu.core_type = #tpu.core_type<tc>, window_params = [{pipeline_mode = #tpu.pipeline_mode<synchronous>, transform_indices = @transform_0, window_bounds = array<i64: 16, 128>}, {pipeline_mode = #tpu.pipeline_mode<synchronous>, transform_indices = @transform_1, window_bounds = array<i64: 128, 128>}, {pipeline_mode = #tpu.pipeline_mode<synchronous>, transform_indices = @transform_2, window_bounds = array<i64: 1, 128>}, {pipeline_mode = #tpu.pipeline_mode<synchronous>, transform_indices = @transform_3, window_bounds = array<i64: 16, 128>}]} {
    %c0 = arith.constant 0 : index
    %c0_0 = arith.constant 0 : index
    %0 = vector.load %arg1[%c0, %c0_0] : memref<16x128xf32, #tpu.memory_space<vmem>>, vector<16x128xf32>
    %1 = arith.truncf %0 : vector<16x128xf32> to vector<16x128xbf16>
    %c0_1 = arith.constant 0 : index
    %c0_2 = arith.constant 0 : index
    %2 = vector.load %arg2[%c0_1, %c0_2] : memref<128x128xbf16, #tpu.memory_space<vmem>>, vector<128x128xbf16>
    %cst = arith.constant dense<0.000000e+00> : vector<16x128xf32>
    %3 = tpu.matmul %1, %2, %cst {dimension_numbers = #tpu.dot_dimension_numbers<[1], [0], [0], [1], [0, 0, 1, 1], [], []>} : vector<16x128xbf16>, vector<128x128xbf16>, vector<16x128xf32> -> vector<16x128xf32>
    %c0_3 = arith.constant 0 : index
    %c0_4 = arith.constant 0 : index
    %4 = vector.load %arg3[%c0_3, %c0_4] : memref<1x128xf32, #tpu.memory_space<vmem>>, vector<1x128xf32>
    %5 = vector.broadcast %4 : vector<1x128xf32> to vector<16x128xf32>
    %6 = arith.addf %3, %5 : vector<16x128xf32>
    %c0_5 = arith.constant 0 : index
    %c0_6 = arith.constant 0 : index
    %7 = vector.load %arg4[%c0_5, %c0_6] : memref<16x128xf32, #tpu.memory_space<vmem>>, vector<16x128xf32>
    tpu.vector_store %arg4[%c0_5, %c0_6], %6 {strides = array<i32>} : memref<16x128xf32, #tpu.memory_space<vmem>>, vector<16x128xf32>,
    return
  }
  func.func @transform_0(%arg0: i32) -> (i32, i32) {
    %c0_i32 = arith.constant 0 : i32
    %c0_i32_0 = arith.constant 0 : i32
    %c0_i32_1 = arith.constant 0 : i32
    return %c0_i32, %c0_i32_0 : i32, i32
  }
  func.func @transform_1(%arg0: i32) -> (i32, i32) {
    %c0_i32 = arith.constant 0 : i32
    %c0_i32_0 = arith.constant 0 : i32
    %c0_i32_1 = arith.constant 0 : i32
    return %c0_i32, %c0_i32_0 : i32, i32
  }
  func.func @transform_2(%arg0: i32) -> (i32, i32) {
    %c0_i32 = arith.constant 0 : i32
    %c0_i32_0 = arith.constant 0 : i32
    %c0_i32_1 = arith.constant 0 : i32
    return %c0_i32, %c0_i32_0 : i32, i32
  }
  func.func @transform_3(%arg0: i32) -> (i32, i32) {
    %c0_i32 = arith.constant 0 : i32
    %c0_i32_0 = arith.constant 0 : i32
    %c0_i32_1 = arith.constant 0 : i32
    return %c0_i32, %c0_i32_0 : i32, i32
  }
}

</mosaic_0001>

<llo_original>
// kernel: transformer_forward.5
$region0: #{transformer_forward.5}
  #allocation0 [shape = 'u32[]', space=smem, size = 0x4, offset = 0x4, fixed_abs, tag = 'smem constant byte address 0x4 - core index']
  #allocation1 [shape = 'u32[72,128]{1,0:T(1,128)}', space=vmem, size = 0x9000, scoped, tag = 'internal scratch']
  %s0 = inlined_call_operand.vmem [shape: f32[2,12,128], index: 0, kind: input, shape index: {}]
  %s1 = inlined_call_operand.vmem [shape: f32[2,1,12], index: 1, kind: input, shape index: {}]
  %s2 = inlined_call_operand.vmem [shape: bf16[128,384], index: 2, kind: input, shape index: {}]
  %s3 = inlined_call_operand.vmem [shape: f32[1,384], index: 3, kind: input, shape index: {}]
  %s4 = inlined_call_operand.vmem [shape: bf16[128,128], index: 4, kind: input, shape index: {}]
  %s5 = inlined_call_operand.vmem [shape: f32[1,128], index: 5, kind: input, shape index: {}]
  %s6 = inlined_call_operand.vmem [shape: f32[1,128], index: 6, kind: input, shape index: {}]
  %s7 = inlined_call_operand.vmem [shape: f32[1,128], index: 7, kind: input, shape index: {}]
  %s8 = inlined_call_operand.hbm [shape: bf16[128,128], index: 8, kind: input, shape index: {}]
  %s9 = inlined_call_operand.vmem [shape: f32[1,128], index: 9, kind: input, shape index: {}]
  %s10 = inlined_call_operand.hbm [shape: bf16[128,128], index: 10, kind: input, shape index: {}]
  %s11 = inlined_call_operand.vmem [shape: f32[1,128], index: 11, kind: input, shape index: {}]
  %s12 = inlined_call_operand.vmem [shape: f32[1,128], index: 12, kind: input, shape index: {}]
  %s13 = inlined_call_operand.vmem [shape: f32[1,128], index: 13, kind: input, shape index: {}]
  %s14 = inlined_call_operand.vmem [shape: f32[2,12,128], index: 14, kind: output, shape index: {}]
  %s15 = sld [smem:[#allocation0]]
  $region97: #{transformer_forward.5} parent=0
    _
  %s17 = ssub.s32 1, %s15
  %s18 = scalar_select 0, %s17, %s15
  $region1: #{transformer_forward.5} parent=0
    #allocation2 [shape = 'u8[32768]{0}', space=vmem, size = 0x8000, scoped, tag = 'input window, operand 8, single buffered']
    #allocation3 [shape = 's32[2]{0}', space=sflag, size = 0x8, scoped, tag = 'scoped memory for transformer_forward.5']
    #allocation4 [shape = 'u8[32768]{0}', space=vmem, size = 0x8000, scoped, tag = 'input window, operand 10, single buffered']
    #allocation5 [shape = 's32[1]{0}', space=sflag, size = 0x4, scoped, tag = 'scoped memory for transformer_forward.5']
    %19 = vsyncpa [#allocation3], 0
    %20 = vsyncpa [#allocation5], 0
    loop: start=0, step=1, limit=4
    $region2: #{transformer_forward.5} parent=1 // loop_pre_header
      _
    $region3: #{transformer_forward.5} parent=1 // loop_header
      %s22 = sphi 0, %s26
      %p23 = scmp.ge.s32.totalorder %s22, 4
      %s32 = sphi 0, %s34
      %s35 = sphi 0, %s32
      %s36 = sphi 0, %s35
      %s52 = sphi 0, %s36
      %s58 = sphi 0, %s60
      %s61 = sphi 0, %s58
      %s62 = sphi 0, %s61
      %s78 = sphi 0, %s62
      %s82 = sphi 0, %s82
      %s84 = sphi 0, %s82
      %s85 = sphi 0, %s84
      %s99 = sphi 0, %s85
      %s103 = sphi 0, %s103
      %s105 = sphi 0, %s103
      %s106 = sphi 0, %s105
      %s120 = sphi 0, %s106
      %s124 = sphi 0, %s124
      %s126 = sphi 0, %s124
      %s127 = sphi 0, %s126
      %s141 = sphi 0, %s127
      %s145 = sphi 0, %s145
      %s147 = sphi 0, %s145
      %s148 = sphi 0, %s147
      %s162 = sphi 0, %s148
      %s166 = sphi 0, %s166
      %s168 = sphi 0, %s166
      %s169 = sphi 0, %s168
      %s183 = sphi 0, %s169
      %s187 = sphi 0, %s187
      %s189 = sphi 0, %s187
      %s190 = sphi 0, %s189
      %s204 = sphi 0, %s190
      %s208 = sphi 0, %s208
      %s210 = sphi 0, %s208
      %s211 = sphi 0, %s210
      %s225 = sphi 0, %s211
      %s229 = sphi 0, %s229
      %s231 = sphi 0, %s229
      %s232 = sphi 0, %s231
      %s246 = sphi 0, %s232
      %s250 = sphi 0, %s250
      %s252 = sphi 0, %s250
      %s253 = sphi 0, %s252
      %s267 = sphi 0, %s253
      %s271 = sphi 0, %s271
      %s273 = sphi 0, %s271
      %s274 = sphi 0, %s273
      %s288 = sphi 0, %s274
      %s292 = sphi 0, %s292
      %s294 = sphi 0, %s292
      %s295 = sphi 0, %s294
      %s309 = sphi 0, %s295
      %s313 = sphi 0, %s313
      %s315 = sphi 0, %s313
      %s316 = sphi 0, %s315
      %s330 = sphi 0, %s316
      %s336 = sphi 0, %s338
      %s339 = sphi 0, %s336
      %s340 = sphi 0, %s339
      %s356 = sphi 0, %s340
    $region4: #{transformer_forward.5} parent=1 // loop_header_branch
      %25 = sbr.rel (%p23) target = $region8
    $region5: #{transformer_forward.5} parent=1 // loop_body
      %s27 = ssub.s32 %s22, 1
      %s28 = ssub.s32 %s22, 2
      %s29 = sadd.s32 %s22, 1
      %s30 = ssub.s32 %s22, %s29
      %p31 = scmp.eq.s32.totalorder %s30, 0
      %s33 = sadd.s32 %s32, 1
      %s34 = scalar_select %p31, %s32, %s33
      %p37 = pneg %p31
      %p38 = scmp.eq.s32.totalorder %s22, 1
      %p39 = por %p37, %p38
      %p40 = scmp.ne.s32.totalorder %s32, %s35
      %p41 = scmp.eq.s32.totalorder %s22, 0
      %p42 = por %p40, %p41
      %p43 = scmp.ne.s32.totalorder %s32, %s35
      %p44 = scmp.eq.s32.totalorder %s27, 1
      %p45 = por %p43, %p44
      %p46 = scmp.ne.s32.totalorder %s35, %s36
      %p47 = scmp.eq.s32.totalorder %s27, 0
      %p48 = por %p46, %p47
      %p49 = scmp.ne.s32.totalorder %s35, %s36
      %p50 = scmp.eq.s32.totalorder %s28, 1
      %p51 = por %p49, %p50
      %p53 = scmp.ne.s32.totalorder %s36, %s52
      %p54 = scmp.eq.s32.totalorder %s28, 0
      %p55 = por %p53, %p54
      %s56 = ssub.s32 %s22, %s29
      %p57 = scmp.eq.s32.totalorder %s56, 0
      %s59 = sadd.s32 %s58, 1
      %s60 = scalar_select %p57, %s58, %s59
      %p63 = pneg %p57
      %p64 = scmp.eq.s32.totalorder %s22, 1
      %p65 = por %p63, %p64
      %p66 = scmp.ne.s32.totalorder %s58, %s61
      %p67 = scmp.eq.s32.totalorder %s22, 0
      %p68 = por %p66, %p67
      %p69 = scmp.ne.s32.totalorder %s58, %s61
      %p70 = scmp.eq.s32.totalorder %s27, 1
      %p71 = por %p69, %p70
      %p72 = scmp.ne.s32.totalorder %s61, %s62
      %p73 = scmp.eq.s32.totalorder %s27, 0
      %p74 = por %p72, %p73
      %p75 = scmp.ne.s32.totalorder %s61, %s62
      %p76 = scmp.eq.s32.totalorder %s28, 1
      %p77 = por %p75, %p76
      %p79 = scmp.ne.s32.totalorder %s62, %s78
      %p80 = scmp.eq.s32.totalorder %s28, 0
      %p81 = por %p79, %p80
      %s83 = sadd.s32 %s82, 1
      %p86 = scmp.eq.s32.totalorder %s22, 1
      %p87 = scmp.ne.s32.totalorder %s82, %s84
      %p88 = scmp.eq.s32.totalorder %s22, 0
      %p89 = por %p87, %p88
      %p90 = scmp.ne.s32.totalorder %s82, %s84
      %p91 = scmp.eq.s32.totalorder %s27, 1
      %p92 = por %p90, %p91
      %p93 = scmp.ne.s32.totalorder %s84, %s85
      %p94 = scmp.eq.s32.totalorder %s27, 0
      %p95 = por %p93, %p94
      %p96 = scmp.ne.s32.totalorder %s84, %s85
      %p97 = scmp.eq.s32.totalorder %s28, 1
      %p98 = por %p96, %p97
      %p100 = scmp.ne.s32.totalorder %s85, %s99
      %p101 = scmp.eq.s32.totalorder %s28, 0
      %p102 = por %p100, %p101
      %s104 = sadd.s32 %s103, 1
      %p107 = scmp.eq.s32.totalorder %s22, 1
      %p108 = scmp.ne.s32.totalorder %s103, %s105
      %p109 = scmp.eq.s32.totalorder %s22, 0
      %p110 = por %p108, %p109
      %p111 = scmp.ne.s32.totalorder %s103, %s105
      %p112 = scmp.eq.s32.totalorder %s27, 1
      %p113 = por %p111, %p112
      %p114 = scmp.ne.s32.totalorder %s105, %s106
      %p115 = scmp.eq.s32.totalorder %s27, 0
      %p116 = por %p114, %p115
      %p117 = scmp.ne.s32.totalorder %s105, %s106
      %p118 = scmp.eq.s32.totalorder %s28, 1
      %p119 = por %p117, %p118
      %p121 = scmp.ne.s32.totalorder %s106, %s120
      %p122 = scmp.eq.s32.totalorder %s28, 0
      %p123 = por %p121, %p122
      %s125 = sadd.s32 %s124, 1
      %p128 = scmp.eq.s32.totalorder %s22, 1
      %p129 = scmp.ne.s32.totalorder %s124, %s126
      %p130 = scmp.eq.s32.totalorder %s22, 0
      %p131 = por %p129, %p130
      %p132 = scmp.ne.s32.totalorder %s124, %s126
      %p133 = scmp.eq.s32.totalorder %s27, 1
      %p134 = por %p132, %p133
      %p135 = scmp.ne.s32.totalorder %s126, %s127
      %p136 = scmp.eq.s32.totalorder %s27, 0
      %p137 = por %p135, %p136
      %p138 = scmp.ne.s32.totalorder %s126, %s127
      %p139 = scmp.eq.s32.totalorder %s28, 1
      %p140 = por %p138, %p139
      %p142 = scmp.ne.s32.totalorder %s127, %s141
      %p143 = scmp.eq.s32.totalorder %s28, 0
      %p144 = por %p142, %p143
      %s146 = sadd.s32 %s145, 1
      %p149 = scmp.eq.s32.totalorder %s22, 1
      %p150 = scmp.ne.s32.totalorder %s145, %s147
      %p151 = scmp.eq.s32.totalorder %s22, 0
      %p152 = por %p150, %p151
      %p153 = scmp.ne.s32.totalorder %s145, %s147
      %p154 = scmp.eq.s32.totalorder %s27, 1
      %p155 = por %p153, %p154
      %p156 = scmp.ne.s32.totalorder %s147, %s148
      %p157 = scmp.eq.s32.totalorder %s27, 0
      %p158 = por %p156, %p157
      %p159 = scmp.ne.s32.totalorder %s147, %s148
      %p160 = scmp.eq.s32.totalorder %s28, 1
      %p161 = por %p159, %p160
      %p163 = scmp.ne.s32.totalorder %s148, %s162
      %p164 = scmp.eq.s32.totalorder %s28, 0
      %p165 = por %p163, %p164
      %s167 = sadd.s32 %s166, 1
      %p170 = scmp.eq.s32.totalorder %s22, 1
      %p171 = scmp.ne.s32.totalorder %s166, %s168
      %p172 = scmp.eq.s32.totalorder %s22, 0
      %p173 = por %p171, %p172
      %p174 = scmp.ne.s32.totalorder %s166, %s168
      %p175 = scmp.eq.s32.totalorder %s27, 1
      %p176 = por %p174, %p175
      %p177 = scmp.ne.s32.totalorder %s168, %s169
      %p178 = scmp.eq.s32.totalorder %s27, 0
      %p179 = por %p177, %p178
      %p180 = scmp.ne.s32.totalorder %s168, %s169
      %p181 = scmp.eq.s32.totalorder %s28, 1
      %p182 = por %p180, %p181
      %p184 = scmp.ne.s32.totalorder %s169, %s183
      %p185 = scmp.eq.s32.totalorder %s28, 0
      %p186 = por %p184, %p185
      %s188 = sadd.s32 %s187, 1
      %p191 = scmp.eq.s32.totalorder %s22, 1
      %p192 = scmp.ne.s32.totalorder %s187, %s189
      %p193 = scmp.eq.s32.totalorder %s22, 0
      %p194 = por %p192, %p193
      %p195 = scmp.ne.s32.totalorder %s187, %s189
      %p196 = scmp.eq.s32.totalorder %s27, 1
      %p197 = por %p195, %p196
      %p198 = scmp.ne.s32.totalorder %s189, %s190
      %p199 = scmp.eq.s32.totalorder %s27, 0
      %p200 = por %p198, %p199
      %p201 = scmp.ne.s32.totalorder %s189, %s190
      %p202 = scmp.eq.s32.totalorder %s28, 1
      %p203 = por %p201, %p202
      %p205 = scmp.ne.s32.totalorder %s190, %s204
      %p206 = scmp.eq.s32.totalorder %s28, 0
      %p207 = por %p205, %p206
      %s209 = sadd.s32 %s208, 1
      %p212 = scmp.eq.s32.totalorder %s22, 1
      %p213 = scmp.ne.s32.totalorder %s208, %s210
      %p214 = scmp.eq.s32.totalorder %s22, 0
      %p215 = por %p213, %p214
      %p216 = scmp.ne.s32.totalorder %s208, %s210
      %p217 = scmp.eq.s32.totalorder %s27, 1
      %p218 = por %p216, %p217
      %p219 = scmp.ne.s32.totalorder %s210, %s211
      %p220 = scmp.eq.s32.totalorder %s27, 0
      %p221 = por %p219, %p220
      %p222 = scmp.ne.s32.totalorder %s210, %s211
      %p223 = scmp.eq.s32.totalorder %s28, 1
      %p224 = por %p222, %p223
      %p226 = scmp.ne.s32.totalorder %s211, %s225
      %p227 = scmp.eq.s32.totalorder %s28, 0
      %p228 = por %p226, %p227
      %s230 = sadd.s32 %s229, 1
      %p233 = scmp.eq.s32.totalorder %s22, 1
      %p234 = scmp.ne.s32.totalorder %s229, %s231
      %p235 = scmp.eq.s32.totalorder %s22, 0
      %p236 = por %p234, %p235
      %p237 = scmp.ne.s32.totalorder %s229, %s231
      %p238 = scmp.eq.s32.totalorder %s27, 1
      %p239 = por %p237, %p238
      %p240 = scmp.ne.s32.totalorder %s231, %s232
      %p241 = scmp.eq.s32.totalorder %s27, 0
      %p242 = por %p240, %p241
      %p243 = scmp.ne.s32.totalorder %s231, %s232
      %p244 = scmp.eq.s32.totalorder %s28, 1
      %p245 = por %p243, %p244
      %p247 = scmp.ne.s32.totalorder %s232, %s246
      %p248 = scmp.eq.s32.totalorder %s28, 0
      %p249 = por %p247, %p248
      %s251 = sadd.s32 %s250, 1
      %p254 = scmp.eq.s32.totalorder %s22, 1
      %p255 = scmp.ne.s32.totalorder %s250, %s252
      %p256 = scmp.eq.s32.totalorder %s22, 0
      %p257 = por %p255, %p256
      %p258 = scmp.ne.s32.totalorder %s250, %s252
      %p259 = scmp.eq.s32.totalorder %s27, 1
      %p260 = por %p258, %p259
      %p261 = scmp.ne.s32.totalorder %s252, %s253
      %p262 = scmp.eq.s32.totalorder %s27, 0
      %p263 = por %p261, %p262
      %p264 = scmp.ne.s32.totalorder %s252, %s253
      %p265 = scmp.eq.s32.totalorder %s28, 1
      %p266 = por %p264, %p265
      %p268 = scmp.ne.s32.totalorder %s253, %s267
      %p269 = scmp.eq.s32.totalorder %s28, 0
      %p270 = por %p268, %p269
      %s272 = sadd.s32 %s271, 1
      %p275 = scmp.eq.s32.totalorder %s22, 1
      %p276 = scmp.ne.s32.totalorder %s271, %s273
      %p277 = scmp.eq.s32.totalorder %s22, 0
      %p278 = por %p276, %p277
      %p279 = scmp.ne.s32.totalorder %s271, %s273
      %p280 = scmp.eq.s32.totalorder %s27, 1
      %p281 = por %p279, %p280
      %p282 = scmp.ne.s32.totalorder %s273, %s274
      %p283 = scmp.eq.s32.totalorder %s27, 0
      %p284 = por %p282, %p283
      %p285 = scmp.ne.s32.totalorder %s273, %s274
      %p286 = scmp.eq.s32.totalorder %s28, 1
      %p287 = por %p285, %p286
      %p289 = scmp.ne.s32.totalorder %s274, %s288
      %p290 = scmp.eq.s32.totalorder %s28, 0
      %p291 = por %p289, %p290
      %s293 = sadd.s32 %s292, 1
      %p296 = scmp.eq.s32.totalorder %s22, 1
      %p297 = scmp.ne.s32.totalorder %s292, %s294
      %p298 = scmp.eq.s32.totalorder %s22, 0
      %p299 = por %p297, %p298
      %p300 = scmp.ne.s32.totalorder %s292, %s294
      %p301 = scmp.eq.s32.totalorder %s27, 1
      %p302 = por %p300, %p301
      %p303 = scmp.ne.s32.totalorder %s294, %s295
      %p304 = scmp.eq.s32.totalorder %s27, 0
      %p305 = por %p303, %p304
      %p306 = scmp.ne.s32.totalorder %s294, %s295
      %p307 = scmp.eq.s32.totalorder %s28, 1
      %p308 = por %p306, %p307
      %p310 = scmp.ne.s32.totalorder %s295, %s309
      %p311 = scmp.eq.s32.totalorder %s28, 0
      %p312 = por %p310, %p311
      %s314 = sadd.s32 %s313, 1
      %p317 = scmp.eq.s32.totalorder %s22, 1
      %p318 = scmp.ne.s32.totalorder %s313, %s315
      %p319 = scmp.eq.s32.totalorder %s22, 0
      %p320 = por %p318, %p319
      %p321 = scmp.ne.s32.totalorder %s313, %s315
      %p322 = scmp.eq.s32.totalorder %s27, 1
      %p323 = por %p321, %p322
      %p324 = scmp.ne.s32.totalorder %s315, %s316
      %p325 = scmp.eq.s32.totalorder %s27, 0
      %p326 = por %p324, %p325
      %p327 = scmp.ne.s32.totalorder %s315, %s316
      %p328 = scmp.eq.s32.totalorder %s28, 1
      %p329 = por %p327, %p328
      %p331 = scmp.ne.s32.totalorder %s316, %s330
      %p332 = scmp.eq.s32.totalorder %s28, 0
      %p333 = por %p331, %p332
      %s334 = ssub.s32 %s22, %s29
      %p335 = scmp.eq.s32.totalorder %s334, 0
      %s337 = sadd.s32 %s336, 1
      %s338 = scalar_select %p335, %s336, %s337
      %p341 = pneg %p335
      %p342 = scmp.eq.s32.totalorder %s22, 1
      %p343 = por %p341, %p342
      %p344 = scmp.ne.s32.totalorder %s336, %s339
      %p345 = scmp.eq.s32.totalorder %s22, 0
      %p346 = por %p344, %p345
      %p347 = scmp.ne.s32.totalorder %s336, %s339
      %p348 = scmp.eq.s32.totalorder %s27, 1
      %p349 = por %p347, %p348
      %p350 = scmp.ne.s32.totalorder %s339, %s340
      %p351 = scmp.eq.s32.totalorder %s27, 0
      %p352 = por %p350, %p351
      %p353 = scmp.ne.s32.totalorder %s339, %s340
      %p354 = scmp.eq.s32.totalorder %s28, 1
      %p355 = por %p353, %p354
      %p357 = scmp.ne.s32.totalorder %s340, %s356
      %p358 = scmp.eq.s32.totalorder %s28, 0
      %p359 = por %p357, %p358
      %p360 = scmp.le.s32.totalorder 1, %s22
      %p361 = scmp.lt.s32.totalorder %s22, 3
      %p362 = pnand %p360, %p361
      %p363 = pneg %p362
      // Predicated region
      $region9: #{transformer_forward.5} parent=5 // pred_check
        _
      $region10: #{transformer_forward.5} parent=5 // pred_check_branch
        %365 = sbr.rel (%p362) target = $region12
      $region11: #{transformer_forward.5} parent=5 // pred_region
        %s366 = ssub.s32 %s22, 1
        // Predicated region
        $region13: #{transformer_forward.5} parent=11 // pred_check
          %p367 = pneg %p95
        $region14: #{transformer_forward.5} parent=11 // pred_check_branch
          %369 = sbr.rel (%p367) target = $region16
        $region15: #{transformer_forward.5} parent=11 // pred_region
          _
        $region16: #{transformer_forward.5} parent=11 // pred_fallthru
          _
        // Predicated region
        $region17: #{transformer_forward.5} parent=11 // pred_check
          %p370 = pneg %p116
        $region18: #{transformer_forward.5} parent=11 // pred_check_branch
          %372 = sbr.rel (%p370) target = $region20
        $region19: #{transformer_forward.5} parent=11 // pred_region
          _
        $region20: #{transformer_forward.5} parent=11 // pred_fallthru
          _
        // Predicated region
        $region21: #{transformer_forward.5} parent=11 // pred_check
          %p373 = pneg %p137
        $region22: #{transformer_forward.5} parent=11 // pred_check_branch
          %375 = sbr.rel (%p373) target = $region24
        $region23: #{transformer_forward.5} parent=11 // pred_region
          _
        $region24: #{transformer_forward.5} parent=11 // pred_fallthru
          _
        // Predicated region
        $region25: #{transformer_forward.5} parent=11 // pred_check
          %p376 = pneg %p158
        $region26: #{transformer_forward.5} parent=11 // pred_check_branch
          %378 = sbr.rel (%p376) target = $region28
        $region27: #{transformer_forward.5} parent=11 // pred_region
          _
        $region28: #{transformer_forward.5} parent=11 // pred_fallthru
          _
        // Predicated region
        $region29: #{transformer_forward.5} parent=11 // pred_check
          %p379 = pneg %p179
        $region30: #{transformer_forward.5} parent=11 // pred_check_branch
          %381 = sbr.rel (%p379) target = $region32
        $region31: #{transformer_forward.5} parent=11 // pred_region
          _
        $region32: #{transformer_forward.5} parent=11 // pred_fallthru
          _
        // Predicated region
        $region33: #{transformer_forward.5} parent=11 // pred_check
          %p382 = pneg %p200
        $region34: #{transformer_forward.5} parent=11 // pred_check_branch
          %384 = sbr.rel (%p382) target = $region36
        $region35: #{transformer_forward.5} parent=11 // pred_region
          _
        $region36: #{transformer_forward.5} parent=11 // pred_fallthru
          _
        // Predicated region
        $region37: #{transformer_forward.5} parent=11 // pred_check
          %p385 = pneg %p221
        $region38: #{transformer_forward.5} parent=11 // pred_check_branch
          %387 = sbr.rel (%p385) target = $region40
        $region39: #{transformer_forward.5} parent=11 // pred_region
          %389 = vsyncadd [#allocation3], 0
          %s390 = sshll.u32 %s8, 4
          %s391 = int_to_ptr.hbm [resolvable:$true] %s390
          %s392 = sshll.u32 [#allocation2], 4
          %s393 = int_to_ptr.vmem [resolvable:$true] %s392
          %398 = dma.hbm_to_vmem [thread:$0]  %s391, 1024, %s393, [#allocation3], 64, 64, 4
        $region40: #{transformer_forward.5} parent=11 // pred_fallthru
          _
        // Predicated region
        $region41: #{transformer_forward.5} parent=11 // pred_check
          %p399 = pneg %p242
        $region42: #{transformer_forward.5} parent=11 // pred_check_branch
          %401 = sbr.rel (%p399) target = $region44
        $region43: #{transformer_forward.5} parent=11 // pred_region
          _
        $region44: #{transformer_forward.5} parent=11 // pred_fallthru
          _
        // Predicated region
        $region45: #{transformer_forward.5} parent=11 // pred_check
          %p402 = pneg %p263
        $region46: #{transformer_forward.5} parent=11 // pred_check_branch
          %404 = sbr.rel (%p402) target = $region48
        $region47: #{transformer_forward.5} parent=11 // pred_region
          %406 = vsyncadd [#allocation5], 0
          %s407 = sshll.u32 %s10, 4
          %s408 = int_to_ptr.hbm [resolvable:$true] %s407
          %s409 = sshll.u32 [#allocation4], 4
          %s410 = int_to_ptr.vmem [resolvable:$true] %s409
          %415 = dma.hbm_to_vmem [thread:$0]  %s408, 1024, %s410, [#allocation5], 64, 64, 4
        $region48: #{transformer_forward.5} parent=11 // pred_fallthru
          _
        // Predicated region
        $region49: #{transformer_forward.5} parent=11 // pred_check
          %p416 = pneg %p284
        $region50: #{transformer_forward.5} parent=11 // pred_check_branch
          %418 = sbr.rel (%p416) target = $region52
        $region51: #{transformer_forward.5} parent=11 // pred_region
          _
        $region52: #{transformer_forward.5} parent=11 // pred_fallthru
          _
        // Predicated region
        $region53: #{transformer_forward.5} parent=11 // pred_check
          %p419 = pneg %p305
        $region54: #{transformer_forward.5} parent=11 // pred_check_branch
          %421 = sbr.rel (%p419) target = $region56
        $region55: #{transformer_forward.5} parent=11 // pred_region
          _
        $region56: #{transformer_forward.5} parent=11 // pred_fallthru
          _
        // Predicated region
        $region57: #{transformer_forward.5} parent=11 // pred_check
          %p422 = pneg %p326
        $region58: #{transformer_forward.5} parent=11 // pred_check_branch
          %424 = sbr.rel (%p422) target = $region60
        $region59: #{transformer_forward.5} parent=11 // pred_region
          _
        $region60: #{transformer_forward.5} parent=11 // pred_fallthru
          _
      $region12: #{transformer_forward.5} parent=5 // pred_fallthru
        _
      %p425 = scmp.lt.s32.totalorder %s22, 2
      // Predicated region
      $region61: #{transformer_forward.5} parent=5 // pred_check
        %p426 = pneg %p425
      $region62: #{transformer_forward.5} parent=5 // pred_check_branch
        %428 = sbr.rel (%p426) target = $region64
      $region63: #{transformer_forward.5} parent=5 // pred_region
        // Predicated region
        $region65: #{transformer_forward.5} parent=63 // pred_check
          %p429 = pneg %p42
        $region66: #{transformer_forward.5} parent=63 // pred_check_branch
          %431 = sbr.rel (%p429) target = $region68
        $region67: #{transformer_forward.5} parent=63 // pred_region
          %p432 = scmp.lt.s32.totalorder %s22, 1
          %s433 = scalar_select %p432, %s22, 1
          %s434 = smul.addr %s433, 2
          %s435 = smul.addr %s434, 8
          %s436 = scalar_lea.vmem %s0, %s435
        $region68: #{transformer_forward.5} parent=63 // pred_fallthru
          _
        // Predicated region
        $region69: #{transformer_forward.5} parent=63 // pred_check
          %p437 = pneg %p68
        $region70: #{transformer_forward.5} parent=63 // pred_check_branch
          %439 = sbr.rel (%p437) target = $region72
        $region71: #{transformer_forward.5} parent=63 // pred_region
          %p440 = scmp.lt.s32.totalorder %s22, 1
          %s441 = scalar_select %p440, %s22, 1
          %s442 = scalar_lea.vmem %s1, %s441
        $region72: #{transformer_forward.5} parent=63 // pred_fallthru
          _
      $region64: #{transformer_forward.5} parent=5 // pred_fallthru
        _
      %p443 = scmp.le.s32.totalorder 1, %s22
      %p444 = scmp.lt.s32.totalorder %s22, 3
      %p445 = pnand %p443, %p444
      %p446 = pneg %p445
      // Predicated region
      $region73: #{transformer_forward.5} parent=5 // pred_check
        _
      $region74: #{transformer_forward.5} parent=5 // pred_check_branch
        %448 = sbr.rel (%p445) target = $region76
      $region75: #{transformer_forward.5} parent=5 // pred_region
        %s449 = ssub.s32 %s22, 1
        // Predicated region
        $region77: #{transformer_forward.5} parent=75 // pred_check
          %p450 = pneg %p221
        $region78: #{transformer_forward.5} parent=75 // pred_check_branch
          %452 = sbr.rel (%p450) target = $region80
        $region79: #{transformer_forward.5} parent=75 // pred_region
          %454 = dma.done [#allocation3], 1024
        $region80: #{transformer_forward.5} parent=75 // pred_fallthru
          _
        // Predicated region
        $region81: #{transformer_forward.5} parent=75 // pred_check
          %p455 = pneg %p263
        $region82: #{transformer_forward.5} parent=75 // pred_check_branch
          %457 = sbr.rel (%p455) target = $region84
        $region83: #{transformer_forward.5} parent=75 // pred_region
          %459 = dma.done [#allocation5], 1024
        $region84: #{transformer_forward.5} parent=75 // pred_fallthru
          _
        %p460 = scmp.lt.s32.totalorder %s27, 1
        %s461 = scalar_select %p460, %s27, 1
        %s462 = smul.addr %s461, 2
        %s463 = smul.addr %s462, 8
        %s464 = scalar_lea.vmem %s0, %s463
        %p465 = pneg %p48
        %p466 = pneg %p45
        %p467 = scmp.lt.s32.totalorder %s27, 1
        %s468 = scalar_select %p467, %s27, 1
        %s469 = scalar_lea.vmem %s1, %s468
        %p470 = pneg %p74
        %p471 = pneg %p71
        %p472 = pneg %p95
        %p473 = pneg %p92
        %p474 = pneg %p116
        %p475 = pneg %p113
        %p476 = pneg %p137
        %p477 = pneg %p134
        %p478 = pneg %p158
        %p479 = pneg %p155
        %p480 = pneg %p179
        %p481 = pneg %p176
        %p482 = pneg %p200
        %p483 = pneg %p197
        %p484 = pneg %p221
        %p485 = pneg %p218
        %p486 = pneg %p242
        %p487 = pneg %p239
        %p488 = pneg %p263
        %p489 = pneg %p260
        %p490 = pneg %p284
        %p491 = pneg %p281
        %p492 = pneg %p305
        %p493 = pneg %p302
        %p494 = pneg %p326
        %p495 = pneg %p323
        %p496 = pneg %p352
        %p497 = pneg %p349
        %p498 = scmp.lt.s32.totalorder %s27, 1
        %s499 = scalar_select %p498, %s27, 1
        %s500 = smul.addr %s499, 2
        %s501 = smul.addr %s500, 8
        %s502 = scalar_lea.vmem %s14, %s501
        %p503 = scmp.lt.s32.totalorder %s27, 1
        %s504 = scalar_select %p503, %s27, 1
        %s505 = smul.addr %s504, 2
        %s506 = smul.addr %s505, 8
        %s507 = scalar_lea.vmem %s0, %s506
        %p508 = scmp.lt.s32.totalorder %s27, 1
        %s509 = scalar_select %p508, %s27, 1
        %s510 = scalar_lea.vmem %s1, %s509
        %p511 = scmp.lt.s32.totalorder %s27, 1
        %s512 = scalar_select %p511, %s27, 1
        %s513 = smul.addr %s512, 2
        %s514 = smul.addr %s513, 8
        %s515 = scalar_lea.vmem %s14, %s514
        %v516 = vld [vmem:[%s507] sm:$0xff]
        %v517 = vld [vmem:[%s507 + $0x8] sm:$0xf]
        %v518 = vpack.c.bf16 %v517, %v516
        %v519 = vld [vmem:[%s2] sm:$0xff]
        %v520 = vld [vmem:[%s2 + $0x8] sm:$0xf]
        %v521 = vld [vmem:[%s2 + $0xc] sm:$0xff]
        %v522 = vld [vmem:[%s2 + $0x14] sm:$0xf]
        %v523 = vld [vmem:[%s2 + $0x18] sm:$0xff]
        %v524 = vld [vmem:[%s2 + $0x20] sm:$0xf]
        %v525 = vld [vmem:[%s2 + $0x24] sm:$0xff]
        %v526 = vld [vmem:[%s2 + $0x2c] sm:$0xf]
        %v527 = vld [vmem:[%s2 + $0x30] sm:$0xff]
        %v528 = vld [vmem:[%s2 + $0x38] sm:$0xf]
        %v529 = vld [vmem:[%s2 + $0x3c] sm:$0xff]
        %v530 = vld [vmem:[%s2 + $0x44] sm:$0xf]
        %v531 = vld [vmem:[%s2 + $0x48] sm:$0xff]
        %v532 = vld [vmem:[%s2 + $0x50] sm:$0xf]
        %v533 = vld [vmem:[%s2 + $0x54] sm:$0xff]
        %v534 = vld [vmem:[%s2 + $0x5c] sm:$0xf]
        %v535 = vld [vmem:[%s2 + $0x60] sm:$0xff]
        %v536 = vld [vmem:[%s2 + $0x68] sm:$0xf]
        %v537 = vld [vmem:[%s2 + $0x6c] sm:$0xff]
        %v538 = vld [vmem:[%s2 + $0x74] sm:$0xf]
        %v539 = vld [vmem:[%s2 + $0x78] sm:$0xff]
        %v540 = vld [vmem:[%s2 + $0x80] sm:$0xf]
        %v541 = vld [vmem:[%s2 + $0x84] sm:$0xff]
        %v542 = vld [vmem:[%s2 + $0x8c] sm:$0xf]
        %v543 = vld [vmem:[%s2 + $0x90] sm:$0xff]
        %v544 = vld [vmem:[%s2 + $0x98] sm:$0xf]
        %v545 = vld [vmem:[%s2 + $0x9c] sm:$0xff]
        %v546 = vld [vmem:[%s2 + $0xa4] sm:$0xf]
        %v547 = vld [vmem:[%s2 + $0xa8] sm:$0xff]
        %v548 = vld [vmem:[%s2 + $0xb0] sm:$0xf]
        %v549 = vld [vmem:[%s2 + $0xb4] sm:$0xff]
        %v550 = vld [vmem:[%s2 + $0xbc] sm:$0xf]
        %v551 = vld [vmem:[%s3] sm:$0x7]
        %v553 = vperm.slane %v551, 0
        %v554 = vperm.slane %v551, 1
        %v555 = vperm.slane %v551, 2
        %v591 = vunpack.c.l.b16 %v519
        %v592 = vunpack.c.h.b16 %v519
        %v593 = vunpack.c.l.b16 %v520
        %v594 = vunpack.c.l.b16 %v521
        %v595 = vunpack.c.h.b16 %v521
        %v596 = vunpack.c.l.b16 %v522
        %v597 = vunpack.c.l.b16 %v523
        %v598 = vunpack.c.h.b16 %v523
        %v599 = vunpack.c.l.b16 %v524
        %v600 = vunpack.c.l.b16 %v525
        %v601 = vunpack.c.h.b16 %v525
        %v602 = vunpack.c.l.b16 %v526
        %v603 = vunpack.c.l.b16 %v527
        %v604 = vunpack.c.h.b16 %v527
        %v605 = vunpack.c.l.b16 %v528
        %v606 = vunpack.c.l.b16 %v529
        %v607 = vunpack.c.h.b16 %v529
        %v608 = vunpack.c.l.b16 %v530
        %v609 = vunpack.c.l.b16 %v531
        %v610 = vunpack.c.h.b16 %v531
        %v611 = vunpack.c.l.b16 %v532
        %v612 = vunpack.c.l.b16 %v533
        %v613 = vunpack.c.h.b16 %v533
        %v614 = vunpack.c.l.b16 %v534
        %v615 = vunpack.c.l.b16 %v535
        %v616 = vunpack.c.h.b16 %v535
        %v617 = vunpack.c.l.b16 %v536
        %v618 = vunpack.c.l.b16 %v537
        %v619 = vunpack.c.h.b16 %v537
        %v620 = vunpack.c.l.b16 %v538
        %v621 = vunpack.c.l.b16 %v539
        %v622 = vunpack.c.h.b16 %v539
        %v623 = vunpack.c.l.b16 %v540
        %v624 = vunpack.c.l.b16 %v541
        %v625 = vunpack.c.h.b16 %v541
        %v626 = vunpack.c.l.b16 %v542
        %v627 = vunpack.c.l.b16 %v543
        %v628 = vunpack.c.h.b16 %v543
        %v629 = vunpack.c.l.b16 %v544
        %v630 = vunpack.c.l.b16 %v545
        %v631 = vunpack.c.h.b16 %v545
        %v632 = vunpack.c.l.b16 %v546
        %v633 = vunpack.c.l.b16 %v547
        %v634 = vunpack.c.h.b16 %v547
        %v635 = vunpack.c.l.b16 %v548
        %v636 = vunpack.c.l.b16 %v549
        %v637 = vunpack.c.h.b16 %v549
        %v638 = vunpack.c.l.b16 %v550
        %v639 = vpack.c.b16 %v594, %v591
        %v640 = vpack.c.b16 %v595, %v592
        %v641 = vpack.c.b16 %v596, %v593
        %v642 = vpack.c.b16 %v600, %v597
        %v643 = vpack.c.b16 %v601, %v598
        %v644 = vpack.c.b16 %v602, %v599
        %v645 = vpack.c.b16 %v606, %v603
        %v646 = vpack.c.b16 %v607, %v604
        %v647 = vpack.c.b16 %v608, %v605
        %v648 = vpack.c.b16 %v612, %v609
        %v649 = vpack.c.b16 %v613, %v610
        %v650 = vpack.c.b16 %v614, %v611
        %v651 = vpack.c.b16 %v618, %v615
        %v652 = vpack.c.b16 %v619, %v616
        %v653 = vpack.c.b16 %v620, %v617
        %v654 = vpack.c.b16 %v624, %v621
        %v655 = vpack.c.b16 %v625, %v622
        %v656 = vpack.c.b16 %v626, %v623
        %v657 = vpack.c.b16 %v630, %v627
        %v658 = vpack.c.b16 %v631, %v628
        %v659 = vpack.c.b16 %v632, %v629
        %v660 = vpack.c.b16 %v636, %v633
        %v661 = vpack.c.b16 %v637, %v634
        %v662 = vpack.c.b16 %v638, %v635
        %687 = vmatpush.bf16.msra.mxu0 %v660
        %688 = vmatpush.bf16.msra.mxu0 %v657
        %689 = vmatpush.bf16.msra.mxu0 %v654
        %690 = vmatpush.bf16.msra.mxu0 %v651
        %691 = vmatpush.bf16.msra.mxu0 %v648
        %692 = vmatpush.bf16.msra.mxu0 %v645
        %693 = vmatpush.bf16.msra.mxu0 %v642
        %694 = vmatpush.bf16.msra.mxu0 %v639
        %695 = vmatmul.bf16.gmra.mxu0 %v518
        %v696 = vpop.f32.mrf.mxu0
        %v697 = vadd.f32 %v553, %v696
        %v698 = vpop.f32.mrf.mxu0
        %v699 = vadd.f32 %v553, %v698
        %700 = vdwg.mxu0
        %701 = vmatpush.bf16.msra.mxu0 %v661
        %702 = vmatpush.bf16.msra.mxu0 %v658
        %703 = vmatpush.bf16.msra.mxu0 %v655
        %704 = vmatpush.bf16.msra.mxu0 %v652
        %705 = vmatpush.bf16.msra.mxu0 %v649
        %706 = vmatpush.bf16.msra.mxu0 %v646
        %707 = vmatpush.bf16.msra.mxu0 %v643
        %708 = vmatpush.bf16.msra.mxu0 %v640
        %709 = vmatmul.bf16.gmra.mxu0 %v518
        %v710 = vpop.f32.mrf.mxu0
        %v711 = vadd.f32 %v554, %v710
        %v712 = vpop.f32.mrf.mxu0
        %v713 = vadd.f32 %v554, %v712
        %714 = vdwg.mxu0
        %715 = vmatpush.bf16.msra.mxu0 %v662
        %716 = vmatpush.bf16.msra.mxu0 %v659
        %717 = vmatpush.bf16.msra.mxu0 %v656
        %718 = vmatpush.bf16.msra.mxu0 %v653
        %719 = vmatpush.bf16.msra.mxu0 %v650
        %720 = vmatpush.bf16.msra.mxu0 %v647
        %721 = vmatpush.bf16.msra.mxu0 %v644
        %722 = vmatpush.bf16.msra.mxu0 %v641
        %723 = vmatmul.bf16.gmra.mxu0 %v518
        %v724 = vpop.f32.mrf.mxu0
        %v725 = vadd.f32 %v555, %v724
        %v726 = vpop.f32.mrf.mxu0
        %v727 = vadd.f32 %v555, %v726
        %728 = vdwg.mxu0
        %v729 = vld [vmem:[%s510] sm:$0x1]
        %vm730 = vcmask 261120
        %v732 = vsel %vm730, %v697, 0
        %v735 = vsel %vm730, %v699, 0
        %v738 = vsel %vm730, %v711, 0
        %v741 = vsel %vm730, %v713, 0
        %743 = vmatpush.xpose.msra.mxu0 0.0
        %744 = vmatpush.xpose.msra.mxu0 0.0
        %745 = vmatpush.xpose.msra.mxu0 0.0
        %746 = vmatpush.xpose.msra.mxu0 0.0
        %747 = vmatpush.xpose.msra.mxu0 0.0
        %748 = vmatpush.xpose.msra.mxu0 0.0
        %749 = vmatpush.xpose.msra.mxu0 0.0
        %750 = vmatpush.xpose.msra.mxu0 0.0
        %751 = vmatpush.xpose.msra.mxu0 0.0
        %752 = vmatpush.xpose.msra.mxu0 0.0
        %753 = vmatpush.xpose.msra.mxu0 0.0
        %754 = vmatpush.xpose.msra.mxu0 0.0
        %755 = vmatpush.xpose.msra.mxu0 0.0
        %756 = vmatpush.xpose.msra.mxu0 0.0
        %757 = vmatpush.xpose.msra.mxu0 %v741
        %758 = vmatpush.xpose.msra.mxu0 %v738
        %759 = vmatmul.f32.gmra.mxu0 %v732
        %v760 = vpop.f32.mrf.mxu0
        %v761 = vadd.f32 0.0, %v760
        %762 = vmatmul.f32.gmra.mxu0 %v735
        %v763 = vpop.f32.mrf.mxu0
        %v764 = vadd.f32 0.0, %v763
        %765 = vdwg.mxu0
        %v766 = vmul.f32 %v761, 0.17677669
        %v767 = vmul.f32 %v764, 0.17677669
        %v769 = vperm.slane %v729, 0
        %v771 = vadd.f32 %v766, %v769
        %v772 = vadd.f32 %v767, %v769
        %vm773 = vcmask 97280
        %v774 = vsel %vm773, %v771, -inf
        %775 = vmax.xlane.f32.xlu0 %v774
        %v776 = vpop.xlane.xlu0 %775
        %vm777 = vcmask 93184
        %v778 = vsel %vm777, %v772, -inf
        %779 = vmax.xlane.f32.xlu0 %v778
        %v780 = vpop.xlane.xlu0 %779
        %v781 = vsub.f32 %v771, %v776
        %v782 = vsub.f32 %v772, %v780
        %v783 = vmul.f32 %v781, 1.442695
        %v784 = vpow.pop %v783
        %v785 = vmul.f32 %v782, 1.442695
        %v786 = vpow.pop %v785
        %v787 = vsel %vm773, %v784, 0.0
        %788 = vadd.xlane.f32.xlu0 %v787
        %v789 = vpop.xlane.xlu0 %788
        %v790 = vsel %vm777, %v786, 0.0
        %791 = vadd.xlane.f32.xlu0 %v790
        %v792 = vpop.xlane.xlu0 %791
        %v793 = vrcp.pop %v789
        %v794 = vrcp.pop %v792
        %v795 = vmul.f32 %v784, %v793
        %v796 = vmul.f32 %v786, %v794
        %v798 = vsel %vm773, %v795, 0
        %v801 = vsel %vm773, %v796, 0
        %vm803 = vcmask 1043456
        %v805 = vsel %vm803, %v727, 0
        %807 = vmatpush.msra.mxu0 0.0
        %808 = vmatpush.msra.mxu0 0.0
        %809 = vmatpush.msra.mxu0 0.0
        %810 = vmatpush.msra.mxu0 0.0
        %811 = vmatpush.msra.mxu0 0.0
        %812 = vmatpush.msra.mxu0 0.0
        %813 = vmatpush.msra.mxu0 0.0
        %814 = vmatpush.msra.mxu0 0.0
        %815 = vmatpush.msra.mxu0 0.0
        %816 = vmatpush.msra.mxu0 0.0
        %817 = vmatpush.msra.mxu0 0.0
        %818 = vmatpush.msra.mxu0 0.0
        %819 = vmatpush.msra.mxu0 0.0
        %820 = vmatpush.msra.mxu0 0.0
        %821 = vmatpush.msra.mxu0 %v805
        %822 = vmatpush.msra.mxu0 %v725
        %823 = vmatmul.f32.gmra.mxu0 %v798
        %v824 = vpop.f32.mrf.mxu0
        %v825 = vadd.f32 0.0, %v824
        %826 = vmatmul.f32.gmra.mxu0 %v801
        %v827 = vpop.f32.mrf.mxu0
        %v828 = vadd.f32 0.0, %v827
        %829 = vdwg.mxu0
        %830 = vrot.lane.b32.xlu0 %v697, 96
        %v831 = vpop.permute.xlu0 %830
        %832 = vrot.lane.b32.xlu0 %v699, 96
        %v833 = vpop.permute.xlu0 %832
        %834 = vrot.lane.b32.xlu0 %v711, 96
        %v835 = vpop.permute.xlu0 %834
        %836 = vrot.lane.b32.xlu0 %v713, 96
        %v837 = vpop.permute.xlu0 %836
        %v838 = vsel %vm730, %v831, 0
        %v840 = vsel %vm730, %v833, 0
        %v842 = vsel %vm730, %v835, 0
        %v844 = vsel %vm730, %v837, 0
        %846 = vmatpush.xpose.msra.mxu0 0.0
        %847 = vmatpush.xpose.msra.mxu0 0.0
        %848 = vmatpush.xpose.msra.mxu0 0.0
        %849 = vmatpush.xpose.msra.mxu0 0.0
        %850 = vmatpush.xpose.msra.mxu0 0.0
        %851 = vmatpush.xpose.msra.mxu0 0.0
        %852 = vmatpush.xpose.msra.mxu0 0.0
        %853 = vmatpush.xpose.msra.mxu0 0.0
        %854 = vmatpush.xpose.msra.mxu0 0.0
        %855 = vmatpush.xpose.msra.mxu0 0.0
        %856 = vmatpush.xpose.msra.mxu0 0.0
        %857 = vmatpush.xpose.msra.mxu0 0.0
        %858 = vmatpush.xpose.msra.mxu0 0.0
        %859 = vmatpush.xpose.msra.mxu0 0.0
        %860 = vmatpush.xpose.msra.mxu0 %v844
        %861 = vmatpush.xpose.msra.mxu0 %v842
        %862 = vmatmul.f32.gmra.mxu0 %v838
        %v863 = vpop.f32.mrf.mxu0
        %v864 = vadd.f32 0.0, %v863
        %865 = vmatmul.f32.gmra.mxu0 %v840
        %v866 = vpop.f32.mrf.mxu0
        %v867 = vadd.f32 0.0, %v866
        %868 = vdwg.mxu0
        %v869 = vmul.f32 %v864, 0.17677669
        %v870 = vmul.f32 %v867, 0.17677669
        %v871 = vadd.f32 %v869, %v769
        %v872 = vadd.f32 %v870, %v769
        %v873 = vsel %vm773, %v871, -inf
        %874 = vmax.xlane.f32.xlu0 %v873
        %v875 = vpop.xlane.xlu0 %874
        %v876 = vsel %vm777, %v872, -inf
        %877 = vmax.xlane.f32.xlu0 %v876
        %v878 = vpop.xlane.xlu0 %877
        %v879 = vsub.f32 %v871, %v875
        %v880 = vsub.f32 %v872, %v878
        %v881 = vmul.f32 %v879, 1.442695
        %v882 = vpow.pop %v881
        %v883 = vmul.f32 %v880, 1.442695
        %v884 = vpow.pop %v883
        %v885 = vsel %vm773, %v882, 0.0
        %886 = vadd.xlane.f32.xlu0 %v885
        %v887 = vpop.xlane.xlu0 %886
        %v888 = vsel %vm777, %v884, 0.0
        %889 = vadd.xlane.f32.xlu0 %v888
        %v890 = vpop.xlane.xlu0 %889
        %v891 = vrcp.pop %v887
        %v892 = vrcp.pop %v890
        %v893 = vmul.f32 %v882, %v891
        %v894 = vmul.f32 %v884, %v892
        %896 = vrot.lane.b32.xlu0 %v725, 96
        %v897 = vpop.permute.xlu0 %896
        %898 = vrot.lane.b32.xlu0 %v727, 96
        %v899 = vpop.permute.xlu0 %898
        %v902 = vsel %vm773, %v893, 0
        %v905 = vsel %vm773, %v894, 0
        %v907 = vsel %vm803, %v899, 0
        %909 = vmatpush.msra.mxu0 0.0
        %910 = vmatpush.msra.mxu0 0.0
        %911 = vmatpush.msra.mxu0 0.0
        %912 = vmatpush.msra.mxu0 0.0
        %913 = vmatpush.msra.mxu0 0.0
        %914 = vmatpush.msra.mxu0 0.0
        %915 = vmatpush.msra.mxu0 0.0
        %916 = vmatpush.msra.mxu0 0.0
        %917 = vmatpush.msra.mxu0 0.0
        %918 = vmatpush.msra.mxu0 0.0
        %919 = vmatpush.msra.mxu0 0.0
        %920 = vmatpush.msra.mxu0 0.0
        %921 = vmatpush.msra.mxu0 0.0
        %922 = vmatpush.msra.mxu0 0.0
        %923 = vmatpush.msra.mxu0 %v907
        %924 = vmatpush.msra.mxu0 %v897
        %925 = vmatmul.f32.gmra.mxu0 %v902
        %v926 = vpop.f32.mrf.mxu0
        %v927 = vadd.f32 0.0, %v926
        %928 = vmatmul.f32.gmra.mxu0 %v905
        %v929 = vpop.f32.mrf.mxu0
        %v930 = vadd.f32 0.0, %v929
        %931 = vdwg.mxu0
        %932 = vrot.lane.b32.xlu0 %v697, 64
        %v933 = vpop.permute.xlu0 %932
        %934 = vrot.lane.b32.xlu0 %v699, 64
        %v935 = vpop.permute.xlu0 %934
        %936 = vrot.lane.b32.xlu0 %v711, 64
        %v937 = vpop.permute.xlu0 %936
        %938 = vrot.lane.b32.xlu0 %v713, 64
        %v939 = vpop.permute.xlu0 %938
        %v940 = vsel %vm730, %v933, 0
        %v942 = vsel %vm730, %v935, 0
        %v944 = vsel %vm730, %v937, 0
        %v946 = vsel %vm730, %v939, 0
        %948 = vmatpush.xpose.msra.mxu0 0.0
        %949 = vmatpush.xpose.msra.mxu0 0.0
        %950 = vmatpush.xpose.msra.mxu0 0.0
        %951 = vmatpush.xpose.msra.mxu0 0.0
        %952 = vmatpush.xpose.msra.mxu0 0.0
        %953 = vmatpush.xpose.msra.mxu0 0.0
        %954 = vmatpush.xpose.msra.mxu0 0.0
        %955 = vmatpush.xpose.msra.mxu0 0.0
        %956 = vmatpush.xpose.msra.mxu0 0.0
        %957 = vmatpush.xpose.msra.mxu0 0.0
        %958 = vmatpush.xpose.msra.mxu0 0.0
        %959 = vmatpush.xpose.msra.mxu0 0.0
        %960 = vmatpush.xpose.msra.mxu0 0.0
        %961 = vmatpush.xpose.msra.mxu0 0.0
        %962 = vmatpush.xpose.msra.mxu0 %v946
        %963 = vmatpush.xpose.msra.mxu0 %v944
        %964 = vmatmul.f32.gmra.mxu0 %v940
        %v965 = vpop.f32.mrf.mxu0
        %v966 = vadd.f32 0.0, %v965
        %967 = vmatmul.f32.gmra.mxu0 %v942
        %v968 = vpop.f32.mrf.mxu0
        %v969 = vadd.f32 0.0, %v968
        %970 = vdwg.mxu0
        %v971 = vmul.f32 %v966, 0.17677669
        %v972 = vmul.f32 %v969, 0.17677669
        %v973 = vadd.f32 %v971, %v769
        %v974 = vadd.f32 %v972, %v769
        %v975 = vsel %vm773, %v973, -inf
        %976 = vmax.xlane.f32.xlu0 %v975
        %v977 = vpop.xlane.xlu0 %976
        %v978 = vsel %vm777, %v974, -inf
        %979 = vmax.xlane.f32.xlu0 %v978
        %v980 = vpop.xlane.xlu0 %979
        %v981 = vsub.f32 %v973, %v977
        %v982 = vsub.f32 %v974, %v980
        %v983 = vmul.f32 %v981, 1.442695
        %v984 = vpow.pop %v983
        %v985 = vmul.f32 %v982, 1.442695
        %v986 = vpow.pop %v985
        %v987 = vsel %vm773, %v984, 0.0
        %988 = vadd.xlane.f32.xlu0 %v987
        %v989 = vpop.xlane.xlu0 %988
        %v990 = vsel %vm777, %v986, 0.0
        %991 = vadd.xlane.f32.xlu0 %v990
        %v992 = vpop.xlane.xlu0 %991
        %v993 = vrcp.pop %v989
        %v994 = vrcp.pop %v992
        %v995 = vmul.f32 %v984, %v993
        %v996 = vmul.f32 %v986, %v994
        %997 = vrot.lane.b32.xlu0 %v725, 64
        %v998 = vpop.permute.xlu0 %997
        %999 = vrot.lane.b32.xlu0 %v727, 64
        %v1000 = vpop.permute.xlu0 %999
        %v1003 = vsel %vm773, %v995, 0
        %v1006 = vsel %vm773, %v996, 0
        %v1008 = vsel %vm803, %v1000, 0
        %1010 = vmatpush.msra.mxu0 0.0
        %1011 = vmatpush.msra.mxu0 0.0
        %1012 = vmatpush.msra.mxu0 0.0
        %1013 = vmatpush.msra.mxu0 0.0
        %1014 = vmatpush.msra.mxu0 0.0
        %1015 = vmatpush.msra.mxu0 0.0
        %1016 = vmatpush.msra.mxu0 0.0
        %1017 = vmatpush.msra.mxu0 0.0
        %1018 = vmatpush.msra.mxu0 0.0
        %1019 = vmatpush.msra.mxu0 0.0
        %1020 = vmatpush.msra.mxu0 0.0
        %1021 = vmatpush.msra.mxu0 0.0
        %1022 = vmatpush.msra.mxu0 0.0
        %1023 = vmatpush.msra.mxu0 0.0
        %1024 = vmatpush.msra.mxu0 %v1008
        %1025 = vmatpush.msra.mxu0 %v998
        %1026 = vmatmul.f32.gmra.mxu0 %v1003
        %v1027 = vpop.f32.mrf.mxu0
        %v1028 = vadd.f32 0.0, %v1027
        %1029 = vmatmul.f32.gmra.mxu0 %v1006
        %v1030 = vpop.f32.mrf.mxu0
        %v1031 = vadd.f32 0.0, %v1030
        %1032 = vdwg.mxu0
        %1033 = vrot.lane.b32.xlu0 %v697, 32
        %v1034 = vpop.permute.xlu0 %1033
        %1035 = vrot.lane.b32.xlu0 %v699, 32
        %v1036 = vpop.permute.xlu0 %1035
        %1037 = vrot.lane.b32.xlu0 %v711, 32
        %v1038 = vpop.permute.xlu0 %1037
        %1039 = vrot.lane.b32.xlu0 %v713, 32
        %v1040 = vpop.permute.xlu0 %1039
        %v1041 = vsel %vm730, %v1034, 0
        %v1043 = vsel %vm730, %v1036, 0
        %v1045 = vsel %vm730, %v1038, 0
        %v1047 = vsel %vm730, %v1040, 0
        %1049 = vmatpush.xpose.msra.mxu0 0.0
        %1050 = vmatpush.xpose.msra.mxu0 0.0
        %1051 = vmatpush.xpose.msra.mxu0 0.0
        %1052 = vmatpush.xpose.msra.mxu0 0.0
        %1053 = vmatpush.xpose.msra.mxu0 0.0
        %1054 = vmatpush.xpose.msra.mxu0 0.0
        %1055 = vmatpush.xpose.msra.mxu0 0.0
        %1056 = vmatpush.xpose.msra.mxu0 0.0
        %1057 = vmatpush.xpose.msra.mxu0 0.0
        %1058 = vmatpush.xpose.msra.mxu0 0.0
        %1059 = vmatpush.xpose.msra.mxu0 0.0
        %1060 = vmatpush.xpose.msra.mxu0 0.0
        %1061 = vmatpush.xpose.msra.mxu0 0.0
        %1062 = vmatpush.xpose.msra.mxu0 0.0
        %1063 = vmatpush.xpose.msra.mxu0 %v1047
        %1064 = vmatpush.xpose.msra.mxu0 %v1045
        %1065 = vmatmul.f32.gmra.mxu0 %v1041
        %v1066 = vpop.f32.mrf.mxu0
        %v1067 = vadd.f32 0.0, %v1066
        %1068 = vmatmul.f32.gmra.mxu0 %v1043
        %v1069 = vpop.f32.mrf.mxu0
        %v1070 = vadd.f32 0.0, %v1069
        %1071 = vdwg.mxu0
        %v1072 = vmul.f32 %v1067, 0.17677669
        %v1073 = vmul.f32 %v1070, 0.17677669
        %v1074 = vadd.f32 %v1072, %v769
        %v1075 = vadd.f32 %v1073, %v769
        %v1076 = vsel %vm773, %v1074, -inf
        %1077 = vmax.xlane.f32.xlu0 %v1076
        %v1078 = vpop.xlane.xlu0 %1077
        %v1079 = vsel %vm777, %v1075, -inf
        %1080 = vmax.xlane.f32.xlu0 %v1079
        %v1081 = vpop.xlane.xlu0 %1080
        %v1082 = vsub.f32 %v1074, %v1078
        %v1083 = vsub.f32 %v1075, %v1081
        %v1084 = vmul.f32 %v1082, 1.442695
        %v1085 = vpow.pop %v1084
        %v1086 = vmul.f32 %v1083, 1.442695
        %v1087 = vpow.pop %v1086
        %v1088 = vsel %vm773, %v1085, 0.0
        %1089 = vadd.xlane.f32.xlu0 %v1088
        %v1090 = vpop.xlane.xlu0 %1089
        %v1091 = vsel %vm777, %v1087, 0.0
        %1092 = vadd.xlane.f32.xlu0 %v1091
        %v1093 = vpop.xlane.xlu0 %1092
        %v1094 = vrcp.pop %v1090
        %v1095 = vrcp.pop %v1093
        %v1096 = vmul.f32 %v1085, %v1094
        %v1097 = vmul.f32 %v1087, %v1095
        %1098 = vrot.lane.b32.xlu0 %v725, 32
        %v1099 = vpop.permute.xlu0 %1098
        %1100 = vrot.lane.b32.xlu0 %v727, 32
        %v1101 = vpop.permute.xlu0 %1100
        %v1104 = vsel %vm773, %v1096, 0
        %v1107 = vsel %vm773, %v1097, 0
        %v1109 = vsel %vm803, %v1101, 0
        %1111 = vmatpush.msra.mxu0 0.0
        %1112 = vmatpush.msra.mxu0 0.0
        %1113 = vmatpush.msra.mxu0 0.0
        %1114 = vmatpush.msra.mxu0 0.0
        %1115 = vmatpush.msra.mxu0 0.0
        %1116 = vmatpush.msra.mxu0 0.0
        %1117 = vmatpush.msra.mxu0 0.0
        %1118 = vmatpush.msra.mxu0 0.0
        %1119 = vmatpush.msra.mxu0 0.0
        %1120 = vmatpush.msra.mxu0 0.0
        %1121 = vmatpush.msra.mxu0 0.0
        %1122 = vmatpush.msra.mxu0 0.0
        %1123 = vmatpush.msra.mxu0 0.0
        %1124 = vmatpush.msra.mxu0 0.0
        %1125 = vmatpush.msra.mxu0 %v1109
        %1126 = vmatpush.msra.mxu0 %v1099
        %1127 = vmatmul.f32.gmra.mxu0 %v1104
        %v1128 = vpop.f32.mrf.mxu0
        %v1129 = vadd.f32 0.0, %v1128
        %1130 = vmatmul.f32.gmra.mxu0 %v1107
        %v1131 = vpop.f32.mrf.mxu0
        %v1132 = vadd.f32 0.0, %v1131
        %1133 = vdwg.mxu0
        %1136 = vrot.lane.b32.xlu0 %v927, 32
        %v1137 = vpop.permute.xlu0 %1136
        %1138 = vrot.lane.b32.xlu0 %v930, 32
        %v1139 = vpop.permute.xlu0 %1138
        %1144 = vrot.lane.b32.xlu0 %v1028, 64
        %v1145 = vpop.permute.xlu0 %1144
        %1146 = vrot.lane.b32.xlu0 %v1031, 64
        %v1147 = vpop.permute.xlu0 %1146
        %1152 = vrot.lane.b32.xlu0 %v1129, 96
        %v1153 = vpop.permute.xlu0 %1152
        %1154 = vrot.lane.b32.xlu0 %v1132, 96
        %v1155 = vpop.permute.xlu0 %1154
        %v1158 = vsel %vm730, %v825, %v1137
        %v1159 = vsel %vm730, %v828, %v1139
        %vm1160 = vcmask 523264
        %v1161 = vsel %vm1160, %v1158, %v1145
        %v1162 = vsel %vm1160, %v1159, %v1147
        %vm1163 = vcmask 785408
        %v1164 = vsel %vm1163, %v1161, %v1153
        %v1165 = vsel %vm1163, %v1162, %v1155
        %v1166 = vpack.c.bf16 %v1165, %v1164
        %v1167 = vld [vmem:[%s4] sm:$0xf]
        %v1168 = vld [vmem:[%s4 + $0x4] sm:$0xf]
        %v1169 = vld [vmem:[%s4 + $0x8] sm:$0xf]
        %v1170 = vld [vmem:[%s4 + $0xc] sm:$0xf]
        %v1171 = vld [vmem:[%s4 + $0x10] sm:$0xf]
        %v1172 = vld [vmem:[%s4 + $0x14] sm:$0xf]
        %v1173 = vld [vmem:[%s4 + $0x18] sm:$0xf]
        %v1174 = vld [vmem:[%s4 + $0x1c] sm:$0xf]
        %v1175 = vld [vmem:[%s4 + $0x20] sm:$0xf]
        %v1176 = vld [vmem:[%s4 + $0x24] sm:$0xf]
        %v1177 = vld [vmem:[%s4 + $0x28] sm:$0xf]
        %v1178 = vld [vmem:[%s4 + $0x2c] sm:$0xf]
        %v1179 = vld [vmem:[%s4 + $0x30] sm:$0xf]
        %v1180 = vld [vmem:[%s4 + $0x34] sm:$0xf]
        %v1181 = vld [vmem:[%s4 + $0x38] sm:$0xf]
        %v1182 = vld [vmem:[%s4 + $0x3c] sm:$0xf]
        %v1183 = vld [vmem:[%s5] sm:$0x1]
        %v1185 = vperm.slane %v1183, 0
        %v1203 = vunpack.c.l.b16 %v1167
        %v1204 = vunpack.c.l.b16 %v1168
        %v1205 = vunpack.c.l.b16 %v1169
        %v1206 = vunpack.c.l.b16 %v1170
        %v1207 = vunpack.c.l.b16 %v1171
        %v1208 = vunpack.c.l.b16 %v1172
        %v1209 = vunpack.c.l.b16 %v1173
        %v1210 = vunpack.c.l.b16 %v1174
        %v1211 = vunpack.c.l.b16 %v1175
        %v1212 = vunpack.c.l.b16 %v1176
        %v1213 = vunpack.c.l.b16 %v1177
        %v1214 = vunpack.c.l.b16 %v1178
        %v1215 = vunpack.c.l.b16 %v1179
        %v1216 = vunpack.c.l.b16 %v1180
        %v1217 = vunpack.c.l.b16 %v1181
        %v1218 = vunpack.c.l.b16 %v1182
        %v1219 = vpack.c.b16 %v1204, %v1203
        %v1220 = vpack.c.b16 %v1206, %v1205
        %v1221 = vpack.c.b16 %v1208, %v1207
        %v1222 = vpack.c.b16 %v1210, %v1209
        %v1223 = vpack.c.b16 %v1212, %v1211
        %v1224 = vpack.c.b16 %v1214, %v1213
        %v1225 = vpack.c.b16 %v1216, %v1215
        %v1226 = vpack.c.b16 %v1218, %v1217
        %1235 = vmatpush.bf16.msra.mxu0 %v1226
        %1236 = vmatpush.bf16.msra.mxu0 %v1225
        %1237 = vmatpush.bf16.msra.mxu0 %v1224
        %1238 = vmatpush.bf16.msra.mxu0 %v1223
        %1239 = vmatpush.bf16.msra.mxu0 %v1222
        %1240 = vmatpush.bf16.msra.mxu0 %v1221
        %1241 = vmatpush.bf16.msra.mxu0 %v1220
        %1242 = vmatpush.bf16.msra.mxu0 %v1219
        %1243 = vmatmul.bf16.gmra.mxu0 %v1166
        %v1244 = vpop.f32.mrf.mxu0
        %v1245 = vadd.f32 %v1185, %v1244
        %v1246 = vpop.f32.mrf.mxu0
        %v1247 = vadd.f32 %v1185, %v1246
        %1248 = vdwg.mxu0
        %v1249 = vadd.f32 %v516, %v1245
        %v1250 = vadd.f32 %v517, %v1247
        %v1251 = vld [vmem:[%s6] sm:$0x1]
        %v1252 = vld [vmem:[%s7] sm:$0x1]
        %1253 = vadd.xlane.f32.xlu0 %v1249
        %v1254 = vpop.xlane.xlu0 %1253
        %v1255 = vsel %vm803, %v1250, 0.0
        %1256 = vadd.xlane.f32.xlu0 %v1255
        %v1257 = vpop.xlane.xlu0 %1256
        %v1258 = vrcp.pop 128.0
        %v1259 = vmul.f32 128.0, %v1258
        %v1260 = vsub.f32 1.0, %v1259
        %v1261 = vmul.f32 %v1258, %v1260
        %v1262 = vadd.f32 %v1258, %v1261
        %vm1263 = vweird.f32 %v1258
        %v1264 = vsel %vm1263, %v1258, %v1262
        %v1265 = vmul.f32 %v1254, %v1264
        %v1266 = vmul.f32 %v1257, %v1264
        %v1267 = vsub.f32 %v1249, %v1265
        %v1268 = vsub.f32 %v1250, %v1266
        %v1269 = vmul.f32 %v1267, %v1267
        %v1270 = vmul.f32 %v1268, %v1268
        %1271 = vadd.xlane.f32.xlu0 %v1269
        %v1272 = vpop.xlane.xlu0 %1271
        %v1273 = vsel %vm803, %v1270, 0.0
        %1274 = vadd.xlane.f32.xlu0 %v1273
        %v1275 = vpop.xlane.xlu0 %1274
        %v1276 = vmul.f32 %v1272, %v1264
        %v1277 = vmul.f32 %v1275, %v1264
        %v1278 = vadd.f32 %v1276, 1e-05
        %v1279 = vadd.f32 %v1277, 1e-05
        %v1280 = vrsqrt.pop %v1278
        %v1281 = vmul.f32 %v1280, %v1278
        %v1282 = vmul.f32 %v1281, %v1280
        %v1283 = vmul.f32 0.5, %v1282
        %v1284 = vsub.f32 1.5, %v1283
        %v1285 = vmul.f32 %v1280, %v1284
        %vm1286 = vweird.f32 %v1278
        %vm1287 = vweird.f32 %v1280
        %vm1288 = vmor %vm1286, %vm1287
        %v1289 = vsel %vm1288, %v1280, %v1285
        %v1290 = vrsqrt.pop %v1279
        %v1291 = vmul.f32 %v1290, %v1279
        %v1292 = vmul.f32 %v1291, %v1290
        %v1293 = vmul.f32 0.5, %v1292
        %v1294 = vsub.f32 1.5, %v1293
        %v1295 = vmul.f32 %v1290, %v1294
        %vm1296 = vweird.f32 %v1279
        %vm1297 = vweird.f32 %v1290
        %vm1298 = vmor %vm1296, %vm1297
        %v1299 = vsel %vm1298, %v1290, %v1295
        %v1300 = vmul.f32 %v1267, %v1289
        %v1301 = vmul.f32 %v1268, %v1299
        %v1303 = vperm.slane %v1251, 0
        %v1305 = vmul.f32 %v1300, %v1303
        %v1306 = vmul.f32 %v1301, %v1303
        %v1308 = vperm.slane %v1252, 0
        %v1310 = vadd.f32 %v1305, %v1308
        %v1311 = vadd.f32 %v1306, %v1308
        %v1312 = vpack.c.bf16 %v1311, %v1310
        %v1313 = vld [vmem:[#allocation2] sm:$0xf]
        %v1314 = vld [vmem:[#allocation2 + $0x4] sm:$0xf]
        %v1315 = vld [vmem:[#allocation2 + $0x8] sm:$0xf]
        %v1316 = vld [vmem:[#allocation2 + $0xc] sm:$0xf]
        %v1317 = vld [vmem:[#allocation2 + $0x10] sm:$0xf]
        %v1318 = vld [vmem:[#allocation2 + $0x14] sm:$0xf]
        %v1319 = vld [vmem:[#allocation2 + $0x18] sm:$0xf]
        %v1320 = vld [vmem:[#allocation2 + $0x1c] sm:$0xf]
        %v1321 = vld [vmem:[#allocation2 + $0x20] sm:$0xf]
        %v1322 = vld [vmem:[#allocation2 + $0x24] sm:$0xf]
        %v1323 = vld [vmem:[#allocation2 + $0x28] sm:$0xf]
        %v1324 = vld [vmem:[#allocation2 + $0x2c] sm:$0xf]
        %v1325 = vld [vmem:[#allocation2 + $0x30] sm:$0xf]
        %v1326 = vld [vmem:[#allocation2 + $0x34] sm:$0xf]
        %v1327 = vld [vmem:[#allocation2 + $0x38] sm:$0xf]
        %v1328 = vld [vmem:[#allocation2 + $0x3c] sm:$0xf]
        %v1329 = vld [vmem:[%s9] sm:$0x1]
        %v1331 = vperm.slane %v1329, 0
        %v1349 = vunpack.c.l.b16 %v1313
        %v1350 = vunpack.c.l.b16 %v1314
        %v1351 = vunpack.c.l.b16 %v1315
        %v1352 = vunpack.c.l.b16 %v1316
        %v1353 = vunpack.c.l.b16 %v1317
        %v1354 = vunpack.c.l.b16 %v1318
        %v1355 = vunpack.c.l.b16 %v1319
        %v1356 = vunpack.c.l.b16 %v1320
        %v1357 = vunpack.c.l.b16 %v1321
        %v1358 = vunpack.c.l.b16 %v1322
        %v1359 = vunpack.c.l.b16 %v1323
        %v1360 = vunpack.c.l.b16 %v1324
        %v1361 = vunpack.c.l.b16 %v1325
        %v1362 = vunpack.c.l.b16 %v1326
        %v1363 = vunpack.c.l.b16 %v1327
        %v1364 = vunpack.c.l.b16 %v1328
        %v1365 = vpack.c.b16 %v1350, %v1349
        %v1366 = vpack.c.b16 %v1352, %v1351
        %v1367 = vpack.c.b16 %v1354, %v1353
        %v1368 = vpack.c.b16 %v1356, %v1355
        %v1369 = vpack.c.b16 %v1358, %v1357
        %v1370 = vpack.c.b16 %v1360, %v1359
        %v1371 = vpack.c.b16 %v1362, %v1361
        %v1372 = vpack.c.b16 %v1364, %v1363
        %1381 = vmatpush.bf16.msra.mxu0 %v1372
        %1382 = vmatpush.bf16.msra.mxu0 %v1371
        %1383 = vmatpush.bf16.msra.mxu0 %v1370
        %1384 = vmatpush.bf16.msra.mxu0 %v1369
        %1385 = vmatpush.bf16.msra.mxu0 %v1368
        %1386 = vmatpush.bf16.msra.mxu0 %v1367
        %1387 = vmatpush.bf16.msra.mxu0 %v1366
        %1388 = vmatpush.bf16.msra.mxu0 %v1365
        %1389 = vmatmul.bf16.gmra.mxu0 %v1312
        %v1390 = vpop.f32.mrf.mxu0
        %v1391 = vadd.f32 %v1331, %v1390
        %v1392 = vpop.f32.mrf.mxu0
        %v1393 = vadd.f32 %v1331, %v1392
        %1394 = vdwg.mxu0
        %v1395 = vmax.f32 %v1391, 0.0
        %v1396 = vmax.f32 %v1393, 0.0
        %v1397 = vpack.c.bf16 %v1396, %v1395
        %v1398 = vld [vmem:[#allocation4] sm:$0xf]
        %v1399 = vld [vmem:[#allocation4 + $0x4] sm:$0xf]
        %v1400 = vld [vmem:[#allocation4 + $0x8] sm:$0xf]
        %v1401 = vld [vmem:[#allocation4 + $0xc] sm:$0xf]
        %v1402 = vld [vmem:[#allocation4 + $0x10] sm:$0xf]
        %v1403 = vld [vmem:[#allocation4 + $0x14] sm:$0xf]
        %v1404 = vld [vmem:[#allocation4 + $0x18] sm:$0xf]
        %v1405 = vld [vmem:[#allocation4 + $0x1c] sm:$0xf]
        %v1406 = vld [vmem:[#allocation4 + $0x20] sm:$0xf]
        %v1407 = vld [vmem:[#allocation4 + $0x24] sm:$0xf]
        %v1408 = vld [vmem:[#allocation4 + $0x28] sm:$0xf]
        %v1409 = vld [vmem:[#allocation4 + $0x2c] sm:$0xf]
        %v1410 = vld [vmem:[#allocation4 + $0x30] sm:$0xf]
        %v1411 = vld [vmem:[#allocation4 + $0x34] sm:$0xf]
        %v1412 = vld [vmem:[#allocation4 + $0x38] sm:$0xf]
        %v1413 = vld [vmem:[#allocation4 + $0x3c] sm:$0xf]
        %v1414 = vld [vmem:[%s11] sm:$0x1]
        %v1416 = vperm.slane %v1414, 0
        %v1434 = vunpack.c.l.b16 %v1398
        %v1435 = vunpack.c.l.b16 %v1399
        %v1436 = vunpack.c.l.b16 %v1400
        %v1437 = vunpack.c.l.b16 %v1401
        %v1438 = vunpack.c.l.b16 %v1402
        %v1439 = vunpack.c.l.b16 %v1403
        %v1440 = vunpack.c.l.b16 %v1404
        %v1441 = vunpack.c.l.b16 %v1405
        %v1442 = vunpack.c.l.b16 %v1406
        %v1443 = vunpack.c.l.b16 %v1407
        %v1444 = vunpack.c.l.b16 %v1408
        %v1445 = vunpack.c.l.b16 %v1409
        %v1446 = vunpack.c.l.b16 %v1410
        %v1447 = vunpack.c.l.b16 %v1411
        %v1448 = vunpack.c.l.b16 %v1412
        %v1449 = vunpack.c.l.b16 %v1413
        %v1450 = vpack.c.b16 %v1435, %v1434
        %v1451 = vpack.c.b16 %v1437, %v1436
        %v1452 = vpack.c.b16 %v1439, %v1438
        %v1453 = vpack.c.b16 %v1441, %v1440
        %v1454 = vpack.c.b16 %v1443, %v1442
        %v1455 = vpack.c.b16 %v1445, %v1444
        %v1456 = vpack.c.b16 %v1447, %v1446
        %v1457 = vpack.c.b16 %v1449, %v1448
        %1466 = vmatpush.bf16.msra.mxu0 %v1457
        %1467 = vmatpush.bf16.msra.mxu0 %v1456
        %1468 = vmatpush.bf16.msra.mxu0 %v1455
        %1469 = vmatpush.bf16.msra.mxu0 %v1454
        %1470 = vmatpush.bf16.msra.mxu0 %v1453
        %1471 = vmatpush.bf16.msra.mxu0 %v1452
        %1472 = vmatpush.bf16.msra.mxu0 %v1451
        %1473 = vmatpush.bf16.msra.mxu0 %v1450
        %1474 = vmatmul.bf16.gmra.mxu0 %v1397
        %v1475 = vpop.f32.mrf.mxu0
        %v1476 = vadd.f32 %v1416, %v1475
        %v1477 = vpop.f32.mrf.mxu0
        %v1478 = vadd.f32 %v1416, %v1477
        %1479 = vdwg.mxu0
        %v1480 = vadd.f32 %v1310, %v1476
        %v1481 = vadd.f32 %v1311, %v1478
        %v1482 = vld [vmem:[%s12] sm:$0x1]
        %v1483 = vld [vmem:[%s13] sm:$0x1]
        %1484 = vadd.xlane.f32.xlu0 %v1480
        %v1485 = vpop.xlane.xlu0 %1484
        %v1486 = vsel %vm803, %v1481, 0.0
        %1487 = vadd.xlane.f32.xlu0 %v1486
        %v1488 = vpop.xlane.xlu0 %1487
        %v1489 = vmul.f32 %v1485, %v1264
        %v1490 = vmul.f32 %v1488, %v1264
        %v1491 = vsub.f32 %v1480, %v1489
        %v1492 = vsub.f32 %v1481, %v1490
        %v1493 = vmul.f32 %v1491, %v1491
        %v1494 = vmul.f32 %v1492, %v1492
        %1495 = vadd.xlane.f32.xlu0 %v1493
        %v1496 = vpop.xlane.xlu0 %1495
        %v1497 = vsel %vm803, %v1494, 0.0
        %1498 = vadd.xlane.f32.xlu0 %v1497
        %v1499 = vpop.xlane.xlu0 %1498
        %v1500 = vmul.f32 %v1496, %v1264
        %v1501 = vmul.f32 %v1499, %v1264
        %v1502 = vadd.f32 %v1500, 1e-05
        %v1503 = vadd.f32 %v1501, 1e-05
        %v1504 = vrsqrt.pop %v1502
        %v1505 = vmul.f32 %v1504, %v1502
        %v1506 = vmul.f32 %v1505, %v1504
        %v1507 = vmul.f32 0.5, %v1506
        %v1508 = vsub.f32 1.5, %v1507
        %v1509 = vmul.f32 %v1504, %v1508
        %vm1510 = vweird.f32 %v1502
        %vm1511 = vweird.f32 %v1504
        %vm1512 = vmor %vm1510, %vm1511
        %v1513 = vsel %vm1512, %v1504, %v1509
        %v1514 = vrsqrt.pop %v1503
        %v1515 = vmul.f32 %v1514, %v1503
        %v1516 = vmul.f32 %v1515, %v1514
        %v1517 = vmul.f32 0.5, %v1516
        %v1518 = vsub.f32 1.5, %v1517
        %v1519 = vmul.f32 %v1514, %v1518
        %vm1520 = vweird.f32 %v1503
        %vm1521 = vweird.f32 %v1514
        %vm1522 = vmor %vm1520, %vm1521
        %v1523 = vsel %vm1522, %v1514, %v1519
        %v1524 = vmul.f32 %v1491, %v1513
        %v1525 = vmul.f32 %v1492, %v1523
        %v1527 = vperm.slane %v1482, 0
        %v1529 = vmul.f32 %v1524, %v1527
        %v1530 = vmul.f32 %v1525, %v1527
        %v1532 = vperm.slane %v1483, 0
        %v1534 = vadd.f32 %v1529, %v1532
        %v1535 = vadd.f32 %v1530, %v1532
        %1536 = vst [vmem:[%s515] sm:$0xff] %v1534
        %1537 = vst [vmem:[%s515 + $0x8] sm:$0xf] %v1535
        %p1538 = scmp.lt.s32.totalorder %s27, 1
        %s1539 = scalar_select %p1538, %s27, 1
        %s1540 = smul.addr %s1539, 2
        %s1541 = smul.addr %s1540, 8
        %s1542 = scalar_lea.vmem %s14, %s1541
        // Predicated region
        $region85: #{transformer_forward.5} parent=75 // pred_check
          %p1543 = pneg %p349
        $region86: #{transformer_forward.5} parent=75 // pred_check_branch
          %1545 = sbr.rel (%p1543) target = $region88
        $region87: #{transformer_forward.5} parent=75 // pred_region
          _
        $region88: #{transformer_forward.5} parent=75 // pred_fallthru
          _
      $region76: #{transformer_forward.5} parent=5 // pred_fallthru
        _
      %p1546 = scmp.le.s32.totalorder 2, %s22
      // Predicated region
      $region89: #{transformer_forward.5} parent=5 // pred_check
        %p1547 = pneg %p1546
      $region90: #{transformer_forward.5} parent=5 // pred_check_branch
        %1549 = sbr.rel (%p1547) target = $region92
      $region91: #{transformer_forward.5} parent=5 // pred_region
        %s1550 = ssub.s32 %s22, 2
        // Predicated region
        $region93: #{transformer_forward.5} parent=91 // pred_check
          %p1551 = pneg %p355
        $region94: #{transformer_forward.5} parent=91 // pred_check_branch
          %1553 = sbr.rel (%p1551) target = $region96
        $region95: #{transformer_forward.5} parent=91 // pred_region
          %p1554 = scmp.lt.s32.totalorder %s28, 1
          %s1555 = scalar_select %p1554, %s28, 1
          %s1556 = smul.addr %s1555, 2
          %s1557 = smul.addr %s1556, 8
          %s1558 = scalar_lea.vmem %s14, %s1557
        $region96: #{transformer_forward.5} parent=91 // pred_fallthru
          _
      $region92: #{transformer_forward.5} parent=5 // pred_fallthru
        _
    $region6: #{transformer_forward.5} parent=1 // loop_footer
      %s26 = sadd.s32 1, %s22
    $region7: #{transformer_forward.5} parent=1 // loop_footer_branch
      %21 = sbr.rel target = $region3
    $region8: #{transformer_forward.5} parent=1 // loop_exit
      _
    %1559 = vsyncpa [#allocation3], 1
    %s1560 = scalar_lea.sflag [#allocation3], 1
    %1561 = vsyncpa %s1560, 1
    %1562 = vsyncpa [#allocation5], 1

// kernel: transformer_forward.6
$region0: #{transformer_forward.6}
  #allocation0 [shape = 'u32[]', space=smem, size = 0x4, offset = 0x4, fixed_abs, tag = 'smem constant byte address 0x4 - core index']
  #allocation1 [shape = 'u32[72,128]{1,0:T(1,128)}', space=vmem, size = 0x9000, scoped, tag = 'internal scratch']
  %s0 = inlined_call_operand.vmem [shape: f32[2,12,128], index: 0, kind: input, shape index: {}]
  %s1 = inlined_call_operand.vmem [shape: f32[2,1,12], index: 1, kind: input, shape index: {}]
  %s2 = inlined_call_operand.vmem [shape: bf16[128,384], index: 2, kind: input, shape index: {}]
  %s3 = inlined_call_operand.vmem [shape: f32[1,384], index: 3, kind: input, shape index: {}]
  %s4 = inlined_call_operand.hbm [shape: bf16[128,128], index: 4, kind: input, shape index: {}]
  %s5 = inlined_call_operand.vmem [shape: f32[1,128], index: 5, kind: input, shape index: {}]
  %s6 = inlined_call_operand.vmem [shape: f32[1,128], index: 6, kind: input, shape index: {}]
  %s7 = inlined_call_operand.vmem [shape: f32[1,128], index: 7, kind: input, shape index: {}]
  %s8 = inlined_call_operand.hbm [shape: bf16[128,128], index: 8, kind: input, shape index: {}]
  %s9 = inlined_call_operand.vmem [shape: f32[1,128], index: 9, kind: input, shape index: {}]
  %s10 = inlined_call_operand.hbm [shape: bf16[128,128], index: 10, kind: input, shape index: {}]
  %s11 = inlined_call_operand.vmem [shape: f32[1,128], index: 11, kind: input, shape index: {}]
  %s12 = inlined_call_operand.vmem [shape: f32[1,128], index: 12, kind: input, shape index: {}]
  %s13 = inlined_call_operand.vmem [shape: f32[1,128], index: 13, kind: input, shape index: {}]
  %s14 = inlined_call_operand.vmem [shape: f32[2,12,128], index: 14, kind: output, shape index: {}]
  %s15 = sld [smem:[#allocation0]]
  $region101: #{transformer_forward.6} parent=0
    _
  %s17 = ssub.s32 1, %s15
  %s18 = scalar_select 0, %s17, %s15
  $region1: #{transformer_forward.6} parent=0
    #allocation2 [shape = 'u8[32768]{0}', space=vmem, size = 0x8000, scoped, tag = 'input window, operand 4, single buffered']
    #allocation3 [shape = 's32[2]{0}', space=sflag, size = 0x8, scoped, tag = 'scoped memory for transformer_forward.6']
    #allocation4 [shape = 'u8[32768]{0}', space=vmem, size = 0x8000, scoped, tag = 'input window, operand 8, single buffered']
    #allocation5 [shape = 's32[1]{0}', space=sflag, size = 0x4, scoped, tag = 'scoped memory for transformer_forward.6']
    #allocation6 [shape = 'u8[32768]{0}', space=vmem, size = 0x8000, scoped, tag = 'input window, operand 10, single buffered']
    %19 = vsyncpa [#allocation3], 0
    %20 = vsyncpa [#allocation5], 0
    loop: start=0, step=1, limit=4
    $region2: #{transformer_forward.6} parent=1 // loop_pre_header
      _
    $region3: #{transformer_forward.6} parent=1 // loop_header
      %s22 = sphi 0, %s26
      %p23 = scmp.ge.s32.totalorder %s22, 4
      %s32 = sphi 0, %s34
      %s35 = sphi 0, %s32
      %s36 = sphi 0, %s35
      %s52 = sphi 0, %s36
      %s58 = sphi 0, %s60
      %s61 = sphi 0, %s58
      %s62 = sphi 0, %s61
      %s78 = sphi 0, %s62
      %s82 = sphi 0, %s82
      %s84 = sphi 0, %s82
      %s85 = sphi 0, %s84
      %s99 = sphi 0, %s85
      %s103 = sphi 0, %s103
      %s105 = sphi 0, %s103
      %s106 = sphi 0, %s105
      %s120 = sphi 0, %s106
      %s124 = sphi 0, %s124
      %s126 = sphi 0, %s124
      %s127 = sphi 0, %s126
      %s141 = sphi 0, %s127
      %s145 = sphi 0, %s145
      %s147 = sphi 0, %s145
      %s148 = sphi 0, %s147
      %s162 = sphi 0, %s148
      %s166 = sphi 0, %s166
      %s168 = sphi 0, %s166
      %s169 = sphi 0, %s168
      %s183 = sphi 0, %s169
      %s187 = sphi 0, %s187
      %s189 = sphi 0, %s187
      %s190 = sphi 0, %s189
      %s204 = sphi 0, %s190
      %s208 = sphi 0, %s208
      %s210 = sphi 0, %s208
      %s211 = sphi 0, %s210
      %s225 = sphi 0, %s211
      %s229 = sphi 0, %s229
      %s231 = sphi 0, %s229
      %s232 = sphi 0, %s231
      %s246 = sphi 0, %s232
      %s250 = sphi 0, %s250
      %s252 = sphi 0, %s250
      %s253 = sphi 0, %s252
      %s267 = sphi 0, %s253
      %s271 = sphi 0, %s271
      %s273 = sphi 0, %s271
      %s274 = sphi 0, %s273
      %s288 = sphi 0, %s274
      %s292 = sphi 0, %s292
      %s294 = sphi 0, %s292
      %s295 = sphi 0, %s294
      %s309 = sphi 0, %s295
      %s313 = sphi 0, %s313
      %s315 = sphi 0, %s313
      %s316 = sphi 0, %s315
      %s330 = sphi 0, %s316
      %s336 = sphi 0, %s338
      %s339 = sphi 0, %s336
      %s340 = sphi 0, %s339
      %s356 = sphi 0, %s340
    $region4: #{transformer_forward.6} parent=1 // loop_header_branch
      %25 = sbr.rel (%p23) target = $region8
    $region5: #{transformer_forward.6} parent=1 // loop_body
      %s27 = ssub.s32 %s22, 1
      %s28 = ssub.s32 %s22, 2
      %s29 = sadd.s32 %s22, 1
      %s30 = ssub.s32 %s22, %s29
      %p31 = scmp.eq.s32.totalorder %s30, 0
      %s33 = sadd.s32 %s32, 1
      %s34 = scalar_select %p31, %s32, %s33
      %p37 = pneg %p31
      %p38 = scmp.eq.s32.totalorder %s22, 1
      %p39 = por %p37, %p38
      %p40 = scmp.ne.s32.totalorder %s32, %s35
      %p41 = scmp.eq.s32.totalorder %s22, 0
      %p42 = por %p40, %p41
      %p43 = scmp.ne.s32.totalorder %s32, %s35
      %p44 = scmp.eq.s32.totalorder %s27, 1
      %p45 = por %p43, %p44
      %p46 = scmp.ne.s32.totalorder %s35, %s36
      %p47 = scmp.eq.s32.totalorder %s27, 0
      %p48 = por %p46, %p47
      %p49 = scmp.ne.s32.totalorder %s35, %s36
      %p50 = scmp.eq.s32.totalorder %s28, 1
      %p51 = por %p49, %p50
      %p53 = scmp.ne.s32.totalorder %s36, %s52
      %p54 = scmp.eq.s32.totalorder %s28, 0
      %p55 = por %p53, %p54
      %s56 = ssub.s32 %s22, %s29
      %p57 = scmp.eq.s32.totalorder %s56, 0
      %s59 = sadd.s32 %s58, 1
      %s60 = scalar_select %p57, %s58, %s59
      %p63 = pneg %p57
      %p64 = scmp.eq.s32.totalorder %s22, 1
      %p65 = por %p63, %p64
      %p66 = scmp.ne.s32.totalorder %s58, %s61
      %p67 = scmp.eq.s32.totalorder %s22, 0
      %p68 = por %p66, %p67
      %p69 = scmp.ne.s32.totalorder %s58, %s61
      %p70 = scmp.eq.s32.totalorder %s27, 1
      %p71 = por %p69, %p70
      %p72 = scmp.ne.s32.totalorder %s61, %s62
      %p73 = scmp.eq.s32.totalorder %s27, 0
      %p74 = por %p72, %p73
      %p75 = scmp.ne.s32.totalorder %s61, %s62
      %p76 = scmp.eq.s32.totalorder %s28, 1
      %p77 = por %p75, %p76
      %p79 = scmp.ne.s32.totalorder %s62, %s78
      %p80 = scmp.eq.s32.totalorder %s28, 0
      %p81 = por %p79, %p80
      %s83 = sadd.s32 %s82, 1
      %p86 = scmp.eq.s32.totalorder %s22, 1
      %p87 = scmp.ne.s32.totalorder %s82, %s84
      %p88 = scmp.eq.s32.totalorder %s22, 0
      %p89 = por %p87, %p88
      %p90 = scmp.ne.s32.totalorder %s82, %s84
      %p91 = scmp.eq.s32.totalorder %s27, 1
      %p92 = por %p90, %p91
      %p93 = scmp.ne.s32.totalorder %s84, %s85
      %p94 = scmp.eq.s32.totalorder %s27, 0
      %p95 = por %p93, %p94
      %p96 = scmp.ne.s32.totalorder %s84, %s85
      %p97 = scmp.eq.s32.totalorder %s28, 1
      %p98 = por %p96, %p97
      %p100 = scmp.ne.s32.totalorder %s85, %s99
      %p101 = scmp.eq.s32.totalorder %s28, 0
      %p102 = por %p100, %p101
      %s104 = sadd.s32 %s103, 1
      %p107 = scmp.eq.s32.totalorder %s22, 1
      %p108 = scmp.ne.s32.totalorder %s103, %s105
      %p109 = scmp.eq.s32.totalorder %s22, 0
      %p110 = por %p108, %p109
      %p111 = scmp.ne.s32.totalorder %s103, %s105
      %p112 = scmp.eq.s32.totalorder %s27, 1
      %p113 = por %p111, %p112
      %p114 = scmp.ne.s32.totalorder %s105, %s106
      %p115 = scmp.eq.s32.totalorder %s27, 0
      %p116 = por %p114, %p115
      %p117 = scmp.ne.s32.totalorder %s105, %s106
      %p118 = scmp.eq.s32.totalorder %s28, 1
      %p119 = por %p117, %p118
      %p121 = scmp.ne.s32.totalorder %s106, %s120
      %p122 = scmp.eq.s32.totalorder %s28, 0
      %p123 = por %p121, %p122
      %s125 = sadd.s32 %s124, 1
      %p128 = scmp.eq.s32.totalorder %s22, 1
      %p129 = scmp.ne.s32.totalorder %s124, %s126
      %p130 = scmp.eq.s32.totalorder %s22, 0
      %p131 = por %p129, %p130
      %p132 = scmp.ne.s32.totalorder %s124, %s126
      %p133 = scmp.eq.s32.totalorder %s27, 1
      %p134 = por %p132, %p133
      %p135 = scmp.ne.s32.totalorder %s126, %s127
      %p136 = scmp.eq.s32.totalorder %s27, 0
      %p137 = por %p135, %p136
      %p138 = scmp.ne.s32.totalorder %s126, %s127
      %p139 = scmp.eq.s32.totalorder %s28, 1
      %p140 = por %p138, %p139
      %p142 = scmp.ne.s32.totalorder %s127, %s141
      %p143 = scmp.eq.s32.totalorder %s28, 0
      %p144 = por %p142, %p143
      %s146 = sadd.s32 %s145, 1
      %p149 = scmp.eq.s32.totalorder %s22, 1
      %p150 = scmp.ne.s32.totalorder %s145, %s147
      %p151 = scmp.eq.s32.totalorder %s22, 0
      %p152 = por %p150, %p151
      %p153 = scmp.ne.s32.totalorder %s145, %s147
      %p154 = scmp.eq.s32.totalorder %s27, 1
      %p155 = por %p153, %p154
      %p156 = scmp.ne.s32.totalorder %s147, %s148
      %p157 = scmp.eq.s32.totalorder %s27, 0
      %p158 = por %p156, %p157
      %p159 = scmp.ne.s32.totalorder %s147, %s148
      %p160 = scmp.eq.s32.totalorder %s28, 1
      %p161 = por %p159, %p160
      %p163 = scmp.ne.s32.totalorder %s148, %s162
      %p164 = scmp.eq.s32.totalorder %s28, 0
      %p165 = por %p163, %p164
      %s167 = sadd.s32 %s166, 1
      %p170 = scmp.eq.s32.totalorder %s22, 1
      %p171 = scmp.ne.s32.totalorder %s166, %s168
      %p172 = scmp.eq.s32.totalorder %s22, 0
      %p173 = por %p171, %p172
      %p174 = scmp.ne.s32.totalorder %s166, %s168
      %p175 = scmp.eq.s32.totalorder %s27, 1
      %p176 = por %p174, %p175
      %p177 = scmp.ne.s32.totalorder %s168, %s169
      %p178 = scmp.eq.s32.totalorder %s27, 0
      %p179 = por %p177, %p178
      %p180 = scmp.ne.s32.totalorder %s168, %s169
      %p181 = scmp.eq.s32.totalorder %s28, 1
      %p182 = por %p180, %p181
      %p184 = scmp.ne.s32.totalorder %s169, %s183
      %p185 = scmp.eq.s32.totalorder %s28, 0
      %p186 = por %p184, %p185
      %s188 = sadd.s32 %s187, 1
      %p191 = scmp.eq.s32.totalorder %s22, 1
      %p192 = scmp.ne.s32.totalorder %s187, %s189
      %p193 = scmp.eq.s32.totalorder %s22, 0
      %p194 = por %p192, %p193
      %p195 = scmp.ne.s32.totalorder %s187, %s189
      %p196 = scmp.eq.s32.totalorder %s27, 1
      %p197 = por %p195, %p196
      %p198 = scmp.ne.s32.totalorder %s189, %s190
      %p199 = scmp.eq.s32.totalorder %s27, 0
      %p200 = por %p198, %p199
      %p201 = scmp.ne.s32.totalorder %s189, %s190
      %p202 = scmp.eq.s32.totalorder %s28, 1
      %p203 = por %p201, %p202
      %p205 = scmp.ne.s32.totalorder %s190, %s204
      %p206 = scmp.eq.s32.totalorder %s28, 0
      %p207 = por %p205, %p206
      %s209 = sadd.s32 %s208, 1
      %p212 = scmp.eq.s32.totalorder %s22, 1
      %p213 = scmp.ne.s32.totalorder %s208, %s210
      %p214 = scmp.eq.s32.totalorder %s22, 0
      %p215 = por %p213, %p214
      %p216 = scmp.ne.s32.totalorder %s208, %s210
      %p217 = scmp.eq.s32.totalorder %s27, 1
      %p218 = por %p216, %p217
      %p219 = scmp.ne.s32.totalorder %s210, %s211
      %p220 = scmp.eq.s32.totalorder %s27, 0
      %p221 = por %p219, %p220
      %p222 = scmp.ne.s32.totalorder %s210, %s211
      %p223 = scmp.eq.s32.totalorder %s28, 1
      %p224 = por %p222, %p223
      %p226 = scmp.ne.s32.totalorder %s211, %s225
      %p227 = scmp.eq.s32.totalorder %s28, 0
      %p228 = por %p226, %p227
      %s230 = sadd.s32 %s229, 1
      %p233 = scmp.eq.s32.totalorder %s22, 1
      %p234 = scmp.ne.s32.totalorder %s229, %s231
      %p235 = scmp.eq.s32.totalorder %s22, 0
      %p236 = por %p234, %p235
      %p237 = scmp.ne.s32.totalorder %s229, %s231
      %p238 = scmp.eq.s32.totalorder %s27, 1
      %p239 = por %p237, %p238
      %p240 = scmp.ne.s32.totalorder %s231, %s232
      %p241 = scmp.eq.s32.totalorder %s27, 0
      %p242 = por %p240, %p241
      %p243 = scmp.ne.s32.totalorder %s231, %s232
      %p244 = scmp.eq.s32.totalorder %s28, 1
      %p245 = por %p243, %p244
      %p247 = scmp.ne.s32.totalorder %s232, %s246
      %p248 = scmp.eq.s32.totalorder %s28, 0
      %p249 = por %p247, %p248
      %s251 = sadd.s32 %s250, 1
      %p254 = scmp.eq.s32.totalorder %s22, 1
      %p255 = scmp.ne.s32.totalorder %s250, %s252
      %p256 = scmp.eq.s32.totalorder %s22, 0
      %p257 = por %p255, %p256
      %p258 = scmp.ne.s32.totalorder %s250, %s252
      %p259 = scmp.eq.s32.totalorder %s27, 1
      %p260 = por %p258, %p259
      %p261 = scmp.ne.s32.totalorder %s252, %s253
      %p262 = scmp.eq.s32.totalorder %s27, 0
      %p263 = por %p261, %p262
      %p264 = scmp.ne.s32.totalorder %s252, %s253
      %p265 = scmp.eq.s32.totalorder %s28, 1
      %p266 = por %p264, %p265
      %p268 = scmp.ne.s32.totalorder %s253, %s267
      %p269 = scmp.eq.s32.totalorder %s28, 0
      %p270 = por %p268, %p269
      %s272 = sadd.s32 %s271, 1
      %p275 = scmp.eq.s32.totalorder %s22, 1
      %p276 = scmp.ne.s32.totalorder %s271, %s273
      %p277 = scmp.eq.s32.totalorder %s22, 0
      %p278 = por %p276, %p277
      %p279 = scmp.ne.s32.totalorder %s271, %s273
      %p280 = scmp.eq.s32.totalorder %s27, 1
      %p281 = por %p279, %p280
      %p282 = scmp.ne.s32.totalorder %s273, %s274
      %p283 = scmp.eq.s32.totalorder %s27, 0
      %p284 = por %p282, %p283
      %p285 = scmp.ne.s32.totalorder %s273, %s274
      %p286 = scmp.eq.s32.totalorder %s28, 1
      %p287 = por %p285, %p286
      %p289 = scmp.ne.s32.totalorder %s274, %s288
      %p290 = scmp.eq.s32.totalorder %s28, 0
      %p291 = por %p289, %p290
      %s293 = sadd.s32 %s292, 1
      %p296 = scmp.eq.s32.totalorder %s22, 1
      %p297 = scmp.ne.s32.totalorder %s292, %s294
      %p298 = scmp.eq.s32.totalorder %s22, 0
      %p299 = por %p297, %p298
      %p300 = scmp.ne.s32.totalorder %s292, %s294
      %p301 = scmp.eq.s32.totalorder %s27, 1
      %p302 = por %p300, %p301
      %p303 = scmp.ne.s32.totalorder %s294, %s295
      %p304 = scmp.eq.s32.totalorder %s27, 0
      %p305 = por %p303, %p304
      %p306 = scmp.ne.s32.totalorder %s294, %s295
      %p307 = scmp.eq.s32.totalorder %s28, 1
      %p308 = por %p306, %p307
      %p310 = scmp.ne.s32.totalorder %s295, %s309
      %p311 = scmp.eq.s32.totalorder %s28, 0
      %p312 = por %p310, %p311
      %s314 = sadd.s32 %s313, 1
      %p317 = scmp.eq.s32.totalorder %s22, 1
      %p318 = scmp.ne.s32.totalorder %s313, %s315
      %p319 = scmp.eq.s32.totalorder %s22, 0
      %p320 = por %p318, %p319
      %p321 = scmp.ne.s32.totalorder %s313, %s315
      %p322 = scmp.eq.s32.totalorder %s27, 1
      %p323 = por %p321, %p322
      %p324 = scmp.ne.s32.totalorder %s315, %s316
      %p325 = scmp.eq.s32.totalorder %s27, 0
      %p326 = por %p324, %p325
      %p327 = scmp.ne.s32.totalorder %s315, %s316
      %p328 = scmp.eq.s32.totalorder %s28, 1
      %p329 = por %p327, %p328
      %p331 = scmp.ne.s32.totalorder %s316, %s330
      %p332 = scmp.eq.s32.totalorder %s28, 0
      %p333 = por %p331, %p332
      %s334 = ssub.s32 %s22, %s29
      %p335 = scmp.eq.s32.totalorder %s334, 0
      %s337 = sadd.s32 %s336, 1
      %s338 = scalar_select %p335, %s336, %s337
      %p341 = pneg %p335
      %p342 = scmp.eq.s32.totalorder %s22, 1
      %p343 = por %p341, %p342
      %p344 = scmp.ne.s32.totalorder %s336, %s339
      %p345 = scmp.eq.s32.totalorder %s22, 0
      %p346 = por %p344, %p345
      %p347 = scmp.ne.s32.totalorder %s336, %s339
      %p348 = scmp.eq.s32.totalorder %s27, 1
      %p349 = por %p347, %p348
      %p350 = scmp.ne.s32.totalorder %s339, %s340
      %p351 = scmp.eq.s32.totalorder %s27, 0
      %p352 = por %p350, %p351
      %p353 = scmp.ne.s32.totalorder %s339, %s340
      %p354 = scmp.eq.s32.totalorder %s28, 1
      %p355 = por %p353, %p354
      %p357 = scmp.ne.s32.totalorder %s340, %s356
      %p358 = scmp.eq.s32.totalorder %s28, 0
      %p359 = por %p357, %p358
      %p360 = scmp.le.s32.totalorder 1, %s22
      %p361 = scmp.lt.s32.totalorder %s22, 3
      %p362 = pnand %p360, %p361
      %p363 = pneg %p362
      // Predicated region
      $region9: #{transformer_forward.6} parent=5 // pred_check
        _
      $region10: #{transformer_forward.6} parent=5 // pred_check_branch
        %365 = sbr.rel (%p362) target = $region12
      $region11: #{transformer_forward.6} parent=5 // pred_region
        %s366 = ssub.s32 %s22, 1
        // Predicated region
        $region13: #{transformer_forward.6} parent=11 // pred_check
          %p367 = pneg %p95
        $region14: #{transformer_forward.6} parent=11 // pred_check_branch
          %369 = sbr.rel (%p367) target = $region16
        $region15: #{transformer_forward.6} parent=11 // pred_region
          _
        $region16: #{transformer_forward.6} parent=11 // pred_fallthru
          _
        // Predicated region
        $region17: #{transformer_forward.6} parent=11 // pred_check
          %p370 = pneg %p116
        $region18: #{transformer_forward.6} parent=11 // pred_check_branch
          %372 = sbr.rel (%p370) target = $region20
        $region19: #{transformer_forward.6} parent=11 // pred_region
          _
        $region20: #{transformer_forward.6} parent=11 // pred_fallthru
          _
        // Predicated region
        $region21: #{transformer_forward.6} parent=11 // pred_check
          %p373 = pneg %p137
        $region22: #{transformer_forward.6} parent=11 // pred_check_branch
          %375 = sbr.rel (%p373) target = $region24
        $region23: #{transformer_forward.6} parent=11 // pred_region
          %377 = vsyncadd [#allocation3], 0
          %s378 = sshll.u32 %s4, 4
          %s379 = int_to_ptr.hbm [resolvable:$true] %s378
          %s380 = sshll.u32 [#allocation2], 4
          %s381 = int_to_ptr.vmem [resolvable:$true] %s380
          %386 = dma.hbm_to_vmem [thread:$0]  %s379, 1024, %s381, [#allocation3], 64, 64, 4
        $region24: #{transformer_forward.6} parent=11 // pred_fallthru
          _
        // Predicated region
        $region25: #{transformer_forward.6} parent=11 // pred_check
          %p387 = pneg %p158
        $region26: #{transformer_forward.6} parent=11 // pred_check_branch
          %389 = sbr.rel (%p387) target = $region28
        $region27: #{transformer_forward.6} parent=11 // pred_region
          _
        $region28: #{transformer_forward.6} parent=11 // pred_fallthru
          _
        // Predicated region
        $region29: #{transformer_forward.6} parent=11 // pred_check
          %p390 = pneg %p179
        $region30: #{transformer_forward.6} parent=11 // pred_check_branch
          %392 = sbr.rel (%p390) target = $region32
        $region31: #{transformer_forward.6} parent=11 // pred_region
          _
        $region32: #{transformer_forward.6} parent=11 // pred_fallthru
          _
        // Predicated region
        $region33: #{transformer_forward.6} parent=11 // pred_check
          %p393 = pneg %p200
        $region34: #{transformer_forward.6} parent=11 // pred_check_branch
          %395 = sbr.rel (%p393) target = $region36
        $region35: #{transformer_forward.6} parent=11 // pred_region
          _
        $region36: #{transformer_forward.6} parent=11 // pred_fallthru
          _
        // Predicated region
        $region37: #{transformer_forward.6} parent=11 // pred_check
          %p396 = pneg %p221
        $region38: #{transformer_forward.6} parent=11 // pred_check_branch
          %398 = sbr.rel (%p396) target = $region40
        $region39: #{transformer_forward.6} parent=11 // pred_region
          %400 = vsyncadd [#allocation5], 0
          %s401 = sshll.u32 %s8, 4
          %s402 = int_to_ptr.hbm [resolvable:$true] %s401
          %s403 = sshll.u32 [#allocation4], 4
          %s404 = int_to_ptr.vmem [resolvable:$true] %s403
          %409 = dma.hbm_to_vmem [thread:$0]  %s402, 1024, %s404, [#allocation5], 64, 64, 4
        $region40: #{transformer_forward.6} parent=11 // pred_fallthru
          _
        // Predicated region
        $region41: #{transformer_forward.6} parent=11 // pred_check
          %p410 = pneg %p242
        $region42: #{transformer_forward.6} parent=11 // pred_check_branch
          %412 = sbr.rel (%p410) target = $region44
        $region43: #{transformer_forward.6} parent=11 // pred_region
          _
        $region44: #{transformer_forward.6} parent=11 // pred_fallthru
          _
        // Predicated region
        $region45: #{transformer_forward.6} parent=11 // pred_check
          %p413 = pneg %p263
        $region46: #{transformer_forward.6} parent=11 // pred_check_branch
          %415 = sbr.rel (%p413) target = $region48
        $region47: #{transformer_forward.6} parent=11 // pred_region
          %417 = vsyncadd [#allocation5], 0
          %s418 = sshll.u32 %s10, 4
          %s419 = int_to_ptr.hbm [resolvable:$true] %s418
          %s420 = sshll.u32 [#allocation6], 4
          %s421 = int_to_ptr.vmem [resolvable:$true] %s420
          %426 = dma.hbm_to_vmem [thread:$0]  %s419, 1024, %s421, [#allocation5], 64, 64, 4
        $region48: #{transformer_forward.6} parent=11 // pred_fallthru
          _
        // Predicated region
        $region49: #{transformer_forward.6} parent=11 // pred_check
          %p427 = pneg %p284
        $region50: #{transformer_forward.6} parent=11 // pred_check_branch
          %429 = sbr.rel (%p427) target = $region52
        $region51: #{transformer_forward.6} parent=11 // pred_region
          _
        $region52: #{transformer_forward.6} parent=11 // pred_fallthru
          _
        // Predicated region
        $region53: #{transformer_forward.6} parent=11 // pred_check
          %p430 = pneg %p305
        $region54: #{transformer_forward.6} parent=11 // pred_check_branch
          %432 = sbr.rel (%p430) target = $region56
        $region55: #{transformer_forward.6} parent=11 // pred_region
          _
        $region56: #{transformer_forward.6} parent=11 // pred_fallthru
          _
        // Predicated region
        $region57: #{transformer_forward.6} parent=11 // pred_check
          %p433 = pneg %p326
        $region58: #{transformer_forward.6} parent=11 // pred_check_branch
          %435 = sbr.rel (%p433) target = $region60
        $region59: #{transformer_forward.6} parent=11 // pred_region
          _
        $region60: #{transformer_forward.6} parent=11 // pred_fallthru
          _
      $region12: #{transformer_forward.6} parent=5 // pred_fallthru
        _
      %p436 = scmp.lt.s32.totalorder %s22, 2
      // Predicated region
      $region61: #{transformer_forward.6} parent=5 // pred_check
        %p437 = pneg %p436
      $region62: #{transformer_forward.6} parent=5 // pred_check_branch
        %439 = sbr.rel (%p437) target = $region64
      $region63: #{transformer_forward.6} parent=5 // pred_region
        // Predicated region
        $region65: #{transformer_forward.6} parent=63 // pred_check
          %p440 = pneg %p42
        $region66: #{transformer_forward.6} parent=63 // pred_check_branch
          %442 = sbr.rel (%p440) target = $region68
        $region67: #{transformer_forward.6} parent=63 // pred_region
          %p443 = scmp.lt.s32.totalorder %s22, 1
          %s444 = scalar_select %p443, %s22, 1
          %s445 = smul.addr %s444, 2
          %s446 = smul.addr %s445, 8
          %s447 = scalar_lea.vmem %s0, %s446
        $region68: #{transformer_forward.6} parent=63 // pred_fallthru
          _
        // Predicated region
        $region69: #{transformer_forward.6} parent=63 // pred_check
          %p448 = pneg %p68
        $region70: #{transformer_forward.6} parent=63 // pred_check_branch
          %450 = sbr.rel (%p448) target = $region72
        $region71: #{transformer_forward.6} parent=63 // pred_region
          %p451 = scmp.lt.s32.totalorder %s22, 1
          %s452 = scalar_select %p451, %s22, 1
          %s453 = scalar_lea.vmem %s1, %s452
        $region72: #{transformer_forward.6} parent=63 // pred_fallthru
          _
      $region64: #{transformer_forward.6} parent=5 // pred_fallthru
        _
      %p454 = scmp.le.s32.totalorder 1, %s22
      %p455 = scmp.lt.s32.totalorder %s22, 3
      %p456 = pnand %p454, %p455
      %p457 = pneg %p456
      // Predicated region
      $region73: #{transformer_forward.6} parent=5 // pred_check
        _
      $region74: #{transformer_forward.6} parent=5 // pred_check_branch
        %459 = sbr.rel (%p456) target = $region76
      $region75: #{transformer_forward.6} parent=5 // pred_region
        %s460 = ssub.s32 %s22, 1
        // Predicated region
        $region77: #{transformer_forward.6} parent=75 // pred_check
          %p461 = pneg %p137
        $region78: #{transformer_forward.6} parent=75 // pred_check_branch
          %463 = sbr.rel (%p461) target = $region80
        $region79: #{transformer_forward.6} parent=75 // pred_region
          %465 = dma.done [#allocation3], 1024
        $region80: #{transformer_forward.6} parent=75 // pred_fallthru
          _
        // Predicated region
        $region81: #{transformer_forward.6} parent=75 // pred_check
          %p466 = pneg %p221
        $region82: #{transformer_forward.6} parent=75 // pred_check_branch
          %468 = sbr.rel (%p466) target = $region84
        $region83: #{transformer_forward.6} parent=75 // pred_region
          %470 = dma.done [#allocation5], 1024
        $region84: #{transformer_forward.6} parent=75 // pred_fallthru
          _
        // Predicated region
        $region85: #{transformer_forward.6} parent=75 // pred_check
          %p471 = pneg %p263
        $region86: #{transformer_forward.6} parent=75 // pred_check_branch
          %473 = sbr.rel (%p471) target = $region88
        $region87: #{transformer_forward.6} parent=75 // pred_region
          %475 = dma.done [#allocation5], 1024
        $region88: #{transformer_forward.6} parent=75 // pred_fallthru
          _
        %p476 = scmp.lt.s32.totalorder %s27, 1
        %s477 = scalar_select %p476, %s27, 1
        %s478 = smul.addr %s477, 2
        %s479 = smul.addr %s478, 8
        %s480 = scalar_lea.vmem %s0, %s479
        %p481 = pneg %p48
        %p482 = pneg %p45
        %p483 = scmp.lt.s32.totalorder %s27, 1
        %s484 = scalar_select %p483, %s27, 1
        %s485 = scalar_lea.vmem %s1, %s484
        %p486 = pneg %p74
        %p487 = pneg %p71
        %p488 = pneg %p95
        %p489 = pneg %p92
        %p490 = pneg %p116
        %p491 = pneg %p113
        %p492 = pneg %p137
        %p493 = pneg %p134
        %p494 = pneg %p158
        %p495 = pneg %p155
        %p496 = pneg %p179
        %p497 = pneg %p176
        %p498 = pneg %p200
        %p499 = pneg %p197
        %p500 = pneg %p221
        %p501 = pneg %p218
        %p502 = pneg %p242
        %p503 = pneg %p239
        %p504 = pneg %p263
        %p505 = pneg %p260
        %p506 = pneg %p284
        %p507 = pneg %p281
        %p508 = pneg %p305
        %p509 = pneg %p302
        %p510 = pneg %p326
        %p511 = pneg %p323
        %p512 = pneg %p352
        %p513 = pneg %p349
        %p514 = scmp.lt.s32.totalorder %s27, 1
        %s515 = scalar_select %p514, %s27, 1
        %s516 = smul.addr %s515, 2
        %s517 = smul.addr %s516, 8
        %s518 = scalar_lea.vmem %s14, %s517
        %p519 = scmp.lt.s32.totalorder %s27, 1
        %s520 = scalar_select %p519, %s27, 1
        %s521 = smul.addr %s520, 2
        %s522 = smul.addr %s521, 8
        %s523 = scalar_lea.vmem %s0, %s522
        %p524 = scmp.lt.s32.totalorder %s27, 1
        %s525 = scalar_select %p524, %s27, 1
        %s526 = scalar_lea.vmem %s1, %s525
        %p527 = scmp.lt.s32.totalorder %s27, 1
        %s528 = scalar_select %p527, %s27, 1
        %s529 = smul.addr %s528, 2
        %s530 = smul.addr %s529, 8
        %s531 = scalar_lea.vmem %s14, %s530
        %v532 = vld [vmem:[%s523] sm:$0xff]
        %v533 = vld [vmem:[%s523 + $0x8] sm:$0xf]
        %v534 = vpack.c.bf16 %v533, %v532
        %v535 = vld [vmem:[%s2] sm:$0xff]
        %v536 = vld [vmem:[%s2 + $0x8] sm:$0xf]
        %v537 = vld [vmem:[%s2 + $0xc] sm:$0xff]
        %v538 = vld [vmem:[%s2 + $0x14] sm:$0xf]
        %v539 = vld [vmem:[%s2 + $0x18] sm:$0xff]
        %v540 = vld [vmem:[%s2 + $0x20] sm:$0xf]
        %v541 = vld [vmem:[%s2 + $0x24] sm:$0xff]
        %v542 = vld [vmem:[%s2 + $0x2c] sm:$0xf]
        %v543 = vld [vmem:[%s2 + $0x30] sm:$0xff]
        %v544 = vld [vmem:[%s2 + $0x38] sm:$0xf]
        %v545 = vld [vmem:[%s2 + $0x3c] sm:$0xff]
        %v546 = vld [vmem:[%s2 + $0x44] sm:$0xf]
        %v547 = vld [vmem:[%s2 + $0x48] sm:$0xff]
        %v548 = vld [vmem:[%s2 + $0x50] sm:$0xf]
        %v549 = vld [vmem:[%s2 + $0x54] sm:$0xff]
        %v550 = vld [vmem:[%s2 + $0x5c] sm:$0xf]
        %v551 = vld [vmem:[%s2 + $0x60] sm:$0xff]
        %v552 = vld [vmem:[%s2 + $0x68] sm:$0xf]
        %v553 = vld [vmem:[%s2 + $0x6c] sm:$0xff]
        %v554 = vld [vmem:[%s2 + $0x74] sm:$0xf]
        %v555 = vld [vmem:[%s2 + $0x78] sm:$0xff]
        %v556 = vld [vmem:[%s2 + $0x80] sm:$0xf]
        %v557 = vld [vmem:[%s2 + $0x84] sm:$0xff]
        %v558 = vld [vmem:[%s2 + $0x8c] sm:$0xf]
        %v559 = vld [vmem:[%s2 + $0x90] sm:$0xff]
        %v560 = vld [vmem:[%s2 + $0x98] sm:$0xf]
        %v561 = vld [vmem:[%s2 + $0x9c] sm:$0xff]
        %v562 = vld [vmem:[%s2 + $0xa4] sm:$0xf]
        %v563 = vld [vmem:[%s2 + $0xa8] sm:$0xff]
        %v564 = vld [vmem:[%s2 + $0xb0] sm:$0xf]
        %v565 = vld [vmem:[%s2 + $0xb4] sm:$0xff]
        %v566 = vld [vmem:[%s2 + $0xbc] sm:$0xf]
        %v567 = vld [vmem:[%s3] sm:$0x7]
        %v569 = vperm.slane %v567, 0
        %v570 = vperm.slane %v567, 1
        %v571 = vperm.slane %v567, 2
        %v607 = vunpack.c.l.b16 %v535
        %v608 = vunpack.c.h.b16 %v535
        %v609 = vunpack.c.l.b16 %v536
        %v610 = vunpack.c.l.b16 %v537
        %v611 = vunpack.c.h.b16 %v537
        %v612 = vunpack.c.l.b16 %v538
        %v613 = vunpack.c.l.b16 %v539
        %v614 = vunpack.c.h.b16 %v539
        %v615 = vunpack.c.l.b16 %v540
        %v616 = vunpack.c.l.b16 %v541
        %v617 = vunpack.c.h.b16 %v541
        %v618 = vunpack.c.l.b16 %v542
        %v619 = vunpack.c.l.b16 %v543
        %v620 = vunpack.c.h.b16 %v543
        %v621 = vunpack.c.l.b16 %v544
        %v622 = vunpack.c.l.b16 %v545
        %v623 = vunpack.c.h.b16 %v545
        %v624 = vunpack.c.l.b16 %v546
        %v625 = vunpack.c.l.b16 %v547
        %v626 = vunpack.c.h.b16 %v547
        %v627 = vunpack.c.l.b16 %v548
        %v628 = vunpack.c.l.b16 %v549
        %v629 = vunpack.c.h.b16 %v549
        %v630 = vunpack.c.l.b16 %v550
        %v631 = vunpack.c.l.b16 %v551
        %v632 = vunpack.c.h.b16 %v551
        %v633 = vunpack.c.l.b16 %v552
        %v634 = vunpack.c.l.b16 %v553
        %v635 = vunpack.c.h.b16 %v553
        %v636 = vunpack.c.l.b16 %v554
        %v637 = vunpack.c.l.b16 %v555
        %v638 = vunpack.c.h.b16 %v555
        %v639 = vunpack.c.l.b16 %v556
        %v640 = vunpack.c.l.b16 %v557
        %v641 = vunpack.c.h.b16 %v557
        %v642 = vunpack.c.l.b16 %v558
        %v643 = vunpack.c.l.b16 %v559
        %v644 = vunpack.c.h.b16 %v559
        %v645 = vunpack.c.l.b16 %v560
        %v646 = vunpack.c.l.b16 %v561
        %v647 = vunpack.c.h.b16 %v561
        %v648 = vunpack.c.l.b16 %v562
        %v649 = vunpack.c.l.b16 %v563
        %v650 = vunpack.c.h.b16 %v563
        %v651 = vunpack.c.l.b16 %v564
        %v652 = vunpack.c.l.b16 %v565
        %v653 = vunpack.c.h.b16 %v565
        %v654 = vunpack.c.l.b16 %v566
        %v655 = vpack.c.b16 %v610, %v607
        %v656 = vpack.c.b16 %v611, %v608
        %v657 = vpack.c.b16 %v612, %v609
        %v658 = vpack.c.b16 %v616, %v613
        %v659 = vpack.c.b16 %v617, %v614
        %v660 = vpack.c.b16 %v618, %v615
        %v661 = vpack.c.b16 %v622, %v619
        %v662 = vpack.c.b16 %v623, %v620
        %v663 = vpack.c.b16 %v624, %v621
        %v664 = vpack.c.b16 %v628, %v625
        %v665 = vpack.c.b16 %v629, %v626
        %v666 = vpack.c.b16 %v630, %v627
        %v667 = vpack.c.b16 %v634, %v631
        %v668 = vpack.c.b16 %v635, %v632
        %v669 = vpack.c.b16 %v636, %v633
        %v670 = vpack.c.b16 %v640, %v637
        %v671 = vpack.c.b16 %v641, %v638
        %v672 = vpack.c.b16 %v642, %v639
        %v673 = vpack.c.b16 %v646, %v643
        %v674 = vpack.c.b16 %v647, %v644
        %v675 = vpack.c.b16 %v648, %v645
        %v676 = vpack.c.b16 %v652, %v649
        %v677 = vpack.c.b16 %v653, %v650
        %v678 = vpack.c.b16 %v654, %v651
        %703 = vmatpush.bf16.msra.mxu0 %v676
        %704 = vmatpush.bf16.msra.mxu0 %v673
        %705 = vmatpush.bf16.msra.mxu0 %v670
        %706 = vmatpush.bf16.msra.mxu0 %v667
        %707 = vmatpush.bf16.msra.mxu0 %v664
        %708 = vmatpush.bf16.msra.mxu0 %v661
        %709 = vmatpush.bf16.msra.mxu0 %v658
        %710 = vmatpush.bf16.msra.mxu0 %v655
        %711 = vmatmul.bf16.gmra.mxu0 %v534
        %v712 = vpop.f32.mrf.mxu0
        %v713 = vadd.f32 %v569, %v712
        %v714 = vpop.f32.mrf.mxu0
        %v715 = vadd.f32 %v569, %v714
        %716 = vdwg.mxu0
        %717 = vmatpush.bf16.msra.mxu0 %v677
        %718 = vmatpush.bf16.msra.mxu0 %v674
        %719 = vmatpush.bf16.msra.mxu0 %v671
        %720 = vmatpush.bf16.msra.mxu0 %v668
        %721 = vmatpush.bf16.msra.mxu0 %v665
        %722 = vmatpush.bf16.msra.mxu0 %v662
        %723 = vmatpush.bf16.msra.mxu0 %v659
        %724 = vmatpush.bf16.msra.mxu0 %v656
        %725 = vmatmul.bf16.gmra.mxu0 %v534
        %v726 = vpop.f32.mrf.mxu0
        %v727 = vadd.f32 %v570, %v726
        %v728 = vpop.f32.mrf.mxu0
        %v729 = vadd.f32 %v570, %v728
        %730 = vdwg.mxu0
        %731 = vmatpush.bf16.msra.mxu0 %v678
        %732 = vmatpush.bf16.msra.mxu0 %v675
        %733 = vmatpush.bf16.msra.mxu0 %v672
        %734 = vmatpush.bf16.msra.mxu0 %v669
        %735 = vmatpush.bf16.msra.mxu0 %v666
        %736 = vmatpush.bf16.msra.mxu0 %v663
        %737 = vmatpush.bf16.msra.mxu0 %v660
        %738 = vmatpush.bf16.msra.mxu0 %v657
        %739 = vmatmul.bf16.gmra.mxu0 %v534
        %v740 = vpop.f32.mrf.mxu0
        %v741 = vadd.f32 %v571, %v740
        %v742 = vpop.f32.mrf.mxu0
        %v743 = vadd.f32 %v571, %v742
        %744 = vdwg.mxu0
        %v745 = vld [vmem:[%s526] sm:$0x1]
        %vm746 = vcmask 261120
        %v748 = vsel %vm746, %v713, 0
        %v751 = vsel %vm746, %v715, 0
        %v754 = vsel %vm746, %v727, 0
        %v757 = vsel %vm746, %v729, 0
        %759 = vmatpush.xpose.msra.mxu0 0.0
        %760 = vmatpush.xpose.msra.mxu0 0.0
        %761 = vmatpush.xpose.msra.mxu0 0.0
        %762 = vmatpush.xpose.msra.mxu0 0.0
        %763 = vmatpush.xpose.msra.mxu0 0.0
        %764 = vmatpush.xpose.msra.mxu0 0.0
        %765 = vmatpush.xpose.msra.mxu0 0.0
        %766 = vmatpush.xpose.msra.mxu0 0.0
        %767 = vmatpush.xpose.msra.mxu0 0.0
        %768 = vmatpush.xpose.msra.mxu0 0.0
        %769 = vmatpush.xpose.msra.mxu0 0.0
        %770 = vmatpush.xpose.msra.mxu0 0.0
        %771 = vmatpush.xpose.msra.mxu0 0.0
        %772 = vmatpush.xpose.msra.mxu0 0.0
        %773 = vmatpush.xpose.msra.mxu0 %v757
        %774 = vmatpush.xpose.msra.mxu0 %v754
        %775 = vmatmul.f32.gmra.mxu0 %v748
        %v776 = vpop.f32.mrf.mxu0
        %v777 = vadd.f32 0.0, %v776
        %778 = vmatmul.f32.gmra.mxu0 %v751
        %v779 = vpop.f32.mrf.mxu0
        %v780 = vadd.f32 0.0, %v779
        %781 = vdwg.mxu0
        %v782 = vmul.f32 %v777, 0.17677669
        %v783 = vmul.f32 %v780, 0.17677669
        %v785 = vperm.slane %v745, 0
        %v787 = vadd.f32 %v782, %v785
        %v788 = vadd.f32 %v783, %v785
        %vm789 = vcmask 97280
        %v790 = vsel %vm789, %v787, -inf
        %791 = vmax.xlane.f32.xlu0 %v790
        %v792 = vpop.xlane.xlu0 %791
        %vm793 = vcmask 93184
        %v794 = vsel %vm793, %v788, -inf
        %795 = vmax.xlane.f32.xlu0 %v794
        %v796 = vpop.xlane.xlu0 %795
        %v797 = vsub.f32 %v787, %v792
        %v798 = vsub.f32 %v788, %v796
        %v799 = vmul.f32 %v797, 1.442695
        %v800 = vpow.pop %v799
        %v801 = vmul.f32 %v798, 1.442695
        %v802 = vpow.pop %v801
        %v803 = vsel %vm789, %v800, 0.0
        %804 = vadd.xlane.f32.xlu0 %v803
        %v805 = vpop.xlane.xlu0 %804
        %v806 = vsel %vm793, %v802, 0.0
        %807 = vadd.xlane.f32.xlu0 %v806
        %v808 = vpop.xlane.xlu0 %807
        %v809 = vrcp.pop %v805
        %v810 = vrcp.pop %v808
        %v811 = vmul.f32 %v800, %v809
        %v812 = vmul.f32 %v802, %v810
        %v814 = vsel %vm789, %v811, 0
        %v817 = vsel %vm789, %v812, 0
        %vm819 = vcmask 1043456
        %v821 = vsel %vm819, %v743, 0
        %823 = vmatpush.msra.mxu0 0.0
        %824 = vmatpush.msra.mxu0 0.0
        %825 = vmatpush.msra.mxu0 0.0
        %826 = vmatpush.msra.mxu0 0.0
        %827 = vmatpush.msra.mxu0 0.0
        %828 = vmatpush.msra.mxu0 0.0
        %829 = vmatpush.msra.mxu0 0.0
        %830 = vmatpush.msra.mxu0 0.0
        %831 = vmatpush.msra.mxu0 0.0
        %832 = vmatpush.msra.mxu0 0.0
        %833 = vmatpush.msra.mxu0 0.0
        %834 = vmatpush.msra.mxu0 0.0
        %835 = vmatpush.msra.mxu0 0.0
        %836 = vmatpush.msra.mxu0 0.0
        %837 = vmatpush.msra.mxu0 %v821
        %838 = vmatpush.msra.mxu0 %v741
        %839 = vmatmul.f32.gmra.mxu0 %v814
        %v840 = vpop.f32.mrf.mxu0
        %v841 = vadd.f32 0.0, %v840
        %842 = vmatmul.f32.gmra.mxu0 %v817
        %v843 = vpop.f32.mrf.mxu0
        %v844 = vadd.f32 0.0, %v843
        %845 = vdwg.mxu0
        %846 = vrot.lane.b32.xlu0 %v713, 96
        %v847 = vpop.permute.xlu0 %846
        %848 = vrot.lane.b32.xlu0 %v715, 96
        %v849 = vpop.permute.xlu0 %848
        %850 = vrot.lane.b32.xlu0 %v727, 96
        %v851 = vpop.permute.xlu0 %850
        %852 = vrot.lane.b32.xlu0 %v729, 96
        %v853 = vpop.permute.xlu0 %852
        %v854 = vsel %vm746, %v847, 0
        %v856 = vsel %vm746, %v849, 0
        %v858 = vsel %vm746, %v851, 0
        %v860 = vsel %vm746, %v853, 0
        %862 = vmatpush.xpose.msra.mxu0 0.0
        %863 = vmatpush.xpose.msra.mxu0 0.0
        %864 = vmatpush.xpose.msra.mxu0 0.0
        %865 = vmatpush.xpose.msra.mxu0 0.0
        %866 = vmatpush.xpose.msra.mxu0 0.0
        %867 = vmatpush.xpose.msra.mxu0 0.0
        %868 = vmatpush.xpose.msra.mxu0 0.0
        %869 = vmatpush.xpose.msra.mxu0 0.0
        %870 = vmatpush.xpose.msra.mxu0 0.0
        %871 = vmatpush.xpose.msra.mxu0 0.0
        %872 = vmatpush.xpose.msra.mxu0 0.0
        %873 = vmatpush.xpose.msra.mxu0 0.0
        %874 = vmatpush.xpose.msra.mxu0 0.0
        %875 = vmatpush.xpose.msra.mxu0 0.0
        %876 = vmatpush.xpose.msra.mxu0 %v860
        %877 = vmatpush.xpose.msra.mxu0 %v858
        %878 = vmatmul.f32.gmra.mxu0 %v854
        %v879 = vpop.f32.mrf.mxu0
        %v880 = vadd.f32 0.0, %v879
        %881 = vmatmul.f32.gmra.mxu0 %v856
        %v882 = vpop.f32.mrf.mxu0
        %v883 = vadd.f32 0.0, %v882
        %884 = vdwg.mxu0
        %v885 = vmul.f32 %v880, 0.17677669
        %v886 = vmul.f32 %v883, 0.17677669
        %v887 = vadd.f32 %v885, %v785
        %v888 = vadd.f32 %v886, %v785
        %v889 = vsel %vm789, %v887, -inf
        %890 = vmax.xlane.f32.xlu0 %v889
        %v891 = vpop.xlane.xlu0 %890
        %v892 = vsel %vm793, %v888, -inf
        %893 = vmax.xlane.f32.xlu0 %v892
        %v894 = vpop.xlane.xlu0 %893
        %v895 = vsub.f32 %v887, %v891
        %v896 = vsub.f32 %v888, %v894
        %v897 = vmul.f32 %v895, 1.442695
        %v898 = vpow.pop %v897
        %v899 = vmul.f32 %v896, 1.442695
        %v900 = vpow.pop %v899
        %v901 = vsel %vm789, %v898, 0.0
        %902 = vadd.xlane.f32.xlu0 %v901
        %v903 = vpop.xlane.xlu0 %902
        %v904 = vsel %vm793, %v900, 0.0
        %905 = vadd.xlane.f32.xlu0 %v904
        %v906 = vpop.xlane.xlu0 %905
        %v907 = vrcp.pop %v903
        %v908 = vrcp.pop %v906
        %v909 = vmul.f32 %v898, %v907
        %v910 = vmul.f32 %v900, %v908
        %912 = vrot.lane.b32.xlu0 %v741, 96
        %v913 = vpop.permute.xlu0 %912
        %914 = vrot.lane.b32.xlu0 %v743, 96
        %v915 = vpop.permute.xlu0 %914
        %v918 = vsel %vm789, %v909, 0
        %v921 = vsel %vm789, %v910, 0
        %v923 = vsel %vm819, %v915, 0
        %925 = vmatpush.msra.mxu0 0.0
        %926 = vmatpush.msra.mxu0 0.0
        %927 = vmatpush.msra.mxu0 0.0
        %928 = vmatpush.msra.mxu0 0.0
        %929 = vmatpush.msra.mxu0 0.0
        %930 = vmatpush.msra.mxu0 0.0
        %931 = vmatpush.msra.mxu0 0.0
        %932 = vmatpush.msra.mxu0 0.0
        %933 = vmatpush.msra.mxu0 0.0
        %934 = vmatpush.msra.mxu0 0.0
        %935 = vmatpush.msra.mxu0 0.0
        %936 = vmatpush.msra.mxu0 0.0
        %937 = vmatpush.msra.mxu0 0.0
        %938 = vmatpush.msra.mxu0 0.0
        %939 = vmatpush.msra.mxu0 %v923
        %940 = vmatpush.msra.mxu0 %v913
        %941 = vmatmul.f32.gmra.mxu0 %v918
        %v942 = vpop.f32.mrf.mxu0
        %v943 = vadd.f32 0.0, %v942
        %944 = vmatmul.f32.gmra.mxu0 %v921
        %v945 = vpop.f32.mrf.mxu0
        %v946 = vadd.f32 0.0, %v945
        %947 = vdwg.mxu0
        %948 = vrot.lane.b32.xlu0 %v713, 64
        %v949 = vpop.permute.xlu0 %948
        %950 = vrot.lane.b32.xlu0 %v715, 64
        %v951 = vpop.permute.xlu0 %950
        %952 = vrot.lane.b32.xlu0 %v727, 64
        %v953 = vpop.permute.xlu0 %952
        %954 = vrot.lane.b32.xlu0 %v729, 64
        %v955 = vpop.permute.xlu0 %954
        %v956 = vsel %vm746, %v949, 0
        %v958 = vsel %vm746, %v951, 0
        %v960 = vsel %vm746, %v953, 0
        %v962 = vsel %vm746, %v955, 0
        %964 = vmatpush.xpose.msra.mxu0 0.0
        %965 = vmatpush.xpose.msra.mxu0 0.0
        %966 = vmatpush.xpose.msra.mxu0 0.0
        %967 = vmatpush.xpose.msra.mxu0 0.0
        %968 = vmatpush.xpose.msra.mxu0 0.0
        %969 = vmatpush.xpose.msra.mxu0 0.0
        %970 = vmatpush.xpose.msra.mxu0 0.0
        %971 = vmatpush.xpose.msra.mxu0 0.0
        %972 = vmatpush.xpose.msra.mxu0 0.0
        %973 = vmatpush.xpose.msra.mxu0 0.0
        %974 = vmatpush.xpose.msra.mxu0 0.0
        %975 = vmatpush.xpose.msra.mxu0 0.0
        %976 = vmatpush.xpose.msra.mxu0 0.0
        %977 = vmatpush.xpose.msra.mxu0 0.0
        %978 = vmatpush.xpose.msra.mxu0 %v962
        %979 = vmatpush.xpose.msra.mxu0 %v960
        %980 = vmatmul.f32.gmra.mxu0 %v956
        %v981 = vpop.f32.mrf.mxu0
        %v982 = vadd.f32 0.0, %v981
        %983 = vmatmul.f32.gmra.mxu0 %v958
        %v984 = vpop.f32.mrf.mxu0
        %v985 = vadd.f32 0.0, %v984
        %986 = vdwg.mxu0
        %v987 = vmul.f32 %v982, 0.17677669
        %v988 = vmul.f32 %v985, 0.17677669
        %v989 = vadd.f32 %v987, %v785
        %v990 = vadd.f32 %v988, %v785
        %v991 = vsel %vm789, %v989, -inf
        %992 = vmax.xlane.f32.xlu0 %v991
        %v993 = vpop.xlane.xlu0 %992
        %v994 = vsel %vm793, %v990, -inf
        %995 = vmax.xlane.f32.xlu0 %v994
        %v996 = vpop.xlane.xlu0 %995
        %v997 = vsub.f32 %v989, %v993
        %v998 = vsub.f32 %v990, %v996
        %v999 = vmul.f32 %v997, 1.442695
        %v1000 = vpow.pop %v999
        %v1001 = vmul.f32 %v998, 1.442695
        %v1002 = vpow.pop %v1001
        %v1003 = vsel %vm789, %v1000, 0.0
        %1004 = vadd.xlane.f32.xlu0 %v1003
        %v1005 = vpop.xlane.xlu0 %1004
        %v1006 = vsel %vm793, %v1002, 0.0
        %1007 = vadd.xlane.f32.xlu0 %v1006
        %v1008 = vpop.xlane.xlu0 %1007
        %v1009 = vrcp.pop %v1005
        %v1010 = vrcp.pop %v1008
        %v1011 = vmul.f32 %v1000, %v1009
        %v1012 = vmul.f32 %v1002, %v1010
        %1013 = vrot.lane.b32.xlu0 %v741, 64
        %v1014 = vpop.permute.xlu0 %1013
        %1015 = vrot.lane.b32.xlu0 %v743, 64
        %v1016 = vpop.permute.xlu0 %1015
        %v1019 = vsel %vm789, %v1011, 0
        %v1022 = vsel %vm789, %v1012, 0
        %v1024 = vsel %vm819, %v1016, 0
        %1026 = vmatpush.msra.mxu0 0.0
        %1027 = vmatpush.msra.mxu0 0.0
        %1028 = vmatpush.msra.mxu0 0.0
        %1029 = vmatpush.msra.mxu0 0.0
        %1030 = vmatpush.msra.mxu0 0.0
        %1031 = vmatpush.msra.mxu0 0.0
        %1032 = vmatpush.msra.mxu0 0.0
        %1033 = vmatpush.msra.mxu0 0.0
        %1034 = vmatpush.msra.mxu0 0.0
        %1035 = vmatpush.msra.mxu0 0.0
        %1036 = vmatpush.msra.mxu0 0.0
        %1037 = vmatpush.msra.mxu0 0.0
        %1038 = vmatpush.msra.mxu0 0.0
        %1039 = vmatpush.msra.mxu0 0.0
        %1040 = vmatpush.msra.mxu0 %v1024
        %1041 = vmatpush.msra.mxu0 %v1014
        %1042 = vmatmul.f32.gmra.mxu0 %v1019
        %v1043 = vpop.f32.mrf.mxu0
        %v1044 = vadd.f32 0.0, %v1043
        %1045 = vmatmul.f32.gmra.mxu0 %v1022
        %v1046 = vpop.f32.mrf.mxu0
        %v1047 = vadd.f32 0.0, %v1046
        %1048 = vdwg.mxu0
        %1049 = vrot.lane.b32.xlu0 %v713, 32
        %v1050 = vpop.permute.xlu0 %1049
        %1051 = vrot.lane.b32.xlu0 %v715, 32
        %v1052 = vpop.permute.xlu0 %1051
        %1053 = vrot.lane.b32.xlu0 %v727, 32
        %v1054 = vpop.permute.xlu0 %1053
        %1055 = vrot.lane.b32.xlu0 %v729, 32
        %v1056 = vpop.permute.xlu0 %1055
        %v1057 = vsel %vm746, %v1050, 0
        %v1059 = vsel %vm746, %v1052, 0
        %v1061 = vsel %vm746, %v1054, 0
        %v1063 = vsel %vm746, %v1056, 0
        %1065 = vmatpush.xpose.msra.mxu0 0.0
        %1066 = vmatpush.xpose.msra.mxu0 0.0
        %1067 = vmatpush.xpose.msra.mxu0 0.0
        %1068 = vmatpush.xpose.msra.mxu0 0.0
        %1069 = vmatpush.xpose.msra.mxu0 0.0
        %1070 = vmatpush.xpose.msra.mxu0 0.0
        %1071 = vmatpush.xpose.msra.mxu0 0.0
        %1072 = vmatpush.xpose.msra.mxu0 0.0
        %1073 = vmatpush.xpose.msra.mxu0 0.0
        %1074 = vmatpush.xpose.msra.mxu0 0.0
        %1075 = vmatpush.xpose.msra.mxu0 0.0
        %1076 = vmatpush.xpose.msra.mxu0 0.0
        %1077 = vmatpush.xpose.msra.mxu0 0.0
        %1078 = vmatpush.xpose.msra.mxu0 0.0
        %1079 = vmatpush.xpose.msra.mxu0 %v1063
        %1080 = vmatpush.xpose.msra.mxu0 %v1061
        %1081 = vmatmul.f32.gmra.mxu0 %v1057
        %v1082 = vpop.f32.mrf.mxu0
        %v1083 = vadd.f32 0.0, %v1082
        %1084 = vmatmul.f32.gmra.mxu0 %v1059
        %v1085 = vpop.f32.mrf.mxu0
        %v1086 = vadd.f32 0.0, %v1085
        %1087 = vdwg.mxu0
        %v1088 = vmul.f32 %v1083, 0.17677669
        %v1089 = vmul.f32 %v1086, 0.17677669
        %v1090 = vadd.f32 %v1088, %v785
        %v1091 = vadd.f32 %v1089, %v785
        %v1092 = vsel %vm789, %v1090, -inf
        %1093 = vmax.xlane.f32.xlu0 %v1092
        %v1094 = vpop.xlane.xlu0 %1093
        %v1095 = vsel %vm793, %v1091, -inf
        %1096 = vmax.xlane.f32.xlu0 %v1095
        %v1097 = vpop.xlane.xlu0 %1096
        %v1098 = vsub.f32 %v1090, %v1094
        %v1099 = vsub.f32 %v1091, %v1097
        %v1100 = vmul.f32 %v1098, 1.442695
        %v1101 = vpow.pop %v1100
        %v1102 = vmul.f32 %v1099, 1.442695
        %v1103 = vpow.pop %v1102
        %v1104 = vsel %vm789, %v1101, 0.0
        %1105 = vadd.xlane.f32.xlu0 %v1104
        %v1106 = vpop.xlane.xlu0 %1105
        %v1107 = vsel %vm793, %v1103, 0.0
        %1108 = vadd.xlane.f32.xlu0 %v1107
        %v1109 = vpop.xlane.xlu0 %1108
        %v1110 = vrcp.pop %v1106
        %v1111 = vrcp.pop %v1109
        %v1112 = vmul.f32 %v1101, %v1110
        %v1113 = vmul.f32 %v1103, %v1111
        %1114 = vrot.lane.b32.xlu0 %v741, 32
        %v1115 = vpop.permute.xlu0 %1114
        %1116 = vrot.lane.b32.xlu0 %v743, 32
        %v1117 = vpop.permute.xlu0 %1116
        %v1120 = vsel %vm789, %v1112, 0
        %v1123 = vsel %vm789, %v1113, 0
        %v1125 = vsel %vm819, %v1117, 0
        %1127 = vmatpush.msra.mxu0 0.0
        %1128 = vmatpush.msra.mxu0 0.0
        %1129 = vmatpush.msra.mxu0 0.0
        %1130 = vmatpush.msra.mxu0 0.0
        %1131 = vmatpush.msra.mxu0 0.0
        %1132 = vmatpush.msra.mxu0 0.0
        %1133 = vmatpush.msra.mxu0 0.0
        %1134 = vmatpush.msra.mxu0 0.0
        %1135 = vmatpush.msra.mxu0 0.0
        %1136 = vmatpush.msra.mxu0 0.0
        %1137 = vmatpush.msra.mxu0 0.0
        %1138 = vmatpush.msra.mxu0 0.0
        %1139 = vmatpush.msra.mxu0 0.0
        %1140 = vmatpush.msra.mxu0 0.0
        %1141 = vmatpush.msra.mxu0 %v1125
        %1142 = vmatpush.msra.mxu0 %v1115
        %1143 = vmatmul.f32.gmra.mxu0 %v1120
        %v1144 = vpop.f32.mrf.mxu0
        %v1145 = vadd.f32 0.0, %v1144
        %1146 = vmatmul.f32.gmra.mxu0 %v1123
        %v1147 = vpop.f32.mrf.mxu0
        %v1148 = vadd.f32 0.0, %v1147
        %1149 = vdwg.mxu0
        %1152 = vrot.lane.b32.xlu0 %v943, 32
        %v1153 = vpop.permute.xlu0 %1152
        %1154 = vrot.lane.b32.xlu0 %v946, 32
        %v1155 = vpop.permute.xlu0 %1154
        %1160 = vrot.lane.b32.xlu0 %v1044, 64
        %v1161 = vpop.permute.xlu0 %1160
        %1162 = vrot.lane.b32.xlu0 %v1047, 64
        %v1163 = vpop.permute.xlu0 %1162
        %1168 = vrot.lane.b32.xlu0 %v1145, 96
        %v1169 = vpop.permute.xlu0 %1168
        %1170 = vrot.lane.b32.xlu0 %v1148, 96
        %v1171 = vpop.permute.xlu0 %1170
        %v1174 = vsel %vm746, %v841, %v1153
        %v1175 = vsel %vm746, %v844, %v1155
        %vm1176 = vcmask 523264
        %v1177 = vsel %vm1176, %v1174, %v1161
        %v1178 = vsel %vm1176, %v1175, %v1163
        %vm1179 = vcmask 785408
        %v1180 = vsel %vm1179, %v1177, %v1169
        %v1181 = vsel %vm1179, %v1178, %v1171
        %v1182 = vpack.c.bf16 %v1181, %v1180
        %v1183 = vld [vmem:[#allocation2] sm:$0xf]
        %v1184 = vld [vmem:[#allocation2 + $0x4] sm:$0xf]
        %v1185 = vld [vmem:[#allocation2 + $0x8] sm:$0xf]
        %v1186 = vld [vmem:[#allocation2 + $0xc] sm:$0xf]
        %v1187 = vld [vmem:[#allocation2 + $0x10] sm:$0xf]
        %v1188 = vld [vmem:[#allocation2 + $0x14] sm:$0xf]
        %v1189 = vld [vmem:[#allocation2 + $0x18] sm:$0xf]
        %v1190 = vld [vmem:[#allocation2 + $0x1c] sm:$0xf]
        %v1191 = vld [vmem:[#allocation2 + $0x20] sm:$0xf]
        %v1192 = vld [vmem:[#allocation2 + $0x24] sm:$0xf]
        %v1193 = vld [vmem:[#allocation2 + $0x28] sm:$0xf]
        %v1194 = vld [vmem:[#allocation2 + $0x2c] sm:$0xf]
        %v1195 = vld [vmem:[#allocation2 + $0x30] sm:$0xf]
        %v1196 = vld [vmem:[#allocation2 + $0x34] sm:$0xf]
        %v1197 = vld [vmem:[#allocation2 + $0x38] sm:$0xf]
        %v1198 = vld [vmem:[#allocation2 + $0x3c] sm:$0xf]
        %v1199 = vld [vmem:[%s5] sm:$0x1]
        %v1201 = vperm.slane %v1199, 0
        %v1219 = vunpack.c.l.b16 %v1183
        %v1220 = vunpack.c.l.b16 %v1184
        %v1221 = vunpack.c.l.b16 %v1185
        %v1222 = vunpack.c.l.b16 %v1186
        %v1223 = vunpack.c.l.b16 %v1187
        %v1224 = vunpack.c.l.b16 %v1188
        %v1225 = vunpack.c.l.b16 %v1189
        %v1226 = vunpack.c.l.b16 %v1190
        %v1227 = vunpack.c.l.b16 %v1191
        %v1228 = vunpack.c.l.b16 %v1192
        %v1229 = vunpack.c.l.b16 %v1193
        %v1230 = vunpack.c.l.b16 %v1194
        %v1231 = vunpack.c.l.b16 %v1195
        %v1232 = vunpack.c.l.b16 %v1196
        %v1233 = vunpack.c.l.b16 %v1197
        %v1234 = vunpack.c.l.b16 %v1198
        %v1235 = vpack.c.b16 %v1220, %v1219
        %v1236 = vpack.c.b16 %v1222, %v1221
        %v1237 = vpack.c.b16 %v1224, %v1223
        %v1238 = vpack.c.b16 %v1226, %v1225
        %v1239 = vpack.c.b16 %v1228, %v1227
        %v1240 = vpack.c.b16 %v1230, %v1229
        %v1241 = vpack.c.b16 %v1232, %v1231
        %v1242 = vpack.c.b16 %v1234, %v1233
        %1251 = vmatpush.bf16.msra.mxu0 %v1242
        %1252 = vmatpush.bf16.msra.mxu0 %v1241
        %1253 = vmatpush.bf16.msra.mxu0 %v1240
        %1254 = vmatpush.bf16.msra.mxu0 %v1239
        %1255 = vmatpush.bf16.msra.mxu0 %v1238
        %1256 = vmatpush.bf16.msra.mxu0 %v1237
        %1257 = vmatpush.bf16.msra.mxu0 %v1236
        %1258 = vmatpush.bf16.msra.mxu0 %v1235
        %1259 = vmatmul.bf16.gmra.mxu0 %v1182
        %v1260 = vpop.f32.mrf.mxu0
        %v1261 = vadd.f32 %v1201, %v1260
        %v1262 = vpop.f32.mrf.mxu0
        %v1263 = vadd.f32 %v1201, %v1262
        %1264 = vdwg.mxu0
        %v1265 = vadd.f32 %v532, %v1261
        %v1266 = vadd.f32 %v533, %v1263
        %v1267 = vld [vmem:[%s6] sm:$0x1]
        %v1268 = vld [vmem:[%s7] sm:$0x1]
        %1269 = vadd.xlane.f32.xlu0 %v1265
        %v1270 = vpop.xlane.xlu0 %1269
        %v1271 = vsel %vm819, %v1266, 0.0
        %1272 = vadd.xlane.f32.xlu0 %v1271
        %v1273 = vpop.xlane.xlu0 %1272
        %v1274 = vrcp.pop 128.0
        %v1275 = vmul.f32 128.0, %v1274
        %v1276 = vsub.f32 1.0, %v1275
        %v1277 = vmul.f32 %v1274, %v1276
        %v1278 = vadd.f32 %v1274, %v1277
        %vm1279 = vweird.f32 %v1274
        %v1280 = vsel %vm1279, %v1274, %v1278
        %v1281 = vmul.f32 %v1270, %v1280
        %v1282 = vmul.f32 %v1273, %v1280
        %v1283 = vsub.f32 %v1265, %v1281
        %v1284 = vsub.f32 %v1266, %v1282
        %v1285 = vmul.f32 %v1283, %v1283
        %v1286 = vmul.f32 %v1284, %v1284
        %1287 = vadd.xlane.f32.xlu0 %v1285
        %v1288 = vpop.xlane.xlu0 %1287
        %v1289 = vsel %vm819, %v1286, 0.0
        %1290 = vadd.xlane.f32.xlu0 %v1289
        %v1291 = vpop.xlane.xlu0 %1290
        %v1292 = vmul.f32 %v1288, %v1280
        %v1293 = vmul.f32 %v1291, %v1280
        %v1294 = vadd.f32 %v1292, 1e-05
        %v1295 = vadd.f32 %v1293, 1e-05
        %v1296 = vrsqrt.pop %v1294
        %v1297 = vmul.f32 %v1296, %v1294
        %v1298 = vmul.f32 %v1297, %v1296
        %v1299 = vmul.f32 0.5, %v1298
        %v1300 = vsub.f32 1.5, %v1299
        %v1301 = vmul.f32 %v1296, %v1300
        %vm1302 = vweird.f32 %v1294
        %vm1303 = vweird.f32 %v1296
        %vm1304 = vmor %vm1302, %vm1303
        %v1305 = vsel %vm1304, %v1296, %v1301
        %v1306 = vrsqrt.pop %v1295
        %v1307 = vmul.f32 %v1306, %v1295
        %v1308 = vmul.f32 %v1307, %v1306
        %v1309 = vmul.f32 0.5, %v1308
        %v1310 = vsub.f32 1.5, %v1309
        %v1311 = vmul.f32 %v1306, %v1310
        %vm1312 = vweird.f32 %v1295
        %vm1313 = vweird.f32 %v1306
        %vm1314 = vmor %vm1312, %vm1313
        %v1315 = vsel %vm1314, %v1306, %v1311
        %v1316 = vmul.f32 %v1283, %v1305
        %v1317 = vmul.f32 %v1284, %v1315
        %v1319 = vperm.slane %v1267, 0
        %v1321 = vmul.f32 %v1316, %v1319
        %v1322 = vmul.f32 %v1317, %v1319
        %v1324 = vperm.slane %v1268, 0
        %v1326 = vadd.f32 %v1321, %v1324
        %v1327 = vadd.f32 %v1322, %v1324
        %v1328 = vpack.c.bf16 %v1327, %v1326
        %v1329 = vld [vmem:[#allocation4] sm:$0xf]
        %v1330 = vld [vmem:[#allocation4 + $0x4] sm:$0xf]
        %v1331 = vld [vmem:[#allocation4 + $0x8] sm:$0xf]
        %v1332 = vld [vmem:[#allocation4 + $0xc] sm:$0xf]
        %v1333 = vld [vmem:[#allocation4 + $0x10] sm:$0xf]
        %v1334 = vld [vmem:[#allocation4 + $0x14] sm:$0xf]
        %v1335 = vld [vmem:[#allocation4 + $0x18] sm:$0xf]
        %v1336 = vld [vmem:[#allocation4 + $0x1c] sm:$0xf]
        %v1337 = vld [vmem:[#allocation4 + $0x20] sm:$0xf]
        %v1338 = vld [vmem:[#allocation4 + $0x24] sm:$0xf]
        %v1339 = vld [vmem:[#allocation4 + $0x28] sm:$0xf]
        %v1340 = vld [vmem:[#allocation4 + $0x2c] sm:$0xf]
        %v1341 = vld [vmem:[#allocation4 + $0x30] sm:$0xf]
        %v1342 = vld [vmem:[#allocation4 + $0x34] sm:$0xf]
        %v1343 = vld [vmem:[#allocation4 + $0x38] sm:$0xf]
        %v1344 = vld [vmem:[#allocation4 + $0x3c] sm:$0xf]
        %v1345 = vld [vmem:[%s9] sm:$0x1]
        %v1347 = vperm.slane %v1345, 0
        %v1365 = vunpack.c.l.b16 %v1329
        %v1366 = vunpack.c.l.b16 %v1330
        %v1367 = vunpack.c.l.b16 %v1331
        %v1368 = vunpack.c.l.b16 %v1332
        %v1369 = vunpack.c.l.b16 %v1333
        %v1370 = vunpack.c.l.b16 %v1334
        %v1371 = vunpack.c.l.b16 %v1335
        %v1372 = vunpack.c.l.b16 %v1336
        %v1373 = vunpack.c.l.b16 %v1337
        %v1374 = vunpack.c.l.b16 %v1338
        %v1375 = vunpack.c.l.b16 %v1339
        %v1376 = vunpack.c.l.b16 %v1340
        %v1377 = vunpack.c.l.b16 %v1341
        %v1378 = vunpack.c.l.b16 %v1342
        %v1379 = vunpack.c.l.b16 %v1343
        %v1380 = vunpack.c.l.b16 %v1344
        %v1381 = vpack.c.b16 %v1366, %v1365
        %v1382 = vpack.c.b16 %v1368, %v1367
        %v1383 = vpack.c.b16 %v1370, %v1369
        %v1384 = vpack.c.b16 %v1372, %v1371
        %v1385 = vpack.c.b16 %v1374, %v1373
        %v1386 = vpack.c.b16 %v1376, %v1375
        %v1387 = vpack.c.b16 %v1378, %v1377
        %v1388 = vpack.c.b16 %v1380, %v1379
        %1397 = vmatpush.bf16.msra.mxu0 %v1388
        %1398 = vmatpush.bf16.msra.mxu0 %v1387
        %1399 = vmatpush.bf16.msra.mxu0 %v1386
        %1400 = vmatpush.bf16.msra.mxu0 %v1385
        %1401 = vmatpush.bf16.msra.mxu0 %v1384
        %1402 = vmatpush.bf16.msra.mxu0 %v1383
        %1403 = vmatpush.bf16.msra.mxu0 %v1382
        %1404 = vmatpush.bf16.msra.mxu0 %v1381
        %1405 = vmatmul.bf16.gmra.mxu0 %v1328
        %v1406 = vpop.f32.mrf.mxu0
        %v1407 = vadd.f32 %v1347, %v1406
        %v1408 = vpop.f32.mrf.mxu0
        %v1409 = vadd.f32 %v1347, %v1408
        %1410 = vdwg.mxu0
        %v1411 = vmax.f32 %v1407, 0.0
        %v1412 = vmax.f32 %v1409, 0.0
        %v1413 = vpack.c.bf16 %v1412, %v1411
        %v1414 = vld [vmem:[#allocation6] sm:$0xf]
        %v1415 = vld [vmem:[#allocation6 + $0x4] sm:$0xf]
        %v1416 = vld [vmem:[#allocation6 + $0x8] sm:$0xf]
        %v1417 = vld [vmem:[#allocation6 + $0xc] sm:$0xf]
        %v1418 = vld [vmem:[#allocation6 + $0x10] sm:$0xf]
        %v1419 = vld [vmem:[#allocation6 + $0x14] sm:$0xf]
        %v1420 = vld [vmem:[#allocation6 + $0x18] sm:$0xf]
        %v1421 = vld [vmem:[#allocation6 + $0x1c] sm:$0xf]
        %v1422 = vld [vmem:[#allocation6 + $0x20] sm:$0xf]
        %v1423 = vld [vmem:[#allocation6 + $0x24] sm:$0xf]
        %v1424 = vld [vmem:[#allocation6 + $0x28] sm:$0xf]
        %v1425 = vld [vmem:[#allocation6 + $0x2c] sm:$0xf]
        %v1426 = vld [vmem:[#allocation6 + $0x30] sm:$0xf]
        %v1427 = vld [vmem:[#allocation6 + $0x34] sm:$0xf]
        %v1428 = vld [vmem:[#allocation6 + $0x38] sm:$0xf]
        %v1429 = vld [vmem:[#allocation6 + $0x3c] sm:$0xf]
        %v1430 = vld [vmem:[%s11] sm:$0x1]
        %v1432 = vperm.slane %v1430, 0
        %v1450 = vunpack.c.l.b16 %v1414
        %v1451 = vunpack.c.l.b16 %v1415
        %v1452 = vunpack.c.l.b16 %v1416
        %v1453 = vunpack.c.l.b16 %v1417
        %v1454 = vunpack.c.l.b16 %v1418
        %v1455 = vunpack.c.l.b16 %v1419
        %v1456 = vunpack.c.l.b16 %v1420
        %v1457 = vunpack.c.l.b16 %v1421
        %v1458 = vunpack.c.l.b16 %v1422
        %v1459 = vunpack.c.l.b16 %v1423
        %v1460 = vunpack.c.l.b16 %v1424
        %v1461 = vunpack.c.l.b16 %v1425
        %v1462 = vunpack.c.l.b16 %v1426
        %v1463 = vunpack.c.l.b16 %v1427
        %v1464 = vunpack.c.l.b16 %v1428
        %v1465 = vunpack.c.l.b16 %v1429
        %v1466 = vpack.c.b16 %v1451, %v1450
        %v1467 = vpack.c.b16 %v1453, %v1452
        %v1468 = vpack.c.b16 %v1455, %v1454
        %v1469 = vpack.c.b16 %v1457, %v1456
        %v1470 = vpack.c.b16 %v1459, %v1458
        %v1471 = vpack.c.b16 %v1461, %v1460
        %v1472 = vpack.c.b16 %v1463, %v1462
        %v1473 = vpack.c.b16 %v1465, %v1464
        %1482 = vmatpush.bf16.msra.mxu0 %v1473
        %1483 = vmatpush.bf16.msra.mxu0 %v1472
        %1484 = vmatpush.bf16.msra.mxu0 %v1471
        %1485 = vmatpush.bf16.msra.mxu0 %v1470
        %1486 = vmatpush.bf16.msra.mxu0 %v1469
        %1487 = vmatpush.bf16.msra.mxu0 %v1468
        %1488 = vmatpush.bf16.msra.mxu0 %v1467
        %1489 = vmatpush.bf16.msra.mxu0 %v1466
        %1490 = vmatmul.bf16.gmra.mxu0 %v1413
        %v1491 = vpop.f32.mrf.mxu0
        %v1492 = vadd.f32 %v1432, %v1491
        %v1493 = vpop.f32.mrf.mxu0
        %v1494 = vadd.f32 %v1432, %v1493
        %1495 = vdwg.mxu0
        %v1496 = vadd.f32 %v1326, %v1492
        %v1497 = vadd.f32 %v1327, %v1494
        %v1498 = vld [vmem:[%s12] sm:$0x1]
        %v1499 = vld [vmem:[%s13] sm:$0x1]
        %1500 = vadd.xlane.f32.xlu0 %v1496
        %v1501 = vpop.xlane.xlu0 %1500
        %v1502 = vsel %vm819, %v1497, 0.0
        %1503 = vadd.xlane.f32.xlu0 %v1502
        %v1504 = vpop.xlane.xlu0 %1503
        %v1505 = vmul.f32 %v1501, %v1280
        %v1506 = vmul.f32 %v1504, %v1280
        %v1507 = vsub.f32 %v1496, %v1505
        %v1508 = vsub.f32 %v1497, %v1506
        %v1509 = vmul.f32 %v1507, %v1507
        %v1510 = vmul.f32 %v1508, %v1508
        %1511 = vadd.xlane.f32.xlu0 %v1509
        %v1512 = vpop.xlane.xlu0 %1511
        %v1513 = vsel %vm819, %v1510, 0.0
        %1514 = vadd.xlane.f32.xlu0 %v1513
        %v1515 = vpop.xlane.xlu0 %1514
        %v1516 = vmul.f32 %v1512, %v1280
        %v1517 = vmul.f32 %v1515, %v1280
        %v1518 = vadd.f32 %v1516, 1e-05
        %v1519 = vadd.f32 %v1517, 1e-05
        %v1520 = vrsqrt.pop %v1518
        %v1521 = vmul.f32 %v1520, %v1518
        %v1522 = vmul.f32 %v1521, %v1520
        %v1523 = vmul.f32 0.5, %v1522
        %v1524 = vsub.f32 1.5, %v1523
        %v1525 = vmul.f32 %v1520, %v1524
        %vm1526 = vweird.f32 %v1518
        %vm1527 = vweird.f32 %v1520
        %vm1528 = vmor %vm1526, %vm1527
        %v1529 = vsel %vm1528, %v1520, %v1525
        %v1530 = vrsqrt.pop %v1519
        %v1531 = vmul.f32 %v1530, %v1519
        %v1532 = vmul.f32 %v1531, %v1530
        %v1533 = vmul.f32 0.5, %v1532
        %v1534 = vsub.f32 1.5, %v1533
        %v1535 = vmul.f32 %v1530, %v1534
        %vm1536 = vweird.f32 %v1519
        %vm1537 = vweird.f32 %v1530
        %vm1538 = vmor %vm1536, %vm1537
        %v1539 = vsel %vm1538, %v1530, %v1535
        %v1540 = vmul.f32 %v1507, %v1529
        %v1541 = vmul.f32 %v1508, %v1539
        %v1543 = vperm.slane %v1498, 0
        %v1545 = vmul.f32 %v1540, %v1543
        %v1546 = vmul.f32 %v1541, %v1543
        %v1548 = vperm.slane %v1499, 0
        %v1550 = vadd.f32 %v1545, %v1548
        %v1551 = vadd.f32 %v1546, %v1548
        %1552 = vst [vmem:[%s531] sm:$0xff] %v1550
        %1553 = vst [vmem:[%s531 + $0x8] sm:$0xf] %v1551
        %p1554 = scmp.lt.s32.totalorder %s27, 1
        %s1555 = scalar_select %p1554, %s27, 1
        %s1556 = smul.addr %s1555, 2
        %s1557 = smul.addr %s1556, 8
        %s1558 = scalar_lea.vmem %s14, %s1557
        // Predicated region
        $region89: #{transformer_forward.6} parent=75 // pred_check
          %p1559 = pneg %p349
        $region90: #{transformer_forward.6} parent=75 // pred_check_branch
          %1561 = sbr.rel (%p1559) target = $region92
        $region91: #{transformer_forward.6} parent=75 // pred_region
          _
        $region92: #{transformer_forward.6} parent=75 // pred_fallthru
          _
      $region76: #{transformer_forward.6} parent=5 // pred_fallthru
        _
      %p1562 = scmp.le.s32.totalorder 2, %s22
      // Predicated region
      $region93: #{transformer_forward.6} parent=5 // pred_check
        %p1563 = pneg %p1562
      $region94: #{transformer_forward.6} parent=5 // pred_check_branch
        %1565 = sbr.rel (%p1563) target = $region96
      $region95: #{transformer_forward.6} parent=5 // pred_region
        %s1566 = ssub.s32 %s22, 2
        // Predicated region
        $region97: #{transformer_forward.6} parent=95 // pred_check
          %p1567 = pneg %p355
        $region98: #{transformer_forward.6} parent=95 // pred_check_branch
          %1569 = sbr.rel (%p1567) target = $region100
        $region99: #{transformer_forward.6} parent=95 // pred_region
          %p1570 = scmp.lt.s32.totalorder %s28, 1
          %s1571 = scalar_select %p1570, %s28, 1
          %s1572 = smul.addr %s1571, 2
          %s1573 = smul.addr %s1572, 8
          %s1574 = scalar_lea.vmem %s14, %s1573
        $region100: #{transformer_forward.6} parent=95 // pred_fallthru
          _
      $region96: #{transformer_forward.6} parent=5 // pred_fallthru
        _
    $region6: #{transformer_forward.6} parent=1 // loop_footer
      %s26 = sadd.s32 1, %s22
    $region7: #{transformer_forward.6} parent=1 // loop_footer_branch
      %21 = sbr.rel target = $region3
    $region8: #{transformer_forward.6} parent=1 // loop_exit
      _
    %1575 = vsyncpa [#allocation3], 1
    %s1576 = scalar_lea.sflag [#allocation3], 1
    %1577 = vsyncpa %s1576, 1
    %1578 = vsyncpa [#allocation5], 1

// kernel: transformer_forward.7
$region0: #{transformer_forward.7}
  #allocation0 [shape = 'u32[]', space=smem, size = 0x4, offset = 0x4, fixed_abs, tag = 'smem constant byte address 0x4 - core index']
  #allocation1 [shape = 'u32[72,128]{1,0:T(1,128)}', space=vmem, size = 0x9000, scoped, tag = 'internal scratch']
  %s0 = inlined_call_operand.vmem [shape: f32[2,8,128], index: 0, kind: input, shape index: {}]
  %s1 = inlined_call_operand.vmem [shape: f32[2,12,128], index: 1, kind: input, shape index: {}]
  %s2 = inlined_call_operand.vmem [shape: f32[8,8], index: 2, kind: input, shape index: {}]
  %s3 = inlined_call_operand.vmem [shape: f32[2,1,8], index: 3, kind: input, shape index: {}]
  %s4 = inlined_call_operand.hbm [shape: bf16[128,384], index: 4, kind: input, shape index: {}]
  %s5 = inlined_call_operand.vmem [shape: f32[1,384], index: 5, kind: input, shape index: {}]
  %s6 = inlined_call_operand.hbm [shape: bf16[128,128], index: 6, kind: input, shape index: {}]
  %s7 = inlined_call_operand.vmem [shape: f32[1,128], index: 7, kind: input, shape index: {}]
  %s8 = inlined_call_operand.vmem [shape: f32[1,128], index: 8, kind: input, shape index: {}]
  %s9 = inlined_call_operand.vmem [shape: f32[1,128], index: 9, kind: input, shape index: {}]
  %s10 = inlined_call_operand.hbm [shape: bf16[128,128], index: 10, kind: input, shape index: {}]
  %s11 = inlined_call_operand.vmem [shape: f32[1,128], index: 11, kind: input, shape index: {}]
  %s12 = inlined_call_operand.vmem [shape: bf16[128,256], index: 12, kind: input, shape index: {}]
  %s13 = inlined_call_operand.vmem [shape: f32[1,256], index: 13, kind: input, shape index: {}]
  %s14 = inlined_call_operand.hbm [shape: bf16[128,128], index: 14, kind: input, shape index: {}]
  %s15 = inlined_call_operand.vmem [shape: f32[1,128], index: 15, kind: input, shape index: {}]
  %s16 = inlined_call_operand.vmem [shape: f32[1,128], index: 16, kind: input, shape index: {}]
  %s17 = inlined_call_operand.vmem [shape: f32[1,128], index: 17, kind: input, shape index: {}]
  %s18 = inlined_call_operand.hbm [shape: bf16[128,128], index: 18, kind: input, shape index: {}]
  %s19 = inlined_call_operand.vmem [shape: f32[1,128], index: 19, kind: input, shape index: {}]
  %s20 = inlined_call_operand.hbm [shape: bf16[128,128], index: 20, kind: input, shape index: {}]
  %s21 = inlined_call_operand.vmem [shape: f32[1,128], index: 21, kind: input, shape index: {}]
  %s22 = inlined_call_operand.vmem [shape: f32[1,128], index: 22, kind: input, shape index: {}]
  %s23 = inlined_call_operand.vmem [shape: f32[1,128], index: 23, kind: input, shape index: {}]
  %s24 = inlined_call_operand.vmem [shape: f32[2,8,128], index: 24, kind: output, shape index: {}]
  %s25 = sld [smem:[#allocation0]]
  $region153: #{transformer_forward.7} parent=0
    _
  %s27 = ssub.s32 1, %s25
  %s28 = scalar_select 0, %s27, %s25
  $region1: #{transformer_forward.7} parent=0
    #allocation2 [shape = 'u8[98304]{0}', space=vmem, size = 0x18000, scoped, tag = 'input window, operand 4, single buffered']
    #allocation3 [shape = 's32[2]{0}', space=sflag, size = 0x8, scoped, tag = 'scoped memory for transformer_forward.7']
    #allocation4 [shape = 'u8[32768]{0}', space=vmem, size = 0x8000, scoped, tag = 'input window, operand 6, single buffered']
    #allocation5 [shape = 's32[1]{0}', space=sflag, size = 0x4, scoped, tag = 'scoped memory for transformer_forward.7']
    #allocation6 [shape = 'u8[32768]{0}', space=vmem, size = 0x8000, scoped, tag = 'input window, operand 10, single buffered']
    #allocation7 [shape = 'u8[32768]{0}', space=vmem, size = 0x8000, scoped, tag = 'input window, operand 14, single buffered']
    #allocation8 [shape = 's32[1]{0}', space=sflag, size = 0x4, scoped, tag = 'scoped memory for transformer_forward.7']
    #allocation9 [shape = 'u8[32768]{0}', space=vmem, size = 0x8000, scoped, tag = 'input window, operand 18, single buffered']
    #allocation10 [shape = 'u8[32768]{0}', space=vmem, size = 0x8000, scoped, tag = 'input window, operand 20, single buffered']
    #allocation11 [shape = 's32[1]{0}', space=sflag, size = 0x4, scoped, tag = 'scoped memory for transformer_forward.7']
    %29 = vsyncpa [#allocation3], 0
    %30 = vsyncpa [#allocation5], 0
    %31 = vsyncpa [#allocation8], 0
    %32 = vsyncpa [#allocation11], 0
    loop: start=0, step=1, limit=4
    $region2: #{transformer_forward.7} parent=1 // loop_pre_header
      _
    $region3: #{transformer_forward.7} parent=1 // loop_header
      %s34 = sphi 0, %s38
      %p35 = scmp.ge.s32.totalorder %s34, 4
      %s44 = sphi 0, %s46
      %s47 = sphi 0, %s44
      %s48 = sphi 0, %s47
      %s64 = sphi 0, %s48
      %s70 = sphi 0, %s72
      %s73 = sphi 0, %s70
      %s74 = sphi 0, %s73
      %s90 = sphi 0, %s74
      %s94 = sphi 0, %s94
      %s96 = sphi 0, %s94
      %s97 = sphi 0, %s96
      %s111 = sphi 0, %s97
      %s117 = sphi 0, %s119
      %s120 = sphi 0, %s117
      %s121 = sphi 0, %s120
      %s137 = sphi 0, %s121
      %s141 = sphi 0, %s141
      %s143 = sphi 0, %s141
      %s144 = sphi 0, %s143
      %s158 = sphi 0, %s144
      %s162 = sphi 0, %s162
      %s164 = sphi 0, %s162
      %s165 = sphi 0, %s164
      %s179 = sphi 0, %s165
      %s183 = sphi 0, %s183
      %s185 = sphi 0, %s183
      %s186 = sphi 0, %s185
      %s200 = sphi 0, %s186
      %s204 = sphi 0, %s204
      %s206 = sphi 0, %s204
      %s207 = sphi 0, %s206
      %s221 = sphi 0, %s207
      %s225 = sphi 0, %s225
      %s227 = sphi 0, %s225
      %s228 = sphi 0, %s227
      %s242 = sphi 0, %s228
      %s246 = sphi 0, %s246
      %s248 = sphi 0, %s246
      %s249 = sphi 0, %s248
      %s263 = sphi 0, %s249
      %s267 = sphi 0, %s267
      %s269 = sphi 0, %s267
      %s270 = sphi 0, %s269
      %s284 = sphi 0, %s270
      %s288 = sphi 0, %s288
      %s290 = sphi 0, %s288
      %s291 = sphi 0, %s290
      %s305 = sphi 0, %s291
      %s309 = sphi 0, %s309
      %s311 = sphi 0, %s309
      %s312 = sphi 0, %s311
      %s326 = sphi 0, %s312
      %s330 = sphi 0, %s330
      %s332 = sphi 0, %s330
      %s333 = sphi 0, %s332
      %s347 = sphi 0, %s333
      %s351 = sphi 0, %s351
      %s353 = sphi 0, %s351
      %s354 = sphi 0, %s353
      %s368 = sphi 0, %s354
      %s372 = sphi 0, %s372
      %s374 = sphi 0, %s372
      %s375 = sphi 0, %s374
      %s389 = sphi 0, %s375
      %s393 = sphi 0, %s393
      %s395 = sphi 0, %s393
      %s396 = sphi 0, %s395
      %s410 = sphi 0, %s396
      %s414 = sphi 0, %s414
      %s416 = sphi 0, %s414
      %s417 = sphi 0, %s416
      %s431 = sphi 0, %s417
      %s435 = sphi 0, %s435
      %s437 = sphi 0, %s435
      %s438 = sphi 0, %s437
      %s452 = sphi 0, %s438
      %s456 = sphi 0, %s456
      %s458 = sphi 0, %s456
      %s459 = sphi 0, %s458
      %s473 = sphi 0, %s459
      %s477 = sphi 0, %s477
      %s479 = sphi 0, %s477
      %s480 = sphi 0, %s479
      %s494 = sphi 0, %s480
      %s498 = sphi 0, %s498
      %s500 = sphi 0, %s498
      %s501 = sphi 0, %s500
      %s515 = sphi 0, %s501
      %s519 = sphi 0, %s519
      %s521 = sphi 0, %s519
      %s522 = sphi 0, %s521
      %s536 = sphi 0, %s522
      %s540 = sphi 0, %s540
      %s542 = sphi 0, %s540
      %s543 = sphi 0, %s542
      %s557 = sphi 0, %s543
      %s563 = sphi 0, %s565
      %s566 = sphi 0, %s563
      %s567 = sphi 0, %s566
      %s583 = sphi 0, %s567
    $region4: #{transformer_forward.7} parent=1 // loop_header_branch
      %37 = sbr.rel (%p35) target = $region8
    $region5: #{transformer_forward.7} parent=1 // loop_body
      %s39 = ssub.s32 %s34, 1
      %s40 = ssub.s32 %s34, 2
      %s41 = sadd.s32 %s34, 1
      %s42 = ssub.s32 %s34, %s41
      %p43 = scmp.eq.s32.totalorder %s42, 0
      %s45 = sadd.s32 %s44, 1
      %s46 = scalar_select %p43, %s44, %s45
      %p49 = pneg %p43
      %p50 = scmp.eq.s32.totalorder %s34, 1
      %p51 = por %p49, %p50
      %p52 = scmp.ne.s32.totalorder %s44, %s47
      %p53 = scmp.eq.s32.totalorder %s34, 0
      %p54 = por %p52, %p53
      %p55 = scmp.ne.s32.totalorder %s44, %s47
      %p56 = scmp.eq.s32.totalorder %s39, 1
      %p57 = por %p55, %p56
      %p58 = scmp.ne.s32.totalorder %s47, %s48
      %p59 = scmp.eq.s32.totalorder %s39, 0
      %p60 = por %p58, %p59
      %p61 = scmp.ne.s32.totalorder %s47, %s48
      %p62 = scmp.eq.s32.totalorder %s40, 1
      %p63 = por %p61, %p62
      %p65 = scmp.ne.s32.totalorder %s48, %s64
      %p66 = scmp.eq.s32.totalorder %s40, 0
      %p67 = por %p65, %p66
      %s68 = ssub.s32 %s34, %s41
      %p69 = scmp.eq.s32.totalorder %s68, 0
      %s71 = sadd.s32 %s70, 1
      %s72 = scalar_select %p69, %s70, %s71
      %p75 = pneg %p69
      %p76 = scmp.eq.s32.totalorder %s34, 1
      %p77 = por %p75, %p76
      %p78 = scmp.ne.s32.totalorder %s70, %s73
      %p79 = scmp.eq.s32.totalorder %s34, 0
      %p80 = por %p78, %p79
      %p81 = scmp.ne.s32.totalorder %s70, %s73
      %p82 = scmp.eq.s32.totalorder %s39, 1
      %p83 = por %p81, %p82
      %p84 = scmp.ne.s32.totalorder %s73, %s74
      %p85 = scmp.eq.s32.totalorder %s39, 0
      %p86 = por %p84, %p85
      %p87 = scmp.ne.s32.totalorder %s73, %s74
      %p88 = scmp.eq.s32.totalorder %s40, 1
      %p89 = por %p87, %p88
      %p91 = scmp.ne.s32.totalorder %s74, %s90
      %p92 = scmp.eq.s32.totalorder %s40, 0
      %p93 = por %p91, %p92
      %s95 = sadd.s32 %s94, 1
      %p98 = scmp.eq.s32.totalorder %s34, 1
      %p99 = scmp.ne.s32.totalorder %s94, %s96
      %p100 = scmp.eq.s32.totalorder %s34, 0
      %p101 = por %p99, %p100
      %p102 = scmp.ne.s32.totalorder %s94, %s96
      %p103 = scmp.eq.s32.totalorder %s39, 1
      %p104 = por %p102, %p103
      %p105 = scmp.ne.s32.totalorder %s96, %s97
      %p106 = scmp.eq.s32.totalorder %s39, 0
      %p107 = por %p105, %p106
      %p108 = scmp.ne.s32.totalorder %s96, %s97
      %p109 = scmp.eq.s32.totalorder %s40, 1
      %p110 = por %p108, %p109
      %p112 = scmp.ne.s32.totalorder %s97, %s111
      %p113 = scmp.eq.s32.totalorder %s40, 0
      %p114 = por %p112, %p113
      %s115 = ssub.s32 %s34, %s41
      %p116 = scmp.eq.s32.totalorder %s115, 0
      %s118 = sadd.s32 %s117, 1
      %s119 = scalar_select %p116, %s117, %s118
      %p122 = pneg %p116
      %p123 = scmp.eq.s32.totalorder %s34, 1
      %p124 = por %p122, %p123
      %p125 = scmp.ne.s32.totalorder %s117, %s120
      %p126 = scmp.eq.s32.totalorder %s34, 0
      %p127 = por %p125, %p126
      %p128 = scmp.ne.s32.totalorder %s117, %s120
      %p129 = scmp.eq.s32.totalorder %s39, 1
      %p130 = por %p128, %p129
      %p131 = scmp.ne.s32.totalorder %s120, %s121
      %p132 = scmp.eq.s32.totalorder %s39, 0
      %p133 = por %p131, %p132
      %p134 = scmp.ne.s32.totalorder %s120, %s121
      %p135 = scmp.eq.s32.totalorder %s40, 1
      %p136 = por %p134, %p135
      %p138 = scmp.ne.s32.totalorder %s121, %s137
      %p139 = scmp.eq.s32.totalorder %s40, 0
      %p140 = por %p138, %p139
      %s142 = sadd.s32 %s141, 1
      %p145 = scmp.eq.s32.totalorder %s34, 1
      %p146 = scmp.ne.s32.totalorder %s141, %s143
      %p147 = scmp.eq.s32.totalorder %s34, 0
      %p148 = por %p146, %p147
      %p149 = scmp.ne.s32.totalorder %s141, %s143
      %p150 = scmp.eq.s32.totalorder %s39, 1
      %p151 = por %p149, %p150
      %p152 = scmp.ne.s32.totalorder %s143, %s144
      %p153 = scmp.eq.s32.totalorder %s39, 0
      %p154 = por %p152, %p153
      %p155 = scmp.ne.s32.totalorder %s143, %s144
      %p156 = scmp.eq.s32.totalorder %s40, 1
      %p157 = por %p155, %p156
      %p159 = scmp.ne.s32.totalorder %s144, %s158
      %p160 = scmp.eq.s32.totalorder %s40, 0
      %p161 = por %p159, %p160
      %s163 = sadd.s32 %s162, 1
      %p166 = scmp.eq.s32.totalorder %s34, 1
      %p167 = scmp.ne.s32.totalorder %s162, %s164
      %p168 = scmp.eq.s32.totalorder %s34, 0
      %p169 = por %p167, %p168
      %p170 = scmp.ne.s32.totalorder %s162, %s164
      %p171 = scmp.eq.s32.totalorder %s39, 1
      %p172 = por %p170, %p171
      %p173 = scmp.ne.s32.totalorder %s164, %s165
      %p174 = scmp.eq.s32.totalorder %s39, 0
      %p175 = por %p173, %p174
      %p176 = scmp.ne.s32.totalorder %s164, %s165
      %p177 = scmp.eq.s32.totalorder %s40, 1
      %p178 = por %p176, %p177
      %p180 = scmp.ne.s32.totalorder %s165, %s179
      %p181 = scmp.eq.s32.totalorder %s40, 0
      %p182 = por %p180, %p181
      %s184 = sadd.s32 %s183, 1
      %p187 = scmp.eq.s32.totalorder %s34, 1
      %p188 = scmp.ne.s32.totalorder %s183, %s185
      %p189 = scmp.eq.s32.totalorder %s34, 0
      %p190 = por %p188, %p189
      %p191 = scmp.ne.s32.totalorder %s183, %s185
      %p192 = scmp.eq.s32.totalorder %s39, 1
      %p193 = por %p191, %p192
      %p194 = scmp.ne.s32.totalorder %s185, %s186
      %p195 = scmp.eq.s32.totalorder %s39, 0
      %p196 = por %p194, %p195
      %p197 = scmp.ne.s32.totalorder %s185, %s186
      %p198 = scmp.eq.s32.totalorder %s40, 1
      %p199 = por %p197, %p198
      %p201 = scmp.ne.s32.totalorder %s186, %s200
      %p202 = scmp.eq.s32.totalorder %s40, 0
      %p203 = por %p201, %p202
      %s205 = sadd.s32 %s204, 1
      %p208 = scmp.eq.s32.totalorder %s34, 1
      %p209 = scmp.ne.s32.totalorder %s204, %s206
      %p210 = scmp.eq.s32.totalorder %s34, 0
      %p211 = por %p209, %p210
      %p212 = scmp.ne.s32.totalorder %s204, %s206
      %p213 = scmp.eq.s32.totalorder %s39, 1
      %p214 = por %p212, %p213
      %p215 = scmp.ne.s32.totalorder %s206, %s207
      %p216 = scmp.eq.s32.totalorder %s39, 0
      %p217 = por %p215, %p216
      %p218 = scmp.ne.s32.totalorder %s206, %s207
      %p219 = scmp.eq.s32.totalorder %s40, 1
      %p220 = por %p218, %p219
      %p222 = scmp.ne.s32.totalorder %s207, %s221
      %p223 = scmp.eq.s32.totalorder %s40, 0
      %p224 = por %p222, %p223
      %s226 = sadd.s32 %s225, 1
      %p229 = scmp.eq.s32.totalorder %s34, 1
      %p230 = scmp.ne.s32.totalorder %s225, %s227
      %p231 = scmp.eq.s32.totalorder %s34, 0
      %p232 = por %p230, %p231
      %p233 = scmp.ne.s32.totalorder %s225, %s227
      %p234 = scmp.eq.s32.totalorder %s39, 1
      %p235 = por %p233, %p234
      %p236 = scmp.ne.s32.totalorder %s227, %s228
      %p237 = scmp.eq.s32.totalorder %s39, 0
      %p238 = por %p236, %p237
      %p239 = scmp.ne.s32.totalorder %s227, %s228
      %p240 = scmp.eq.s32.totalorder %s40, 1
      %p241 = por %p239, %p240
      %p243 = scmp.ne.s32.totalorder %s228, %s242
      %p244 = scmp.eq.s32.totalorder %s40, 0
      %p245 = por %p243, %p244
      %s247 = sadd.s32 %s246, 1
      %p250 = scmp.eq.s32.totalorder %s34, 1
      %p251 = scmp.ne.s32.totalorder %s246, %s248
      %p252 = scmp.eq.s32.totalorder %s34, 0
      %p253 = por %p251, %p252
      %p254 = scmp.ne.s32.totalorder %s246, %s248
      %p255 = scmp.eq.s32.totalorder %s39, 1
      %p256 = por %p254, %p255
      %p257 = scmp.ne.s32.totalorder %s248, %s249
      %p258 = scmp.eq.s32.totalorder %s39, 0
      %p259 = por %p257, %p258
      %p260 = scmp.ne.s32.totalorder %s248, %s249
      %p261 = scmp.eq.s32.totalorder %s40, 1
      %p262 = por %p260, %p261
      %p264 = scmp.ne.s32.totalorder %s249, %s263
      %p265 = scmp.eq.s32.totalorder %s40, 0
      %p266 = por %p264, %p265
      %s268 = sadd.s32 %s267, 1
      %p271 = scmp.eq.s32.totalorder %s34, 1
      %p272 = scmp.ne.s32.totalorder %s267, %s269
      %p273 = scmp.eq.s32.totalorder %s34, 0
      %p274 = por %p272, %p273
      %p275 = scmp.ne.s32.totalorder %s267, %s269
      %p276 = scmp.eq.s32.totalorder %s39, 1
      %p277 = por %p275, %p276
      %p278 = scmp.ne.s32.totalorder %s269, %s270
      %p279 = scmp.eq.s32.totalorder %s39, 0
      %p280 = por %p278, %p279
      %p281 = scmp.ne.s32.totalorder %s269, %s270
      %p282 = scmp.eq.s32.totalorder %s40, 1
      %p283 = por %p281, %p282
      %p285 = scmp.ne.s32.totalorder %s270, %s284
      %p286 = scmp.eq.s32.totalorder %s40, 0
      %p287 = por %p285, %p286
      %s289 = sadd.s32 %s288, 1
      %p292 = scmp.eq.s32.totalorder %s34, 1
      %p293 = scmp.ne.s32.totalorder %s288, %s290
      %p294 = scmp.eq.s32.totalorder %s34, 0
      %p295 = por %p293, %p294
      %p296 = scmp.ne.s32.totalorder %s288, %s290
      %p297 = scmp.eq.s32.totalorder %s39, 1
      %p298 = por %p296, %p297
      %p299 = scmp.ne.s32.totalorder %s290, %s291
      %p300 = scmp.eq.s32.totalorder %s39, 0
      %p301 = por %p299, %p300
      %p302 = scmp.ne.s32.totalorder %s290, %s291
      %p303 = scmp.eq.s32.totalorder %s40, 1
      %p304 = por %p302, %p303
      %p306 = scmp.ne.s32.totalorder %s291, %s305
      %p307 = scmp.eq.s32.totalorder %s40, 0
      %p308 = por %p306, %p307
      %s310 = sadd.s32 %s309, 1
      %p313 = scmp.eq.s32.totalorder %s34, 1
      %p314 = scmp.ne.s32.totalorder %s309, %s311
      %p315 = scmp.eq.s32.totalorder %s34, 0
      %p316 = por %p314, %p315
      %p317 = scmp.ne.s32.totalorder %s309, %s311
      %p318 = scmp.eq.s32.totalorder %s39, 1
      %p319 = por %p317, %p318
      %p320 = scmp.ne.s32.totalorder %s311, %s312
      %p321 = scmp.eq.s32.totalorder %s39, 0
      %p322 = por %p320, %p321
      %p323 = scmp.ne.s32.totalorder %s311, %s312
      %p324 = scmp.eq.s32.totalorder %s40, 1
      %p325 = por %p323, %p324
      %p327 = scmp.ne.s32.totalorder %s312, %s326
      %p328 = scmp.eq.s32.totalorder %s40, 0
      %p329 = por %p327, %p328
      %s331 = sadd.s32 %s330, 1
      %p334 = scmp.eq.s32.totalorder %s34, 1
      %p335 = scmp.ne.s32.totalorder %s330, %s332
      %p336 = scmp.eq.s32.totalorder %s34, 0
      %p337 = por %p335, %p336
      %p338 = scmp.ne.s32.totalorder %s330, %s332
      %p339 = scmp.eq.s32.totalorder %s39, 1
      %p340 = por %p338, %p339
      %p341 = scmp.ne.s32.totalorder %s332, %s333
      %p342 = scmp.eq.s32.totalorder %s39, 0
      %p343 = por %p341, %p342
      %p344 = scmp.ne.s32.totalorder %s332, %s333
      %p345 = scmp.eq.s32.totalorder %s40, 1
      %p346 = por %p344, %p345
      %p348 = scmp.ne.s32.totalorder %s333, %s347
      %p349 = scmp.eq.s32.totalorder %s40, 0
      %p350 = por %p348, %p349
      %s352 = sadd.s32 %s351, 1
      %p355 = scmp.eq.s32.totalorder %s34, 1
      %p356 = scmp.ne.s32.totalorder %s351, %s353
      %p357 = scmp.eq.s32.totalorder %s34, 0
      %p358 = por %p356, %p357
      %p359 = scmp.ne.s32.totalorder %s351, %s353
      %p360 = scmp.eq.s32.totalorder %s39, 1
      %p361 = por %p359, %p360
      %p362 = scmp.ne.s32.totalorder %s353, %s354
      %p363 = scmp.eq.s32.totalorder %s39, 0
      %p364 = por %p362, %p363
      %p365 = scmp.ne.s32.totalorder %s353, %s354
      %p366 = scmp.eq.s32.totalorder %s40, 1
      %p367 = por %p365, %p366
      %p369 = scmp.ne.s32.totalorder %s354, %s368
      %p370 = scmp.eq.s32.totalorder %s40, 0
      %p371 = por %p369, %p370
      %s373 = sadd.s32 %s372, 1
      %p376 = scmp.eq.s32.totalorder %s34, 1
      %p377 = scmp.ne.s32.totalorder %s372, %s374
      %p378 = scmp.eq.s32.totalorder %s34, 0
      %p379 = por %p377, %p378
      %p380 = scmp.ne.s32.totalorder %s372, %s374
      %p381 = scmp.eq.s32.totalorder %s39, 1
      %p382 = por %p380, %p381
      %p383 = scmp.ne.s32.totalorder %s374, %s375
      %p384 = scmp.eq.s32.totalorder %s39, 0
      %p385 = por %p383, %p384
      %p386 = scmp.ne.s32.totalorder %s374, %s375
      %p387 = scmp.eq.s32.totalorder %s40, 1
      %p388 = por %p386, %p387
      %p390 = scmp.ne.s32.totalorder %s375, %s389
      %p391 = scmp.eq.s32.totalorder %s40, 0
      %p392 = por %p390, %p391
      %s394 = sadd.s32 %s393, 1
      %p397 = scmp.eq.s32.totalorder %s34, 1
      %p398 = scmp.ne.s32.totalorder %s393, %s395
      %p399 = scmp.eq.s32.totalorder %s34, 0
      %p400 = por %p398, %p399
      %p401 = scmp.ne.s32.totalorder %s393, %s395
      %p402 = scmp.eq.s32.totalorder %s39, 1
      %p403 = por %p401, %p402
      %p404 = scmp.ne.s32.totalorder %s395, %s396
      %p405 = scmp.eq.s32.totalorder %s39, 0
      %p406 = por %p404, %p405
      %p407 = scmp.ne.s32.totalorder %s395, %s396
      %p408 = scmp.eq.s32.totalorder %s40, 1
      %p409 = por %p407, %p408
      %p411 = scmp.ne.s32.totalorder %s396, %s410
      %p412 = scmp.eq.s32.totalorder %s40, 0
      %p413 = por %p411, %p412
      %s415 = sadd.s32 %s414, 1
      %p418 = scmp.eq.s32.totalorder %s34, 1
      %p419 = scmp.ne.s32.totalorder %s414, %s416
      %p420 = scmp.eq.s32.totalorder %s34, 0
      %p421 = por %p419, %p420
      %p422 = scmp.ne.s32.totalorder %s414, %s416
      %p423 = scmp.eq.s32.totalorder %s39, 1
      %p424 = por %p422, %p423
      %p425 = scmp.ne.s32.totalorder %s416, %s417
      %p426 = scmp.eq.s32.totalorder %s39, 0
      %p427 = por %p425, %p426
      %p428 = scmp.ne.s32.totalorder %s416, %s417
      %p429 = scmp.eq.s32.totalorder %s40, 1
      %p430 = por %p428, %p429
      %p432 = scmp.ne.s32.totalorder %s417, %s431
      %p433 = scmp.eq.s32.totalorder %s40, 0
      %p434 = por %p432, %p433
      %s436 = sadd.s32 %s435, 1
      %p439 = scmp.eq.s32.totalorder %s34, 1
      %p440 = scmp.ne.s32.totalorder %s435, %s437
      %p441 = scmp.eq.s32.totalorder %s34, 0
      %p442 = por %p440, %p441
      %p443 = scmp.ne.s32.totalorder %s435, %s437
      %p444 = scmp.eq.s32.totalorder %s39, 1
      %p445 = por %p443, %p444
      %p446 = scmp.ne.s32.totalorder %s437, %s438
      %p447 = scmp.eq.s32.totalorder %s39, 0
      %p448 = por %p446, %p447
      %p449 = scmp.ne.s32.totalorder %s437, %s438
      %p450 = scmp.eq.s32.totalorder %s40, 1
      %p451 = por %p449, %p450
      %p453 = scmp.ne.s32.totalorder %s438, %s452
      %p454 = scmp.eq.s32.totalorder %s40, 0
      %p455 = por %p453, %p454
      %s457 = sadd.s32 %s456, 1
      %p460 = scmp.eq.s32.totalorder %s34, 1
      %p461 = scmp.ne.s32.totalorder %s456, %s458
      %p462 = scmp.eq.s32.totalorder %s34, 0
      %p463 = por %p461, %p462
      %p464 = scmp.ne.s32.totalorder %s456, %s458
      %p465 = scmp.eq.s32.totalorder %s39, 1
      %p466 = por %p464, %p465
      %p467 = scmp.ne.s32.totalorder %s458, %s459
      %p468 = scmp.eq.s32.totalorder %s39, 0
      %p469 = por %p467, %p468
      %p470 = scmp.ne.s32.totalorder %s458, %s459
      %p471 = scmp.eq.s32.totalorder %s40, 1
      %p472 = por %p470, %p471
      %p474 = scmp.ne.s32.totalorder %s459, %s473
      %p475 = scmp.eq.s32.totalorder %s40, 0
      %p476 = por %p474, %p475
      %s478 = sadd.s32 %s477, 1
      %p481 = scmp.eq.s32.totalorder %s34, 1
      %p482 = scmp.ne.s32.totalorder %s477, %s479
      %p483 = scmp.eq.s32.totalorder %s34, 0
      %p484 = por %p482, %p483
      %p485 = scmp.ne.s32.totalorder %s477, %s479
      %p486 = scmp.eq.s32.totalorder %s39, 1
      %p487 = por %p485, %p486
      %p488 = scmp.ne.s32.totalorder %s479, %s480
      %p489 = scmp.eq.s32.totalorder %s39, 0
      %p490 = por %p488, %p489
      %p491 = scmp.ne.s32.totalorder %s479, %s480
      %p492 = scmp.eq.s32.totalorder %s40, 1
      %p493 = por %p491, %p492
      %p495 = scmp.ne.s32.totalorder %s480, %s494
      %p496 = scmp.eq.s32.totalorder %s40, 0
      %p497 = por %p495, %p496
      %s499 = sadd.s32 %s498, 1
      %p502 = scmp.eq.s32.totalorder %s34, 1
      %p503 = scmp.ne.s32.totalorder %s498, %s500
      %p504 = scmp.eq.s32.totalorder %s34, 0
      %p505 = por %p503, %p504
      %p506 = scmp.ne.s32.totalorder %s498, %s500
      %p507 = scmp.eq.s32.totalorder %s39, 1
      %p508 = por %p506, %p507
      %p509 = scmp.ne.s32.totalorder %s500, %s501
      %p510 = scmp.eq.s32.totalorder %s39, 0
      %p511 = por %p509, %p510
      %p512 = scmp.ne.s32.totalorder %s500, %s501
      %p513 = scmp.eq.s32.totalorder %s40, 1
      %p514 = por %p512, %p513
      %p516 = scmp.ne.s32.totalorder %s501, %s515
      %p517 = scmp.eq.s32.totalorder %s40, 0
      %p518 = por %p516, %p517
      %s520 = sadd.s32 %s519, 1
      %p523 = scmp.eq.s32.totalorder %s34, 1
      %p524 = scmp.ne.s32.totalorder %s519, %s521
      %p525 = scmp.eq.s32.totalorder %s34, 0
      %p526 = por %p524, %p525
      %p527 = scmp.ne.s32.totalorder %s519, %s521
      %p528 = scmp.eq.s32.totalorder %s39, 1
      %p529 = por %p527, %p528
      %p530 = scmp.ne.s32.totalorder %s521, %s522
      %p531 = scmp.eq.s32.totalorder %s39, 0
      %p532 = por %p530, %p531
      %p533 = scmp.ne.s32.totalorder %s521, %s522
      %p534 = scmp.eq.s32.totalorder %s40, 1
      %p535 = por %p533, %p534
      %p537 = scmp.ne.s32.totalorder %s522, %s536
      %p538 = scmp.eq.s32.totalorder %s40, 0
      %p539 = por %p537, %p538
      %s541 = sadd.s32 %s540, 1
      %p544 = scmp.eq.s32.totalorder %s34, 1
      %p545 = scmp.ne.s32.totalorder %s540, %s542
      %p546 = scmp.eq.s32.totalorder %s34, 0
      %p547 = por %p545, %p546
      %p548 = scmp.ne.s32.totalorder %s540, %s542
      %p549 = scmp.eq.s32.totalorder %s39, 1
      %p550 = por %p548, %p549
      %p551 = scmp.ne.s32.totalorder %s542, %s543
      %p552 = scmp.eq.s32.totalorder %s39, 0
      %p553 = por %p551, %p552
      %p554 = scmp.ne.s32.totalorder %s542, %s543
      %p555 = scmp.eq.s32.totalorder %s40, 1
      %p556 = por %p554, %p555
      %p558 = scmp.ne.s32.totalorder %s543, %s557
      %p559 = scmp.eq.s32.totalorder %s40, 0
      %p560 = por %p558, %p559
      %s561 = ssub.s32 %s34, %s41
      %p562 = scmp.eq.s32.totalorder %s561, 0
      %s564 = sadd.s32 %s563, 1
      %s565 = scalar_select %p562, %s563, %s564
      %p568 = pneg %p562
      %p569 = scmp.eq.s32.totalorder %s34, 1
      %p570 = por %p568, %p569
      %p571 = scmp.ne.s32.totalorder %s563, %s566
      %p572 = scmp.eq.s32.totalorder %s34, 0
      %p573 = por %p571, %p572
      %p574 = scmp.ne.s32.totalorder %s563, %s566
      %p575 = scmp.eq.s32.totalorder %s39, 1
      %p576 = por %p574, %p575
      %p577 = scmp.ne.s32.totalorder %s566, %s567
      %p578 = scmp.eq.s32.totalorder %s39, 0
      %p579 = por %p577, %p578
      %p580 = scmp.ne.s32.totalorder %s566, %s567
      %p581 = scmp.eq.s32.totalorder %s40, 1
      %p582 = por %p580, %p581
      %p584 = scmp.ne.s32.totalorder %s567, %s583
      %p585 = scmp.eq.s32.totalorder %s40, 0
      %p586 = por %p584, %p585
      %p587 = scmp.le.s32.totalorder 1, %s34
      %p588 = scmp.lt.s32.totalorder %s34, 3
      %p589 = pnand %p587, %p588
      %p590 = pneg %p589
      // Predicated region
      $region9: #{transformer_forward.7} parent=5 // pred_check
        _
      $region10: #{transformer_forward.7} parent=5 // pred_check_branch
        %592 = sbr.rel (%p589) target = $region12
      $region11: #{transformer_forward.7} parent=5 // pred_region
        %s593 = ssub.s32 %s34, 1
        // Predicated region
        $region13: #{transformer_forward.7} parent=11 // pred_check
          %p594 = pneg %p107
        $region14: #{transformer_forward.7} parent=11 // pred_check_branch
          %596 = sbr.rel (%p594) target = $region16
        $region15: #{transformer_forward.7} parent=11 // pred_region
          _
        $region16: #{transformer_forward.7} parent=11 // pred_fallthru
          _
        // Predicated region
        $region17: #{transformer_forward.7} parent=11 // pred_check
          %p597 = pneg %p154
        $region18: #{transformer_forward.7} parent=11 // pred_check_branch
          %599 = sbr.rel (%p597) target = $region20
        $region19: #{transformer_forward.7} parent=11 // pred_region
          %601 = vsyncadd [#allocation3], 0
          %s602 = sshll.u32 %s4, 4
          %s603 = int_to_ptr.hbm [resolvable:$true] %s602
          %s604 = sshll.u32 [#allocation2], 4
          %s605 = int_to_ptr.vmem [resolvable:$true] %s604
          %610 = dma.hbm_to_vmem [thread:$0]  %s603, 3072, %s605, [#allocation3], 192, 192, 12
        $region20: #{transformer_forward.7} parent=11 // pred_fallthru
          _
        // Predicated region
        $region21: #{transformer_forward.7} parent=11 // pred_check
          %p611 = pneg %p175
        $region22: #{transformer_forward.7} parent=11 // pred_check_branch
          %613 = sbr.rel (%p611) target = $region24
        $region23: #{transformer_forward.7} parent=11 // pred_region
          _
        $region24: #{transformer_forward.7} parent=11 // pred_fallthru
          _
        // Predicated region
        $region25: #{transformer_forward.7} parent=11 // pred_check
          %p614 = pneg %p196
        $region26: #{transformer_forward.7} parent=11 // pred_check_branch
          %616 = sbr.rel (%p614) target = $region28
        $region27: #{transformer_forward.7} parent=11 // pred_region
          %618 = vsyncadd [#allocation5], 0
          %s619 = sshll.u32 %s6, 4
          %s620 = int_to_ptr.hbm [resolvable:$true] %s619
          %s621 = sshll.u32 [#allocation4], 4
          %s622 = int_to_ptr.vmem [resolvable:$true] %s621
          %627 = dma.hbm_to_vmem [thread:$0]  %s620, 1024, %s622, [#allocation5], 64, 64, 4
        $region28: #{transformer_forward.7} parent=11 // pred_fallthru
          _
        // Predicated region
        $region29: #{transformer_forward.7} parent=11 // pred_check
          %p628 = pneg %p217
        $region30: #{transformer_forward.7} parent=11 // pred_check_branch
          %630 = sbr.rel (%p628) target = $region32
        $region31: #{transformer_forward.7} parent=11 // pred_region
          _
        $region32: #{transformer_forward.7} parent=11 // pred_fallthru
          _
        // Predicated region
        $region33: #{transformer_forward.7} parent=11 // pred_check
          %p631 = pneg %p238
        $region34: #{transformer_forward.7} parent=11 // pred_check_branch
          %633 = sbr.rel (%p631) target = $region36
        $region35: #{transformer_forward.7} parent=11 // pred_region
          _
        $region36: #{transformer_forward.7} parent=11 // pred_fallthru
          _
        // Predicated region
        $region37: #{transformer_forward.7} parent=11 // pred_check
          %p634 = pneg %p259
        $region38: #{transformer_forward.7} parent=11 // pred_check_branch
          %636 = sbr.rel (%p634) target = $region40
        $region39: #{transformer_forward.7} parent=11 // pred_region
          _
        $region40: #{transformer_forward.7} parent=11 // pred_fallthru
          _
        // Predicated region
        $region41: #{transformer_forward.7} parent=11 // pred_check
          %p637 = pneg %p280
        $region42: #{transformer_forward.7} parent=11 // pred_check_branch
          %639 = sbr.rel (%p637) target = $region44
        $region43: #{transformer_forward.7} parent=11 // pred_region
          %641 = vsyncadd [#allocation5], 0
          %s642 = sshll.u32 %s10, 4
          %s643 = int_to_ptr.hbm [resolvable:$true] %s642
          %s644 = sshll.u32 [#allocation6], 4
          %s645 = int_to_ptr.vmem [resolvable:$true] %s644
          %650 = dma.hbm_to_vmem [thread:$0]  %s643, 1024, %s645, [#allocation5], 64, 64, 4
        $region44: #{transformer_forward.7} parent=11 // pred_fallthru
          _
        // Predicated region
        $region45: #{transformer_forward.7} parent=11 // pred_check
          %p651 = pneg %p301
        $region46: #{transformer_forward.7} parent=11 // pred_check_branch
          %653 = sbr.rel (%p651) target = $region48
        $region47: #{transformer_forward.7} parent=11 // pred_region
          _
        $region48: #{transformer_forward.7} parent=11 // pred_fallthru
          _
        // Predicated region
        $region49: #{transformer_forward.7} parent=11 // pred_check
          %p654 = pneg %p322
        $region50: #{transformer_forward.7} parent=11 // pred_check_branch
          %656 = sbr.rel (%p654) target = $region52
        $region51: #{transformer_forward.7} parent=11 // pred_region
          _
        $region52: #{transformer_forward.7} parent=11 // pred_fallthru
          _
        // Predicated region
        $region53: #{transformer_forward.7} parent=11 // pred_check
          %p657 = pneg %p343
        $region54: #{transformer_forward.7} parent=11 // pred_check_branch
          %659 = sbr.rel (%p657) target = $region56
        $region55: #{transformer_forward.7} parent=11 // pred_region
          _
        $region56: #{transformer_forward.7} parent=11 // pred_fallthru
          _
        // Predicated region
        $region57: #{transformer_forward.7} parent=11 // pred_check
          %p660 = pneg %p364
        $region58: #{transformer_forward.7} parent=11 // pred_check_branch
          %662 = sbr.rel (%p660) target = $region60
        $region59: #{transformer_forward.7} parent=11 // pred_region
          %664 = vsyncadd [#allocation8], 0
          %s665 = sshll.u32 %s14, 4
          %s666 = int_to_ptr.hbm [resolvable:$true] %s665
          %s667 = sshll.u32 [#allocation7], 4
          %s668 = int_to_ptr.vmem [resolvable:$true] %s667
          %673 = dma.hbm_to_vmem [thread:$0]  %s666, 1024, %s668, [#allocation8], 64, 64, 4
        $region60: #{transformer_forward.7} parent=11 // pred_fallthru
          _
        // Predicated region
        $region61: #{transformer_forward.7} parent=11 // pred_check
          %p674 = pneg %p385
        $region62: #{transformer_forward.7} parent=11 // pred_check_branch
          %676 = sbr.rel (%p674) target = $region64
        $region63: #{transformer_forward.7} parent=11 // pred_region
          _
        $region64: #{transformer_forward.7} parent=11 // pred_fallthru
          _
        // Predicated region
        $region65: #{transformer_forward.7} parent=11 // pred_check
          %p677 = pneg %p406
        $region66: #{transformer_forward.7} parent=11 // pred_check_branch
          %679 = sbr.rel (%p677) target = $region68
        $region67: #{transformer_forward.7} parent=11 // pred_region
          _
        $region68: #{transformer_forward.7} parent=11 // pred_fallthru
          _
        // Predicated region
        $region69: #{transformer_forward.7} parent=11 // pred_check
          %p680 = pneg %p427
        $region70: #{transformer_forward.7} parent=11 // pred_check_branch
          %682 = sbr.rel (%p680) target = $region72
        $region71: #{transformer_forward.7} parent=11 // pred_region
          _
        $region72: #{transformer_forward.7} parent=11 // pred_fallthru
          _
        // Predicated region
        $region73: #{transformer_forward.7} parent=11 // pred_check
          %p683 = pneg %p448
        $region74: #{transformer_forward.7} parent=11 // pred_check_branch
          %685 = sbr.rel (%p683) target = $region76
        $region75: #{transformer_forward.7} parent=11 // pred_region
          %687 = vsyncadd [#allocation8], 0
          %s688 = sshll.u32 %s18, 4
          %s689 = int_to_ptr.hbm [resolvable:$true] %s688
          %s690 = sshll.u32 [#allocation9], 4
          %s691 = int_to_ptr.vmem [resolvable:$true] %s690
          %696 = dma.hbm_to_vmem [thread:$0]  %s689, 1024, %s691, [#allocation8], 64, 64, 4
        $region76: #{transformer_forward.7} parent=11 // pred_fallthru
          _
        // Predicated region
        $region77: #{transformer_forward.7} parent=11 // pred_check
          %p697 = pneg %p469
        $region78: #{transformer_forward.7} parent=11 // pred_check_branch
          %699 = sbr.rel (%p697) target = $region80
        $region79: #{transformer_forward.7} parent=11 // pred_region
          _
        $region80: #{transformer_forward.7} parent=11 // pred_fallthru
          _
        // Predicated region
        $region81: #{transformer_forward.7} parent=11 // pred_check
          %p700 = pneg %p490
        $region82: #{transformer_forward.7} parent=11 // pred_check_branch
          %702 = sbr.rel (%p700) target = $region84
        $region83: #{transformer_forward.7} parent=11 // pred_region
          %704 = vsyncadd [#allocation11], 0
          %s705 = sshll.u32 %s20, 4
          %s706 = int_to_ptr.hbm [resolvable:$true] %s705
          %s707 = sshll.u32 [#allocation10], 4
          %s708 = int_to_ptr.vmem [resolvable:$true] %s707
          %713 = dma.hbm_to_vmem [thread:$0]  %s706, 1024, %s708, [#allocation11], 64, 64, 4
        $region84: #{transformer_forward.7} parent=11 // pred_fallthru
          _
        // Predicated region
        $region85: #{transformer_forward.7} parent=11 // pred_check
          %p714 = pneg %p511
        $region86: #{transformer_forward.7} parent=11 // pred_check_branch
          %716 = sbr.rel (%p714) target = $region88
        $region87: #{transformer_forward.7} parent=11 // pred_region
          _
        $region88: #{transformer_forward.7} parent=11 // pred_fallthru
          _
        // Predicated region
        $region89: #{transformer_forward.7} parent=11 // pred_check
          %p717 = pneg %p532
        $region90: #{transformer_forward.7} parent=11 // pred_check_branch
          %719 = sbr.rel (%p717) target = $region92
        $region91: #{transformer_forward.7} parent=11 // pred_region
          _
        $region92: #{transformer_forward.7} parent=11 // pred_fallthru
          _
        // Predicated region
        $region93: #{transformer_forward.7} parent=11 // pred_check
          %p720 = pneg %p553
        $region94: #{transformer_forward.7} parent=11 // pred_check_branch
          %722 = sbr.rel (%p720) target = $region96
        $region95: #{transformer_forward.7} parent=11 // pred_region
          _
        $region96: #{transformer_forward.7} parent=11 // pred_fallthru
          _
      $region12: #{transformer_forward.7} parent=5 // pred_fallthru
        _
      %p723 = scmp.lt.s32.totalorder %s34, 2
      // Predicated region
      $region97: #{transformer_forward.7} parent=5 // pred_check
        %p724 = pneg %p723
      $region98: #{transformer_forward.7} parent=5 // pred_check_branch
        %726 = sbr.rel (%p724) target = $region100
      $region99: #{transformer_forward.7} parent=5 // pred_region
        // Predicated region
        $region101: #{transformer_forward.7} parent=99 // pred_check
          %p727 = pneg %p54
        $region102: #{transformer_forward.7} parent=99 // pred_check_branch
          %729 = sbr.rel (%p727) target = $region104
        $region103: #{transformer_forward.7} parent=99 // pred_region
          %p730 = scmp.lt.s32.totalorder %s34, 1
          %s731 = scalar_select %p730, %s34, 1
          %s732 = smul.addr %s731, 8
          %s733 = scalar_lea.vmem %s0, %s732
        $region104: #{transformer_forward.7} parent=99 // pred_fallthru
          _
        // Predicated region
        $region105: #{transformer_forward.7} parent=99 // pred_check
          %p734 = pneg %p80
        $region106: #{transformer_forward.7} parent=99 // pred_check_branch
          %736 = sbr.rel (%p734) target = $region108
        $region107: #{transformer_forward.7} parent=99 // pred_region
          %p737 = scmp.lt.s32.totalorder %s34, 1
          %s738 = scalar_select %p737, %s34, 1
          %s739 = smul.addr %s738, 2
          %s740 = smul.addr %s739, 8
          %s741 = scalar_lea.vmem %s1, %s740
        $region108: #{transformer_forward.7} parent=99 // pred_fallthru
          _
        // Predicated region
        $region109: #{transformer_forward.7} parent=99 // pred_check
          %p742 = pneg %p127
        $region110: #{transformer_forward.7} parent=99 // pred_check_branch
          %744 = sbr.rel (%p742) target = $region112
        $region111: #{transformer_forward.7} parent=99 // pred_region
          %p745 = scmp.lt.s32.totalorder %s34, 1
          %s746 = scalar_select %p745, %s34, 1
          %s747 = scalar_lea.vmem %s3, %s746
        $region112: #{transformer_forward.7} parent=99 // pred_fallthru
          _
      $region100: #{transformer_forward.7} parent=5 // pred_fallthru
        _
      %p748 = scmp.le.s32.totalorder 1, %s34
      %p749 = scmp.lt.s32.totalorder %s34, 3
      %p750 = pnand %p748, %p749
      %p751 = pneg %p750
      // Predicated region
      $region113: #{transformer_forward.7} parent=5 // pred_check
        _
      $region114: #{transformer_forward.7} parent=5 // pred_check_branch
        %753 = sbr.rel (%p750) target = $region116
      $region115: #{transformer_forward.7} parent=5 // pred_region
        %s754 = ssub.s32 %s34, 1
        // Predicated region
        $region117: #{transformer_forward.7} parent=115 // pred_check
          %p755 = pneg %p154
        $region118: #{transformer_forward.7} parent=115 // pred_check_branch
          %757 = sbr.rel (%p755) target = $region120
        $region119: #{transformer_forward.7} parent=115 // pred_region
          %759 = dma.done [#allocation3], 3072
        $region120: #{transformer_forward.7} parent=115 // pred_fallthru
          _
        // Predicated region
        $region121: #{transformer_forward.7} parent=115 // pred_check
          %p760 = pneg %p196
        $region122: #{transformer_forward.7} parent=115 // pred_check_branch
          %762 = sbr.rel (%p760) target = $region124
        $region123: #{transformer_forward.7} parent=115 // pred_region
          %764 = dma.done [#allocation5], 1024
        $region124: #{transformer_forward.7} parent=115 // pred_fallthru
          _
        // Predicated region
        $region125: #{transformer_forward.7} parent=115 // pred_check
          %p765 = pneg %p280
        $region126: #{transformer_forward.7} parent=115 // pred_check_branch
          %767 = sbr.rel (%p765) target = $region128
        $region127: #{transformer_forward.7} parent=115 // pred_region
          %769 = dma.done [#allocation5], 1024
        $region128: #{transformer_forward.7} parent=115 // pred_fallthru
          _
        // Predicated region
        $region129: #{transformer_forward.7} parent=115 // pred_check
          %p770 = pneg %p364
        $region130: #{transformer_forward.7} parent=115 // pred_check_branch
          %772 = sbr.rel (%p770) target = $region132
        $region131: #{transformer_forward.7} parent=115 // pred_region
          %774 = dma.done [#allocation8], 1024
        $region132: #{transformer_forward.7} parent=115 // pred_fallthru
          _
        // Predicated region
        $region133: #{transformer_forward.7} parent=115 // pred_check
          %p775 = pneg %p448
        $region134: #{transformer_forward.7} parent=115 // pred_check_branch
          %777 = sbr.rel (%p775) target = $region136
        $region135: #{transformer_forward.7} parent=115 // pred_region
          %779 = dma.done [#allocation8], 1024
        $region136: #{transformer_forward.7} parent=115 // pred_fallthru
          _
        // Predicated region
        $region137: #{transformer_forward.7} parent=115 // pred_check
          %p780 = pneg %p490
        $region138: #{transformer_forward.7} parent=115 // pred_check_branch
          %782 = sbr.rel (%p780) target = $region140
        $region139: #{transformer_forward.7} parent=115 // pred_region
          %784 = dma.done [#allocation11], 1024
        $region140: #{transformer_forward.7} parent=115 // pred_fallthru
          _
        %p785 = scmp.lt.s32.totalorder %s39, 1
        %s786 = scalar_select %p785, %s39, 1
        %s787 = smul.addr %s786, 8
        %s788 = scalar_lea.vmem %s0, %s787
        %p789 = pneg %p60
        %p790 = pneg %p57
        %p791 = scmp.lt.s32.totalorder %s39, 1
        %s792 = scalar_select %p791, %s39, 1
        %s793 = smul.addr %s792, 2
        %s794 = smul.addr %s793, 8
        %s795 = scalar_lea.vmem %s1, %s794
        %p796 = pneg %p86
        %p797 = pneg %p83
        %p798 = pneg %p107
        %p799 = pneg %p104
        %p800 = scmp.lt.s32.totalorder %s39, 1
        %s801 = scalar_select %p800, %s39, 1
        %s802 = scalar_lea.vmem %s3, %s801
        %p803 = pneg %p133
        %p804 = pneg %p130
        %p805 = pneg %p154
        %p806 = pneg %p151
        %p807 = pneg %p175
        %p808 = pneg %p172
        %p809 = pneg %p196
        %p810 = pneg %p193
        %p811 = pneg %p217
        %p812 = pneg %p214
        %p813 = pneg %p238
        %p814 = pneg %p235
        %p815 = pneg %p259
        %p816 = pneg %p256
        %p817 = pneg %p280
        %p818 = pneg %p277
        %p819 = pneg %p301
        %p820 = pneg %p298
        %p821 = pneg %p322
        %p822 = pneg %p319
        %p823 = pneg %p343
        %p824 = pneg %p340
        %p825 = pneg %p364
        %p826 = pneg %p361
        %p827 = pneg %p385
        %p828 = pneg %p382
        %p829 = pneg %p406
        %p830 = pneg %p403
        %p831 = pneg %p427
        %p832 = pneg %p424
        %p833 = pneg %p448
        %p834 = pneg %p445
        %p835 = pneg %p469
        %p836 = pneg %p466
        %p837 = pneg %p490
        %p838 = pneg %p487
        %p839 = pneg %p511
        %p840 = pneg %p508
        %p841 = pneg %p532
        %p842 = pneg %p529
        %p843 = pneg %p553
        %p844 = pneg %p550
        %p845 = pneg %p579
        %p846 = pneg %p576
        %p847 = scmp.lt.s32.totalorder %s39, 1
        %s848 = scalar_select %p847, %s39, 1
        %s849 = smul.addr %s848, 8
        %s850 = scalar_lea.vmem %s24, %s849
        %p851 = scmp.lt.s32.totalorder %s39, 1
        %s852 = scalar_select %p851, %s39, 1
        %s853 = smul.addr %s852, 8
        %s854 = scalar_lea.vmem %s0, %s853
        %p855 = scmp.lt.s32.totalorder %s39, 1
        %s856 = scalar_select %p855, %s39, 1
        %s857 = smul.addr %s856, 2
        %s858 = smul.addr %s857, 8
        %s859 = scalar_lea.vmem %s1, %s858
        %p860 = scmp.lt.s32.totalorder %s39, 1
        %s861 = scalar_select %p860, %s39, 1
        %s862 = scalar_lea.vmem %s3, %s861
        %p863 = scmp.lt.s32.totalorder %s39, 1
        %s864 = scalar_select %p863, %s39, 1
        %s865 = smul.addr %s864, 8
        %s866 = scalar_lea.vmem %s24, %s865
        %v867 = vld [vmem:[%s854] sm:$0xff]
        %v868 = vpack.c.bf16 %v867, %v867
        %v869 = vld [vmem:[#allocation2] sm:$0xff]
        %v870 = vld [vmem:[#allocation2 + $0x8] sm:$0xf]
        %v871 = vld [vmem:[#allocation2 + $0xc] sm:$0xff]
        %v872 = vld [vmem:[#allocation2 + $0x14] sm:$0xf]
        %v873 = vld [vmem:[#allocation2 + $0x18] sm:$0xff]
        %v874 = vld [vmem:[#allocation2 + $0x20] sm:$0xf]
        %v875 = vld [vmem:[#allocation2 + $0x24] sm:$0xff]
        %v876 = vld [vmem:[#allocation2 + $0x2c] sm:$0xf]
        %v877 = vld [vmem:[#allocation2 + $0x30] sm:$0xff]
        %v878 = vld [vmem:[#allocation2 + $0x38] sm:$0xf]
        %v879 = vld [vmem:[#allocation2 + $0x3c] sm:$0xff]
        %v880 = vld [vmem:[#allocation2 + $0x44] sm:$0xf]
        %v881 = vld [vmem:[#allocation2 + $0x48] sm:$0xff]
        %v882 = vld [vmem:[#allocation2 + $0x50] sm:$0xf]
        %v883 = vld [vmem:[#allocation2 + $0x54] sm:$0xff]
        %v884 = vld [vmem:[#allocation2 + $0x5c] sm:$0xf]
        %v885 = vld [vmem:[#allocation2 + $0x60] sm:$0xff]
        %v886 = vld [vmem:[#allocation2 + $0x68] sm:$0xf]
        %v887 = vld [vmem:[#allocation2 + $0x6c] sm:$0xff]
        %v888 = vld [vmem:[#allocation2 + $0x74] sm:$0xf]
        %v889 = vld [vmem:[#allocation2 + $0x78] sm:$0xff]
        %v890 = vld [vmem:[#allocation2 + $0x80] sm:$0xf]
        %v891 = vld [vmem:[#allocation2 + $0x84] sm:$0xff]
        %v892 = vld [vmem:[#allocation2 + $0x8c] sm:$0xf]
        %v893 = vld [vmem:[#allocation2 + $0x90] sm:$0xff]
        %v894 = vld [vmem:[#allocation2 + $0x98] sm:$0xf]
        %v895 = vld [vmem:[#allocation2 + $0x9c] sm:$0xff]
        %v896 = vld [vmem:[#allocation2 + $0xa4] sm:$0xf]
        %v897 = vld [vmem:[#allocation2 + $0xa8] sm:$0xff]
        %v898 = vld [vmem:[#allocation2 + $0xb0] sm:$0xf]
        %v899 = vld [vmem:[#allocation2 + $0xb4] sm:$0xff]
        %v900 = vld [vmem:[#allocation2 + $0xbc] sm:$0xf]
        %v901 = vld [vmem:[%s5] sm:$0x7]
        %v903 = vperm.slane %v901, 0
        %v904 = vperm.slane %v901, 1
        %v905 = vperm.slane %v901, 2
        %v941 = vunpack.c.l.b16 %v869
        %v942 = vunpack.c.h.b16 %v869
        %v943 = vunpack.c.l.b16 %v870
        %v944 = vunpack.c.l.b16 %v871
        %v945 = vunpack.c.h.b16 %v871
        %v946 = vunpack.c.l.b16 %v872
        %v947 = vunpack.c.l.b16 %v873
        %v948 = vunpack.c.h.b16 %v873
        %v949 = vunpack.c.l.b16 %v874
        %v950 = vunpack.c.l.b16 %v875
        %v951 = vunpack.c.h.b16 %v875
        %v952 = vunpack.c.l.b16 %v876
        %v953 = vunpack.c.l.b16 %v877
        %v954 = vunpack.c.h.b16 %v877
        %v955 = vunpack.c.l.b16 %v878
        %v956 = vunpack.c.l.b16 %v879
        %v957 = vunpack.c.h.b16 %v879
        %v958 = vunpack.c.l.b16 %v880
        %v959 = vunpack.c.l.b16 %v881
        %v960 = vunpack.c.h.b16 %v881
        %v961 = vunpack.c.l.b16 %v882
        %v962 = vunpack.c.l.b16 %v883
        %v963 = vunpack.c.h.b16 %v883
        %v964 = vunpack.c.l.b16 %v884
        %v965 = vunpack.c.l.b16 %v885
        %v966 = vunpack.c.h.b16 %v885
        %v967 = vunpack.c.l.b16 %v886
        %v968 = vunpack.c.l.b16 %v887
        %v969 = vunpack.c.h.b16 %v887
        %v970 = vunpack.c.l.b16 %v888
        %v971 = vunpack.c.l.b16 %v889
        %v972 = vunpack.c.h.b16 %v889
        %v973 = vunpack.c.l.b16 %v890
        %v974 = vunpack.c.l.b16 %v891
        %v975 = vunpack.c.h.b16 %v891
        %v976 = vunpack.c.l.b16 %v892
        %v977 = vunpack.c.l.b16 %v893
        %v978 = vunpack.c.h.b16 %v893
        %v979 = vunpack.c.l.b16 %v894
        %v980 = vunpack.c.l.b16 %v895
        %v981 = vunpack.c.h.b16 %v895
        %v982 = vunpack.c.l.b16 %v896
        %v983 = vunpack.c.l.b16 %v897
        %v984 = vunpack.c.h.b16 %v897
        %v985 = vunpack.c.l.b16 %v898
        %v986 = vunpack.c.l.b16 %v899
        %v987 = vunpack.c.h.b16 %v899
        %v988 = vunpack.c.l.b16 %v900
        %v989 = vpack.c.b16 %v944, %v941
        %v990 = vpack.c.b16 %v945, %v942
        %v991 = vpack.c.b16 %v946, %v943
        %v992 = vpack.c.b16 %v950, %v947
        %v993 = vpack.c.b16 %v951, %v948
        %v994 = vpack.c.b16 %v952, %v949
        %v995 = vpack.c.b16 %v956, %v953
        %v996 = vpack.c.b16 %v957, %v954
        %v997 = vpack.c.b16 %v958, %v955
        %v998 = vpack.c.b16 %v962, %v959
        %v999 = vpack.c.b16 %v963, %v960
        %v1000 = vpack.c.b16 %v964, %v961
        %v1001 = vpack.c.b16 %v968, %v965
        %v1002 = vpack.c.b16 %v969, %v966
        %v1003 = vpack.c.b16 %v970, %v967
        %v1004 = vpack.c.b16 %v974, %v971
        %v1005 = vpack.c.b16 %v975, %v972
        %v1006 = vpack.c.b16 %v976, %v973
        %v1007 = vpack.c.b16 %v980, %v977
        %v1008 = vpack.c.b16 %v981, %v978
        %v1009 = vpack.c.b16 %v982, %v979
        %v1010 = vpack.c.b16 %v986, %v983
        %v1011 = vpack.c.b16 %v987, %v984
        %v1012 = vpack.c.b16 %v988, %v985
        %1037 = vmatpush.bf16.msra.mxu0 %v1010
        %1038 = vmatpush.bf16.msra.mxu0 %v1007
        %1039 = vmatpush.bf16.msra.mxu0 %v1004
        %1040 = vmatpush.bf16.msra.mxu0 %v1001
        %1041 = vmatpush.bf16.msra.mxu0 %v998
        %1042 = vmatpush.bf16.msra.mxu0 %v995
        %1043 = vmatpush.bf16.msra.mxu0 %v992
        %1044 = vmatpush.bf16.msra.mxu0 %v989
        %1045 = vmatmul.bf16.gmra.mxu0 %v868
        %v1046 = vpop.f32.mrf.mxu0
        %v1047 = vadd.f32 %v903, %v1046
        %v1048 = vpop.f32.mrf.mxu0
        %1049 = vdwg.mxu0
        %1050 = vmatpush.bf16.msra.mxu0 %v1011
        %1051 = vmatpush.bf16.msra.mxu0 %v1008
        %1052 = vmatpush.bf16.msra.mxu0 %v1005
        %1053 = vmatpush.bf16.msra.mxu0 %v1002
        %1054 = vmatpush.bf16.msra.mxu0 %v999
        %1055 = vmatpush.bf16.msra.mxu0 %v996
        %1056 = vmatpush.bf16.msra.mxu0 %v993
        %1057 = vmatpush.bf16.msra.mxu0 %v990
        %1058 = vmatmul.bf16.gmra.mxu0 %v868
        %v1059 = vpop.f32.mrf.mxu0
        %v1060 = vadd.f32 %v904, %v1059
        %v1061 = vpop.f32.mrf.mxu0
        %1062 = vdwg.mxu0
        %1063 = vmatpush.bf16.msra.mxu0 %v1012
        %1064 = vmatpush.bf16.msra.mxu0 %v1009
        %1065 = vmatpush.bf16.msra.mxu0 %v1006
        %1066 = vmatpush.bf16.msra.mxu0 %v1003
        %1067 = vmatpush.bf16.msra.mxu0 %v1000
        %1068 = vmatpush.bf16.msra.mxu0 %v997
        %1069 = vmatpush.bf16.msra.mxu0 %v994
        %1070 = vmatpush.bf16.msra.mxu0 %v991
        %1071 = vmatmul.bf16.gmra.mxu0 %v868
        %v1072 = vpop.f32.mrf.mxu0
        %v1073 = vadd.f32 %v905, %v1072
        %v1074 = vpop.f32.mrf.mxu0
        %1075 = vdwg.mxu0
        %v1076 = vld [vmem:[%s2] sm:$0xff]
        %v1077 = vld [vmem:[%s862] sm:$0x1]
        %v1079 = vperm.slane %v1077, 0
        %v1081 = vadd.f32 %v1076, %v1079
        %vm1082 = vcmask 261120
        %v1084 = vsel %vm1082, %v1047, 0
        %v1087 = vsel %vm1082, %v1060, 0
        %1089 = vmatpush.xpose.msra.mxu0 0.0
        %1090 = vmatpush.xpose.msra.mxu0 0.0
        %1091 = vmatpush.xpose.msra.mxu0 0.0
        %1092 = vmatpush.xpose.msra.mxu0 0.0
        %1093 = vmatpush.xpose.msra.mxu0 0.0
        %1094 = vmatpush.xpose.msra.mxu0 0.0
        %1095 = vmatpush.xpose.msra.mxu0 0.0
        %1096 = vmatpush.xpose.msra.mxu0 0.0
        %1097 = vmatpush.xpose.msra.mxu0 0.0
        %1098 = vmatpush.xpose.msra.mxu0 0.0
        %1099 = vmatpush.xpose.msra.mxu0 0.0
        %1100 = vmatpush.xpose.msra.mxu0 0.0
        %1101 = vmatpush.xpose.msra.mxu0 0.0
        %1102 = vmatpush.xpose.msra.mxu0 0.0
        %1103 = vmatpush.xpose.msra.mxu0 0.0
        %1104 = vmatpush.xpose.msra.mxu0 %v1087
        %1105 = vmatmul.f32.gmra.mxu0 %v1084
        %v1106 = vpop.f32.mrf.mxu0
        %v1107 = vadd.f32 0.0, %v1106
        %1108 = vdwg.mxu0
        %v1109 = vmul.f32 %v1107, 0.17677669
        %v1110 = vadd.f32 %v1109, %v1081
        %vm1111 = vcmask 64512
        %v1112 = vsel %vm1111, %v1110, -inf
        %1113 = vmax.xlane.f32.xlu0 %v1112
        %v1114 = vpop.xlane.xlu0 %1113
        %v1115 = vsub.f32 %v1110, %v1114
        %v1116 = vmul.f32 %v1115, 1.442695
        %v1117 = vpow.pop %v1116
        %v1118 = vsel %vm1111, %v1117, 0.0
        %1119 = vadd.xlane.f32.xlu0 %v1118
        %v1120 = vpop.xlane.xlu0 %1119
        %v1121 = vrcp.pop %v1120
        %v1122 = vmul.f32 %v1117, %v1121
        %v1124 = vsel %vm1111, %v1122, 0
        %1126 = vmatpush.msra.mxu0 0.0
        %1127 = vmatpush.msra.mxu0 0.0
        %1128 = vmatpush.msra.mxu0 0.0
        %1129 = vmatpush.msra.mxu0 0.0
        %1130 = vmatpush.msra.mxu0 0.0
        %1131 = vmatpush.msra.mxu0 0.0
        %1132 = vmatpush.msra.mxu0 0.0
        %1133 = vmatpush.msra.mxu0 0.0
        %1134 = vmatpush.msra.mxu0 0.0
        %1135 = vmatpush.msra.mxu0 0.0
        %1136 = vmatpush.msra.mxu0 0.0
        %1137 = vmatpush.msra.mxu0 0.0
        %1138 = vmatpush.msra.mxu0 0.0
        %1139 = vmatpush.msra.mxu0 0.0
        %1140 = vmatpush.msra.mxu0 0.0
        %1141 = vmatpush.msra.mxu0 %v1073
        %1142 = vmatmul.f32.gmra.mxu0 %v1124
        %v1143 = vpop.f32.mrf.mxu0
        %v1144 = vadd.f32 0.0, %v1143
        %1145 = vdwg.mxu0
        %1146 = vrot.lane.b32.xlu0 %v1047, 96
        %v1147 = vpop.permute.xlu0 %1146
        %1148 = vrot.lane.b32.xlu0 %v1060, 96
        %v1149 = vpop.permute.xlu0 %1148
        %v1150 = vsel %vm1082, %v1147, 0
        %v1152 = vsel %vm1082, %v1149, 0
        %1154 = vmatpush.xpose.msra.mxu0 0.0
        %1155 = vmatpush.xpose.msra.mxu0 0.0
        %1156 = vmatpush.xpose.msra.mxu0 0.0
        %1157 = vmatpush.xpose.msra.mxu0 0.0
        %1158 = vmatpush.xpose.msra.mxu0 0.0
        %1159 = vmatpush.xpose.msra.mxu0 0.0
        %1160 = vmatpush.xpose.msra.mxu0 0.0
        %1161 = vmatpush.xpose.msra.mxu0 0.0
        %1162 = vmatpush.xpose.msra.mxu0 0.0
        %1163 = vmatpush.xpose.msra.mxu0 0.0
        %1164 = vmatpush.xpose.msra.mxu0 0.0
        %1165 = vmatpush.xpose.msra.mxu0 0.0
        %1166 = vmatpush.xpose.msra.mxu0 0.0
        %1167 = vmatpush.xpose.msra.mxu0 0.0
        %1168 = vmatpush.xpose.msra.mxu0 0.0
        %1169 = vmatpush.xpose.msra.mxu0 %v1152
        %1170 = vmatmul.f32.gmra.mxu0 %v1150
        %v1171 = vpop.f32.mrf.mxu0
        %v1172 = vadd.f32 0.0, %v1171
        %1173 = vdwg.mxu0
        %v1174 = vmul.f32 %v1172, 0.17677669
        %v1175 = vadd.f32 %v1174, %v1081
        %v1176 = vsel %vm1111, %v1175, -inf
        %1177 = vmax.xlane.f32.xlu0 %v1176
        %v1178 = vpop.xlane.xlu0 %1177
        %v1179 = vsub.f32 %v1175, %v1178
        %v1180 = vmul.f32 %v1179, 1.442695
        %v1181 = vpow.pop %v1180
        %v1182 = vsel %vm1111, %v1181, 0.0
        %1183 = vadd.xlane.f32.xlu0 %v1182
        %v1184 = vpop.xlane.xlu0 %1183
        %v1185 = vrcp.pop %v1184
        %v1186 = vmul.f32 %v1181, %v1185
        %1188 = vrot.lane.b32.xlu0 %v1073, 96
        %v1189 = vpop.permute.xlu0 %1188
        %v1192 = vsel %vm1111, %v1186, 0
        %1194 = vmatpush.msra.mxu0 0.0
        %1195 = vmatpush.msra.mxu0 0.0
        %1196 = vmatpush.msra.mxu0 0.0
        %1197 = vmatpush.msra.mxu0 0.0
        %1198 = vmatpush.msra.mxu0 0.0
        %1199 = vmatpush.msra.mxu0 0.0
        %1200 = vmatpush.msra.mxu0 0.0
        %1201 = vmatpush.msra.mxu0 0.0
        %1202 = vmatpush.msra.mxu0 0.0
        %1203 = vmatpush.msra.mxu0 0.0
        %1204 = vmatpush.msra.mxu0 0.0
        %1205 = vmatpush.msra.mxu0 0.0
        %1206 = vmatpush.msra.mxu0 0.0
        %1207 = vmatpush.msra.mxu0 0.0
        %1208 = vmatpush.msra.mxu0 0.0
        %1209 = vmatpush.msra.mxu0 %v1189
        %1210 = vmatmul.f32.gmra.mxu0 %v1192
        %v1211 = vpop.f32.mrf.mxu0
        %v1212 = vadd.f32 0.0, %v1211
        %1213 = vdwg.mxu0
        %1214 = vrot.lane.b32.xlu0 %v1047, 64
        %v1215 = vpop.permute.xlu0 %1214
        %1216 = vrot.lane.b32.xlu0 %v1060, 64
        %v1217 = vpop.permute.xlu0 %1216
        %v1218 = vsel %vm1082, %v1215, 0
        %v1220 = vsel %vm1082, %v1217, 0
        %1222 = vmatpush.xpose.msra.mxu0 0.0
        %1223 = vmatpush.xpose.msra.mxu0 0.0
        %1224 = vmatpush.xpose.msra.mxu0 0.0
        %1225 = vmatpush.xpose.msra.mxu0 0.0
        %1226 = vmatpush.xpose.msra.mxu0 0.0
        %1227 = vmatpush.xpose.msra.mxu0 0.0
        %1228 = vmatpush.xpose.msra.mxu0 0.0
        %1229 = vmatpush.xpose.msra.mxu0 0.0
        %1230 = vmatpush.xpose.msra.mxu0 0.0
        %1231 = vmatpush.xpose.msra.mxu0 0.0
        %1232 = vmatpush.xpose.msra.mxu0 0.0
        %1233 = vmatpush.xpose.msra.mxu0 0.0
        %1234 = vmatpush.xpose.msra.mxu0 0.0
        %1235 = vmatpush.xpose.msra.mxu0 0.0
        %1236 = vmatpush.xpose.msra.mxu0 0.0
        %1237 = vmatpush.xpose.msra.mxu0 %v1220
        %1238 = vmatmul.f32.gmra.mxu0 %v1218
        %v1239 = vpop.f32.mrf.mxu0
        %v1240 = vadd.f32 0.0, %v1239
        %1241 = vdwg.mxu0
        %v1242 = vmul.f32 %v1240, 0.17677669
        %v1243 = vadd.f32 %v1242, %v1081
        %v1244 = vsel %vm1111, %v1243, -inf
        %1245 = vmax.xlane.f32.xlu0 %v1244
        %v1246 = vpop.xlane.xlu0 %1245
        %v1247 = vsub.f32 %v1243, %v1246
        %v1248 = vmul.f32 %v1247, 1.442695
        %v1249 = vpow.pop %v1248
        %v1250 = vsel %vm1111, %v1249, 0.0
        %1251 = vadd.xlane.f32.xlu0 %v1250
        %v1252 = vpop.xlane.xlu0 %1251
        %v1253 = vrcp.pop %v1252
        %v1254 = vmul.f32 %v1249, %v1253
        %1255 = vrot.lane.b32.xlu0 %v1073, 64
        %v1256 = vpop.permute.xlu0 %1255
        %v1259 = vsel %vm1111, %v1254, 0
        %1261 = vmatpush.msra.mxu0 0.0
        %1262 = vmatpush.msra.mxu0 0.0
        %1263 = vmatpush.msra.mxu0 0.0
        %1264 = vmatpush.msra.mxu0 0.0
        %1265 = vmatpush.msra.mxu0 0.0
        %1266 = vmatpush.msra.mxu0 0.0
        %1267 = vmatpush.msra.mxu0 0.0
        %1268 = vmatpush.msra.mxu0 0.0
        %1269 = vmatpush.msra.mxu0 0.0
        %1270 = vmatpush.msra.mxu0 0.0
        %1271 = vmatpush.msra.mxu0 0.0
        %1272 = vmatpush.msra.mxu0 0.0
        %1273 = vmatpush.msra.mxu0 0.0
        %1274 = vmatpush.msra.mxu0 0.0
        %1275 = vmatpush.msra.mxu0 0.0
        %1276 = vmatpush.msra.mxu0 %v1256
        %1277 = vmatmul.f32.gmra.mxu0 %v1259
        %v1278 = vpop.f32.mrf.mxu0
        %v1279 = vadd.f32 0.0, %v1278
        %1280 = vdwg.mxu0
        %1281 = vrot.lane.b32.xlu0 %v1047, 32
        %v1282 = vpop.permute.xlu0 %1281
        %1283 = vrot.lane.b32.xlu0 %v1060, 32
        %v1284 = vpop.permute.xlu0 %1283
        %v1285 = vsel %vm1082, %v1282, 0
        %v1287 = vsel %vm1082, %v1284, 0
        %1289 = vmatpush.xpose.msra.mxu0 0.0
        %1290 = vmatpush.xpose.msra.mxu0 0.0
        %1291 = vmatpush.xpose.msra.mxu0 0.0
        %1292 = vmatpush.xpose.msra.mxu0 0.0
        %1293 = vmatpush.xpose.msra.mxu0 0.0
        %1294 = vmatpush.xpose.msra.mxu0 0.0
        %1295 = vmatpush.xpose.msra.mxu0 0.0
        %1296 = vmatpush.xpose.msra.mxu0 0.0
        %1297 = vmatpush.xpose.msra.mxu0 0.0
        %1298 = vmatpush.xpose.msra.mxu0 0.0
        %1299 = vmatpush.xpose.msra.mxu0 0.0
        %1300 = vmatpush.xpose.msra.mxu0 0.0
        %1301 = vmatpush.xpose.msra.mxu0 0.0
        %1302 = vmatpush.xpose.msra.mxu0 0.0
        %1303 = vmatpush.xpose.msra.mxu0 0.0
        %1304 = vmatpush.xpose.msra.mxu0 %v1287
        %1305 = vmatmul.f32.gmra.mxu0 %v1285
        %v1306 = vpop.f32.mrf.mxu0
        %v1307 = vadd.f32 0.0, %v1306
        %1308 = vdwg.mxu0
        %v1309 = vmul.f32 %v1307, 0.17677669
        %v1310 = vadd.f32 %v1309, %v1081
        %v1311 = vsel %vm1111, %v1310, -inf
        %1312 = vmax.xlane.f32.xlu0 %v1311
        %v1313 = vpop.xlane.xlu0 %1312
        %v1314 = vsub.f32 %v1310, %v1313
        %v1315 = vmul.f32 %v1314, 1.442695
        %v1316 = vpow.pop %v1315
        %v1317 = vsel %vm1111, %v1316, 0.0
        %1318 = vadd.xlane.f32.xlu0 %v1317
        %v1319 = vpop.xlane.xlu0 %1318
        %v1320 = vrcp.pop %v1319
        %v1321 = vmul.f32 %v1316, %v1320
        %1322 = vrot.lane.b32.xlu0 %v1073, 32
        %v1323 = vpop.permute.xlu0 %1322
        %v1326 = vsel %vm1111, %v1321, 0
        %1328 = vmatpush.msra.mxu0 0.0
        %1329 = vmatpush.msra.mxu0 0.0
        %1330 = vmatpush.msra.mxu0 0.0
        %1331 = vmatpush.msra.mxu0 0.0
        %1332 = vmatpush.msra.mxu0 0.0
        %1333 = vmatpush.msra.mxu0 0.0
        %1334 = vmatpush.msra.mxu0 0.0
        %1335 = vmatpush.msra.mxu0 0.0
        %1336 = vmatpush.msra.mxu0 0.0
        %1337 = vmatpush.msra.mxu0 0.0
        %1338 = vmatpush.msra.mxu0 0.0
        %1339 = vmatpush.msra.mxu0 0.0
        %1340 = vmatpush.msra.mxu0 0.0
        %1341 = vmatpush.msra.mxu0 0.0
        %1342 = vmatpush.msra.mxu0 0.0
        %1343 = vmatpush.msra.mxu0 %v1323
        %1344 = vmatmul.f32.gmra.mxu0 %v1326
        %v1345 = vpop.f32.mrf.mxu0
        %v1346 = vadd.f32 0.0, %v1345
        %1347 = vdwg.mxu0
        %1349 = vrot.lane.b32.xlu0 %v1212, 32
        %v1350 = vpop.permute.xlu0 %1349
        %1353 = vrot.lane.b32.xlu0 %v1279, 64
        %v1354 = vpop.permute.xlu0 %1353
        %1357 = vrot.lane.b32.xlu0 %v1346, 96
        %v1358 = vpop.permute.xlu0 %1357
        %v1360 = vsel %vm1082, %v1144, %v1350
        %vm1361 = vcmask 523264
        %v1362 = vsel %vm1361, %v1360, %v1354
        %vm1363 = vcmask 785408
        %v1364 = vsel %vm1363, %v1362, %v1358
        %v1365 = vpack.c.bf16 %v1364, %v1364
        %v1366 = vld [vmem:[#allocation4] sm:$0xf]
        %v1367 = vld [vmem:[#allocation4 + $0x4] sm:$0xf]
        %v1368 = vld [vmem:[#allocation4 + $0x8] sm:$0xf]
        %v1369 = vld [vmem:[#allocation4 + $0xc] sm:$0xf]
        %v1370 = vld [vmem:[#allocation4 + $0x10] sm:$0xf]
        %v1371 = vld [vmem:[#allocation4 + $0x14] sm:$0xf]
        %v1372 = vld [vmem:[#allocation4 + $0x18] sm:$0xf]
        %v1373 = vld [vmem:[#allocation4 + $0x1c] sm:$0xf]
        %v1374 = vld [vmem:[#allocation4 + $0x20] sm:$0xf]
        %v1375 = vld [vmem:[#allocation4 + $0x24] sm:$0xf]
        %v1376 = vld [vmem:[#allocation4 + $0x28] sm:$0xf]
        %v1377 = vld [vmem:[#allocation4 + $0x2c] sm:$0xf]
        %v1378 = vld [vmem:[#allocation4 + $0x30] sm:$0xf]
        %v1379 = vld [vmem:[#allocation4 + $0x34] sm:$0xf]
        %v1380 = vld [vmem:[#allocation4 + $0x38] sm:$0xf]
        %v1381 = vld [vmem:[#allocation4 + $0x3c] sm:$0xf]
        %v1382 = vld [vmem:[%s7] sm:$0x1]
        %v1384 = vperm.slane %v1382, 0
        %v1402 = vunpack.c.l.b16 %v1366
        %v1403 = vunpack.c.l.b16 %v1367
        %v1404 = vunpack.c.l.b16 %v1368
        %v1405 = vunpack.c.l.b16 %v1369
        %v1406 = vunpack.c.l.b16 %v1370
        %v1407 = vunpack.c.l.b16 %v1371
        %v1408 = vunpack.c.l.b16 %v1372
        %v1409 = vunpack.c.l.b16 %v1373
        %v1410 = vunpack.c.l.b16 %v1374
        %v1411 = vunpack.c.l.b16 %v1375
        %v1412 = vunpack.c.l.b16 %v1376
        %v1413 = vunpack.c.l.b16 %v1377
        %v1414 = vunpack.c.l.b16 %v1378
        %v1415 = vunpack.c.l.b16 %v1379
        %v1416 = vunpack.c.l.b16 %v1380
        %v1417 = vunpack.c.l.b16 %v1381
        %v1418 = vpack.c.b16 %v1403, %v1402
        %v1419 = vpack.c.b16 %v1405, %v1404
        %v1420 = vpack.c.b16 %v1407, %v1406
        %v1421 = vpack.c.b16 %v1409, %v1408
        %v1422 = vpack.c.b16 %v1411, %v1410
        %v1423 = vpack.c.b16 %v1413, %v1412
        %v1424 = vpack.c.b16 %v1415, %v1414
        %v1425 = vpack.c.b16 %v1417, %v1416
        %1434 = vmatpush.bf16.msra.mxu0 %v1425
        %1435 = vmatpush.bf16.msra.mxu0 %v1424
        %1436 = vmatpush.bf16.msra.mxu0 %v1423
        %1437 = vmatpush.bf16.msra.mxu0 %v1422
        %1438 = vmatpush.bf16.msra.mxu0 %v1421
        %1439 = vmatpush.bf16.msra.mxu0 %v1420
        %1440 = vmatpush.bf16.msra.mxu0 %v1419
        %1441 = vmatpush.bf16.msra.mxu0 %v1418
        %1442 = vmatmul.bf16.gmra.mxu0 %v1365
        %v1443 = vpop.f32.mrf.mxu0
        %v1444 = vadd.f32 %v1384, %v1443
        %v1445 = vpop.f32.mrf.mxu0
        %1446 = vdwg.mxu0
        %v1447 = vadd.f32 %v867, %v1444
        %v1448 = vld [vmem:[%s8] sm:$0x1]
        %v1449 = vld [vmem:[%s9] sm:$0x1]
        %1450 = vadd.xlane.f32.xlu0 %v1447
        %v1451 = vpop.xlane.xlu0 %1450
        %v1452 = vrcp.pop 128.0
        %v1453 = vmul.f32 128.0, %v1452
        %v1454 = vsub.f32 1.0, %v1453
        %v1455 = vmul.f32 %v1452, %v1454
        %v1456 = vadd.f32 %v1452, %v1455
        %vm1457 = vweird.f32 %v1452
        %v1458 = vsel %vm1457, %v1452, %v1456
        %v1459 = vmul.f32 %v1451, %v1458
        %v1460 = vsub.f32 %v1447, %v1459
        %v1461 = vmul.f32 %v1460, %v1460
        %1462 = vadd.xlane.f32.xlu0 %v1461
        %v1463 = vpop.xlane.xlu0 %1462
        %v1464 = vmul.f32 %v1463, %v1458
        %v1465 = vadd.f32 %v1464, 1e-05
        %v1466 = vrsqrt.pop %v1465
        %v1467 = vmul.f32 %v1466, %v1465
        %v1468 = vmul.f32 %v1467, %v1466
        %v1469 = vmul.f32 0.5, %v1468
        %v1470 = vsub.f32 1.5, %v1469
        %v1471 = vmul.f32 %v1466, %v1470
        %vm1472 = vweird.f32 %v1465
        %vm1473 = vweird.f32 %v1466
        %vm1474 = vmor %vm1472, %vm1473
        %v1475 = vsel %vm1474, %v1466, %v1471
        %v1476 = vmul.f32 %v1460, %v1475
        %v1478 = vperm.slane %v1448, 0
        %v1480 = vmul.f32 %v1476, %v1478
        %v1482 = vperm.slane %v1449, 0
        %v1484 = vadd.f32 %v1480, %v1482
        %v1485 = vld [vmem:[%s859] sm:$0xff]
        %v1486 = vld [vmem:[%s859 + $0x8] sm:$0xf]
        %v1487 = vpack.c.bf16 %v1484, %v1484
        %v1488 = vld [vmem:[#allocation6] sm:$0xf]
        %v1489 = vld [vmem:[#allocation6 + $0x4] sm:$0xf]
        %v1490 = vld [vmem:[#allocation6 + $0x8] sm:$0xf]
        %v1491 = vld [vmem:[#allocation6 + $0xc] sm:$0xf]
        %v1492 = vld [vmem:[#allocation6 + $0x10] sm:$0xf]
        %v1493 = vld [vmem:[#allocation6 + $0x14] sm:$0xf]
        %v1494 = vld [vmem:[#allocation6 + $0x18] sm:$0xf]
        %v1495 = vld [vmem:[#allocation6 + $0x1c] sm:$0xf]
        %v1496 = vld [vmem:[#allocation6 + $0x20] sm:$0xf]
        %v1497 = vld [vmem:[#allocation6 + $0x24] sm:$0xf]
        %v1498 = vld [vmem:[#allocation6 + $0x28] sm:$0xf]
        %v1499 = vld [vmem:[#allocation6 + $0x2c] sm:$0xf]
        %v1500 = vld [vmem:[#allocation6 + $0x30] sm:$0xf]
        %v1501 = vld [vmem:[#allocation6 + $0x34] sm:$0xf]
        %v1502 = vld [vmem:[#allocation6 + $0x38] sm:$0xf]
        %v1503 = vld [vmem:[#allocation6 + $0x3c] sm:$0xf]
        %v1504 = vld [vmem:[%s11] sm:$0x1]
        %v1506 = vperm.slane %v1504, 0
        %v1524 = vunpack.c.l.b16 %v1488
        %v1525 = vunpack.c.l.b16 %v1489
        %v1526 = vunpack.c.l.b16 %v1490
        %v1527 = vunpack.c.l.b16 %v1491
        %v1528 = vunpack.c.l.b16 %v1492
        %v1529 = vunpack.c.l.b16 %v1493
        %v1530 = vunpack.c.l.b16 %v1494
        %v1531 = vunpack.c.l.b16 %v1495
        %v1532 = vunpack.c.l.b16 %v1496
        %v1533 = vunpack.c.l.b16 %v1497
        %v1534 = vunpack.c.l.b16 %v1498
        %v1535 = vunpack.c.l.b16 %v1499
        %v1536 = vunpack.c.l.b16 %v1500
        %v1537 = vunpack.c.l.b16 %v1501
        %v1538 = vunpack.c.l.b16 %v1502
        %v1539 = vunpack.c.l.b16 %v1503
        %v1540 = vpack.c.b16 %v1525, %v1524
        %v1541 = vpack.c.b16 %v1527, %v1526
        %v1542 = vpack.c.b16 %v1529, %v1528
        %v1543 = vpack.c.b16 %v1531, %v1530
        %v1544 = vpack.c.b16 %v1533, %v1532
        %v1545 = vpack.c.b16 %v1535, %v1534
        %v1546 = vpack.c.b16 %v1537, %v1536
        %v1547 = vpack.c.b16 %v1539, %v1538
        %1556 = vmatpush.bf16.msra.mxu0 %v1547
        %1557 = vmatpush.bf16.msra.mxu0 %v1546
        %1558 = vmatpush.bf16.msra.mxu0 %v1545
        %1559 = vmatpush.bf16.msra.mxu0 %v1544
        %1560 = vmatpush.bf16.msra.mxu0 %v1543
        %1561 = vmatpush.bf16.msra.mxu0 %v1542
        %1562 = vmatpush.bf16.msra.mxu0 %v1541
        %1563 = vmatpush.bf16.msra.mxu0 %v1540
        %1564 = vmatmul.bf16.gmra.mxu0 %v1487
        %v1565 = vpop.f32.mrf.mxu0
        %v1566 = vadd.f32 %v1506, %v1565
        %v1567 = vpop.f32.mrf.mxu0
        %1568 = vdwg.mxu0
        %v1569 = vpack.c.bf16 %v1486, %v1485
        %v1570 = vld [vmem:[%s12] sm:$0xff]
        %v1571 = vld [vmem:[%s12 + $0x8] sm:$0xff]
        %v1572 = vld [vmem:[%s12 + $0x10] sm:$0xff]
        %v1573 = vld [vmem:[%s12 + $0x18] sm:$0xff]
        %v1574 = vld [vmem:[%s12 + $0x20] sm:$0xff]
        %v1575 = vld [vmem:[%s12 + $0x28] sm:$0xff]
        %v1576 = vld [vmem:[%s12 + $0x30] sm:$0xff]
        %v1577 = vld [vmem:[%s12 + $0x38] sm:$0xff]
        %v1578 = vld [vmem:[%s12 + $0x40] sm:$0xff]
        %v1579 = vld [vmem:[%s12 + $0x48] sm:$0xff]
        %v1580 = vld [vmem:[%s12 + $0x50] sm:$0xff]
        %v1581 = vld [vmem:[%s12 + $0x58] sm:$0xff]
        %v1582 = vld [vmem:[%s12 + $0x60] sm:$0xff]
        %v1583 = vld [vmem:[%s12 + $0x68] sm:$0xff]
        %v1584 = vld [vmem:[%s12 + $0x70] sm:$0xff]
        %v1585 = vld [vmem:[%s12 + $0x78] sm:$0xff]
        %v1586 = vld [vmem:[%s13] sm:$0x3]
        %v1588 = vperm.slane %v1586, 0
        %v1589 = vperm.slane %v1586, 1
        %v1608 = vunpack.c.l.b16 %v1570
        %v1609 = vunpack.c.h.b16 %v1570
        %v1610 = vunpack.c.l.b16 %v1571
        %v1611 = vunpack.c.h.b16 %v1571
        %v1612 = vunpack.c.l.b16 %v1572
        %v1613 = vunpack.c.h.b16 %v1572
        %v1614 = vunpack.c.l.b16 %v1573
        %v1615 = vunpack.c.h.b16 %v1573
        %v1616 = vunpack.c.l.b16 %v1574
        %v1617 = vunpack.c.h.b16 %v1574
        %v1618 = vunpack.c.l.b16 %v1575
        %v1619 = vunpack.c.h.b16 %v1575
        %v1620 = vunpack.c.l.b16 %v1576
        %v1621 = vunpack.c.h.b16 %v1576
        %v1622 = vunpack.c.l.b16 %v1577
        %v1623 = vunpack.c.h.b16 %v1577
        %v1624 = vunpack.c.l.b16 %v1578
        %v1625 = vunpack.c.h.b16 %v1578
        %v1626 = vunpack.c.l.b16 %v1579
        %v1627 = vunpack.c.h.b16 %v1579
        %v1628 = vunpack.c.l.b16 %v1580
        %v1629 = vunpack.c.h.b16 %v1580
        %v1630 = vunpack.c.l.b16 %v1581
        %v1631 = vunpack.c.h.b16 %v1581
        %v1632 = vunpack.c.l.b16 %v1582
        %v1633 = vunpack.c.h.b16 %v1582
        %v1634 = vunpack.c.l.b16 %v1583
        %v1635 = vunpack.c.h.b16 %v1583
        %v1636 = vunpack.c.l.b16 %v1584
        %v1637 = vunpack.c.h.b16 %v1584
        %v1638 = vunpack.c.l.b16 %v1585
        %v1639 = vunpack.c.h.b16 %v1585
        %v1640 = vpack.c.b16 %v1610, %v1608
        %v1641 = vpack.c.b16 %v1611, %v1609
        %v1642 = vpack.c.b16 %v1614, %v1612
        %v1643 = vpack.c.b16 %v1615, %v1613
        %v1644 = vpack.c.b16 %v1618, %v1616
        %v1645 = vpack.c.b16 %v1619, %v1617
        %v1646 = vpack.c.b16 %v1622, %v1620
        %v1647 = vpack.c.b16 %v1623, %v1621
        %v1648 = vpack.c.b16 %v1626, %v1624
        %v1649 = vpack.c.b16 %v1627, %v1625
        %v1650 = vpack.c.b16 %v1630, %v1628
        %v1651 = vpack.c.b16 %v1631, %v1629
        %v1652 = vpack.c.b16 %v1634, %v1632
        %v1653 = vpack.c.b16 %v1635, %v1633
        %v1654 = vpack.c.b16 %v1638, %v1636
        %v1655 = vpack.c.b16 %v1639, %v1637
        %1672 = vmatpush.bf16.msra.mxu0 %v1654
        %1673 = vmatpush.bf16.msra.mxu0 %v1652
        %1674 = vmatpush.bf16.msra.mxu0 %v1650
        %1675 = vmatpush.bf16.msra.mxu0 %v1648
        %1676 = vmatpush.bf16.msra.mxu0 %v1646
        %1677 = vmatpush.bf16.msra.mxu0 %v1644
        %1678 = vmatpush.bf16.msra.mxu0 %v1642
        %1679 = vmatpush.bf16.msra.mxu0 %v1640
        %1680 = vmatmul.bf16.gmra.mxu0 %v1569
        %v1681 = vpop.f32.mrf.mxu0
        %v1682 = vadd.f32 %v1588, %v1681
        %v1683 = vpop.f32.mrf.mxu0
        %v1684 = vadd.f32 %v1588, %v1683
        %1685 = vdwg.mxu0
        %1686 = vmatpush.bf16.msra.mxu0 %v1655
        %1687 = vmatpush.bf16.msra.mxu0 %v1653
        %1688 = vmatpush.bf16.msra.mxu0 %v1651
        %1689 = vmatpush.bf16.msra.mxu0 %v1649
        %1690 = vmatpush.bf16.msra.mxu0 %v1647
        %1691 = vmatpush.bf16.msra.mxu0 %v1645
        %1692 = vmatpush.bf16.msra.mxu0 %v1643
        %1693 = vmatpush.bf16.msra.mxu0 %v1641
        %1694 = vmatmul.bf16.gmra.mxu0 %v1569
        %v1695 = vpop.f32.mrf.mxu0
        %v1696 = vadd.f32 %v1589, %v1695
        %v1697 = vpop.f32.mrf.mxu0
        %v1698 = vadd.f32 %v1589, %v1697
        %1699 = vdwg.mxu0
        %v1701 = vsel %vm1082, %v1566, 0
        %v1704 = vsel %vm1082, %v1682, 0
        %v1707 = vsel %vm1082, %v1684, 0
        %1709 = vmatpush.xpose.msra.mxu0 0.0
        %1710 = vmatpush.xpose.msra.mxu0 0.0
        %1711 = vmatpush.xpose.msra.mxu0 0.0
        %1712 = vmatpush.xpose.msra.mxu0 0.0
        %1713 = vmatpush.xpose.msra.mxu0 0.0
        %1714 = vmatpush.xpose.msra.mxu0 0.0
        %1715 = vmatpush.xpose.msra.mxu0 0.0
        %1716 = vmatpush.xpose.msra.mxu0 0.0
        %1717 = vmatpush.xpose.msra.mxu0 0.0
        %1718 = vmatpush.xpose.msra.mxu0 0.0
        %1719 = vmatpush.xpose.msra.mxu0 0.0
        %1720 = vmatpush.xpose.msra.mxu0 0.0
        %1721 = vmatpush.xpose.msra.mxu0 0.0
        %1722 = vmatpush.xpose.msra.mxu0 0.0
        %1723 = vmatpush.xpose.msra.mxu0 %v1707
        %1724 = vmatpush.xpose.msra.mxu0 %v1704
        %1725 = vmatmul.f32.gmra.mxu0 %v1701
        %v1726 = vpop.f32.mrf.mxu0
        %v1727 = vadd.f32 0.0, %v1726
        %1728 = vdwg.mxu0
        %v1729 = vmul.f32 %v1727, 0.17677669
        %vm1730 = vcmask 97280
        %v1731 = vsel %vm1730, %v1729, -inf
        %1732 = vmax.xlane.f32.xlu0 %v1731
        %v1733 = vpop.xlane.xlu0 %1732
        %v1734 = vsub.f32 %v1729, %v1733
        %v1735 = vmul.f32 %v1734, 1.442695
        %v1736 = vpow.pop %v1735
        %v1737 = vsel %vm1730, %v1736, 0.0
        %1738 = vadd.xlane.f32.xlu0 %v1737
        %v1739 = vpop.xlane.xlu0 %1738
        %v1740 = vrcp.pop %v1739
        %v1741 = vmul.f32 %v1736, %v1740
        %v1743 = vsel %vm1730, %v1741, 0
        %vm1745 = vcmask 1043456
        %v1747 = vsel %vm1745, %v1698, 0
        %1749 = vmatpush.msra.mxu0 0.0
        %1750 = vmatpush.msra.mxu0 0.0
        %1751 = vmatpush.msra.mxu0 0.0
        %1752 = vmatpush.msra.mxu0 0.0
        %1753 = vmatpush.msra.mxu0 0.0
        %1754 = vmatpush.msra.mxu0 0.0
        %1755 = vmatpush.msra.mxu0 0.0
        %1756 = vmatpush.msra.mxu0 0.0
        %1757 = vmatpush.msra.mxu0 0.0
        %1758 = vmatpush.msra.mxu0 0.0
        %1759 = vmatpush.msra.mxu0 0.0
        %1760 = vmatpush.msra.mxu0 0.0
        %1761 = vmatpush.msra.mxu0 0.0
        %1762 = vmatpush.msra.mxu0 0.0
        %1763 = vmatpush.msra.mxu0 %v1747
        %1764 = vmatpush.msra.mxu0 %v1696
        %1765 = vmatmul.f32.gmra.mxu0 %v1743
        %v1766 = vpop.f32.mrf.mxu0
        %v1767 = vadd.f32 0.0, %v1766
        %1768 = vdwg.mxu0
        %1769 = vrot.lane.b32.xlu0 %v1566, 96
        %v1770 = vpop.permute.xlu0 %1769
        %1771 = vrot.lane.b32.xlu0 %v1682, 96
        %v1772 = vpop.permute.xlu0 %1771
        %1773 = vrot.lane.b32.xlu0 %v1684, 96
        %v1774 = vpop.permute.xlu0 %1773
        %v1775 = vsel %vm1082, %v1770, 0
        %v1777 = vsel %vm1082, %v1772, 0
        %v1779 = vsel %vm1082, %v1774, 0
        %1781 = vmatpush.xpose.msra.mxu0 0.0
        %1782 = vmatpush.xpose.msra.mxu0 0.0
        %1783 = vmatpush.xpose.msra.mxu0 0.0
        %1784 = vmatpush.xpose.msra.mxu0 0.0
        %1785 = vmatpush.xpose.msra.mxu0 0.0
        %1786 = vmatpush.xpose.msra.mxu0 0.0
        %1787 = vmatpush.xpose.msra.mxu0 0.0
        %1788 = vmatpush.xpose.msra.mxu0 0.0
        %1789 = vmatpush.xpose.msra.mxu0 0.0
        %1790 = vmatpush.xpose.msra.mxu0 0.0
        %1791 = vmatpush.xpose.msra.mxu0 0.0
        %1792 = vmatpush.xpose.msra.mxu0 0.0
        %1793 = vmatpush.xpose.msra.mxu0 0.0
        %1794 = vmatpush.xpose.msra.mxu0 0.0
        %1795 = vmatpush.xpose.msra.mxu0 %v1779
        %1796 = vmatpush.xpose.msra.mxu0 %v1777
        %1797 = vmatmul.f32.gmra.mxu0 %v1775
        %v1798 = vpop.f32.mrf.mxu0
        %v1799 = vadd.f32 0.0, %v1798
        %1800 = vdwg.mxu0
        %v1801 = vmul.f32 %v1799, 0.17677669
        %v1802 = vsel %vm1730, %v1801, -inf
        %1803 = vmax.xlane.f32.xlu0 %v1802
        %v1804 = vpop.xlane.xlu0 %1803
        %v1805 = vsub.f32 %v1801, %v1804
        %v1806 = vmul.f32 %v1805, 1.442695
        %v1807 = vpow.pop %v1806
        %v1808 = vsel %vm1730, %v1807, 0.0
        %1809 = vadd.xlane.f32.xlu0 %v1808
        %v1810 = vpop.xlane.xlu0 %1809
        %v1811 = vrcp.pop %v1810
        %v1812 = vmul.f32 %v1807, %v1811
        %1814 = vrot.lane.b32.xlu0 %v1696, 96
        %v1815 = vpop.permute.xlu0 %1814
        %1816 = vrot.lane.b32.xlu0 %v1698, 96
        %v1817 = vpop.permute.xlu0 %1816
        %v1820 = vsel %vm1730, %v1812, 0
        %v1822 = vsel %vm1745, %v1817, 0
        %1824 = vmatpush.msra.mxu0 0.0
        %1825 = vmatpush.msra.mxu0 0.0
        %1826 = vmatpush.msra.mxu0 0.0
        %1827 = vmatpush.msra.mxu0 0.0
        %1828 = vmatpush.msra.mxu0 0.0
        %1829 = vmatpush.msra.mxu0 0.0
        %1830 = vmatpush.msra.mxu0 0.0
        %1831 = vmatpush.msra.mxu0 0.0
        %1832 = vmatpush.msra.mxu0 0.0
        %1833 = vmatpush.msra.mxu0 0.0
        %1834 = vmatpush.msra.mxu0 0.0
        %1835 = vmatpush.msra.mxu0 0.0
        %1836 = vmatpush.msra.mxu0 0.0
        %1837 = vmatpush.msra.mxu0 0.0
        %1838 = vmatpush.msra.mxu0 %v1822
        %1839 = vmatpush.msra.mxu0 %v1815
        %1840 = vmatmul.f32.gmra.mxu0 %v1820
        %v1841 = vpop.f32.mrf.mxu0
        %v1842 = vadd.f32 0.0, %v1841
        %1843 = vdwg.mxu0
        %1844 = vrot.lane.b32.xlu0 %v1566, 64
        %v1845 = vpop.permute.xlu0 %1844
        %1846 = vrot.lane.b32.xlu0 %v1682, 64
        %v1847 = vpop.permute.xlu0 %1846
        %1848 = vrot.lane.b32.xlu0 %v1684, 64
        %v1849 = vpop.permute.xlu0 %1848
        %v1850 = vsel %vm1082, %v1845, 0
        %v1852 = vsel %vm1082, %v1847, 0
        %v1854 = vsel %vm1082, %v1849, 0
        %1856 = vmatpush.xpose.msra.mxu0 0.0
        %1857 = vmatpush.xpose.msra.mxu0 0.0
        %1858 = vmatpush.xpose.msra.mxu0 0.0
        %1859 = vmatpush.xpose.msra.mxu0 0.0
        %1860 = vmatpush.xpose.msra.mxu0 0.0
        %1861 = vmatpush.xpose.msra.mxu0 0.0
        %1862 = vmatpush.xpose.msra.mxu0 0.0
        %1863 = vmatpush.xpose.msra.mxu0 0.0
        %1864 = vmatpush.xpose.msra.mxu0 0.0
        %1865 = vmatpush.xpose.msra.mxu0 0.0
        %1866 = vmatpush.xpose.msra.mxu0 0.0
        %1867 = vmatpush.xpose.msra.mxu0 0.0
        %1868 = vmatpush.xpose.msra.mxu0 0.0
        %1869 = vmatpush.xpose.msra.mxu0 0.0
        %1870 = vmatpush.xpose.msra.mxu0 %v1854
        %1871 = vmatpush.xpose.msra.mxu0 %v1852
        %1872 = vmatmul.f32.gmra.mxu0 %v1850
        %v1873 = vpop.f32.mrf.mxu0
        %v1874 = vadd.f32 0.0, %v1873
        %1875 = vdwg.mxu0
        %v1876 = vmul.f32 %v1874, 0.17677669
        %v1877 = vsel %vm1730, %v1876, -inf
        %1878 = vmax.xlane.f32.xlu0 %v1877
        %v1879 = vpop.xlane.xlu0 %1878
        %v1880 = vsub.f32 %v1876, %v1879
        %v1881 = vmul.f32 %v1880, 1.442695
        %v1882 = vpow.pop %v1881
        %v1883 = vsel %vm1730, %v1882, 0.0
        %1884 = vadd.xlane.f32.xlu0 %v1883
        %v1885 = vpop.xlane.xlu0 %1884
        %v1886 = vrcp.pop %v1885
        %v1887 = vmul.f32 %v1882, %v1886
        %1888 = vrot.lane.b32.xlu0 %v1696, 64
        %v1889 = vpop.permute.xlu0 %1888
        %1890 = vrot.lane.b32.xlu0 %v1698, 64
        %v1891 = vpop.permute.xlu0 %1890
        %v1894 = vsel %vm1730, %v1887, 0
        %v1896 = vsel %vm1745, %v1891, 0
        %1898 = vmatpush.msra.mxu0 0.0
        %1899 = vmatpush.msra.mxu0 0.0
        %1900 = vmatpush.msra.mxu0 0.0
        %1901 = vmatpush.msra.mxu0 0.0
        %1902 = vmatpush.msra.mxu0 0.0
        %1903 = vmatpush.msra.mxu0 0.0
        %1904 = vmatpush.msra.mxu0 0.0
        %1905 = vmatpush.msra.mxu0 0.0
        %1906 = vmatpush.msra.mxu0 0.0
        %1907 = vmatpush.msra.mxu0 0.0
        %1908 = vmatpush.msra.mxu0 0.0
        %1909 = vmatpush.msra.mxu0 0.0
        %1910 = vmatpush.msra.mxu0 0.0
        %1911 = vmatpush.msra.mxu0 0.0
        %1912 = vmatpush.msra.mxu0 %v1896
        %1913 = vmatpush.msra.mxu0 %v1889
        %1914 = vmatmul.f32.gmra.mxu0 %v1894
        %v1915 = vpop.f32.mrf.mxu0
        %v1916 = vadd.f32 0.0, %v1915
        %1917 = vdwg.mxu0
        %1918 = vrot.lane.b32.xlu0 %v1566, 32
        %v1919 = vpop.permute.xlu0 %1918
        %1920 = vrot.lane.b32.xlu0 %v1682, 32
        %v1921 = vpop.permute.xlu0 %1920
        %1922 = vrot.lane.b32.xlu0 %v1684, 32
        %v1923 = vpop.permute.xlu0 %1922
        %v1924 = vsel %vm1082, %v1919, 0
        %v1926 = vsel %vm1082, %v1921, 0
        %v1928 = vsel %vm1082, %v1923, 0
        %1930 = vmatpush.xpose.msra.mxu0 0.0
        %1931 = vmatpush.xpose.msra.mxu0 0.0
        %1932 = vmatpush.xpose.msra.mxu0 0.0
        %1933 = vmatpush.xpose.msra.mxu0 0.0
        %1934 = vmatpush.xpose.msra.mxu0 0.0
        %1935 = vmatpush.xpose.msra.mxu0 0.0
        %1936 = vmatpush.xpose.msra.mxu0 0.0
        %1937 = vmatpush.xpose.msra.mxu0 0.0
        %1938 = vmatpush.xpose.msra.mxu0 0.0
        %1939 = vmatpush.xpose.msra.mxu0 0.0
        %1940 = vmatpush.xpose.msra.mxu0 0.0
        %1941 = vmatpush.xpose.msra.mxu0 0.0
        %1942 = vmatpush.xpose.msra.mxu0 0.0
        %1943 = vmatpush.xpose.msra.mxu0 0.0
        %1944 = vmatpush.xpose.msra.mxu0 %v1928
        %1945 = vmatpush.xpose.msra.mxu0 %v1926
        %1946 = vmatmul.f32.gmra.mxu0 %v1924
        %v1947 = vpop.f32.mrf.mxu0
        %v1948 = vadd.f32 0.0, %v1947
        %1949 = vdwg.mxu0
        %v1950 = vmul.f32 %v1948, 0.17677669
        %v1951 = vsel %vm1730, %v1950, -inf
        %1952 = vmax.xlane.f32.xlu0 %v1951
        %v1953 = vpop.xlane.xlu0 %1952
        %v1954 = vsub.f32 %v1950, %v1953
        %v1955 = vmul.f32 %v1954, 1.442695
        %v1956 = vpow.pop %v1955
        %v1957 = vsel %vm1730, %v1956, 0.0
        %1958 = vadd.xlane.f32.xlu0 %v1957
        %v1959 = vpop.xlane.xlu0 %1958
        %v1960 = vrcp.pop %v1959
        %v1961 = vmul.f32 %v1956, %v1960
        %1962 = vrot.lane.b32.xlu0 %v1696, 32
        %v1963 = vpop.permute.xlu0 %1962
        %1964 = vrot.lane.b32.xlu0 %v1698, 32
        %v1965 = vpop.permute.xlu0 %1964
        %v1968 = vsel %vm1730, %v1961, 0
        %v1970 = vsel %vm1745, %v1965, 0
        %1972 = vmatpush.msra.mxu0 0.0
        %1973 = vmatpush.msra.mxu0 0.0
        %1974 = vmatpush.msra.mxu0 0.0
        %1975 = vmatpush.msra.mxu0 0.0
        %1976 = vmatpush.msra.mxu0 0.0
        %1977 = vmatpush.msra.mxu0 0.0
        %1978 = vmatpush.msra.mxu0 0.0
        %1979 = vmatpush.msra.mxu0 0.0
        %1980 = vmatpush.msra.mxu0 0.0
        %1981 = vmatpush.msra.mxu0 0.0
        %1982 = vmatpush.msra.mxu0 0.0
        %1983 = vmatpush.msra.mxu0 0.0
        %1984 = vmatpush.msra.mxu0 0.0
        %1985 = vmatpush.msra.mxu0 0.0
        %1986 = vmatpush.msra.mxu0 %v1970
        %1987 = vmatpush.msra.mxu0 %v1963
        %1988 = vmatmul.f32.gmra.mxu0 %v1968
        %v1989 = vpop.f32.mrf.mxu0
        %v1990 = vadd.f32 0.0, %v1989
        %1991 = vdwg.mxu0
        %1993 = vrot.lane.b32.xlu0 %v1842, 32
        %v1994 = vpop.permute.xlu0 %1993
        %1997 = vrot.lane.b32.xlu0 %v1916, 64
        %v1998 = vpop.permute.xlu0 %1997
        %2001 = vrot.lane.b32.xlu0 %v1990, 96
        %v2002 = vpop.permute.xlu0 %2001
        %v2004 = vsel %vm1082, %v1767, %v1994
        %v2005 = vsel %vm1361, %v2004, %v1998
        %v2006 = vsel %vm1363, %v2005, %v2002
        %v2007 = vpack.c.bf16 %v2006, %v2006
        %v2008 = vld [vmem:[#allocation7] sm:$0xf]
        %v2009 = vld [vmem:[#allocation7 + $0x4] sm:$0xf]
        %v2010 = vld [vmem:[#allocation7 + $0x8] sm:$0xf]
        %v2011 = vld [vmem:[#allocation7 + $0xc] sm:$0xf]
        %v2012 = vld [vmem:[#allocation7 + $0x10] sm:$0xf]
        %v2013 = vld [vmem:[#allocation7 + $0x14] sm:$0xf]
        %v2014 = vld [vmem:[#allocation7 + $0x18] sm:$0xf]
        %v2015 = vld [vmem:[#allocation7 + $0x1c] sm:$0xf]
        %v2016 = vld [vmem:[#allocation7 + $0x20] sm:$0xf]
        %v2017 = vld [vmem:[#allocation7 + $0x24] sm:$0xf]
        %v2018 = vld [vmem:[#allocation7 + $0x28] sm:$0xf]
        %v2019 = vld [vmem:[#allocation7 + $0x2c] sm:$0xf]
        %v2020 = vld [vmem:[#allocation7 + $0x30] sm:$0xf]
        %v2021 = vld [vmem:[#allocation7 + $0x34] sm:$0xf]
        %v2022 = vld [vmem:[#allocation7 + $0x38] sm:$0xf]
        %v2023 = vld [vmem:[#allocation7 + $0x3c] sm:$0xf]
        %v2024 = vld [vmem:[%s15] sm:$0x1]
        %v2026 = vperm.slane %v2024, 0
        %v2044 = vunpack.c.l.b16 %v2008
        %v2045 = vunpack.c.l.b16 %v2009
        %v2046 = vunpack.c.l.b16 %v2010
        %v2047 = vunpack.c.l.b16 %v2011
        %v2048 = vunpack.c.l.b16 %v2012
        %v2049 = vunpack.c.l.b16 %v2013
        %v2050 = vunpack.c.l.b16 %v2014
        %v2051 = vunpack.c.l.b16 %v2015
        %v2052 = vunpack.c.l.b16 %v2016
        %v2053 = vunpack.c.l.b16 %v2017
        %v2054 = vunpack.c.l.b16 %v2018
        %v2055 = vunpack.c.l.b16 %v2019
        %v2056 = vunpack.c.l.b16 %v2020
        %v2057 = vunpack.c.l.b16 %v2021
        %v2058 = vunpack.c.l.b16 %v2022
        %v2059 = vunpack.c.l.b16 %v2023
        %v2060 = vpack.c.b16 %v2045, %v2044
        %v2061 = vpack.c.b16 %v2047, %v2046
        %v2062 = vpack.c.b16 %v2049, %v2048
        %v2063 = vpack.c.b16 %v2051, %v2050
        %v2064 = vpack.c.b16 %v2053, %v2052
        %v2065 = vpack.c.b16 %v2055, %v2054
        %v2066 = vpack.c.b16 %v2057, %v2056
        %v2067 = vpack.c.b16 %v2059, %v2058
        %2076 = vmatpush.bf16.msra.mxu0 %v2067
        %2077 = vmatpush.bf16.msra.mxu0 %v2066
        %2078 = vmatpush.bf16.msra.mxu0 %v2065
        %2079 = vmatpush.bf16.msra.mxu0 %v2064
        %2080 = vmatpush.bf16.msra.mxu0 %v2063
        %2081 = vmatpush.bf16.msra.mxu0 %v2062
        %2082 = vmatpush.bf16.msra.mxu0 %v2061
        %2083 = vmatpush.bf16.msra.mxu0 %v2060
        %2084 = vmatmul.bf16.gmra.mxu0 %v2007
        %v2085 = vpop.f32.mrf.mxu0
        %v2086 = vadd.f32 %v2026, %v2085
        %v2087 = vpop.f32.mrf.mxu0
        %2088 = vdwg.mxu0
        %v2089 = vadd.f32 %v1484, %v2086
        %v2090 = vld [vmem:[%s16] sm:$0x1]
        %v2091 = vld [vmem:[%s17] sm:$0x1]
        %2092 = vadd.xlane.f32.xlu0 %v2089
        %v2093 = vpop.xlane.xlu0 %2092
        %v2094 = vmul.f32 %v2093, %v1458
        %v2095 = vsub.f32 %v2089, %v2094
        %v2096 = vmul.f32 %v2095, %v2095
        %2097 = vadd.xlane.f32.xlu0 %v2096
        %v2098 = vpop.xlane.xlu0 %2097
        %v2099 = vmul.f32 %v2098, %v1458
        %v2100 = vadd.f32 %v2099, 1e-05
        %v2101 = vrsqrt.pop %v2100
        %v2102 = vmul.f32 %v2101, %v2100
        %v2103 = vmul.f32 %v2102, %v2101
        %v2104 = vmul.f32 0.5, %v2103
        %v2105 = vsub.f32 1.5, %v2104
        %v2106 = vmul.f32 %v2101, %v2105
        %vm2107 = vweird.f32 %v2100
        %vm2108 = vweird.f32 %v2101
        %vm2109 = vmor %vm2107, %vm2108
        %v2110 = vsel %vm2109, %v2101, %v2106
        %v2111 = vmul.f32 %v2095, %v2110
        %v2113 = vperm.slane %v2090, 0
        %v2115 = vmul.f32 %v2111, %v2113
        %v2117 = vperm.slane %v2091, 0
        %v2119 = vadd.f32 %v2115, %v2117
        %v2120 = vpack.c.bf16 %v2119, %v2119
        %v2121 = vld [vmem:[#allocation9] sm:$0xf]
        %v2122 = vld [vmem:[#allocation9 + $0x4] sm:$0xf]
        %v2123 = vld [vmem:[#allocation9 + $0x8] sm:$0xf]
        %v2124 = vld [vmem:[#allocation9 + $0xc] sm:$0xf]
        %v2125 = vld [vmem:[#allocation9 + $0x10] sm:$0xf]
        %v2126 = vld [vmem:[#allocation9 + $0x14] sm:$0xf]
        %v2127 = vld [vmem:[#allocation9 + $0x18] sm:$0xf]
        %v2128 = vld [vmem:[#allocation9 + $0x1c] sm:$0xf]
        %v2129 = vld [vmem:[#allocation9 + $0x20] sm:$0xf]
        %v2130 = vld [vmem:[#allocation9 + $0x24] sm:$0xf]
        %v2131 = vld [vmem:[#allocation9 + $0x28] sm:$0xf]
        %v2132 = vld [vmem:[#allocation9 + $0x2c] sm:$0xf]
        %v2133 = vld [vmem:[#allocation9 + $0x30] sm:$0xf]
        %v2134 = vld [vmem:[#allocation9 + $0x34] sm:$0xf]
        %v2135 = vld [vmem:[#allocation9 + $0x38] sm:$0xf]
        %v2136 = vld [vmem:[#allocation9 + $0x3c] sm:$0xf]
        %v2137 = vld [vmem:[%s19] sm:$0x1]
        %v2139 = vperm.slane %v2137, 0
        %v2157 = vunpack.c.l.b16 %v2121
        %v2158 = vunpack.c.l.b16 %v2122
        %v2159 = vunpack.c.l.b16 %v2123
        %v2160 = vunpack.c.l.b16 %v2124
        %v2161 = vunpack.c.l.b16 %v2125
        %v2162 = vunpack.c.l.b16 %v2126
        %v2163 = vunpack.c.l.b16 %v2127
        %v2164 = vunpack.c.l.b16 %v2128
        %v2165 = vunpack.c.l.b16 %v2129
        %v2166 = vunpack.c.l.b16 %v2130
        %v2167 = vunpack.c.l.b16 %v2131
        %v2168 = vunpack.c.l.b16 %v2132
        %v2169 = vunpack.c.l.b16 %v2133
        %v2170 = vunpack.c.l.b16 %v2134
        %v2171 = vunpack.c.l.b16 %v2135
        %v2172 = vunpack.c.l.b16 %v2136
        %v2173 = vpack.c.b16 %v2158, %v2157
        %v2174 = vpack.c.b16 %v2160, %v2159
        %v2175 = vpack.c.b16 %v2162, %v2161
        %v2176 = vpack.c.b16 %v2164, %v2163
        %v2177 = vpack.c.b16 %v2166, %v2165
        %v2178 = vpack.c.b16 %v2168, %v2167
        %v2179 = vpack.c.b16 %v2170, %v2169
        %v2180 = vpack.c.b16 %v2172, %v2171
        %2189 = vmatpush.bf16.msra.mxu0 %v2180
        %2190 = vmatpush.bf16.msra.mxu0 %v2179
        %2191 = vmatpush.bf16.msra.mxu0 %v2178
        %2192 = vmatpush.bf16.msra.mxu0 %v2177
        %2193 = vmatpush.bf16.msra.mxu0 %v2176
        %2194 = vmatpush.bf16.msra.mxu0 %v2175
        %2195 = vmatpush.bf16.msra.mxu0 %v2174
        %2196 = vmatpush.bf16.msra.mxu0 %v2173
        %2197 = vmatmul.bf16.gmra.mxu0 %v2120
        %v2198 = vpop.f32.mrf.mxu0
        %v2199 = vadd.f32 %v2139, %v2198
        %v2200 = vpop.f32.mrf.mxu0
        %2201 = vdwg.mxu0
        %v2202 = vmax.f32 %v2199, 0.0
        %v2203 = vpack.c.bf16 %v2202, %v2202
        %v2204 = vld [vmem:[#allocation10] sm:$0xf]
        %v2205 = vld [vmem:[#allocation10 + $0x4] sm:$0xf]
        %v2206 = vld [vmem:[#allocation10 + $0x8] sm:$0xf]
        %v2207 = vld [vmem:[#allocation10 + $0xc] sm:$0xf]
        %v2208 = vld [vmem:[#allocation10 + $0x10] sm:$0xf]
        %v2209 = vld [vmem:[#allocation10 + $0x14] sm:$0xf]
        %v2210 = vld [vmem:[#allocation10 + $0x18] sm:$0xf]
        %v2211 = vld [vmem:[#allocation10 + $0x1c] sm:$0xf]
        %v2212 = vld [vmem:[#allocation10 + $0x20] sm:$0xf]
        %v2213 = vld [vmem:[#allocation10 + $0x24] sm:$0xf]
        %v2214 = vld [vmem:[#allocation10 + $0x28] sm:$0xf]
        %v2215 = vld [vmem:[#allocation10 + $0x2c] sm:$0xf]
        %v2216 = vld [vmem:[#allocation10 + $0x30] sm:$0xf]
        %v2217 = vld [vmem:[#allocation10 + $0x34] sm:$0xf]
        %v2218 = vld [vmem:[#allocation10 + $0x38] sm:$0xf]
        %v2219 = vld [vmem:[#allocation10 + $0x3c] sm:$0xf]
        %v2220 = vld [vmem:[%s21] sm:$0x1]
        %v2222 = vperm.slane %v2220, 0
        %v2240 = vunpack.c.l.b16 %v2204
        %v2241 = vunpack.c.l.b16 %v2205
        %v2242 = vunpack.c.l.b16 %v2206
        %v2243 = vunpack.c.l.b16 %v2207
        %v2244 = vunpack.c.l.b16 %v2208
        %v2245 = vunpack.c.l.b16 %v2209
        %v2246 = vunpack.c.l.b16 %v2210
        %v2247 = vunpack.c.l.b16 %v2211
        %v2248 = vunpack.c.l.b16 %v2212
        %v2249 = vunpack.c.l.b16 %v2213
        %v2250 = vunpack.c.l.b16 %v2214
        %v2251 = vunpack.c.l.b16 %v2215
        %v2252 = vunpack.c.l.b16 %v2216
        %v2253 = vunpack.c.l.b16 %v2217
        %v2254 = vunpack.c.l.b16 %v2218
        %v2255 = vunpack.c.l.b16 %v2219
        %v2256 = vpack.c.b16 %v2241, %v2240
        %v2257 = vpack.c.b16 %v2243, %v2242
        %v2258 = vpack.c.b16 %v2245, %v2244
        %v2259 = vpack.c.b16 %v2247, %v2246
        %v2260 = vpack.c.b16 %v2249, %v2248
        %v2261 = vpack.c.b16 %v2251, %v2250
        %v2262 = vpack.c.b16 %v2253, %v2252
        %v2263 = vpack.c.b16 %v2255, %v2254
        %2272 = vmatpush.bf16.msra.mxu0 %v2263
        %2273 = vmatpush.bf16.msra.mxu0 %v2262
        %2274 = vmatpush.bf16.msra.mxu0 %v2261
        %2275 = vmatpush.bf16.msra.mxu0 %v2260
        %2276 = vmatpush.bf16.msra.mxu0 %v2259
        %2277 = vmatpush.bf16.msra.mxu0 %v2258
        %2278 = vmatpush.bf16.msra.mxu0 %v2257
        %2279 = vmatpush.bf16.msra.mxu0 %v2256
        %2280 = vmatmul.bf16.gmra.mxu0 %v2203
        %v2281 = vpop.f32.mrf.mxu0
        %v2282 = vadd.f32 %v2222, %v2281
        %v2283 = vpop.f32.mrf.mxu0
        %2284 = vdwg.mxu0
        %v2285 = vadd.f32 %v2119, %v2282
        %v2286 = vld [vmem:[%s22] sm:$0x1]
        %v2287 = vld [vmem:[%s23] sm:$0x1]
        %2288 = vadd.xlane.f32.xlu0 %v2285
        %v2289 = vpop.xlane.xlu0 %2288
        %v2290 = vmul.f32 %v2289, %v1458
        %v2291 = vsub.f32 %v2285, %v2290
        %v2292 = vmul.f32 %v2291, %v2291
        %2293 = vadd.xlane.f32.xlu0 %v2292
        %v2294 = vpop.xlane.xlu0 %2293
        %v2295 = vmul.f32 %v2294, %v1458
        %v2296 = vadd.f32 %v2295, 1e-05
        %v2297 = vrsqrt.pop %v2296
        %v2298 = vmul.f32 %v2297, %v2296
        %v2299 = vmul.f32 %v2298, %v2297
        %v2300 = vmul.f32 0.5, %v2299
        %v2301 = vsub.f32 1.5, %v2300
        %v2302 = vmul.f32 %v2297, %v2301
        %vm2303 = vweird.f32 %v2296
        %vm2304 = vweird.f32 %v2297
        %vm2305 = vmor %vm2303, %vm2304
        %v2306 = vsel %vm2305, %v2297, %v2302
        %v2307 = vmul.f32 %v2291, %v2306
        %v2309 = vperm.slane %v2286, 0
        %v2311 = vmul.f32 %v2307, %v2309
        %v2313 = vperm.slane %v2287, 0
        %v2315 = vadd.f32 %v2311, %v2313
        %2316 = vst [vmem:[%s866] sm:$0xff] %v2315
        %p2317 = scmp.lt.s32.totalorder %s39, 1
        %s2318 = scalar_select %p2317, %s39, 1
        %s2319 = smul.addr %s2318, 8
        %s2320 = scalar_lea.vmem %s24, %s2319
        // Predicated region
        $region141: #{transformer_forward.7} parent=115 // pred_check
          %p2321 = pneg %p576
        $region142: #{transformer_forward.7} parent=115 // pred_check_branch
          %2323 = sbr.rel (%p2321) target = $region144
        $region143: #{transformer_forward.7} parent=115 // pred_region
          _
        $region144: #{transformer_forward.7} parent=115 // pred_fallthru
          _
      $region116: #{transformer_forward.7} parent=5 // pred_fallthru
        _
      %p2324 = scmp.le.s32.totalorder 2, %s34
      // Predicated region
      $region145: #{transformer_forward.7} parent=5 // pred_check
        %p2325 = pneg %p2324
      $region146: #{transformer_forward.7} parent=5 // pred_check_branch
        %2327 = sbr.rel (%p2325) target = $region148
      $region147: #{transformer_forward.7} parent=5 // pred_region
        %s2328 = ssub.s32 %s34, 2
        // Predicated region
        $region149: #{transformer_forward.7} parent=147 // pred_check
          %p2329 = pneg %p582
        $region150: #{transformer_forward.7} parent=147 // pred_check_branch
          %2331 = sbr.rel (%p2329) target = $region152
        $region151: #{transformer_forward.7} parent=147 // pred_region
          %p2332 = scmp.lt.s32.totalorder %s40, 1
          %s2333 = scalar_select %p2332, %s40, 1
          %s2334 = smul.addr %s2333, 8
          %s2335 = scalar_lea.vmem %s24, %s2334
        $region152: #{transformer_forward.7} parent=147 // pred_fallthru
          _
      $region148: #{transformer_forward.7} parent=5 // pred_fallthru
        _
    $region6: #{transformer_forward.7} parent=1 // loop_footer
      %s38 = sadd.s32 1, %s34
    $region7: #{transformer_forward.7} parent=1 // loop_footer_branch
      %33 = sbr.rel target = $region3
    $region8: #{transformer_forward.7} parent=1 // loop_exit
      _
    %2336 = vsyncpa [#allocation3], 1
    %s2337 = scalar_lea.sflag [#allocation3], 1
    %2338 = vsyncpa %s2337, 1
    %2339 = vsyncpa [#allocation5], 1
    %2340 = vsyncpa [#allocation8], 1
    %2341 = vsyncpa [#allocation11], 1

// kernel: transformer_forward.8
$region0: #{transformer_forward.8}
  #allocation0 [shape = 'u32[]', space=smem, size = 0x4, offset = 0x4, fixed_abs, tag = 'smem constant byte address 0x4 - core index']
  #allocation1 [shape = 'u32[72,128]{1,0:T(1,128)}', space=vmem, size = 0x9000, scoped, tag = 'internal scratch']
  %s0 = inlined_call_operand.vmem [shape: f32[2,8,128], index: 0, kind: input, shape index: {}]
  %s1 = inlined_call_operand.vmem [shape: f32[2,12,128], index: 1, kind: input, shape index: {}]
  %s2 = inlined_call_operand.vmem [shape: f32[8,8], index: 2, kind: input, shape index: {}]
  %s3 = inlined_call_operand.vmem [shape: f32[2,1,8], index: 3, kind: input, shape index: {}]
  %s4 = inlined_call_operand.hbm [shape: bf16[128,384], index: 4, kind: input, shape index: {}]
  %s5 = inlined_call_operand.vmem [shape: f32[1,384], index: 5, kind: input, shape index: {}]
  %s6 = inlined_call_operand.hbm [shape: bf16[128,128], index: 6, kind: input, shape index: {}]
  %s7 = inlined_call_operand.vmem [shape: f32[1,128], index: 7, kind: input, shape index: {}]
  %s8 = inlined_call_operand.vmem [shape: f32[1,128], index: 8, kind: input, shape index: {}]
  %s9 = inlined_call_operand.vmem [shape: f32[1,128], index: 9, kind: input, shape index: {}]
  %s10 = inlined_call_operand.hbm [shape: bf16[128,128], index: 10, kind: input, shape index: {}]
  %s11 = inlined_call_operand.vmem [shape: f32[1,128], index: 11, kind: input, shape index: {}]
  %s12 = inlined_call_operand.hbm [shape: bf16[128,256], index: 12, kind: input, shape index: {}]
  %s13 = inlined_call_operand.vmem [shape: f32[1,256], index: 13, kind: input, shape index: {}]
  %s14 = inlined_call_operand.hbm [shape: bf16[128,128], index: 14, kind: input, shape index: {}]
  %s15 = inlined_call_operand.hbm [shape: f32[1,128], index: 15, kind: input, shape index: {}]
  %s16 = inlined_call_operand.hbm [shape: f32[1,128], index: 16, kind: input, shape index: {}]
  %s17 = inlined_call_operand.hbm [shape: f32[1,128], index: 17, kind: input, shape index: {}]
  %s18 = inlined_call_operand.hbm [shape: bf16[128,128], index: 18, kind: input, shape index: {}]
  %s19 = inlined_call_operand.hbm [shape: f32[1,128], index: 19, kind: input, shape index: {}]
  %s20 = inlined_call_operand.hbm [shape: bf16[128,128], index: 20, kind: input, shape index: {}]
  %s21 = inlined_call_operand.hbm [shape: f32[1,128], index: 21, kind: input, shape index: {}]
  %s22 = inlined_call_operand.hbm [shape: f32[1,128], index: 22, kind: input, shape index: {}]
  %s23 = inlined_call_operand.hbm [shape: f32[1,128], index: 23, kind: input, shape index: {}]
  %s24 = inlined_call_operand.vmem [shape: f32[2,8,128], index: 24, kind: output, shape index: {}]
  %s25 = sld [smem:[#allocation0]]
  $region185: #{transformer_forward.8} parent=0
    _
  %s27 = ssub.s32 1, %s25
  %s28 = scalar_select 0, %s27, %s25
  $region1: #{transformer_forward.8} parent=0
    #allocation2 [shape = 'u8[98304]{0}', space=vmem, size = 0x18000, scoped, tag = 'input window, operand 4, single buffered']
    #allocation3 [shape = 's32[2]{0}', space=sflag, size = 0x8, scoped, tag = 'scoped memory for transformer_forward.8']
    #allocation4 [shape = 'u8[32768]{0}', space=vmem, size = 0x8000, scoped, tag = 'input window, operand 6, single buffered']
    #allocation5 [shape = 's32[1]{0}', space=sflag, size = 0x4, scoped, tag = 'scoped memory for transformer_forward.8']
    #allocation6 [shape = 'u8[32768]{0}', space=vmem, size = 0x8000, scoped, tag = 'input window, operand 10, single buffered']
    #allocation7 [shape = 'u8[65536]{0}', space=vmem, size = 0x10000, scoped, tag = 'input window, operand 12, single buffered']
    #allocation8 [shape = 's32[1]{0}', space=sflag, size = 0x4, scoped, tag = 'scoped memory for transformer_forward.8']
    #allocation9 [shape = 'u8[32768]{0}', space=vmem, size = 0x8000, scoped, tag = 'input window, operand 14, single buffered']
    #allocation10 [shape = 'u8[512]{0}', space=vmem, size = 0x400, scoped, tag = 'input window, operand 15, single buffered']
    #allocation11 [shape = 's32[1]{0}', space=sflag, size = 0x4, scoped, tag = 'scoped memory for transformer_forward.8']
    #allocation12 [shape = 'u8[512]{0}', space=vmem, size = 0x400, scoped, tag = 'input window, operand 16, single buffered']
    #allocation13 [shape = 'u8[512]{0}', space=vmem, size = 0x400, scoped, tag = 'input window, operand 17, single buffered']
    #allocation14 [shape = 's32[1]{0}', space=sflag, size = 0x4, scoped, tag = 'scoped memory for transformer_forward.8']
    #allocation15 [shape = 'u8[32768]{0}', space=vmem, size = 0x8000, scoped, tag = 'input window, operand 18, single buffered']
    #allocation16 [shape = 'u8[512]{0}', space=vmem, size = 0x400, scoped, tag = 'input window, operand 19, single buffered']
    #allocation17 [shape = 's32[1]{0}', space=sflag, size = 0x4, scoped, tag = 'scoped memory for transformer_forward.8']
    #allocation18 [shape = 'u8[32768]{0}', space=vmem, size = 0x8000, scoped, tag = 'input window, operand 20, single buffered']
    #allocation19 [shape = 'u8[512]{0}', space=vmem, size = 0x400, scoped, tag = 'input window, operand 21, single buffered']
    #allocation20 [shape = 's32[1]{0}', space=sflag, size = 0x4, scoped, tag = 'scoped memory for transformer_forward.8']
    #allocation21 [shape = 'u8[512]{0}', space=vmem, size = 0x400, scoped, tag = 'input window, operand 22, single buffered']
    #allocation22 [shape = 'u8[512]{0}', space=vmem, size = 0x400, scoped, tag = 'input window, operand 23, single buffered']
    #allocation23 [shape = 's32[1]{0}', space=sflag, size = 0x4, scoped, tag = 'scoped memory for transformer_forward.8']
    %29 = vsyncpa [#allocation3], 0
    %30 = vsyncpa [#allocation5], 0
    %31 = vsyncpa [#allocation8], 0
    %32 = vsyncpa [#allocation11], 0
    %33 = vsyncpa [#allocation14], 0
    %34 = vsyncpa [#allocation17], 0
    %35 = vsyncpa [#allocation20], 0
    %36 = vsyncpa [#allocation23], 0
    loop: start=0, step=1, limit=4
    $region2: #{transformer_forward.8} parent=1 // loop_pre_header
      _
    $region3: #{transformer_forward.8} parent=1 // loop_header
      %s38 = sphi 0, %s42
      %p39 = scmp.ge.s32.totalorder %s38, 4
      %s48 = sphi 0, %s50
      %s51 = sphi 0, %s48
      %s52 = sphi 0, %s51
      %s68 = sphi 0, %s52
      %s74 = sphi 0, %s76
      %s77 = sphi 0, %s74
      %s78 = sphi 0, %s77
      %s94 = sphi 0, %s78
      %s98 = sphi 0, %s98
      %s100 = sphi 0, %s98
      %s101 = sphi 0, %s100
      %s115 = sphi 0, %s101
      %s121 = sphi 0, %s123
      %s124 = sphi 0, %s121
      %s125 = sphi 0, %s124
      %s141 = sphi 0, %s125
      %s145 = sphi 0, %s145
      %s147 = sphi 0, %s145
      %s148 = sphi 0, %s147
      %s162 = sphi 0, %s148
      %s166 = sphi 0, %s166
      %s168 = sphi 0, %s166
      %s169 = sphi 0, %s168
      %s183 = sphi 0, %s169
      %s187 = sphi 0, %s187
      %s189 = sphi 0, %s187
      %s190 = sphi 0, %s189
      %s204 = sphi 0, %s190
      %s208 = sphi 0, %s208
      %s210 = sphi 0, %s208
      %s211 = sphi 0, %s210
      %s225 = sphi 0, %s211
      %s229 = sphi 0, %s229
      %s231 = sphi 0, %s229
      %s232 = sphi 0, %s231
      %s246 = sphi 0, %s232
      %s250 = sphi 0, %s250
      %s252 = sphi 0, %s250
      %s253 = sphi 0, %s252
      %s267 = sphi 0, %s253
      %s271 = sphi 0, %s271
      %s273 = sphi 0, %s271
      %s274 = sphi 0, %s273
      %s288 = sphi 0, %s274
      %s292 = sphi 0, %s292
      %s294 = sphi 0, %s292
      %s295 = sphi 0, %s294
      %s309 = sphi 0, %s295
      %s313 = sphi 0, %s313
      %s315 = sphi 0, %s313
      %s316 = sphi 0, %s315
      %s330 = sphi 0, %s316
      %s334 = sphi 0, %s334
      %s336 = sphi 0, %s334
      %s337 = sphi 0, %s336
      %s351 = sphi 0, %s337
      %s355 = sphi 0, %s355
      %s357 = sphi 0, %s355
      %s358 = sphi 0, %s357
      %s372 = sphi 0, %s358
      %s376 = sphi 0, %s376
      %s378 = sphi 0, %s376
      %s379 = sphi 0, %s378
      %s393 = sphi 0, %s379
      %s397 = sphi 0, %s397
      %s399 = sphi 0, %s397
      %s400 = sphi 0, %s399
      %s414 = sphi 0, %s400
      %s418 = sphi 0, %s418
      %s420 = sphi 0, %s418
      %s421 = sphi 0, %s420
      %s435 = sphi 0, %s421
      %s439 = sphi 0, %s439
      %s441 = sphi 0, %s439
      %s442 = sphi 0, %s441
      %s456 = sphi 0, %s442
      %s460 = sphi 0, %s460
      %s462 = sphi 0, %s460
      %s463 = sphi 0, %s462
      %s477 = sphi 0, %s463
      %s481 = sphi 0, %s481
      %s483 = sphi 0, %s481
      %s484 = sphi 0, %s483
      %s498 = sphi 0, %s484
      %s502 = sphi 0, %s502
      %s504 = sphi 0, %s502
      %s505 = sphi 0, %s504
      %s519 = sphi 0, %s505
      %s523 = sphi 0, %s523
      %s525 = sphi 0, %s523
      %s526 = sphi 0, %s525
      %s540 = sphi 0, %s526
      %s544 = sphi 0, %s544
      %s546 = sphi 0, %s544
      %s547 = sphi 0, %s546
      %s561 = sphi 0, %s547
      %s567 = sphi 0, %s569
      %s570 = sphi 0, %s567
      %s571 = sphi 0, %s570
      %s587 = sphi 0, %s571
    $region4: #{transformer_forward.8} parent=1 // loop_header_branch
      %41 = sbr.rel (%p39) target = $region8
    $region5: #{transformer_forward.8} parent=1 // loop_body
      %s43 = ssub.s32 %s38, 1
      %s44 = ssub.s32 %s38, 2
      %s45 = sadd.s32 %s38, 1
      %s46 = ssub.s32 %s38, %s45
      %p47 = scmp.eq.s32.totalorder %s46, 0
      %s49 = sadd.s32 %s48, 1
      %s50 = scalar_select %p47, %s48, %s49
      %p53 = pneg %p47
      %p54 = scmp.eq.s32.totalorder %s38, 1
      %p55 = por %p53, %p54
      %p56 = scmp.ne.s32.totalorder %s48, %s51
      %p57 = scmp.eq.s32.totalorder %s38, 0
      %p58 = por %p56, %p57
      %p59 = scmp.ne.s32.totalorder %s48, %s51
      %p60 = scmp.eq.s32.totalorder %s43, 1
      %p61 = por %p59, %p60
      %p62 = scmp.ne.s32.totalorder %s51, %s52
      %p63 = scmp.eq.s32.totalorder %s43, 0
      %p64 = por %p62, %p63
      %p65 = scmp.ne.s32.totalorder %s51, %s52
      %p66 = scmp.eq.s32.totalorder %s44, 1
      %p67 = por %p65, %p66
      %p69 = scmp.ne.s32.totalorder %s52, %s68
      %p70 = scmp.eq.s32.totalorder %s44, 0
      %p71 = por %p69, %p70
      %s72 = ssub.s32 %s38, %s45
      %p73 = scmp.eq.s32.totalorder %s72, 0
      %s75 = sadd.s32 %s74, 1
      %s76 = scalar_select %p73, %s74, %s75
      %p79 = pneg %p73
      %p80 = scmp.eq.s32.totalorder %s38, 1
      %p81 = por %p79, %p80
      %p82 = scmp.ne.s32.totalorder %s74, %s77
      %p83 = scmp.eq.s32.totalorder %s38, 0
      %p84 = por %p82, %p83
      %p85 = scmp.ne.s32.totalorder %s74, %s77
      %p86 = scmp.eq.s32.totalorder %s43, 1
      %p87 = por %p85, %p86
      %p88 = scmp.ne.s32.totalorder %s77, %s78
      %p89 = scmp.eq.s32.totalorder %s43, 0
      %p90 = por %p88, %p89
      %p91 = scmp.ne.s32.totalorder %s77, %s78
      %p92 = scmp.eq.s32.totalorder %s44, 1
      %p93 = por %p91, %p92
      %p95 = scmp.ne.s32.totalorder %s78, %s94
      %p96 = scmp.eq.s32.totalorder %s44, 0
      %p97 = por %p95, %p96
      %s99 = sadd.s32 %s98, 1
      %p102 = scmp.eq.s32.totalorder %s38, 1
      %p103 = scmp.ne.s32.totalorder %s98, %s100
      %p104 = scmp.eq.s32.totalorder %s38, 0
      %p105 = por %p103, %p104
      %p106 = scmp.ne.s32.totalorder %s98, %s100
      %p107 = scmp.eq.s32.totalorder %s43, 1
      %p108 = por %p106, %p107
      %p109 = scmp.ne.s32.totalorder %s100, %s101
      %p110 = scmp.eq.s32.totalorder %s43, 0
      %p111 = por %p109, %p110
      %p112 = scmp.ne.s32.totalorder %s100, %s101
      %p113 = scmp.eq.s32.totalorder %s44, 1
      %p114 = por %p112, %p113
      %p116 = scmp.ne.s32.totalorder %s101, %s115
      %p117 = scmp.eq.s32.totalorder %s44, 0
      %p118 = por %p116, %p117
      %s119 = ssub.s32 %s38, %s45
      %p120 = scmp.eq.s32.totalorder %s119, 0
      %s122 = sadd.s32 %s121, 1
      %s123 = scalar_select %p120, %s121, %s122
      %p126 = pneg %p120
      %p127 = scmp.eq.s32.totalorder %s38, 1
      %p128 = por %p126, %p127
      %p129 = scmp.ne.s32.totalorder %s121, %s124
      %p130 = scmp.eq.s32.totalorder %s38, 0
      %p131 = por %p129, %p130
      %p132 = scmp.ne.s32.totalorder %s121, %s124
      %p133 = scmp.eq.s32.totalorder %s43, 1
      %p134 = por %p132, %p133
      %p135 = scmp.ne.s32.totalorder %s124, %s125
      %p136 = scmp.eq.s32.totalorder %s43, 0
      %p137 = por %p135, %p136
      %p138 = scmp.ne.s32.totalorder %s124, %s125
      %p139 = scmp.eq.s32.totalorder %s44, 1
      %p140 = por %p138, %p139
      %p142 = scmp.ne.s32.totalorder %s125, %s141
      %p143 = scmp.eq.s32.totalorder %s44, 0
      %p144 = por %p142, %p143
      %s146 = sadd.s32 %s145, 1
      %p149 = scmp.eq.s32.totalorder %s38, 1
      %p150 = scmp.ne.s32.totalorder %s145, %s147
      %p151 = scmp.eq.s32.totalorder %s38, 0
      %p152 = por %p150, %p151
      %p153 = scmp.ne.s32.totalorder %s145, %s147
      %p154 = scmp.eq.s32.totalorder %s43, 1
      %p155 = por %p153, %p154
      %p156 = scmp.ne.s32.totalorder %s147, %s148
      %p157 = scmp.eq.s32.totalorder %s43, 0
      %p158 = por %p156, %p157
      %p159 = scmp.ne.s32.totalorder %s147, %s148
      %p160 = scmp.eq.s32.totalorder %s44, 1
      %p161 = por %p159, %p160
      %p163 = scmp.ne.s32.totalorder %s148, %s162
      %p164 = scmp.eq.s32.totalorder %s44, 0
      %p165 = por %p163, %p164
      %s167 = sadd.s32 %s166, 1
      %p170 = scmp.eq.s32.totalorder %s38, 1
      %p171 = scmp.ne.s32.totalorder %s166, %s168
      %p172 = scmp.eq.s32.totalorder %s38, 0
      %p173 = por %p171, %p172
      %p174 = scmp.ne.s32.totalorder %s166, %s168
      %p175 = scmp.eq.s32.totalorder %s43, 1
      %p176 = por %p174, %p175
      %p177 = scmp.ne.s32.totalorder %s168, %s169
      %p178 = scmp.eq.s32.totalorder %s43, 0
      %p179 = por %p177, %p178
      %p180 = scmp.ne.s32.totalorder %s168, %s169
      %p181 = scmp.eq.s32.totalorder %s44, 1
      %p182 = por %p180, %p181
      %p184 = scmp.ne.s32.totalorder %s169, %s183
      %p185 = scmp.eq.s32.totalorder %s44, 0
      %p186 = por %p184, %p185
      %s188 = sadd.s32 %s187, 1
      %p191 = scmp.eq.s32.totalorder %s38, 1
      %p192 = scmp.ne.s32.totalorder %s187, %s189
      %p193 = scmp.eq.s32.totalorder %s38, 0
      %p194 = por %p192, %p193
      %p195 = scmp.ne.s32.totalorder %s187, %s189
      %p196 = scmp.eq.s32.totalorder %s43, 1
      %p197 = por %p195, %p196
      %p198 = scmp.ne.s32.totalorder %s189, %s190
      %p199 = scmp.eq.s32.totalorder %s43, 0
      %p200 = por %p198, %p199
      %p201 = scmp.ne.s32.totalorder %s189, %s190
      %p202 = scmp.eq.s32.totalorder %s44, 1
      %p203 = por %p201, %p202
      %p205 = scmp.ne.s32.totalorder %s190, %s204
      %p206 = scmp.eq.s32.totalorder %s44, 0
      %p207 = por %p205, %p206
      %s209 = sadd.s32 %s208, 1
      %p212 = scmp.eq.s32.totalorder %s38, 1
      %p213 = scmp.ne.s32.totalorder %s208, %s210
      %p214 = scmp.eq.s32.totalorder %s38, 0
      %p215 = por %p213, %p214
      %p216 = scmp.ne.s32.totalorder %s208, %s210
      %p217 = scmp.eq.s32.totalorder %s43, 1
      %p218 = por %p216, %p217
      %p219 = scmp.ne.s32.totalorder %s210, %s211
      %p220 = scmp.eq.s32.totalorder %s43, 0
      %p221 = por %p219, %p220
      %p222 = scmp.ne.s32.totalorder %s210, %s211
      %p223 = scmp.eq.s32.totalorder %s44, 1
      %p224 = por %p222, %p223
      %p226 = scmp.ne.s32.totalorder %s211, %s225
      %p227 = scmp.eq.s32.totalorder %s44, 0
      %p228 = por %p226, %p227
      %s230 = sadd.s32 %s229, 1
      %p233 = scmp.eq.s32.totalorder %s38, 1
      %p234 = scmp.ne.s32.totalorder %s229, %s231
      %p235 = scmp.eq.s32.totalorder %s38, 0
      %p236 = por %p234, %p235
      %p237 = scmp.ne.s32.totalorder %s229, %s231
      %p238 = scmp.eq.s32.totalorder %s43, 1
      %p239 = por %p237, %p238
      %p240 = scmp.ne.s32.totalorder %s231, %s232
      %p241 = scmp.eq.s32.totalorder %s43, 0
      %p242 = por %p240, %p241
      %p243 = scmp.ne.s32.totalorder %s231, %s232
      %p244 = scmp.eq.s32.totalorder %s44, 1
      %p245 = por %p243, %p244
      %p247 = scmp.ne.s32.totalorder %s232, %s246
      %p248 = scmp.eq.s32.totalorder %s44, 0
      %p249 = por %p247, %p248
      %s251 = sadd.s32 %s250, 1
      %p254 = scmp.eq.s32.totalorder %s38, 1
      %p255 = scmp.ne.s32.totalorder %s250, %s252
      %p256 = scmp.eq.s32.totalorder %s38, 0
      %p257 = por %p255, %p256
      %p258 = scmp.ne.s32.totalorder %s250, %s252
      %p259 = scmp.eq.s32.totalorder %s43, 1
      %p260 = por %p258, %p259
      %p261 = scmp.ne.s32.totalorder %s252, %s253
      %p262 = scmp.eq.s32.totalorder %s43, 0
      %p263 = por %p261, %p262
      %p264 = scmp.ne.s32.totalorder %s252, %s253
      %p265 = scmp.eq.s32.totalorder %s44, 1
      %p266 = por %p264, %p265
      %p268 = scmp.ne.s32.totalorder %s253, %s267
      %p269 = scmp.eq.s32.totalorder %s44, 0
      %p270 = por %p268, %p269
      %s272 = sadd.s32 %s271, 1
      %p275 = scmp.eq.s32.totalorder %s38, 1
      %p276 = scmp.ne.s32.totalorder %s271, %s273
      %p277 = scmp.eq.s32.totalorder %s38, 0
      %p278 = por %p276, %p277
      %p279 = scmp.ne.s32.totalorder %s271, %s273
      %p280 = scmp.eq.s32.totalorder %s43, 1
      %p281 = por %p279, %p280
      %p282 = scmp.ne.s32.totalorder %s273, %s274
      %p283 = scmp.eq.s32.totalorder %s43, 0
      %p284 = por %p282, %p283
      %p285 = scmp.ne.s32.totalorder %s273, %s274
      %p286 = scmp.eq.s32.totalorder %s44, 1
      %p287 = por %p285, %p286
      %p289 = scmp.ne.s32.totalorder %s274, %s288
      %p290 = scmp.eq.s32.totalorder %s44, 0
      %p291 = por %p289, %p290
      %s293 = sadd.s32 %s292, 1
      %p296 = scmp.eq.s32.totalorder %s38, 1
      %p297 = scmp.ne.s32.totalorder %s292, %s294
      %p298 = scmp.eq.s32.totalorder %s38, 0
      %p299 = por %p297, %p298
      %p300 = scmp.ne.s32.totalorder %s292, %s294
      %p301 = scmp.eq.s32.totalorder %s43, 1
      %p302 = por %p300, %p301
      %p303 = scmp.ne.s32.totalorder %s294, %s295
      %p304 = scmp.eq.s32.totalorder %s43, 0
      %p305 = por %p303, %p304
      %p306 = scmp.ne.s32.totalorder %s294, %s295
      %p307 = scmp.eq.s32.totalorder %s44, 1
      %p308 = por %p306, %p307
      %p310 = scmp.ne.s32.totalorder %s295, %s309
      %p311 = scmp.eq.s32.totalorder %s44, 0
      %p312 = por %p310, %p311
      %s314 = sadd.s32 %s313, 1
      %p317 = scmp.eq.s32.totalorder %s38, 1
      %p318 = scmp.ne.s32.totalorder %s313, %s315
      %p319 = scmp.eq.s32.totalorder %s38, 0
      %p320 = por %p318, %p319
      %p321 = scmp.ne.s32.totalorder %s313, %s315
      %p322 = scmp.eq.s32.totalorder %s43, 1
      %p323 = por %p321, %p322
      %p324 = scmp.ne.s32.totalorder %s315, %s316
      %p325 = scmp.eq.s32.totalorder %s43, 0
      %p326 = por %p324, %p325
      %p327 = scmp.ne.s32.totalorder %s315, %s316
      %p328 = scmp.eq.s32.totalorder %s44, 1
      %p329 = por %p327, %p328
      %p331 = scmp.ne.s32.totalorder %s316, %s330
      %p332 = scmp.eq.s32.totalorder %s44, 0
      %p333 = por %p331, %p332
      %s335 = sadd.s32 %s334, 1
      %p338 = scmp.eq.s32.totalorder %s38, 1
      %p339 = scmp.ne.s32.totalorder %s334, %s336
      %p340 = scmp.eq.s32.totalorder %s38, 0
      %p341 = por %p339, %p340
      %p342 = scmp.ne.s32.totalorder %s334, %s336
      %p343 = scmp.eq.s32.totalorder %s43, 1
      %p344 = por %p342, %p343
      %p345 = scmp.ne.s32.totalorder %s336, %s337
      %p346 = scmp.eq.s32.totalorder %s43, 0
      %p347 = por %p345, %p346
      %p348 = scmp.ne.s32.totalorder %s336, %s337
      %p349 = scmp.eq.s32.totalorder %s44, 1
      %p350 = por %p348, %p349
      %p352 = scmp.ne.s32.totalorder %s337, %s351
      %p353 = scmp.eq.s32.totalorder %s44, 0
      %p354 = por %p352, %p353
      %s356 = sadd.s32 %s355, 1
      %p359 = scmp.eq.s32.totalorder %s38, 1
      %p360 = scmp.ne.s32.totalorder %s355, %s357
      %p361 = scmp.eq.s32.totalorder %s38, 0
      %p362 = por %p360, %p361
      %p363 = scmp.ne.s32.totalorder %s355, %s357
      %p364 = scmp.eq.s32.totalorder %s43, 1
      %p365 = por %p363, %p364
      %p366 = scmp.ne.s32.totalorder %s357, %s358
      %p367 = scmp.eq.s32.totalorder %s43, 0
      %p368 = por %p366, %p367
      %p369 = scmp.ne.s32.totalorder %s357, %s358
      %p370 = scmp.eq.s32.totalorder %s44, 1
      %p371 = por %p369, %p370
      %p373 = scmp.ne.s32.totalorder %s358, %s372
      %p374 = scmp.eq.s32.totalorder %s44, 0
      %p375 = por %p373, %p374
      %s377 = sadd.s32 %s376, 1
      %p380 = scmp.eq.s32.totalorder %s38, 1
      %p381 = scmp.ne.s32.totalorder %s376, %s378
      %p382 = scmp.eq.s32.totalorder %s38, 0
      %p383 = por %p381, %p382
      %p384 = scmp.ne.s32.totalorder %s376, %s378
      %p385 = scmp.eq.s32.totalorder %s43, 1
      %p386 = por %p384, %p385
      %p387 = scmp.ne.s32.totalorder %s378, %s379
      %p388 = scmp.eq.s32.totalorder %s43, 0
      %p389 = por %p387, %p388
      %p390 = scmp.ne.s32.totalorder %s378, %s379
      %p391 = scmp.eq.s32.totalorder %s44, 1
      %p392 = por %p390, %p391
      %p394 = scmp.ne.s32.totalorder %s379, %s393
      %p395 = scmp.eq.s32.totalorder %s44, 0
      %p396 = por %p394, %p395
      %s398 = sadd.s32 %s397, 1
      %p401 = scmp.eq.s32.totalorder %s38, 1
      %p402 = scmp.ne.s32.totalorder %s397, %s399
      %p403 = scmp.eq.s32.totalorder %s38, 0
      %p404 = por %p402, %p403
      %p405 = scmp.ne.s32.totalorder %s397, %s399
      %p406 = scmp.eq.s32.totalorder %s43, 1
      %p407 = por %p405, %p406
      %p408 = scmp.ne.s32.totalorder %s399, %s400
      %p409 = scmp.eq.s32.totalorder %s43, 0
      %p410 = por %p408, %p409
      %p411 = scmp.ne.s32.totalorder %s399, %s400
      %p412 = scmp.eq.s32.totalorder %s44, 1
      %p413 = por %p411, %p412
      %p415 = scmp.ne.s32.totalorder %s400, %s414
      %p416 = scmp.eq.s32.totalorder %s44, 0
      %p417 = por %p415, %p416
      %s419 = sadd.s32 %s418, 1
      %p422 = scmp.eq.s32.totalorder %s38, 1
      %p423 = scmp.ne.s32.totalorder %s418, %s420
      %p424 = scmp.eq.s32.totalorder %s38, 0
      %p425 = por %p423, %p424
      %p426 = scmp.ne.s32.totalorder %s418, %s420
      %p427 = scmp.eq.s32.totalorder %s43, 1
      %p428 = por %p426, %p427
      %p429 = scmp.ne.s32.totalorder %s420, %s421
      %p430 = scmp.eq.s32.totalorder %s43, 0
      %p431 = por %p429, %p430
      %p432 = scmp.ne.s32.totalorder %s420, %s421
      %p433 = scmp.eq.s32.totalorder %s44, 1
      %p434 = por %p432, %p433
      %p436 = scmp.ne.s32.totalorder %s421, %s435
      %p437 = scmp.eq.s32.totalorder %s44, 0
      %p438 = por %p436, %p437
      %s440 = sadd.s32 %s439, 1
      %p443 = scmp.eq.s32.totalorder %s38, 1
      %p444 = scmp.ne.s32.totalorder %s439, %s441
      %p445 = scmp.eq.s32.totalorder %s38, 0
      %p446 = por %p444, %p445
      %p447 = scmp.ne.s32.totalorder %s439, %s441
      %p448 = scmp.eq.s32.totalorder %s43, 1
      %p449 = por %p447, %p448
      %p450 = scmp.ne.s32.totalorder %s441, %s442
      %p451 = scmp.eq.s32.totalorder %s43, 0
      %p452 = por %p450, %p451
      %p453 = scmp.ne.s32.totalorder %s441, %s442
      %p454 = scmp.eq.s32.totalorder %s44, 1
      %p455 = por %p453, %p454
      %p457 = scmp.ne.s32.totalorder %s442, %s456
      %p458 = scmp.eq.s32.totalorder %s44, 0
      %p459 = por %p457, %p458
      %s461 = sadd.s32 %s460, 1
      %p464 = scmp.eq.s32.totalorder %s38, 1
      %p465 = scmp.ne.s32.totalorder %s460, %s462
      %p466 = scmp.eq.s32.totalorder %s38, 0
      %p467 = por %p465, %p466
      %p468 = scmp.ne.s32.totalorder %s460, %s462
      %p469 = scmp.eq.s32.totalorder %s43, 1
      %p470 = por %p468, %p469
      %p471 = scmp.ne.s32.totalorder %s462, %s463
      %p472 = scmp.eq.s32.totalorder %s43, 0
      %p473 = por %p471, %p472
      %p474 = scmp.ne.s32.totalorder %s462, %s463
      %p475 = scmp.eq.s32.totalorder %s44, 1
      %p476 = por %p474, %p475
      %p478 = scmp.ne.s32.totalorder %s463, %s477
      %p479 = scmp.eq.s32.totalorder %s44, 0
      %p480 = por %p478, %p479
      %s482 = sadd.s32 %s481, 1
      %p485 = scmp.eq.s32.totalorder %s38, 1
      %p486 = scmp.ne.s32.totalorder %s481, %s483
      %p487 = scmp.eq.s32.totalorder %s38, 0
      %p488 = por %p486, %p487
      %p489 = scmp.ne.s32.totalorder %s481, %s483
      %p490 = scmp.eq.s32.totalorder %s43, 1
      %p491 = por %p489, %p490
      %p492 = scmp.ne.s32.totalorder %s483, %s484
      %p493 = scmp.eq.s32.totalorder %s43, 0
      %p494 = por %p492, %p493
      %p495 = scmp.ne.s32.totalorder %s483, %s484
      %p496 = scmp.eq.s32.totalorder %s44, 1
      %p497 = por %p495, %p496
      %p499 = scmp.ne.s32.totalorder %s484, %s498
      %p500 = scmp.eq.s32.totalorder %s44, 0
      %p501 = por %p499, %p500
      %s503 = sadd.s32 %s502, 1
      %p506 = scmp.eq.s32.totalorder %s38, 1
      %p507 = scmp.ne.s32.totalorder %s502, %s504
      %p508 = scmp.eq.s32.totalorder %s38, 0
      %p509 = por %p507, %p508
      %p510 = scmp.ne.s32.totalorder %s502, %s504
      %p511 = scmp.eq.s32.totalorder %s43, 1
      %p512 = por %p510, %p511
      %p513 = scmp.ne.s32.totalorder %s504, %s505
      %p514 = scmp.eq.s32.totalorder %s43, 0
      %p515 = por %p513, %p514
      %p516 = scmp.ne.s32.totalorder %s504, %s505
      %p517 = scmp.eq.s32.totalorder %s44, 1
      %p518 = por %p516, %p517
      %p520 = scmp.ne.s32.totalorder %s505, %s519
      %p521 = scmp.eq.s32.totalorder %s44, 0
      %p522 = por %p520, %p521
      %s524 = sadd.s32 %s523, 1
      %p527 = scmp.eq.s32.totalorder %s38, 1
      %p528 = scmp.ne.s32.totalorder %s523, %s525
      %p529 = scmp.eq.s32.totalorder %s38, 0
      %p530 = por %p528, %p529
      %p531 = scmp.ne.s32.totalorder %s523, %s525
      %p532 = scmp.eq.s32.totalorder %s43, 1
      %p533 = por %p531, %p532
      %p534 = scmp.ne.s32.totalorder %s525, %s526
      %p535 = scmp.eq.s32.totalorder %s43, 0
      %p536 = por %p534, %p535
      %p537 = scmp.ne.s32.totalorder %s525, %s526
      %p538 = scmp.eq.s32.totalorder %s44, 1
      %p539 = por %p537, %p538
      %p541 = scmp.ne.s32.totalorder %s526, %s540
      %p542 = scmp.eq.s32.totalorder %s44, 0
      %p543 = por %p541, %p542
      %s545 = sadd.s32 %s544, 1
      %p548 = scmp.eq.s32.totalorder %s38, 1
      %p549 = scmp.ne.s32.totalorder %s544, %s546
      %p550 = scmp.eq.s32.totalorder %s38, 0
      %p551 = por %p549, %p550
      %p552 = scmp.ne.s32.totalorder %s544, %s546
      %p553 = scmp.eq.s32.totalorder %s43, 1
      %p554 = por %p552, %p553
      %p555 = scmp.ne.s32.totalorder %s546, %s547
      %p556 = scmp.eq.s32.totalorder %s43, 0
      %p557 = por %p555, %p556
      %p558 = scmp.ne.s32.totalorder %s546, %s547
      %p559 = scmp.eq.s32.totalorder %s44, 1
      %p560 = por %p558, %p559
      %p562 = scmp.ne.s32.totalorder %s547, %s561
      %p563 = scmp.eq.s32.totalorder %s44, 0
      %p564 = por %p562, %p563
      %s565 = ssub.s32 %s38, %s45
      %p566 = scmp.eq.s32.totalorder %s565, 0
      %s568 = sadd.s32 %s567, 1
      %s569 = scalar_select %p566, %s567, %s568
      %p572 = pneg %p566
      %p573 = scmp.eq.s32.totalorder %s38, 1
      %p574 = por %p572, %p573
      %p575 = scmp.ne.s32.totalorder %s567, %s570
      %p576 = scmp.eq.s32.totalorder %s38, 0
      %p577 = por %p575, %p576
      %p578 = scmp.ne.s32.totalorder %s567, %s570
      %p579 = scmp.eq.s32.totalorder %s43, 1
      %p580 = por %p578, %p579
      %p581 = scmp.ne.s32.totalorder %s570, %s571
      %p582 = scmp.eq.s32.totalorder %s43, 0
      %p583 = por %p581, %p582
      %p584 = scmp.ne.s32.totalorder %s570, %s571
      %p585 = scmp.eq.s32.totalorder %s44, 1
      %p586 = por %p584, %p585
      %p588 = scmp.ne.s32.totalorder %s571, %s587
      %p589 = scmp.eq.s32.totalorder %s44, 0
      %p590 = por %p588, %p589
      %p591 = scmp.le.s32.totalorder 1, %s38
      %p592 = scmp.lt.s32.totalorder %s38, 3
      %p593 = pnand %p591, %p592
      %p594 = pneg %p593
      // Predicated region
      $region9: #{transformer_forward.8} parent=5 // pred_check
        _
      $region10: #{transformer_forward.8} parent=5 // pred_check_branch
        %596 = sbr.rel (%p593) target = $region12
      $region11: #{transformer_forward.8} parent=5 // pred_region
        %s597 = ssub.s32 %s38, 1
        // Predicated region
        $region13: #{transformer_forward.8} parent=11 // pred_check
          %p598 = pneg %p111
        $region14: #{transformer_forward.8} parent=11 // pred_check_branch
          %600 = sbr.rel (%p598) target = $region16
        $region15: #{transformer_forward.8} parent=11 // pred_region
          _
        $region16: #{transformer_forward.8} parent=11 // pred_fallthru
          _
        // Predicated region
        $region17: #{transformer_forward.8} parent=11 // pred_check
          %p601 = pneg %p158
        $region18: #{transformer_forward.8} parent=11 // pred_check_branch
          %603 = sbr.rel (%p601) target = $region20
        $region19: #{transformer_forward.8} parent=11 // pred_region
          %605 = vsyncadd [#allocation3], 0
          %s606 = sshll.u32 %s4, 4
          %s607 = int_to_ptr.hbm [resolvable:$true] %s606
          %s608 = sshll.u32 [#allocation2], 4
          %s609 = int_to_ptr.vmem [resolvable:$true] %s608
          %614 = dma.hbm_to_vmem [thread:$0]  %s607, 3072, %s609, [#allocation3], 192, 192, 12
        $region20: #{transformer_forward.8} parent=11 // pred_fallthru
          _
        // Predicated region
        $region21: #{transformer_forward.8} parent=11 // pred_check
          %p615 = pneg %p179
        $region22: #{transformer_forward.8} parent=11 // pred_check_branch
          %617 = sbr.rel (%p615) target = $region24
        $region23: #{transformer_forward.8} parent=11 // pred_region
          _
        $region24: #{transformer_forward.8} parent=11 // pred_fallthru
          _
        // Predicated region
        $region25: #{transformer_forward.8} parent=11 // pred_check
          %p618 = pneg %p200
        $region26: #{transformer_forward.8} parent=11 // pred_check_branch
          %620 = sbr.rel (%p618) target = $region28
        $region27: #{transformer_forward.8} parent=11 // pred_region
          %622 = vsyncadd [#allocation5], 0
          %s623 = sshll.u32 %s6, 4
          %s624 = int_to_ptr.hbm [resolvable:$true] %s623
          %s625 = sshll.u32 [#allocation4], 4
          %s626 = int_to_ptr.vmem [resolvable:$true] %s625
          %631 = dma.hbm_to_vmem [thread:$0]  %s624, 1024, %s626, [#allocation5], 64, 64, 4
        $region28: #{transformer_forward.8} parent=11 // pred_fallthru
          _
        // Predicated region
        $region29: #{transformer_forward.8} parent=11 // pred_check
          %p632 = pneg %p221
        $region30: #{transformer_forward.8} parent=11 // pred_check_branch
          %634 = sbr.rel (%p632) target = $region32
        $region31: #{transformer_forward.8} parent=11 // pred_region
          _
        $region32: #{transformer_forward.8} parent=11 // pred_fallthru
          _
        // Predicated region
        $region33: #{transformer_forward.8} parent=11 // pred_check
          %p635 = pneg %p242
        $region34: #{transformer_forward.8} parent=11 // pred_check_branch
          %637 = sbr.rel (%p635) target = $region36
        $region35: #{transformer_forward.8} parent=11 // pred_region
          _
        $region36: #{transformer_forward.8} parent=11 // pred_fallthru
          _
        // Predicated region
        $region37: #{transformer_forward.8} parent=11 // pred_check
          %p638 = pneg %p263
        $region38: #{transformer_forward.8} parent=11 // pred_check_branch
          %640 = sbr.rel (%p638) target = $region40
        $region39: #{transformer_forward.8} parent=11 // pred_region
          _
        $region40: #{transformer_forward.8} parent=11 // pred_fallthru
          _
        // Predicated region
        $region41: #{transformer_forward.8} parent=11 // pred_check
          %p641 = pneg %p284
        $region42: #{transformer_forward.8} parent=11 // pred_check_branch
          %643 = sbr.rel (%p641) target = $region44
        $region43: #{transformer_forward.8} parent=11 // pred_region
          %645 = vsyncadd [#allocation5], 0
          %s646 = sshll.u32 %s10, 4
          %s647 = int_to_ptr.hbm [resolvable:$true] %s646
          %s648 = sshll.u32 [#allocation6], 4
          %s649 = int_to_ptr.vmem [resolvable:$true] %s648
          %654 = dma.hbm_to_vmem [thread:$0]  %s647, 1024, %s649, [#allocation5], 64, 64, 4
        $region44: #{transformer_forward.8} parent=11 // pred_fallthru
          _
        // Predicated region
        $region45: #{transformer_forward.8} parent=11 // pred_check
          %p655 = pneg %p305
        $region46: #{transformer_forward.8} parent=11 // pred_check_branch
          %657 = sbr.rel (%p655) target = $region48
        $region47: #{transformer_forward.8} parent=11 // pred_region
          _
        $region48: #{transformer_forward.8} parent=11 // pred_fallthru
          _
        // Predicated region
        $region49: #{transformer_forward.8} parent=11 // pred_check
          %p658 = pneg %p326
        $region50: #{transformer_forward.8} parent=11 // pred_check_branch
          %660 = sbr.rel (%p658) target = $region52
        $region51: #{transformer_forward.8} parent=11 // pred_region
          %662 = vsyncadd [#allocation8], 0
          %s663 = sshll.u32 %s12, 4
          %s664 = int_to_ptr.hbm [resolvable:$true] %s663
          %s665 = sshll.u32 [#allocation7], 4
          %s666 = int_to_ptr.vmem [resolvable:$true] %s665
          %671 = dma.hbm_to_vmem [thread:$0]  %s664, 2048, %s666, [#allocation8], 128, 128, 8
        $region52: #{transformer_forward.8} parent=11 // pred_fallthru
          _
        // Predicated region
        $region53: #{transformer_forward.8} parent=11 // pred_check
          %p672 = pneg %p347
        $region54: #{transformer_forward.8} parent=11 // pred_check_branch
          %674 = sbr.rel (%p672) target = $region56
        $region55: #{transformer_forward.8} parent=11 // pred_region
          _
        $region56: #{transformer_forward.8} parent=11 // pred_fallthru
          _
        // Predicated region
        $region57: #{transformer_forward.8} parent=11 // pred_check
          %p675 = pneg %p368
        $region58: #{transformer_forward.8} parent=11 // pred_check_branch
          %677 = sbr.rel (%p675) target = $region60
        $region59: #{transformer_forward.8} parent=11 // pred_region
          %679 = vsyncadd [#allocation8], 0
          %s680 = sshll.u32 %s14, 4
          %s681 = int_to_ptr.hbm [resolvable:$true] %s680
          %s682 = sshll.u32 [#allocation9], 4
          %s683 = int_to_ptr.vmem [resolvable:$true] %s682
          %688 = dma.hbm_to_vmem [thread:$0]  %s681, 1024, %s683, [#allocation8], 64, 64, 4
        $region60: #{transformer_forward.8} parent=11 // pred_fallthru
          _
        // Predicated region
        $region61: #{transformer_forward.8} parent=11 // pred_check
          %p689 = pneg %p389
        $region62: #{transformer_forward.8} parent=11 // pred_check_branch
          %691 = sbr.rel (%p689) target = $region64
        $region63: #{transformer_forward.8} parent=11 // pred_region
          %693 = vsyncadd [#allocation11], 0
          %s695 = sshll.u32 %s15, 4
          %s696 = int_to_ptr.hbm [resolvable:$true] %s695
          %s697 = sshll.u32 [#allocation10], 4
          %s698 = int_to_ptr.vmem [resolvable:$true] %s697
          %700 = dma.hbm_to_vmem [thread:$0]  %s696, 16, %s698, [#allocation11]
        $region64: #{transformer_forward.8} parent=11 // pred_fallthru
          _
        // Predicated region
        $region65: #{transformer_forward.8} parent=11 // pred_check
          %p701 = pneg %p410
        $region66: #{transformer_forward.8} parent=11 // pred_check_branch
          %703 = sbr.rel (%p701) target = $region68
        $region67: #{transformer_forward.8} parent=11 // pred_region
          %705 = vsyncadd [#allocation11], 0
          %s707 = sshll.u32 %s16, 4
          %s708 = int_to_ptr.hbm [resolvable:$true] %s707
          %s709 = sshll.u32 [#allocation12], 4
          %s710 = int_to_ptr.vmem [resolvable:$true] %s709
          %712 = dma.hbm_to_vmem [thread:$0]  %s708, 16, %s710, [#allocation11]
        $region68: #{transformer_forward.8} parent=11 // pred_fallthru
          _
        // Predicated region
        $region69: #{transformer_forward.8} parent=11 // pred_check
          %p713 = pneg %p431
        $region70: #{transformer_forward.8} parent=11 // pred_check_branch
          %715 = sbr.rel (%p713) target = $region72
        $region71: #{transformer_forward.8} parent=11 // pred_region
          %717 = vsyncadd [#allocation14], 0
          %s719 = sshll.u32 %s17, 4
          %s720 = int_to_ptr.hbm [resolvable:$true] %s719
          %s721 = sshll.u32 [#allocation13], 4
          %s722 = int_to_ptr.vmem [resolvable:$true] %s721
          %724 = dma.hbm_to_vmem [thread:$0]  %s720, 16, %s722, [#allocation14]
        $region72: #{transformer_forward.8} parent=11 // pred_fallthru
          _
        // Predicated region
        $region73: #{transformer_forward.8} parent=11 // pred_check
          %p725 = pneg %p452
        $region74: #{transformer_forward.8} parent=11 // pred_check_branch
          %727 = sbr.rel (%p725) target = $region76
        $region75: #{transformer_forward.8} parent=11 // pred_region
          %729 = vsyncadd [#allocation14], 0
          %s730 = sshll.u32 %s18, 4
          %s731 = int_to_ptr.hbm [resolvable:$true] %s730
          %s732 = sshll.u32 [#allocation15], 4
          %s733 = int_to_ptr.vmem [resolvable:$true] %s732
          %738 = dma.hbm_to_vmem [thread:$0]  %s731, 1024, %s733, [#allocation14], 64, 64, 4
        $region76: #{transformer_forward.8} parent=11 // pred_fallthru
          _
        // Predicated region
        $region77: #{transformer_forward.8} parent=11 // pred_check
          %p739 = pneg %p473
        $region78: #{transformer_forward.8} parent=11 // pred_check_branch
          %741 = sbr.rel (%p739) target = $region80
        $region79: #{transformer_forward.8} parent=11 // pred_region
          %743 = vsyncadd [#allocation17], 0
          %s745 = sshll.u32 %s19, 4
          %s746 = int_to_ptr.hbm [resolvable:$true] %s745
          %s747 = sshll.u32 [#allocation16], 4
          %s748 = int_to_ptr.vmem [resolvable:$true] %s747
          %750 = dma.hbm_to_vmem [thread:$0]  %s746, 16, %s748, [#allocation17]
        $region80: #{transformer_forward.8} parent=11 // pred_fallthru
          _
        // Predicated region
        $region81: #{transformer_forward.8} parent=11 // pred_check
          %p751 = pneg %p494
        $region82: #{transformer_forward.8} parent=11 // pred_check_branch
          %753 = sbr.rel (%p751) target = $region84
        $region83: #{transformer_forward.8} parent=11 // pred_region
          %755 = vsyncadd [#allocation17], 0
          %s756 = sshll.u32 %s20, 4
          %s757 = int_to_ptr.hbm [resolvable:$true] %s756
          %s758 = sshll.u32 [#allocation18], 4
          %s759 = int_to_ptr.vmem [resolvable:$true] %s758
          %764 = dma.hbm_to_vmem [thread:$0]  %s757, 1024, %s759, [#allocation17], 64, 64, 4
        $region84: #{transformer_forward.8} parent=11 // pred_fallthru
          _
        // Predicated region
        $region85: #{transformer_forward.8} parent=11 // pred_check
          %p765 = pneg %p515
        $region86: #{transformer_forward.8} parent=11 // pred_check_branch
          %767 = sbr.rel (%p765) target = $region88
        $region87: #{transformer_forward.8} parent=11 // pred_region
          %769 = vsyncadd [#allocation20], 0
          %s771 = sshll.u32 %s21, 4
          %s772 = int_to_ptr.hbm [resolvable:$true] %s771
          %s773 = sshll.u32 [#allocation19], 4
          %s774 = int_to_ptr.vmem [resolvable:$true] %s773
          %776 = dma.hbm_to_vmem [thread:$0]  %s772, 16, %s774, [#allocation20]
        $region88: #{transformer_forward.8} parent=11 // pred_fallthru
          _
        // Predicated region
        $region89: #{transformer_forward.8} parent=11 // pred_check
          %p777 = pneg %p536
        $region90: #{transformer_forward.8} parent=11 // pred_check_branch
          %779 = sbr.rel (%p777) target = $region92
        $region91: #{transformer_forward.8} parent=11 // pred_region
          %781 = vsyncadd [#allocation20], 0
          %s783 = sshll.u32 %s22, 4
          %s784 = int_to_ptr.hbm [resolvable:$true] %s783
          %s785 = sshll.u32 [#allocation21], 4
          %s786 = int_to_ptr.vmem [resolvable:$true] %s785
          %788 = dma.hbm_to_vmem [thread:$0]  %s784, 16, %s786, [#allocation20]
        $region92: #{transformer_forward.8} parent=11 // pred_fallthru
          _
        // Predicated region
        $region93: #{transformer_forward.8} parent=11 // pred_check
          %p789 = pneg %p557
        $region94: #{transformer_forward.8} parent=11 // pred_check_branch
          %791 = sbr.rel (%p789) target = $region96
        $region95: #{transformer_forward.8} parent=11 // pred_region
          %793 = vsyncadd [#allocation23], 0
          %s795 = sshll.u32 %s23, 4
          %s796 = int_to_ptr.hbm [resolvable:$true] %s795
          %s797 = sshll.u32 [#allocation22], 4
          %s798 = int_to_ptr.vmem [resolvable:$true] %s797
          %800 = dma.hbm_to_vmem [thread:$0]  %s796, 16, %s798, [#allocation23]
        $region96: #{transformer_forward.8} parent=11 // pred_fallthru
          _
      $region12: #{transformer_forward.8} parent=5 // pred_fallthru
        _
      %p801 = scmp.lt.s32.totalorder %s38, 2
      // Predicated region
      $region97: #{transformer_forward.8} parent=5 // pred_check
        %p802 = pneg %p801
      $region98: #{transformer_forward.8} parent=5 // pred_check_branch
        %804 = sbr.rel (%p802) target = $region100
      $region99: #{transformer_forward.8} parent=5 // pred_region
        // Predicated region
        $region101: #{transformer_forward.8} parent=99 // pred_check
          %p805 = pneg %p58
        $region102: #{transformer_forward.8} parent=99 // pred_check_branch
          %807 = sbr.rel (%p805) target = $region104
        $region103: #{transformer_forward.8} parent=99 // pred_region
          %p808 = scmp.lt.s32.totalorder %s38, 1
          %s809 = scalar_select %p808, %s38, 1
          %s810 = smul.addr %s809, 8
          %s811 = scalar_lea.vmem %s0, %s810
        $region104: #{transformer_forward.8} parent=99 // pred_fallthru
          _
        // Predicated region
        $region105: #{transformer_forward.8} parent=99 // pred_check
          %p812 = pneg %p84
        $region106: #{transformer_forward.8} parent=99 // pred_check_branch
          %814 = sbr.rel (%p812) target = $region108
        $region107: #{transformer_forward.8} parent=99 // pred_region
          %p815 = scmp.lt.s32.totalorder %s38, 1
          %s816 = scalar_select %p815, %s38, 1
          %s817 = smul.addr %s816, 2
          %s818 = smul.addr %s817, 8
          %s819 = scalar_lea.vmem %s1, %s818
        $region108: #{transformer_forward.8} parent=99 // pred_fallthru
          _
        // Predicated region
        $region109: #{transformer_forward.8} parent=99 // pred_check
          %p820 = pneg %p131
        $region110: #{transformer_forward.8} parent=99 // pred_check_branch
          %822 = sbr.rel (%p820) target = $region112
        $region111: #{transformer_forward.8} parent=99 // pred_region
          %p823 = scmp.lt.s32.totalorder %s38, 1
          %s824 = scalar_select %p823, %s38, 1
          %s825 = scalar_lea.vmem %s3, %s824
        $region112: #{transformer_forward.8} parent=99 // pred_fallthru
          _
      $region100: #{transformer_forward.8} parent=5 // pred_fallthru
        _
      %p826 = scmp.le.s32.totalorder 1, %s38
      %p827 = scmp.lt.s32.totalorder %s38, 3
      %p828 = pnand %p826, %p827
      %p829 = pneg %p828
      // Predicated region
      $region113: #{transformer_forward.8} parent=5 // pred_check
        _
      $region114: #{transformer_forward.8} parent=5 // pred_check_branch
        %831 = sbr.rel (%p828) target = $region116
      $region115: #{transformer_forward.8} parent=5 // pred_region
        %s832 = ssub.s32 %s38, 1
        // Predicated region
        $region117: #{transformer_forward.8} parent=115 // pred_check
          %p833 = pneg %p158
        $region118: #{transformer_forward.8} parent=115 // pred_check_branch
          %835 = sbr.rel (%p833) target = $region120
        $region119: #{transformer_forward.8} parent=115 // pred_region
          %837 = dma.done [#allocation3], 3072
        $region120: #{transformer_forward.8} parent=115 // pred_fallthru
          _
        // Predicated region
        $region121: #{transformer_forward.8} parent=115 // pred_check
          %p838 = pneg %p200
        $region122: #{transformer_forward.8} parent=115 // pred_check_branch
          %840 = sbr.rel (%p838) target = $region124
        $region123: #{transformer_forward.8} parent=115 // pred_region
          %842 = dma.done [#allocation5], 1024
        $region124: #{transformer_forward.8} parent=115 // pred_fallthru
          _
        // Predicated region
        $region125: #{transformer_forward.8} parent=115 // pred_check
          %p843 = pneg %p284
        $region126: #{transformer_forward.8} parent=115 // pred_check_branch
          %845 = sbr.rel (%p843) target = $region128
        $region127: #{transformer_forward.8} parent=115 // pred_region
          %847 = dma.done [#allocation5], 1024
        $region128: #{transformer_forward.8} parent=115 // pred_fallthru
          _
        // Predicated region
        $region129: #{transformer_forward.8} parent=115 // pred_check
          %p848 = pneg %p326
        $region130: #{transformer_forward.8} parent=115 // pred_check_branch
          %850 = sbr.rel (%p848) target = $region132
        $region131: #{transformer_forward.8} parent=115 // pred_region
          %852 = dma.done [#allocation8], 2048
        $region132: #{transformer_forward.8} parent=115 // pred_fallthru
          _
        // Predicated region
        $region133: #{transformer_forward.8} parent=115 // pred_check
          %p853 = pneg %p368
        $region134: #{transformer_forward.8} parent=115 // pred_check_branch
          %855 = sbr.rel (%p853) target = $region136
        $region135: #{transformer_forward.8} parent=115 // pred_region
          %857 = dma.done [#allocation8], 1024
        $region136: #{transformer_forward.8} parent=115 // pred_fallthru
          _
        // Predicated region
        $region137: #{transformer_forward.8} parent=115 // pred_check
          %p858 = pneg %p389
        $region138: #{transformer_forward.8} parent=115 // pred_check_branch
          %860 = sbr.rel (%p858) target = $region140
        $region139: #{transformer_forward.8} parent=115 // pred_region
          %862 = dma.done [#allocation11], 16
        $region140: #{transformer_forward.8} parent=115 // pred_fallthru
          _
        // Predicated region
        $region141: #{transformer_forward.8} parent=115 // pred_check
          %p863 = pneg %p410
        $region142: #{transformer_forward.8} parent=115 // pred_check_branch
          %865 = sbr.rel (%p863) target = $region144
        $region143: #{transformer_forward.8} parent=115 // pred_region
          %867 = dma.done [#allocation11], 16
        $region144: #{transformer_forward.8} parent=115 // pred_fallthru
          _
        // Predicated region
        $region145: #{transformer_forward.8} parent=115 // pred_check
          %p868 = pneg %p431
        $region146: #{transformer_forward.8} parent=115 // pred_check_branch
          %870 = sbr.rel (%p868) target = $region148
        $region147: #{transformer_forward.8} parent=115 // pred_region
          %872 = dma.done [#allocation14], 16
        $region148: #{transformer_forward.8} parent=115 // pred_fallthru
          _
        // Predicated region
        $region149: #{transformer_forward.8} parent=115 // pred_check
          %p873 = pneg %p452
        $region150: #{transformer_forward.8} parent=115 // pred_check_branch
          %875 = sbr.rel (%p873) target = $region152
        $region151: #{transformer_forward.8} parent=115 // pred_region
          %877 = dma.done [#allocation14], 1024
        $region152: #{transformer_forward.8} parent=115 // pred_fallthru
          _
        // Predicated region
        $region153: #{transformer_forward.8} parent=115 // pred_check
          %p878 = pneg %p473
        $region154: #{transformer_forward.8} parent=115 // pred_check_branch
          %880 = sbr.rel (%p878) target = $region156
        $region155: #{transformer_forward.8} parent=115 // pred_region
          %882 = dma.done [#allocation17], 16
        $region156: #{transformer_forward.8} parent=115 // pred_fallthru
          _
        // Predicated region
        $region157: #{transformer_forward.8} parent=115 // pred_check
          %p883 = pneg %p494
        $region158: #{transformer_forward.8} parent=115 // pred_check_branch
          %885 = sbr.rel (%p883) target = $region160
        $region159: #{transformer_forward.8} parent=115 // pred_region
          %887 = dma.done [#allocation17], 1024
        $region160: #{transformer_forward.8} parent=115 // pred_fallthru
          _
        // Predicated region
        $region161: #{transformer_forward.8} parent=115 // pred_check
          %p888 = pneg %p515
        $region162: #{transformer_forward.8} parent=115 // pred_check_branch
          %890 = sbr.rel (%p888) target = $region164
        $region163: #{transformer_forward.8} parent=115 // pred_region
          %892 = dma.done [#allocation20], 16
        $region164: #{transformer_forward.8} parent=115 // pred_fallthru
          _
        // Predicated region
        $region165: #{transformer_forward.8} parent=115 // pred_check
          %p893 = pneg %p536
        $region166: #{transformer_forward.8} parent=115 // pred_check_branch
          %895 = sbr.rel (%p893) target = $region168
        $region167: #{transformer_forward.8} parent=115 // pred_region
          %897 = dma.done [#allocation20], 16
        $region168: #{transformer_forward.8} parent=115 // pred_fallthru
          _
        // Predicated region
        $region169: #{transformer_forward.8} parent=115 // pred_check
          %p898 = pneg %p557
        $region170: #{transformer_forward.8} parent=115 // pred_check_branch
          %900 = sbr.rel (%p898) target = $region172
        $region171: #{transformer_forward.8} parent=115 // pred_region
          %902 = dma.done [#allocation23], 16
        $region172: #{transformer_forward.8} parent=115 // pred_fallthru
          _
        %p903 = scmp.lt.s32.totalorder %s43, 1
        %s904 = scalar_select %p903, %s43, 1
        %s905 = smul.addr %s904, 8
        %s906 = scalar_lea.vmem %s0, %s905
        %p907 = pneg %p64
        %p908 = pneg %p61
        %p909 = scmp.lt.s32.totalorder %s43, 1
        %s910 = scalar_select %p909, %s43, 1
        %s911 = smul.addr %s910, 2
        %s912 = smul.addr %s911, 8
        %s913 = scalar_lea.vmem %s1, %s912
        %p914 = pneg %p90
        %p915 = pneg %p87
        %p916 = pneg %p111
        %p917 = pneg %p108
        %p918 = scmp.lt.s32.totalorder %s43, 1
        %s919 = scalar_select %p918, %s43, 1
        %s920 = scalar_lea.vmem %s3, %s919
        %p921 = pneg %p137
        %p922 = pneg %p134
        %p923 = pneg %p158
        %p924 = pneg %p155
        %p925 = pneg %p179
        %p926 = pneg %p176
        %p927 = pneg %p200
        %p928 = pneg %p197
        %p929 = pneg %p221
        %p930 = pneg %p218
        %p931 = pneg %p242
        %p932 = pneg %p239
        %p933 = pneg %p263
        %p934 = pneg %p260
        %p935 = pneg %p284
        %p936 = pneg %p281
        %p937 = pneg %p305
        %p938 = pneg %p302
        %p939 = pneg %p326
        %p940 = pneg %p323
        %p941 = pneg %p347
        %p942 = pneg %p344
        %p943 = pneg %p368
        %p944 = pneg %p365
        %p945 = pneg %p389
        %p946 = pneg %p386
        %p947 = pneg %p410
        %p948 = pneg %p407
        %p949 = pneg %p431
        %p950 = pneg %p428
        %p951 = pneg %p452
        %p952 = pneg %p449
        %p953 = pneg %p473
        %p954 = pneg %p470
        %p955 = pneg %p494
        %p956 = pneg %p491
        %p957 = pneg %p515
        %p958 = pneg %p512
        %p959 = pneg %p536
        %p960 = pneg %p533
        %p961 = pneg %p557
        %p962 = pneg %p554
        %p963 = pneg %p583
        %p964 = pneg %p580
        %p965 = scmp.lt.s32.totalorder %s43, 1
        %s966 = scalar_select %p965, %s43, 1
        %s967 = smul.addr %s966, 8
        %s968 = scalar_lea.vmem %s24, %s967
        %p969 = scmp.lt.s32.totalorder %s43, 1
        %s970 = scalar_select %p969, %s43, 1
        %s971 = smul.addr %s970, 8
        %s972 = scalar_lea.vmem %s0, %s971
        %p973 = scmp.lt.s32.totalorder %s43, 1
        %s974 = scalar_select %p973, %s43, 1
        %s975 = smul.addr %s974, 2
        %s976 = smul.addr %s975, 8
        %s977 = scalar_lea.vmem %s1, %s976
        %p978 = scmp.lt.s32.totalorder %s43, 1
        %s979 = scalar_select %p978, %s43, 1
        %s980 = scalar_lea.vmem %s3, %s979
        %p981 = scmp.lt.s32.totalorder %s43, 1
        %s982 = scalar_select %p981, %s43, 1
        %s983 = smul.addr %s982, 8
        %s984 = scalar_lea.vmem %s24, %s983
        %v985 = vld [vmem:[%s972] sm:$0xff]
        %v986 = vpack.c.bf16 %v985, %v985
        %v987 = vld [vmem:[#allocation2] sm:$0xff]
        %v988 = vld [vmem:[#allocation2 + $0x8] sm:$0xf]
        %v989 = vld [vmem:[#allocation2 + $0xc] sm:$0xff]
        %v990 = vld [vmem:[#allocation2 + $0x14] sm:$0xf]
        %v991 = vld [vmem:[#allocation2 + $0x18] sm:$0xff]
        %v992 = vld [vmem:[#allocation2 + $0x20] sm:$0xf]
        %v993 = vld [vmem:[#allocation2 + $0x24] sm:$0xff]
        %v994 = vld [vmem:[#allocation2 + $0x2c] sm:$0xf]
        %v995 = vld [vmem:[#allocation2 + $0x30] sm:$0xff]
        %v996 = vld [vmem:[#allocation2 + $0x38] sm:$0xf]
        %v997 = vld [vmem:[#allocation2 + $0x3c] sm:$0xff]
        %v998 = vld [vmem:[#allocation2 + $0x44] sm:$0xf]
        %v999 = vld [vmem:[#allocation2 + $0x48] sm:$0xff]
        %v1000 = vld [vmem:[#allocation2 + $0x50] sm:$0xf]
        %v1001 = vld [vmem:[#allocation2 + $0x54] sm:$0xff]
        %v1002 = vld [vmem:[#allocation2 + $0x5c] sm:$0xf]
        %v1003 = vld [vmem:[#allocation2 + $0x60] sm:$0xff]
        %v1004 = vld [vmem:[#allocation2 + $0x68] sm:$0xf]
        %v1005 = vld [vmem:[#allocation2 + $0x6c] sm:$0xff]
        %v1006 = vld [vmem:[#allocation2 + $0x74] sm:$0xf]
        %v1007 = vld [vmem:[#allocation2 + $0x78] sm:$0xff]
        %v1008 = vld [vmem:[#allocation2 + $0x80] sm:$0xf]
        %v1009 = vld [vmem:[#allocation2 + $0x84] sm:$0xff]
        %v1010 = vld [vmem:[#allocation2 + $0x8c] sm:$0xf]
        %v1011 = vld [vmem:[#allocation2 + $0x90] sm:$0xff]
        %v1012 = vld [vmem:[#allocation2 + $0x98] sm:$0xf]
        %v1013 = vld [vmem:[#allocation2 + $0x9c] sm:$0xff]
        %v1014 = vld [vmem:[#allocation2 + $0xa4] sm:$0xf]
        %v1015 = vld [vmem:[#allocation2 + $0xa8] sm:$0xff]
        %v1016 = vld [vmem:[#allocation2 + $0xb0] sm:$0xf]
        %v1017 = vld [vmem:[#allocation2 + $0xb4] sm:$0xff]
        %v1018 = vld [vmem:[#allocation2 + $0xbc] sm:$0xf]
        %v1019 = vld [vmem:[%s5] sm:$0x7]
        %v1021 = vperm.slane %v1019, 0
        %v1022 = vperm.slane %v1019, 1
        %v1023 = vperm.slane %v1019, 2
        %v1059 = vunpack.c.l.b16 %v987
        %v1060 = vunpack.c.h.b16 %v987
        %v1061 = vunpack.c.l.b16 %v988
        %v1062 = vunpack.c.l.b16 %v989
        %v1063 = vunpack.c.h.b16 %v989
        %v1064 = vunpack.c.l.b16 %v990
        %v1065 = vunpack.c.l.b16 %v991
        %v1066 = vunpack.c.h.b16 %v991
        %v1067 = vunpack.c.l.b16 %v992
        %v1068 = vunpack.c.l.b16 %v993
        %v1069 = vunpack.c.h.b16 %v993
        %v1070 = vunpack.c.l.b16 %v994
        %v1071 = vunpack.c.l.b16 %v995
        %v1072 = vunpack.c.h.b16 %v995
        %v1073 = vunpack.c.l.b16 %v996
        %v1074 = vunpack.c.l.b16 %v997
        %v1075 = vunpack.c.h.b16 %v997
        %v1076 = vunpack.c.l.b16 %v998
        %v1077 = vunpack.c.l.b16 %v999
        %v1078 = vunpack.c.h.b16 %v999
        %v1079 = vunpack.c.l.b16 %v1000
        %v1080 = vunpack.c.l.b16 %v1001
        %v1081 = vunpack.c.h.b16 %v1001
        %v1082 = vunpack.c.l.b16 %v1002
        %v1083 = vunpack.c.l.b16 %v1003
        %v1084 = vunpack.c.h.b16 %v1003
        %v1085 = vunpack.c.l.b16 %v1004
        %v1086 = vunpack.c.l.b16 %v1005
        %v1087 = vunpack.c.h.b16 %v1005
        %v1088 = vunpack.c.l.b16 %v1006
        %v1089 = vunpack.c.l.b16 %v1007
        %v1090 = vunpack.c.h.b16 %v1007
        %v1091 = vunpack.c.l.b16 %v1008
        %v1092 = vunpack.c.l.b16 %v1009
        %v1093 = vunpack.c.h.b16 %v1009
        %v1094 = vunpack.c.l.b16 %v1010
        %v1095 = vunpack.c.l.b16 %v1011
        %v1096 = vunpack.c.h.b16 %v1011
        %v1097 = vunpack.c.l.b16 %v1012
        %v1098 = vunpack.c.l.b16 %v1013
        %v1099 = vunpack.c.h.b16 %v1013
        %v1100 = vunpack.c.l.b16 %v1014
        %v1101 = vunpack.c.l.b16 %v1015
        %v1102 = vunpack.c.h.b16 %v1015
        %v1103 = vunpack.c.l.b16 %v1016
        %v1104 = vunpack.c.l.b16 %v1017
        %v1105 = vunpack.c.h.b16 %v1017
        %v1106 = vunpack.c.l.b16 %v1018
        %v1107 = vpack.c.b16 %v1062, %v1059
        %v1108 = vpack.c.b16 %v1063, %v1060
        %v1109 = vpack.c.b16 %v1064, %v1061
        %v1110 = vpack.c.b16 %v1068, %v1065
        %v1111 = vpack.c.b16 %v1069, %v1066
        %v1112 = vpack.c.b16 %v1070, %v1067
        %v1113 = vpack.c.b16 %v1074, %v1071
        %v1114 = vpack.c.b16 %v1075, %v1072
        %v1115 = vpack.c.b16 %v1076, %v1073
        %v1116 = vpack.c.b16 %v1080, %v1077
        %v1117 = vpack.c.b16 %v1081, %v1078
        %v1118 = vpack.c.b16 %v1082, %v1079
        %v1119 = vpack.c.b16 %v1086, %v1083
        %v1120 = vpack.c.b16 %v1087, %v1084
        %v1121 = vpack.c.b16 %v1088, %v1085
        %v1122 = vpack.c.b16 %v1092, %v1089
        %v1123 = vpack.c.b16 %v1093, %v1090
        %v1124 = vpack.c.b16 %v1094, %v1091
        %v1125 = vpack.c.b16 %v1098, %v1095
        %v1126 = vpack.c.b16 %v1099, %v1096
        %v1127 = vpack.c.b16 %v1100, %v1097
        %v1128 = vpack.c.b16 %v1104, %v1101
        %v1129 = vpack.c.b16 %v1105, %v1102
        %v1130 = vpack.c.b16 %v1106, %v1103
        %1155 = vmatpush.bf16.msra.mxu0 %v1128
        %1156 = vmatpush.bf16.msra.mxu0 %v1125
        %1157 = vmatpush.bf16.msra.mxu0 %v1122
        %1158 = vmatpush.bf16.msra.mxu0 %v1119
        %1159 = vmatpush.bf16.msra.mxu0 %v1116
        %1160 = vmatpush.bf16.msra.mxu0 %v1113
        %1161 = vmatpush.bf16.msra.mxu0 %v1110
        %1162 = vmatpush.bf16.msra.mxu0 %v1107
        %1163 = vmatmul.bf16.gmra.mxu0 %v986
        %v1164 = vpop.f32.mrf.mxu0
        %v1165 = vadd.f32 %v1021, %v1164
        %v1166 = vpop.f32.mrf.mxu0
        %1167 = vdwg.mxu0
        %1168 = vmatpush.bf16.msra.mxu0 %v1129
        %1169 = vmatpush.bf16.msra.mxu0 %v1126
        %1170 = vmatpush.bf16.msra.mxu0 %v1123
        %1171 = vmatpush.bf16.msra.mxu0 %v1120
        %1172 = vmatpush.bf16.msra.mxu0 %v1117
        %1173 = vmatpush.bf16.msra.mxu0 %v1114
        %1174 = vmatpush.bf16.msra.mxu0 %v1111
        %1175 = vmatpush.bf16.msra.mxu0 %v1108
        %1176 = vmatmul.bf16.gmra.mxu0 %v986
        %v1177 = vpop.f32.mrf.mxu0
        %v1178 = vadd.f32 %v1022, %v1177
        %v1179 = vpop.f32.mrf.mxu0
        %1180 = vdwg.mxu0
        %1181 = vmatpush.bf16.msra.mxu0 %v1130
        %1182 = vmatpush.bf16.msra.mxu0 %v1127
        %1183 = vmatpush.bf16.msra.mxu0 %v1124
        %1184 = vmatpush.bf16.msra.mxu0 %v1121
        %1185 = vmatpush.bf16.msra.mxu0 %v1118
        %1186 = vmatpush.bf16.msra.mxu0 %v1115
        %1187 = vmatpush.bf16.msra.mxu0 %v1112
        %1188 = vmatpush.bf16.msra.mxu0 %v1109
        %1189 = vmatmul.bf16.gmra.mxu0 %v986
        %v1190 = vpop.f32.mrf.mxu0
        %v1191 = vadd.f32 %v1023, %v1190
        %v1192 = vpop.f32.mrf.mxu0
        %1193 = vdwg.mxu0
        %v1194 = vld [vmem:[%s2] sm:$0xff]
        %v1195 = vld [vmem:[%s980] sm:$0x1]
        %v1197 = vperm.slane %v1195, 0
        %v1199 = vadd.f32 %v1194, %v1197
        %vm1200 = vcmask 261120
        %v1202 = vsel %vm1200, %v1165, 0
        %v1205 = vsel %vm1200, %v1178, 0
        %1207 = vmatpush.xpose.msra.mxu0 0.0
        %1208 = vmatpush.xpose.msra.mxu0 0.0
        %1209 = vmatpush.xpose.msra.mxu0 0.0
        %1210 = vmatpush.xpose.msra.mxu0 0.0
        %1211 = vmatpush.xpose.msra.mxu0 0.0
        %1212 = vmatpush.xpose.msra.mxu0 0.0
        %1213 = vmatpush.xpose.msra.mxu0 0.0
        %1214 = vmatpush.xpose.msra.mxu0 0.0
        %1215 = vmatpush.xpose.msra.mxu0 0.0
        %1216 = vmatpush.xpose.msra.mxu0 0.0
        %1217 = vmatpush.xpose.msra.mxu0 0.0
        %1218 = vmatpush.xpose.msra.mxu0 0.0
        %1219 = vmatpush.xpose.msra.mxu0 0.0
        %1220 = vmatpush.xpose.msra.mxu0 0.0
        %1221 = vmatpush.xpose.msra.mxu0 0.0
        %1222 = vmatpush.xpose.msra.mxu0 %v1205
        %1223 = vmatmul.f32.gmra.mxu0 %v1202
        %v1224 = vpop.f32.mrf.mxu0
        %v1225 = vadd.f32 0.0, %v1224
        %1226 = vdwg.mxu0
        %v1227 = vmul.f32 %v1225, 0.17677669
        %v1228 = vadd.f32 %v1227, %v1199
        %vm1229 = vcmask 64512
        %v1230 = vsel %vm1229, %v1228, -inf
        %1231 = vmax.xlane.f32.xlu0 %v1230
        %v1232 = vpop.xlane.xlu0 %1231
        %v1233 = vsub.f32 %v1228, %v1232
        %v1234 = vmul.f32 %v1233, 1.442695
        %v1235 = vpow.pop %v1234
        %v1236 = vsel %vm1229, %v1235, 0.0
        %1237 = vadd.xlane.f32.xlu0 %v1236
        %v1238 = vpop.xlane.xlu0 %1237
        %v1239 = vrcp.pop %v1238
        %v1240 = vmul.f32 %v1235, %v1239
        %v1242 = vsel %vm1229, %v1240, 0
        %1244 = vmatpush.msra.mxu0 0.0
        %1245 = vmatpush.msra.mxu0 0.0
        %1246 = vmatpush.msra.mxu0 0.0
        %1247 = vmatpush.msra.mxu0 0.0
        %1248 = vmatpush.msra.mxu0 0.0
        %1249 = vmatpush.msra.mxu0 0.0
        %1250 = vmatpush.msra.mxu0 0.0
        %1251 = vmatpush.msra.mxu0 0.0
        %1252 = vmatpush.msra.mxu0 0.0
        %1253 = vmatpush.msra.mxu0 0.0
        %1254 = vmatpush.msra.mxu0 0.0
        %1255 = vmatpush.msra.mxu0 0.0
        %1256 = vmatpush.msra.mxu0 0.0
        %1257 = vmatpush.msra.mxu0 0.0
        %1258 = vmatpush.msra.mxu0 0.0
        %1259 = vmatpush.msra.mxu0 %v1191
        %1260 = vmatmul.f32.gmra.mxu0 %v1242
        %v1261 = vpop.f32.mrf.mxu0
        %v1262 = vadd.f32 0.0, %v1261
        %1263 = vdwg.mxu0
        %1264 = vrot.lane.b32.xlu0 %v1165, 96
        %v1265 = vpop.permute.xlu0 %1264
        %1266 = vrot.lane.b32.xlu0 %v1178, 96
        %v1267 = vpop.permute.xlu0 %1266
        %v1268 = vsel %vm1200, %v1265, 0
        %v1270 = vsel %vm1200, %v1267, 0
        %1272 = vmatpush.xpose.msra.mxu0 0.0
        %1273 = vmatpush.xpose.msra.mxu0 0.0
        %1274 = vmatpush.xpose.msra.mxu0 0.0
        %1275 = vmatpush.xpose.msra.mxu0 0.0
        %1276 = vmatpush.xpose.msra.mxu0 0.0
        %1277 = vmatpush.xpose.msra.mxu0 0.0
        %1278 = vmatpush.xpose.msra.mxu0 0.0
        %1279 = vmatpush.xpose.msra.mxu0 0.0
        %1280 = vmatpush.xpose.msra.mxu0 0.0
        %1281 = vmatpush.xpose.msra.mxu0 0.0
        %1282 = vmatpush.xpose.msra.mxu0 0.0
        %1283 = vmatpush.xpose.msra.mxu0 0.0
        %1284 = vmatpush.xpose.msra.mxu0 0.0
        %1285 = vmatpush.xpose.msra.mxu0 0.0
        %1286 = vmatpush.xpose.msra.mxu0 0.0
        %1287 = vmatpush.xpose.msra.mxu0 %v1270
        %1288 = vmatmul.f32.gmra.mxu0 %v1268
        %v1289 = vpop.f32.mrf.mxu0
        %v1290 = vadd.f32 0.0, %v1289
        %1291 = vdwg.mxu0
        %v1292 = vmul.f32 %v1290, 0.17677669
        %v1293 = vadd.f32 %v1292, %v1199
        %v1294 = vsel %vm1229, %v1293, -inf
        %1295 = vmax.xlane.f32.xlu0 %v1294
        %v1296 = vpop.xlane.xlu0 %1295
        %v1297 = vsub.f32 %v1293, %v1296
        %v1298 = vmul.f32 %v1297, 1.442695
        %v1299 = vpow.pop %v1298
        %v1300 = vsel %vm1229, %v1299, 0.0
        %1301 = vadd.xlane.f32.xlu0 %v1300
        %v1302 = vpop.xlane.xlu0 %1301
        %v1303 = vrcp.pop %v1302
        %v1304 = vmul.f32 %v1299, %v1303
        %1306 = vrot.lane.b32.xlu0 %v1191, 96
        %v1307 = vpop.permute.xlu0 %1306
        %v1310 = vsel %vm1229, %v1304, 0
        %1312 = vmatpush.msra.mxu0 0.0
        %1313 = vmatpush.msra.mxu0 0.0
        %1314 = vmatpush.msra.mxu0 0.0
        %1315 = vmatpush.msra.mxu0 0.0
        %1316 = vmatpush.msra.mxu0 0.0
        %1317 = vmatpush.msra.mxu0 0.0
        %1318 = vmatpush.msra.mxu0 0.0
        %1319 = vmatpush.msra.mxu0 0.0
        %1320 = vmatpush.msra.mxu0 0.0
        %1321 = vmatpush.msra.mxu0 0.0
        %1322 = vmatpush.msra.mxu0 0.0
        %1323 = vmatpush.msra.mxu0 0.0
        %1324 = vmatpush.msra.mxu0 0.0
        %1325 = vmatpush.msra.mxu0 0.0
        %1326 = vmatpush.msra.mxu0 0.0
        %1327 = vmatpush.msra.mxu0 %v1307
        %1328 = vmatmul.f32.gmra.mxu0 %v1310
        %v1329 = vpop.f32.mrf.mxu0
        %v1330 = vadd.f32 0.0, %v1329
        %1331 = vdwg.mxu0
        %1332 = vrot.lane.b32.xlu0 %v1165, 64
        %v1333 = vpop.permute.xlu0 %1332
        %1334 = vrot.lane.b32.xlu0 %v1178, 64
        %v1335 = vpop.permute.xlu0 %1334
        %v1336 = vsel %vm1200, %v1333, 0
        %v1338 = vsel %vm1200, %v1335, 0
        %1340 = vmatpush.xpose.msra.mxu0 0.0
        %1341 = vmatpush.xpose.msra.mxu0 0.0
        %1342 = vmatpush.xpose.msra.mxu0 0.0
        %1343 = vmatpush.xpose.msra.mxu0 0.0
        %1344 = vmatpush.xpose.msra.mxu0 0.0
        %1345 = vmatpush.xpose.msra.mxu0 0.0
        %1346 = vmatpush.xpose.msra.mxu0 0.0
        %1347 = vmatpush.xpose.msra.mxu0 0.0
        %1348 = vmatpush.xpose.msra.mxu0 0.0
        %1349 = vmatpush.xpose.msra.mxu0 0.0
        %1350 = vmatpush.xpose.msra.mxu0 0.0
        %1351 = vmatpush.xpose.msra.mxu0 0.0
        %1352 = vmatpush.xpose.msra.mxu0 0.0
        %1353 = vmatpush.xpose.msra.mxu0 0.0
        %1354 = vmatpush.xpose.msra.mxu0 0.0
        %1355 = vmatpush.xpose.msra.mxu0 %v1338
        %1356 = vmatmul.f32.gmra.mxu0 %v1336
        %v1357 = vpop.f32.mrf.mxu0
        %v1358 = vadd.f32 0.0, %v1357
        %1359 = vdwg.mxu0
        %v1360 = vmul.f32 %v1358, 0.17677669
        %v1361 = vadd.f32 %v1360, %v1199
        %v1362 = vsel %vm1229, %v1361, -inf
        %1363 = vmax.xlane.f32.xlu0 %v1362
        %v1364 = vpop.xlane.xlu0 %1363
        %v1365 = vsub.f32 %v1361, %v1364
        %v1366 = vmul.f32 %v1365, 1.442695
        %v1367 = vpow.pop %v1366
        %v1368 = vsel %vm1229, %v1367, 0.0
        %1369 = vadd.xlane.f32.xlu0 %v1368
        %v1370 = vpop.xlane.xlu0 %1369
        %v1371 = vrcp.pop %v1370
        %v1372 = vmul.f32 %v1367, %v1371
        %1373 = vrot.lane.b32.xlu0 %v1191, 64
        %v1374 = vpop.permute.xlu0 %1373
        %v1377 = vsel %vm1229, %v1372, 0
        %1379 = vmatpush.msra.mxu0 0.0
        %1380 = vmatpush.msra.mxu0 0.0
        %1381 = vmatpush.msra.mxu0 0.0
        %1382 = vmatpush.msra.mxu0 0.0
        %1383 = vmatpush.msra.mxu0 0.0
        %1384 = vmatpush.msra.mxu0 0.0
        %1385 = vmatpush.msra.mxu0 0.0
        %1386 = vmatpush.msra.mxu0 0.0
        %1387 = vmatpush.msra.mxu0 0.0
        %1388 = vmatpush.msra.mxu0 0.0
        %1389 = vmatpush.msra.mxu0 0.0
        %1390 = vmatpush.msra.mxu0 0.0
        %1391 = vmatpush.msra.mxu0 0.0
        %1392 = vmatpush.msra.mxu0 0.0
        %1393 = vmatpush.msra.mxu0 0.0
        %1394 = vmatpush.msra.mxu0 %v1374
        %1395 = vmatmul.f32.gmra.mxu0 %v1377
        %v1396 = vpop.f32.mrf.mxu0
        %v1397 = vadd.f32 0.0, %v1396
        %1398 = vdwg.mxu0
        %1399 = vrot.lane.b32.xlu0 %v1165, 32
        %v1400 = vpop.permute.xlu0 %1399
        %1401 = vrot.lane.b32.xlu0 %v1178, 32
        %v1402 = vpop.permute.xlu0 %1401
        %v1403 = vsel %vm1200, %v1400, 0
        %v1405 = vsel %vm1200, %v1402, 0
        %1407 = vmatpush.xpose.msra.mxu0 0.0
        %1408 = vmatpush.xpose.msra.mxu0 0.0
        %1409 = vmatpush.xpose.msra.mxu0 0.0
        %1410 = vmatpush.xpose.msra.mxu0 0.0
        %1411 = vmatpush.xpose.msra.mxu0 0.0
        %1412 = vmatpush.xpose.msra.mxu0 0.0
        %1413 = vmatpush.xpose.msra.mxu0 0.0
        %1414 = vmatpush.xpose.msra.mxu0 0.0
        %1415 = vmatpush.xpose.msra.mxu0 0.0
        %1416 = vmatpush.xpose.msra.mxu0 0.0
        %1417 = vmatpush.xpose.msra.mxu0 0.0
        %1418 = vmatpush.xpose.msra.mxu0 0.0
        %1419 = vmatpush.xpose.msra.mxu0 0.0
        %1420 = vmatpush.xpose.msra.mxu0 0.0
        %1421 = vmatpush.xpose.msra.mxu0 0.0
        %1422 = vmatpush.xpose.msra.mxu0 %v1405
        %1423 = vmatmul.f32.gmra.mxu0 %v1403
        %v1424 = vpop.f32.mrf.mxu0
        %v1425 = vadd.f32 0.0, %v1424
        %1426 = vdwg.mxu0
        %v1427 = vmul.f32 %v1425, 0.17677669
        %v1428 = vadd.f32 %v1427, %v1199
        %v1429 = vsel %vm1229, %v1428, -inf
        %1430 = vmax.xlane.f32.xlu0 %v1429
        %v1431 = vpop.xlane.xlu0 %1430
        %v1432 = vsub.f32 %v1428, %v1431
        %v1433 = vmul.f32 %v1432, 1.442695
        %v1434 = vpow.pop %v1433
        %v1435 = vsel %vm1229, %v1434, 0.0
        %1436 = vadd.xlane.f32.xlu0 %v1435
        %v1437 = vpop.xlane.xlu0 %1436
        %v1438 = vrcp.pop %v1437
        %v1439 = vmul.f32 %v1434, %v1438
        %1440 = vrot.lane.b32.xlu0 %v1191, 32
        %v1441 = vpop.permute.xlu0 %1440
        %v1444 = vsel %vm1229, %v1439, 0
        %1446 = vmatpush.msra.mxu0 0.0
        %1447 = vmatpush.msra.mxu0 0.0
        %1448 = vmatpush.msra.mxu0 0.0
        %1449 = vmatpush.msra.mxu0 0.0
        %1450 = vmatpush.msra.mxu0 0.0
        %1451 = vmatpush.msra.mxu0 0.0
        %1452 = vmatpush.msra.mxu0 0.0
        %1453 = vmatpush.msra.mxu0 0.0
        %1454 = vmatpush.msra.mxu0 0.0
        %1455 = vmatpush.msra.mxu0 0.0
        %1456 = vmatpush.msra.mxu0 0.0
        %1457 = vmatpush.msra.mxu0 0.0
        %1458 = vmatpush.msra.mxu0 0.0
        %1459 = vmatpush.msra.mxu0 0.0
        %1460 = vmatpush.msra.mxu0 0.0
        %1461 = vmatpush.msra.mxu0 %v1441
        %1462 = vmatmul.f32.gmra.mxu0 %v1444
        %v1463 = vpop.f32.mrf.mxu0
        %v1464 = vadd.f32 0.0, %v1463
        %1465 = vdwg.mxu0
        %1467 = vrot.lane.b32.xlu0 %v1330, 32
        %v1468 = vpop.permute.xlu0 %1467
        %1471 = vrot.lane.b32.xlu0 %v1397, 64
        %v1472 = vpop.permute.xlu0 %1471
        %1475 = vrot.lane.b32.xlu0 %v1464, 96
        %v1476 = vpop.permute.xlu0 %1475
        %v1478 = vsel %vm1200, %v1262, %v1468
        %vm1479 = vcmask 523264
        %v1480 = vsel %vm1479, %v1478, %v1472
        %vm1481 = vcmask 785408
        %v1482 = vsel %vm1481, %v1480, %v1476
        %v1483 = vpack.c.bf16 %v1482, %v1482
        %v1484 = vld [vmem:[#allocation4] sm:$0xf]
        %v1485 = vld [vmem:[#allocation4 + $0x4] sm:$0xf]
        %v1486 = vld [vmem:[#allocation4 + $0x8] sm:$0xf]
        %v1487 = vld [vmem:[#allocation4 + $0xc] sm:$0xf]
        %v1488 = vld [vmem:[#allocation4 + $0x10] sm:$0xf]
        %v1489 = vld [vmem:[#allocation4 + $0x14] sm:$0xf]
        %v1490 = vld [vmem:[#allocation4 + $0x18] sm:$0xf]
        %v1491 = vld [vmem:[#allocation4 + $0x1c] sm:$0xf]
        %v1492 = vld [vmem:[#allocation4 + $0x20] sm:$0xf]
        %v1493 = vld [vmem:[#allocation4 + $0x24] sm:$0xf]
        %v1494 = vld [vmem:[#allocation4 + $0x28] sm:$0xf]
        %v1495 = vld [vmem:[#allocation4 + $0x2c] sm:$0xf]
        %v1496 = vld [vmem:[#allocation4 + $0x30] sm:$0xf]
        %v1497 = vld [vmem:[#allocation4 + $0x34] sm:$0xf]
        %v1498 = vld [vmem:[#allocation4 + $0x38] sm:$0xf]
        %v1499 = vld [vmem:[#allocation4 + $0x3c] sm:$0xf]
        %v1500 = vld [vmem:[%s7] sm:$0x1]
        %v1502 = vperm.slane %v1500, 0
        %v1520 = vunpack.c.l.b16 %v1484
        %v1521 = vunpack.c.l.b16 %v1485
        %v1522 = vunpack.c.l.b16 %v1486
        %v1523 = vunpack.c.l.b16 %v1487
        %v1524 = vunpack.c.l.b16 %v1488
        %v1525 = vunpack.c.l.b16 %v1489
        %v1526 = vunpack.c.l.b16 %v1490
        %v1527 = vunpack.c.l.b16 %v1491
        %v1528 = vunpack.c.l.b16 %v1492
        %v1529 = vunpack.c.l.b16 %v1493
        %v1530 = vunpack.c.l.b16 %v1494
        %v1531 = vunpack.c.l.b16 %v1495
        %v1532 = vunpack.c.l.b16 %v1496
        %v1533 = vunpack.c.l.b16 %v1497
        %v1534 = vunpack.c.l.b16 %v1498
        %v1535 = vunpack.c.l.b16 %v1499
        %v1536 = vpack.c.b16 %v1521, %v1520
        %v1537 = vpack.c.b16 %v1523, %v1522
        %v1538 = vpack.c.b16 %v1525, %v1524
        %v1539 = vpack.c.b16 %v1527, %v1526
        %v1540 = vpack.c.b16 %v1529, %v1528
        %v1541 = vpack.c.b16 %v1531, %v1530
        %v1542 = vpack.c.b16 %v1533, %v1532
        %v1543 = vpack.c.b16 %v1535, %v1534
        %1552 = vmatpush.bf16.msra.mxu0 %v1543
        %1553 = vmatpush.bf16.msra.mxu0 %v1542
        %1554 = vmatpush.bf16.msra.mxu0 %v1541
        %1555 = vmatpush.bf16.msra.mxu0 %v1540
        %1556 = vmatpush.bf16.msra.mxu0 %v1539
        %1557 = vmatpush.bf16.msra.mxu0 %v1538
        %1558 = vmatpush.bf16.msra.mxu0 %v1537
        %1559 = vmatpush.bf16.msra.mxu0 %v1536
        %1560 = vmatmul.bf16.gmra.mxu0 %v1483
        %v1561 = vpop.f32.mrf.mxu0
        %v1562 = vadd.f32 %v1502, %v1561
        %v1563 = vpop.f32.mrf.mxu0
        %1564 = vdwg.mxu0
        %v1565 = vadd.f32 %v985, %v1562
        %v1566 = vld [vmem:[%s8] sm:$0x1]
        %v1567 = vld [vmem:[%s9] sm:$0x1]
        %1568 = vadd.xlane.f32.xlu0 %v1565
        %v1569 = vpop.xlane.xlu0 %1568
        %v1570 = vrcp.pop 128.0
        %v1571 = vmul.f32 128.0, %v1570
        %v1572 = vsub.f32 1.0, %v1571
        %v1573 = vmul.f32 %v1570, %v1572
        %v1574 = vadd.f32 %v1570, %v1573
        %vm1575 = vweird.f32 %v1570
        %v1576 = vsel %vm1575, %v1570, %v1574
        %v1577 = vmul.f32 %v1569, %v1576
        %v1578 = vsub.f32 %v1565, %v1577
        %v1579 = vmul.f32 %v1578, %v1578
        %1580 = vadd.xlane.f32.xlu0 %v1579
        %v1581 = vpop.xlane.xlu0 %1580
        %v1582 = vmul.f32 %v1581, %v1576
        %v1583 = vadd.f32 %v1582, 1e-05
        %v1584 = vrsqrt.pop %v1583
        %v1585 = vmul.f32 %v1584, %v1583
        %v1586 = vmul.f32 %v1585, %v1584
        %v1587 = vmul.f32 0.5, %v1586
        %v1588 = vsub.f32 1.5, %v1587
        %v1589 = vmul.f32 %v1584, %v1588
        %vm1590 = vweird.f32 %v1583
        %vm1591 = vweird.f32 %v1584
        %vm1592 = vmor %vm1590, %vm1591
        %v1593 = vsel %vm1592, %v1584, %v1589
        %v1594 = vmul.f32 %v1578, %v1593
        %v1596 = vperm.slane %v1566, 0
        %v1598 = vmul.f32 %v1594, %v1596
        %v1600 = vperm.slane %v1567, 0
        %v1602 = vadd.f32 %v1598, %v1600
        %v1603 = vld [vmem:[%s977] sm:$0xff]
        %v1604 = vld [vmem:[%s977 + $0x8] sm:$0xf]
        %v1605 = vpack.c.bf16 %v1602, %v1602
        %v1606 = vld [vmem:[#allocation6] sm:$0xf]
        %v1607 = vld [vmem:[#allocation6 + $0x4] sm:$0xf]
        %v1608 = vld [vmem:[#allocation6 + $0x8] sm:$0xf]
        %v1609 = vld [vmem:[#allocation6 + $0xc] sm:$0xf]
        %v1610 = vld [vmem:[#allocation6 + $0x10] sm:$0xf]
        %v1611 = vld [vmem:[#allocation6 + $0x14] sm:$0xf]
        %v1612 = vld [vmem:[#allocation6 + $0x18] sm:$0xf]
        %v1613 = vld [vmem:[#allocation6 + $0x1c] sm:$0xf]
        %v1614 = vld [vmem:[#allocation6 + $0x20] sm:$0xf]
        %v1615 = vld [vmem:[#allocation6 + $0x24] sm:$0xf]
        %v1616 = vld [vmem:[#allocation6 + $0x28] sm:$0xf]
        %v1617 = vld [vmem:[#allocation6 + $0x2c] sm:$0xf]
        %v1618 = vld [vmem:[#allocation6 + $0x30] sm:$0xf]
        %v1619 = vld [vmem:[#allocation6 + $0x34] sm:$0xf]
        %v1620 = vld [vmem:[#allocation6 + $0x38] sm:$0xf]
        %v1621 = vld [vmem:[#allocation6 + $0x3c] sm:$0xf]
        %v1622 = vld [vmem:[%s11] sm:$0x1]
        %v1624 = vperm.slane %v1622, 0
        %v1642 = vunpack.c.l.b16 %v1606
        %v1643 = vunpack.c.l.b16 %v1607
        %v1644 = vunpack.c.l.b16 %v1608
        %v1645 = vunpack.c.l.b16 %v1609
        %v1646 = vunpack.c.l.b16 %v1610
        %v1647 = vunpack.c.l.b16 %v1611
        %v1648 = vunpack.c.l.b16 %v1612
        %v1649 = vunpack.c.l.b16 %v1613
        %v1650 = vunpack.c.l.b16 %v1614
        %v1651 = vunpack.c.l.b16 %v1615
        %v1652 = vunpack.c.l.b16 %v1616
        %v1653 = vunpack.c.l.b16 %v1617
        %v1654 = vunpack.c.l.b16 %v1618
        %v1655 = vunpack.c.l.b16 %v1619
        %v1656 = vunpack.c.l.b16 %v1620
        %v1657 = vunpack.c.l.b16 %v1621
        %v1658 = vpack.c.b16 %v1643, %v1642
        %v1659 = vpack.c.b16 %v1645, %v1644
        %v1660 = vpack.c.b16 %v1647, %v1646
        %v1661 = vpack.c.b16 %v1649, %v1648
        %v1662 = vpack.c.b16 %v1651, %v1650
        %v1663 = vpack.c.b16 %v1653, %v1652
        %v1664 = vpack.c.b16 %v1655, %v1654
        %v1665 = vpack.c.b16 %v1657, %v1656
        %1674 = vmatpush.bf16.msra.mxu0 %v1665
        %1675 = vmatpush.bf16.msra.mxu0 %v1664
        %1676 = vmatpush.bf16.msra.mxu0 %v1663
        %1677 = vmatpush.bf16.msra.mxu0 %v1662
        %1678 = vmatpush.bf16.msra.mxu0 %v1661
        %1679 = vmatpush.bf16.msra.mxu0 %v1660
        %1680 = vmatpush.bf16.msra.mxu0 %v1659
        %1681 = vmatpush.bf16.msra.mxu0 %v1658
        %1682 = vmatmul.bf16.gmra.mxu0 %v1605
        %v1683 = vpop.f32.mrf.mxu0
        %v1684 = vadd.f32 %v1624, %v1683
        %v1685 = vpop.f32.mrf.mxu0
        %1686 = vdwg.mxu0
        %v1687 = vpack.c.bf16 %v1604, %v1603
        %v1688 = vld [vmem:[#allocation7] sm:$0xff]
        %v1689 = vld [vmem:[#allocation7 + $0x8] sm:$0xff]
        %v1690 = vld [vmem:[#allocation7 + $0x10] sm:$0xff]
        %v1691 = vld [vmem:[#allocation7 + $0x18] sm:$0xff]
        %v1692 = vld [vmem:[#allocation7 + $0x20] sm:$0xff]
        %v1693 = vld [vmem:[#allocation7 + $0x28] sm:$0xff]
        %v1694 = vld [vmem:[#allocation7 + $0x30] sm:$0xff]
        %v1695 = vld [vmem:[#allocation7 + $0x38] sm:$0xff]
        %v1696 = vld [vmem:[#allocation7 + $0x40] sm:$0xff]
        %v1697 = vld [vmem:[#allocation7 + $0x48] sm:$0xff]
        %v1698 = vld [vmem:[#allocation7 + $0x50] sm:$0xff]
        %v1699 = vld [vmem:[#allocation7 + $0x58] sm:$0xff]
        %v1700 = vld [vmem:[#allocation7 + $0x60] sm:$0xff]
        %v1701 = vld [vmem:[#allocation7 + $0x68] sm:$0xff]
        %v1702 = vld [vmem:[#allocation7 + $0x70] sm:$0xff]
        %v1703 = vld [vmem:[#allocation7 + $0x78] sm:$0xff]
        %v1704 = vld [vmem:[%s13] sm:$0x3]
        %v1706 = vperm.slane %v1704, 0
        %v1707 = vperm.slane %v1704, 1
        %v1726 = vunpack.c.l.b16 %v1688
        %v1727 = vunpack.c.h.b16 %v1688
        %v1728 = vunpack.c.l.b16 %v1689
        %v1729 = vunpack.c.h.b16 %v1689
        %v1730 = vunpack.c.l.b16 %v1690
        %v1731 = vunpack.c.h.b16 %v1690
        %v1732 = vunpack.c.l.b16 %v1691
        %v1733 = vunpack.c.h.b16 %v1691
        %v1734 = vunpack.c.l.b16 %v1692
        %v1735 = vunpack.c.h.b16 %v1692
        %v1736 = vunpack.c.l.b16 %v1693
        %v1737 = vunpack.c.h.b16 %v1693
        %v1738 = vunpack.c.l.b16 %v1694
        %v1739 = vunpack.c.h.b16 %v1694
        %v1740 = vunpack.c.l.b16 %v1695
        %v1741 = vunpack.c.h.b16 %v1695
        %v1742 = vunpack.c.l.b16 %v1696
        %v1743 = vunpack.c.h.b16 %v1696
        %v1744 = vunpack.c.l.b16 %v1697
        %v1745 = vunpack.c.h.b16 %v1697
        %v1746 = vunpack.c.l.b16 %v1698
        %v1747 = vunpack.c.h.b16 %v1698
        %v1748 = vunpack.c.l.b16 %v1699
        %v1749 = vunpack.c.h.b16 %v1699
        %v1750 = vunpack.c.l.b16 %v1700
        %v1751 = vunpack.c.h.b16 %v1700
        %v1752 = vunpack.c.l.b16 %v1701
        %v1753 = vunpack.c.h.b16 %v1701
        %v1754 = vunpack.c.l.b16 %v1702
        %v1755 = vunpack.c.h.b16 %v1702
        %v1756 = vunpack.c.l.b16 %v1703
        %v1757 = vunpack.c.h.b16 %v1703
        %v1758 = vpack.c.b16 %v1728, %v1726
        %v1759 = vpack.c.b16 %v1729, %v1727
        %v1760 = vpack.c.b16 %v1732, %v1730
        %v1761 = vpack.c.b16 %v1733, %v1731
        %v1762 = vpack.c.b16 %v1736, %v1734
        %v1763 = vpack.c.b16 %v1737, %v1735
        %v1764 = vpack.c.b16 %v1740, %v1738
        %v1765 = vpack.c.b16 %v1741, %v1739
        %v1766 = vpack.c.b16 %v1744, %v1742
        %v1767 = vpack.c.b16 %v1745, %v1743
        %v1768 = vpack.c.b16 %v1748, %v1746
        %v1769 = vpack.c.b16 %v1749, %v1747
        %v1770 = vpack.c.b16 %v1752, %v1750
        %v1771 = vpack.c.b16 %v1753, %v1751
        %v1772 = vpack.c.b16 %v1756, %v1754
        %v1773 = vpack.c.b16 %v1757, %v1755
        %1790 = vmatpush.bf16.msra.mxu0 %v1772
        %1791 = vmatpush.bf16.msra.mxu0 %v1770
        %1792 = vmatpush.bf16.msra.mxu0 %v1768
        %1793 = vmatpush.bf16.msra.mxu0 %v1766
        %1794 = vmatpush.bf16.msra.mxu0 %v1764
        %1795 = vmatpush.bf16.msra.mxu0 %v1762
        %1796 = vmatpush.bf16.msra.mxu0 %v1760
        %1797 = vmatpush.bf16.msra.mxu0 %v1758
        %1798 = vmatmul.bf16.gmra.mxu0 %v1687
        %v1799 = vpop.f32.mrf.mxu0
        %v1800 = vadd.f32 %v1706, %v1799
        %v1801 = vpop.f32.mrf.mxu0
        %v1802 = vadd.f32 %v1706, %v1801
        %1803 = vdwg.mxu0
        %1804 = vmatpush.bf16.msra.mxu0 %v1773
        %1805 = vmatpush.bf16.msra.mxu0 %v1771
        %1806 = vmatpush.bf16.msra.mxu0 %v1769
        %1807 = vmatpush.bf16.msra.mxu0 %v1767
        %1808 = vmatpush.bf16.msra.mxu0 %v1765
        %1809 = vmatpush.bf16.msra.mxu0 %v1763
        %1810 = vmatpush.bf16.msra.mxu0 %v1761
        %1811 = vmatpush.bf16.msra.mxu0 %v1759
        %1812 = vmatmul.bf16.gmra.mxu0 %v1687
        %v1813 = vpop.f32.mrf.mxu0
        %v1814 = vadd.f32 %v1707, %v1813
        %v1815 = vpop.f32.mrf.mxu0
        %v1816 = vadd.f32 %v1707, %v1815
        %1817 = vdwg.mxu0
        %v1819 = vsel %vm1200, %v1684, 0
        %v1822 = vsel %vm1200, %v1800, 0
        %v1825 = vsel %vm1200, %v1802, 0
        %1827 = vmatpush.xpose.msra.mxu0 0.0
        %1828 = vmatpush.xpose.msra.mxu0 0.0
        %1829 = vmatpush.xpose.msra.mxu0 0.0
        %1830 = vmatpush.xpose.msra.mxu0 0.0
        %1831 = vmatpush.xpose.msra.mxu0 0.0
        %1832 = vmatpush.xpose.msra.mxu0 0.0
        %1833 = vmatpush.xpose.msra.mxu0 0.0
        %1834 = vmatpush.xpose.msra.mxu0 0.0
        %1835 = vmatpush.xpose.msra.mxu0 0.0
        %1836 = vmatpush.xpose.msra.mxu0 0.0
        %1837 = vmatpush.xpose.msra.mxu0 0.0
        %1838 = vmatpush.xpose.msra.mxu0 0.0
        %1839 = vmatpush.xpose.msra.mxu0 0.0
        %1840 = vmatpush.xpose.msra.mxu0 0.0
        %1841 = vmatpush.xpose.msra.mxu0 %v1825
        %1842 = vmatpush.xpose.msra.mxu0 %v1822
        %1843 = vmatmul.f32.gmra.mxu0 %v1819
        %v1844 = vpop.f32.mrf.mxu0
        %v1845 = vadd.f32 0.0, %v1844
        %1846 = vdwg.mxu0
        %v1847 = vmul.f32 %v1845, 0.17677669
        %vm1848 = vcmask 97280
        %v1849 = vsel %vm1848, %v1847, -inf
        %1850 = vmax.xlane.f32.xlu0 %v1849
        %v1851 = vpop.xlane.xlu0 %1850
        %v1852 = vsub.f32 %v1847, %v1851
        %v1853 = vmul.f32 %v1852, 1.442695
        %v1854 = vpow.pop %v1853
        %v1855 = vsel %vm1848, %v1854, 0.0
        %1856 = vadd.xlane.f32.xlu0 %v1855
        %v1857 = vpop.xlane.xlu0 %1856
        %v1858 = vrcp.pop %v1857
        %v1859 = vmul.f32 %v1854, %v1858
        %v1861 = vsel %vm1848, %v1859, 0
        %vm1863 = vcmask 1043456
        %v1865 = vsel %vm1863, %v1816, 0
        %1867 = vmatpush.msra.mxu0 0.0
        %1868 = vmatpush.msra.mxu0 0.0
        %1869 = vmatpush.msra.mxu0 0.0
        %1870 = vmatpush.msra.mxu0 0.0
        %1871 = vmatpush.msra.mxu0 0.0
        %1872 = vmatpush.msra.mxu0 0.0
        %1873 = vmatpush.msra.mxu0 0.0
        %1874 = vmatpush.msra.mxu0 0.0
        %1875 = vmatpush.msra.mxu0 0.0
        %1876 = vmatpush.msra.mxu0 0.0
        %1877 = vmatpush.msra.mxu0 0.0
        %1878 = vmatpush.msra.mxu0 0.0
        %1879 = vmatpush.msra.mxu0 0.0
        %1880 = vmatpush.msra.mxu0 0.0
        %1881 = vmatpush.msra.mxu0 %v1865
        %1882 = vmatpush.msra.mxu0 %v1814
        %1883 = vmatmul.f32.gmra.mxu0 %v1861
        %v1884 = vpop.f32.mrf.mxu0
        %v1885 = vadd.f32 0.0, %v1884
        %1886 = vdwg.mxu0
        %1887 = vrot.lane.b32.xlu0 %v1684, 96
        %v1888 = vpop.permute.xlu0 %1887
        %1889 = vrot.lane.b32.xlu0 %v1800, 96
        %v1890 = vpop.permute.xlu0 %1889
        %1891 = vrot.lane.b32.xlu0 %v1802, 96
        %v1892 = vpop.permute.xlu0 %1891
        %v1893 = vsel %vm1200, %v1888, 0
        %v1895 = vsel %vm1200, %v1890, 0
        %v1897 = vsel %vm1200, %v1892, 0
        %1899 = vmatpush.xpose.msra.mxu0 0.0
        %1900 = vmatpush.xpose.msra.mxu0 0.0
        %1901 = vmatpush.xpose.msra.mxu0 0.0
        %1902 = vmatpush.xpose.msra.mxu0 0.0
        %1903 = vmatpush.xpose.msra.mxu0 0.0
        %1904 = vmatpush.xpose.msra.mxu0 0.0
        %1905 = vmatpush.xpose.msra.mxu0 0.0
        %1906 = vmatpush.xpose.msra.mxu0 0.0
        %1907 = vmatpush.xpose.msra.mxu0 0.0
        %1908 = vmatpush.xpose.msra.mxu0 0.0
        %1909 = vmatpush.xpose.msra.mxu0 0.0
        %1910 = vmatpush.xpose.msra.mxu0 0.0
        %1911 = vmatpush.xpose.msra.mxu0 0.0
        %1912 = vmatpush.xpose.msra.mxu0 0.0
        %1913 = vmatpush.xpose.msra.mxu0 %v1897
        %1914 = vmatpush.xpose.msra.mxu0 %v1895
        %1915 = vmatmul.f32.gmra.mxu0 %v1893
        %v1916 = vpop.f32.mrf.mxu0
        %v1917 = vadd.f32 0.0, %v1916
        %1918 = vdwg.mxu0
        %v1919 = vmul.f32 %v1917, 0.17677669
        %v1920 = vsel %vm1848, %v1919, -inf
        %1921 = vmax.xlane.f32.xlu0 %v1920
        %v1922 = vpop.xlane.xlu0 %1921
        %v1923 = vsub.f32 %v1919, %v1922
        %v1924 = vmul.f32 %v1923, 1.442695
        %v1925 = vpow.pop %v1924
        %v1926 = vsel %vm1848, %v1925, 0.0
        %1927 = vadd.xlane.f32.xlu0 %v1926
        %v1928 = vpop.xlane.xlu0 %1927
        %v1929 = vrcp.pop %v1928
        %v1930 = vmul.f32 %v1925, %v1929
        %1932 = vrot.lane.b32.xlu0 %v1814, 96
        %v1933 = vpop.permute.xlu0 %1932
        %1934 = vrot.lane.b32.xlu0 %v1816, 96
        %v1935 = vpop.permute.xlu0 %1934
        %v1938 = vsel %vm1848, %v1930, 0
        %v1940 = vsel %vm1863, %v1935, 0
        %1942 = vmatpush.msra.mxu0 0.0
        %1943 = vmatpush.msra.mxu0 0.0
        %1944 = vmatpush.msra.mxu0 0.0
        %1945 = vmatpush.msra.mxu0 0.0
        %1946 = vmatpush.msra.mxu0 0.0
        %1947 = vmatpush.msra.mxu0 0.0
        %1948 = vmatpush.msra.mxu0 0.0
        %1949 = vmatpush.msra.mxu0 0.0
        %1950 = vmatpush.msra.mxu0 0.0
        %1951 = vmatpush.msra.mxu0 0.0
        %1952 = vmatpush.msra.mxu0 0.0
        %1953 = vmatpush.msra.mxu0 0.0
        %1954 = vmatpush.msra.mxu0 0.0
        %1955 = vmatpush.msra.mxu0 0.0
        %1956 = vmatpush.msra.mxu0 %v1940
        %1957 = vmatpush.msra.mxu0 %v1933
        %1958 = vmatmul.f32.gmra.mxu0 %v1938
        %v1959 = vpop.f32.mrf.mxu0
        %v1960 = vadd.f32 0.0, %v1959
        %1961 = vdwg.mxu0
        %1962 = vrot.lane.b32.xlu0 %v1684, 64
        %v1963 = vpop.permute.xlu0 %1962
        %1964 = vrot.lane.b32.xlu0 %v1800, 64
        %v1965 = vpop.permute.xlu0 %1964
        %1966 = vrot.lane.b32.xlu0 %v1802, 64
        %v1967 = vpop.permute.xlu0 %1966
        %v1968 = vsel %vm1200, %v1963, 0
        %v1970 = vsel %vm1200, %v1965, 0
        %v1972 = vsel %vm1200, %v1967, 0
        %1974 = vmatpush.xpose.msra.mxu0 0.0
        %1975 = vmatpush.xpose.msra.mxu0 0.0
        %1976 = vmatpush.xpose.msra.mxu0 0.0
        %1977 = vmatpush.xpose.msra.mxu0 0.0
        %1978 = vmatpush.xpose.msra.mxu0 0.0
        %1979 = vmatpush.xpose.msra.mxu0 0.0
        %1980 = vmatpush.xpose.msra.mxu0 0.0
        %1981 = vmatpush.xpose.msra.mxu0 0.0
        %1982 = vmatpush.xpose.msra.mxu0 0.0
        %1983 = vmatpush.xpose.msra.mxu0 0.0
        %1984 = vmatpush.xpose.msra.mxu0 0.0
        %1985 = vmatpush.xpose.msra.mxu0 0.0
        %1986 = vmatpush.xpose.msra.mxu0 0.0
        %1987 = vmatpush.xpose.msra.mxu0 0.0
        %1988 = vmatpush.xpose.msra.mxu0 %v1972
        %1989 = vmatpush.xpose.msra.mxu0 %v1970
        %1990 = vmatmul.f32.gmra.mxu0 %v1968
        %v1991 = vpop.f32.mrf.mxu0
        %v1992 = vadd.f32 0.0, %v1991
        %1993 = vdwg.mxu0
        %v1994 = vmul.f32 %v1992, 0.17677669
        %v1995 = vsel %vm1848, %v1994, -inf
        %1996 = vmax.xlane.f32.xlu0 %v1995
        %v1997 = vpop.xlane.xlu0 %1996
        %v1998 = vsub.f32 %v1994, %v1997
        %v1999 = vmul.f32 %v1998, 1.442695
        %v2000 = vpow.pop %v1999
        %v2001 = vsel %vm1848, %v2000, 0.0
        %2002 = vadd.xlane.f32.xlu0 %v2001
        %v2003 = vpop.xlane.xlu0 %2002
        %v2004 = vrcp.pop %v2003
        %v2005 = vmul.f32 %v2000, %v2004
        %2006 = vrot.lane.b32.xlu0 %v1814, 64
        %v2007 = vpop.permute.xlu0 %2006
        %2008 = vrot.lane.b32.xlu0 %v1816, 64
        %v2009 = vpop.permute.xlu0 %2008
        %v2012 = vsel %vm1848, %v2005, 0
        %v2014 = vsel %vm1863, %v2009, 0
        %2016 = vmatpush.msra.mxu0 0.0
        %2017 = vmatpush.msra.mxu0 0.0
        %2018 = vmatpush.msra.mxu0 0.0
        %2019 = vmatpush.msra.mxu0 0.0
        %2020 = vmatpush.msra.mxu0 0.0
        %2021 = vmatpush.msra.mxu0 0.0
        %2022 = vmatpush.msra.mxu0 0.0
        %2023 = vmatpush.msra.mxu0 0.0
        %2024 = vmatpush.msra.mxu0 0.0
        %2025 = vmatpush.msra.mxu0 0.0
        %2026 = vmatpush.msra.mxu0 0.0
        %2027 = vmatpush.msra.mxu0 0.0
        %2028 = vmatpush.msra.mxu0 0.0
        %2029 = vmatpush.msra.mxu0 0.0
        %2030 = vmatpush.msra.mxu0 %v2014
        %2031 = vmatpush.msra.mxu0 %v2007
        %2032 = vmatmul.f32.gmra.mxu0 %v2012
        %v2033 = vpop.f32.mrf.mxu0
        %v2034 = vadd.f32 0.0, %v2033
        %2035 = vdwg.mxu0
        %2036 = vrot.lane.b32.xlu0 %v1684, 32
        %v2037 = vpop.permute.xlu0 %2036
        %2038 = vrot.lane.b32.xlu0 %v1800, 32
        %v2039 = vpop.permute.xlu0 %2038
        %2040 = vrot.lane.b32.xlu0 %v1802, 32
        %v2041 = vpop.permute.xlu0 %2040
        %v2042 = vsel %vm1200, %v2037, 0
        %v2044 = vsel %vm1200, %v2039, 0
        %v2046 = vsel %vm1200, %v2041, 0
        %2048 = vmatpush.xpose.msra.mxu0 0.0
        %2049 = vmatpush.xpose.msra.mxu0 0.0
        %2050 = vmatpush.xpose.msra.mxu0 0.0
        %2051 = vmatpush.xpose.msra.mxu0 0.0
        %2052 = vmatpush.xpose.msra.mxu0 0.0
        %2053 = vmatpush.xpose.msra.mxu0 0.0
        %2054 = vmatpush.xpose.msra.mxu0 0.0
        %2055 = vmatpush.xpose.msra.mxu0 0.0
        %2056 = vmatpush.xpose.msra.mxu0 0.0
        %2057 = vmatpush.xpose.msra.mxu0 0.0
        %2058 = vmatpush.xpose.msra.mxu0 0.0
        %2059 = vmatpush.xpose.msra.mxu0 0.0
        %2060 = vmatpush.xpose.msra.mxu0 0.0
        %2061 = vmatpush.xpose.msra.mxu0 0.0
        %2062 = vmatpush.xpose.msra.mxu0 %v2046
        %2063 = vmatpush.xpose.msra.mxu0 %v2044
        %2064 = vmatmul.f32.gmra.mxu0 %v2042
        %v2065 = vpop.f32.mrf.mxu0
        %v2066 = vadd.f32 0.0, %v2065
        %2067 = vdwg.mxu0
        %v2068 = vmul.f32 %v2066, 0.17677669
        %v2069 = vsel %vm1848, %v2068, -inf
        %2070 = vmax.xlane.f32.xlu0 %v2069
        %v2071 = vpop.xlane.xlu0 %2070
        %v2072 = vsub.f32 %v2068, %v2071
        %v2073 = vmul.f32 %v2072, 1.442695
        %v2074 = vpow.pop %v2073
        %v2075 = vsel %vm1848, %v2074, 0.0
        %2076 = vadd.xlane.f32.xlu0 %v2075
        %v2077 = vpop.xlane.xlu0 %2076
        %v2078 = vrcp.pop %v2077
        %v2079 = vmul.f32 %v2074, %v2078
        %2080 = vrot.lane.b32.xlu0 %v1814, 32
        %v2081 = vpop.permute.xlu0 %2080
        %2082 = vrot.lane.b32.xlu0 %v1816, 32
        %v2083 = vpop.permute.xlu0 %2082
        %v2086 = vsel %vm1848, %v2079, 0
        %v2088 = vsel %vm1863, %v2083, 0
        %2090 = vmatpush.msra.mxu0 0.0
        %2091 = vmatpush.msra.mxu0 0.0
        %2092 = vmatpush.msra.mxu0 0.0
        %2093 = vmatpush.msra.mxu0 0.0
        %2094 = vmatpush.msra.mxu0 0.0
        %2095 = vmatpush.msra.mxu0 0.0
        %2096 = vmatpush.msra.mxu0 0.0
        %2097 = vmatpush.msra.mxu0 0.0
        %2098 = vmatpush.msra.mxu0 0.0
        %2099 = vmatpush.msra.mxu0 0.0
        %2100 = vmatpush.msra.mxu0 0.0
        %2101 = vmatpush.msra.mxu0 0.0
        %2102 = vmatpush.msra.mxu0 0.0
        %2103 = vmatpush.msra.mxu0 0.0
        %2104 = vmatpush.msra.mxu0 %v2088
        %2105 = vmatpush.msra.mxu0 %v2081
        %2106 = vmatmul.f32.gmra.mxu0 %v2086
        %v2107 = vpop.f32.mrf.mxu0
        %v2108 = vadd.f32 0.0, %v2107
        %2109 = vdwg.mxu0
        %2111 = vrot.lane.b32.xlu0 %v1960, 32
        %v2112 = vpop.permute.xlu0 %2111
        %2115 = vrot.lane.b32.xlu0 %v2034, 64
        %v2116 = vpop.permute.xlu0 %2115
        %2119 = vrot.lane.b32.xlu0 %v2108, 96
        %v2120 = vpop.permute.xlu0 %2119
        %v2122 = vsel %vm1200, %v1885, %v2112
        %v2123 = vsel %vm1479, %v2122, %v2116
        %v2124 = vsel %vm1481, %v2123, %v2120
        %v2125 = vpack.c.bf16 %v2124, %v2124
        %v2126 = vld [vmem:[#allocation9] sm:$0xf]
        %v2127 = vld [vmem:[#allocation9 + $0x4] sm:$0xf]
        %v2128 = vld [vmem:[#allocation9 + $0x8] sm:$0xf]
        %v2129 = vld [vmem:[#allocation9 + $0xc] sm:$0xf]
        %v2130 = vld [vmem:[#allocation9 + $0x10] sm:$0xf]
        %v2131 = vld [vmem:[#allocation9 + $0x14] sm:$0xf]
        %v2132 = vld [vmem:[#allocation9 + $0x18] sm:$0xf]
        %v2133 = vld [vmem:[#allocation9 + $0x1c] sm:$0xf]
        %v2134 = vld [vmem:[#allocation9 + $0x20] sm:$0xf]
        %v2135 = vld [vmem:[#allocation9 + $0x24] sm:$0xf]
        %v2136 = vld [vmem:[#allocation9 + $0x28] sm:$0xf]
        %v2137 = vld [vmem:[#allocation9 + $0x2c] sm:$0xf]
        %v2138 = vld [vmem:[#allocation9 + $0x30] sm:$0xf]
        %v2139 = vld [vmem:[#allocation9 + $0x34] sm:$0xf]
        %v2140 = vld [vmem:[#allocation9 + $0x38] sm:$0xf]
        %v2141 = vld [vmem:[#allocation9 + $0x3c] sm:$0xf]
        %v2142 = vld [vmem:[#allocation10] sm:$0x1]
        %v2144 = vperm.slane %v2142, 0
        %v2162 = vunpack.c.l.b16 %v2126
        %v2163 = vunpack.c.l.b16 %v2127
        %v2164 = vunpack.c.l.b16 %v2128
        %v2165 = vunpack.c.l.b16 %v2129
        %v2166 = vunpack.c.l.b16 %v2130
        %v2167 = vunpack.c.l.b16 %v2131
        %v2168 = vunpack.c.l.b16 %v2132
        %v2169 = vunpack.c.l.b16 %v2133
        %v2170 = vunpack.c.l.b16 %v2134
        %v2171 = vunpack.c.l.b16 %v2135
        %v2172 = vunpack.c.l.b16 %v2136
        %v2173 = vunpack.c.l.b16 %v2137
        %v2174 = vunpack.c.l.b16 %v2138
        %v2175 = vunpack.c.l.b16 %v2139
        %v2176 = vunpack.c.l.b16 %v2140
        %v2177 = vunpack.c.l.b16 %v2141
        %v2178 = vpack.c.b16 %v2163, %v2162
        %v2179 = vpack.c.b16 %v2165, %v2164
        %v2180 = vpack.c.b16 %v2167, %v2166
        %v2181 = vpack.c.b16 %v2169, %v2168
        %v2182 = vpack.c.b16 %v2171, %v2170
        %v2183 = vpack.c.b16 %v2173, %v2172
        %v2184 = vpack.c.b16 %v2175, %v2174
        %v2185 = vpack.c.b16 %v2177, %v2176
        %2194 = vmatpush.bf16.msra.mxu0 %v2185
        %2195 = vmatpush.bf16.msra.mxu0 %v2184
        %2196 = vmatpush.bf16.msra.mxu0 %v2183
        %2197 = vmatpush.bf16.msra.mxu0 %v2182
        %2198 = vmatpush.bf16.msra.mxu0 %v2181
        %2199 = vmatpush.bf16.msra.mxu0 %v2180
        %2200 = vmatpush.bf16.msra.mxu0 %v2179
        %2201 = vmatpush.bf16.msra.mxu0 %v2178
        %2202 = vmatmul.bf16.gmra.mxu0 %v2125
        %v2203 = vpop.f32.mrf.mxu0
        %v2204 = vadd.f32 %v2144, %v2203
        %v2205 = vpop.f32.mrf.mxu0
        %2206 = vdwg.mxu0
        %v2207 = vadd.f32 %v1602, %v2204
        %v2208 = vld [vmem:[#allocation12] sm:$0x1]
        %v2209 = vld [vmem:[#allocation13] sm:$0x1]
        %2210 = vadd.xlane.f32.xlu0 %v2207
        %v2211 = vpop.xlane.xlu0 %2210
        %v2212 = vmul.f32 %v2211, %v1576
        %v2213 = vsub.f32 %v2207, %v2212
        %v2214 = vmul.f32 %v2213, %v2213
        %2215 = vadd.xlane.f32.xlu0 %v2214
        %v2216 = vpop.xlane.xlu0 %2215
        %v2217 = vmul.f32 %v2216, %v1576
        %v2218 = vadd.f32 %v2217, 1e-05
        %v2219 = vrsqrt.pop %v2218
        %v2220 = vmul.f32 %v2219, %v2218
        %v2221 = vmul.f32 %v2220, %v2219
        %v2222 = vmul.f32 0.5, %v2221
        %v2223 = vsub.f32 1.5, %v2222
        %v2224 = vmul.f32 %v2219, %v2223
        %vm2225 = vweird.f32 %v2218
        %vm2226 = vweird.f32 %v2219
        %vm2227 = vmor %vm2225, %vm2226
        %v2228 = vsel %vm2227, %v2219, %v2224
        %v2229 = vmul.f32 %v2213, %v2228
        %v2231 = vperm.slane %v2208, 0
        %v2233 = vmul.f32 %v2229, %v2231
        %v2235 = vperm.slane %v2209, 0
        %v2237 = vadd.f32 %v2233, %v2235
        %v2238 = vpack.c.bf16 %v2237, %v2237
        %v2239 = vld [vmem:[#allocation15] sm:$0xf]
        %v2240 = vld [vmem:[#allocation15 + $0x4] sm:$0xf]
        %v2241 = vld [vmem:[#allocation15 + $0x8] sm:$0xf]
        %v2242 = vld [vmem:[#allocation15 + $0xc] sm:$0xf]
        %v2243 = vld [vmem:[#allocation15 + $0x10] sm:$0xf]
        %v2244 = vld [vmem:[#allocation15 + $0x14] sm:$0xf]
        %v2245 = vld [vmem:[#allocation15 + $0x18] sm:$0xf]
        %v2246 = vld [vmem:[#allocation15 + $0x1c] sm:$0xf]
        %v2247 = vld [vmem:[#allocation15 + $0x20] sm:$0xf]
        %v2248 = vld [vmem:[#allocation15 + $0x24] sm:$0xf]
        %v2249 = vld [vmem:[#allocation15 + $0x28] sm:$0xf]
        %v2250 = vld [vmem:[#allocation15 + $0x2c] sm:$0xf]
        %v2251 = vld [vmem:[#allocation15 + $0x30] sm:$0xf]
        %v2252 = vld [vmem:[#allocation15 + $0x34] sm:$0xf]
        %v2253 = vld [vmem:[#allocation15 + $0x38] sm:$0xf]
        %v2254 = vld [vmem:[#allocation15 + $0x3c] sm:$0xf]
        %v2255 = vld [vmem:[#allocation16] sm:$0x1]
        %v2257 = vperm.slane %v2255, 0
        %v2275 = vunpack.c.l.b16 %v2239
        %v2276 = vunpack.c.l.b16 %v2240
        %v2277 = vunpack.c.l.b16 %v2241
        %v2278 = vunpack.c.l.b16 %v2242
        %v2279 = vunpack.c.l.b16 %v2243
        %v2280 = vunpack.c.l.b16 %v2244
        %v2281 = vunpack.c.l.b16 %v2245
        %v2282 = vunpack.c.l.b16 %v2246
        %v2283 = vunpack.c.l.b16 %v2247
        %v2284 = vunpack.c.l.b16 %v2248
        %v2285 = vunpack.c.l.b16 %v2249
        %v2286 = vunpack.c.l.b16 %v2250
        %v2287 = vunpack.c.l.b16 %v2251
        %v2288 = vunpack.c.l.b16 %v2252
        %v2289 = vunpack.c.l.b16 %v2253
        %v2290 = vunpack.c.l.b16 %v2254
        %v2291 = vpack.c.b16 %v2276, %v2275
        %v2292 = vpack.c.b16 %v2278, %v2277
        %v2293 = vpack.c.b16 %v2280, %v2279
        %v2294 = vpack.c.b16 %v2282, %v2281
        %v2295 = vpack.c.b16 %v2284, %v2283
        %v2296 = vpack.c.b16 %v2286, %v2285
        %v2297 = vpack.c.b16 %v2288, %v2287
        %v2298 = vpack.c.b16 %v2290, %v2289
        %2307 = vmatpush.bf16.msra.mxu0 %v2298
        %2308 = vmatpush.bf16.msra.mxu0 %v2297
        %2309 = vmatpush.bf16.msra.mxu0 %v2296
        %2310 = vmatpush.bf16.msra.mxu0 %v2295
        %2311 = vmatpush.bf16.msra.mxu0 %v2294
        %2312 = vmatpush.bf16.msra.mxu0 %v2293
        %2313 = vmatpush.bf16.msra.mxu0 %v2292
        %2314 = vmatpush.bf16.msra.mxu0 %v2291
        %2315 = vmatmul.bf16.gmra.mxu0 %v2238
        %v2316 = vpop.f32.mrf.mxu0
        %v2317 = vadd.f32 %v2257, %v2316
        %v2318 = vpop.f32.mrf.mxu0
        %2319 = vdwg.mxu0
        %v2320 = vmax.f32 %v2317, 0.0
        %v2321 = vpack.c.bf16 %v2320, %v2320
        %v2322 = vld [vmem:[#allocation18] sm:$0xf]
        %v2323 = vld [vmem:[#allocation18 + $0x4] sm:$0xf]
        %v2324 = vld [vmem:[#allocation18 + $0x8] sm:$0xf]
        %v2325 = vld [vmem:[#allocation18 + $0xc] sm:$0xf]
        %v2326 = vld [vmem:[#allocation18 + $0x10] sm:$0xf]
        %v2327 = vld [vmem:[#allocation18 + $0x14] sm:$0xf]
        %v2328 = vld [vmem:[#allocation18 + $0x18] sm:$0xf]
        %v2329 = vld [vmem:[#allocation18 + $0x1c] sm:$0xf]
        %v2330 = vld [vmem:[#allocation18 + $0x20] sm:$0xf]
        %v2331 = vld [vmem:[#allocation18 + $0x24] sm:$0xf]
        %v2332 = vld [vmem:[#allocation18 + $0x28] sm:$0xf]
        %v2333 = vld [vmem:[#allocation18 + $0x2c] sm:$0xf]
        %v2334 = vld [vmem:[#allocation18 + $0x30] sm:$0xf]
        %v2335 = vld [vmem:[#allocation18 + $0x34] sm:$0xf]
        %v2336 = vld [vmem:[#allocation18 + $0x38] sm:$0xf]
        %v2337 = vld [vmem:[#allocation18 + $0x3c] sm:$0xf]
        %v2338 = vld [vmem:[#allocation19] sm:$0x1]
        %v2340 = vperm.slane %v2338, 0
        %v2358 = vunpack.c.l.b16 %v2322
        %v2359 = vunpack.c.l.b16 %v2323
        %v2360 = vunpack.c.l.b16 %v2324
        %v2361 = vunpack.c.l.b16 %v2325
        %v2362 = vunpack.c.l.b16 %v2326
        %v2363 = vunpack.c.l.b16 %v2327
        %v2364 = vunpack.c.l.b16 %v2328
        %v2365 = vunpack.c.l.b16 %v2329
        %v2366 = vunpack.c.l.b16 %v2330
        %v2367 = vunpack.c.l.b16 %v2331
        %v2368 = vunpack.c.l.b16 %v2332
        %v2369 = vunpack.c.l.b16 %v2333
        %v2370 = vunpack.c.l.b16 %v2334
        %v2371 = vunpack.c.l.b16 %v2335
        %v2372 = vunpack.c.l.b16 %v2336
        %v2373 = vunpack.c.l.b16 %v2337
        %v2374 = vpack.c.b16 %v2359, %v2358
        %v2375 = vpack.c.b16 %v2361, %v2360
        %v2376 = vpack.c.b16 %v2363, %v2362
        %v2377 = vpack.c.b16 %v2365, %v2364
        %v2378 = vpack.c.b16 %v2367, %v2366
        %v2379 = vpack.c.b16 %v2369, %v2368
        %v2380 = vpack.c.b16 %v2371, %v2370
        %v2381 = vpack.c.b16 %v2373, %v2372
        %2390 = vmatpush.bf16.msra.mxu0 %v2381
        %2391 = vmatpush.bf16.msra.mxu0 %v2380
        %2392 = vmatpush.bf16.msra.mxu0 %v2379
        %2393 = vmatpush.bf16.msra.mxu0 %v2378
        %2394 = vmatpush.bf16.msra.mxu0 %v2377
        %2395 = vmatpush.bf16.msra.mxu0 %v2376
        %2396 = vmatpush.bf16.msra.mxu0 %v2375
        %2397 = vmatpush.bf16.msra.mxu0 %v2374
        %2398 = vmatmul.bf16.gmra.mxu0 %v2321
        %v2399 = vpop.f32.mrf.mxu0
        %v2400 = vadd.f32 %v2340, %v2399
        %v2401 = vpop.f32.mrf.mxu0
        %2402 = vdwg.mxu0
        %v2403 = vadd.f32 %v2237, %v2400
        %v2404 = vld [vmem:[#allocation21] sm:$0x1]
        %v2405 = vld [vmem:[#allocation22] sm:$0x1]
        %2406 = vadd.xlane.f32.xlu0 %v2403
        %v2407 = vpop.xlane.xlu0 %2406
        %v2408 = vmul.f32 %v2407, %v1576
        %v2409 = vsub.f32 %v2403, %v2408
        %v2410 = vmul.f32 %v2409, %v2409
        %2411 = vadd.xlane.f32.xlu0 %v2410
        %v2412 = vpop.xlane.xlu0 %2411
        %v2413 = vmul.f32 %v2412, %v1576
        %v2414 = vadd.f32 %v2413, 1e-05
        %v2415 = vrsqrt.pop %v2414
        %v2416 = vmul.f32 %v2415, %v2414
        %v2417 = vmul.f32 %v2416, %v2415
        %v2418 = vmul.f32 0.5, %v2417
        %v2419 = vsub.f32 1.5, %v2418
        %v2420 = vmul.f32 %v2415, %v2419
        %vm2421 = vweird.f32 %v2414
        %vm2422 = vweird.f32 %v2415
        %vm2423 = vmor %vm2421, %vm2422
        %v2424 = vsel %vm2423, %v2415, %v2420
        %v2425 = vmul.f32 %v2409, %v2424
        %v2427 = vperm.slane %v2404, 0
        %v2429 = vmul.f32 %v2425, %v2427
        %v2431 = vperm.slane %v2405, 0
        %v2433 = vadd.f32 %v2429, %v2431
        %2434 = vst [vmem:[%s984] sm:$0xff] %v2433
        %p2435 = scmp.lt.s32.totalorder %s43, 1
        %s2436 = scalar_select %p2435, %s43, 1
        %s2437 = smul.addr %s2436, 8
        %s2438 = scalar_lea.vmem %s24, %s2437
        // Predicated region
        $region173: #{transformer_forward.8} parent=115 // pred_check
          %p2439 = pneg %p580
        $region174: #{transformer_forward.8} parent=115 // pred_check_branch
          %2441 = sbr.rel (%p2439) target = $region176
        $region175: #{transformer_forward.8} parent=115 // pred_region
          _
        $region176: #{transformer_forward.8} parent=115 // pred_fallthru
          _
      $region116: #{transformer_forward.8} parent=5 // pred_fallthru
        _
      %p2442 = scmp.le.s32.totalorder 2, %s38
      // Predicated region
      $region177: #{transformer_forward.8} parent=5 // pred_check
        %p2443 = pneg %p2442
      $region178: #{transformer_forward.8} parent=5 // pred_check_branch
        %2445 = sbr.rel (%p2443) target = $region180
      $region179: #{transformer_forward.8} parent=5 // pred_region
        %s2446 = ssub.s32 %s38, 2
        // Predicated region
        $region181: #{transformer_forward.8} parent=179 // pred_check
          %p2447 = pneg %p586
        $region182: #{transformer_forward.8} parent=179 // pred_check_branch
          %2449 = sbr.rel (%p2447) target = $region184
        $region183: #{transformer_forward.8} parent=179 // pred_region
          %p2450 = scmp.lt.s32.totalorder %s44, 1
          %s2451 = scalar_select %p2450, %s44, 1
          %s2452 = smul.addr %s2451, 8
          %s2453 = scalar_lea.vmem %s24, %s2452
        $region184: #{transformer_forward.8} parent=179 // pred_fallthru
          _
      $region180: #{transformer_forward.8} parent=5 // pred_fallthru
        _
    $region6: #{transformer_forward.8} parent=1 // loop_footer
      %s42 = sadd.s32 1, %s38
    $region7: #{transformer_forward.8} parent=1 // loop_footer_branch
      %37 = sbr.rel target = $region3
    $region8: #{transformer_forward.8} parent=1 // loop_exit
      _
    %2454 = vsyncpa [#allocation3], 1
    %s2455 = scalar_lea.sflag [#allocation3], 1
    %2456 = vsyncpa %s2455, 1
    %2457 = vsyncpa [#allocation5], 1
    %2458 = vsyncpa [#allocation8], 1
    %2459 = vsyncpa [#allocation11], 1
    %2460 = vsyncpa [#allocation14], 1
    %2461 = vsyncpa [#allocation17], 1
    %2462 = vsyncpa [#allocation20], 1
    %2463 = vsyncpa [#allocation23], 1

// kernel: transformer_forward.9
$region0: #{transformer_forward.9}
  #allocation0 [shape = 'u32[]', space=smem, size = 0x4, offset = 0x4, fixed_abs, tag = 'smem constant byte address 0x4 - core index']
  #allocation1 [shape = 'u32[72,128]{1,0:T(1,128)}', space=vmem, size = 0x9000, scoped, tag = 'internal scratch']
  %s0 = inlined_call_operand.vmem [shape: f32[16,128], index: 0, kind: input, shape index: {}]
  %s1 = inlined_call_operand.hbm [shape: bf16[128,128], index: 1, kind: input, shape index: {}]
  %s2 = inlined_call_operand.vmem [shape: f32[1,128], index: 2, kind: input, shape index: {}]
  %s3 = inlined_call_operand.vmem [shape: f32[16,128], index: 3, kind: output, shape index: {}]
  %s4 = sld [smem:[#allocation0]]
  $region26: #{transformer_forward.9} parent=0
    _
  %s6 = ssub.s32 1, %s4
  %s7 = scalar_select 0, %s6, %s4
  $region1: #{transformer_forward.9} parent=0
    #allocation2 [shape = 'u8[32768]{0}', space=vmem, size = 0x8000, scoped, tag = 'input window, operand 1, single buffered']
    #allocation3 [shape = 's32[1]{0}', space=sflag, size = 0x4, scoped, tag = 'scoped memory for transformer_forward.9']
    %8 = vsyncpa [#allocation3], 0
    // Predicated region
    $region2: #{transformer_forward.9} parent=1 // pred_check
      _
    $region3: #{transformer_forward.9} parent=1 // pred_check_branch
      %10 = sbr.rel (0) target = $region5
    $region4: #{transformer_forward.9} parent=1 // pred_region
      _
    $region5: #{transformer_forward.9} parent=1 // pred_fallthru
      _
    // Predicated region
    $region6: #{transformer_forward.9} parent=1 // pred_check
      _
    $region7: #{transformer_forward.9} parent=1 // pred_check_branch
      %12 = sbr.rel (0) target = $region9
    $region8: #{transformer_forward.9} parent=1 // pred_region
      %14 = vsyncadd [#allocation3], 0
      %s15 = sshll.u32 %s1, 4
      %s16 = int_to_ptr.hbm [resolvable:$true] %s15
      %s17 = sshll.u32 [#allocation2], 4
      %s18 = int_to_ptr.vmem [resolvable:$true] %s17
      %23 = dma.hbm_to_vmem [thread:$0]  %s16, 1024, %s18, [#allocation3], 64, 64, 4
    $region9: #{transformer_forward.9} parent=1 // pred_fallthru
      _
    // Predicated region
    $region10: #{transformer_forward.9} parent=1 // pred_check
      _
    $region11: #{transformer_forward.9} parent=1 // pred_check_branch
      %25 = sbr.rel (0) target = $region13
    $region12: #{transformer_forward.9} parent=1 // pred_region
      _
    $region13: #{transformer_forward.9} parent=1 // pred_fallthru
      _
    // Predicated region
    $region14: #{transformer_forward.9} parent=1 // pred_check
      _
    $region15: #{transformer_forward.9} parent=1 // pred_check_branch
      %27 = sbr.rel (0) target = $region17
    $region16: #{transformer_forward.9} parent=1 // pred_region
      %29 = dma.done [#allocation3], 1024
    $region17: #{transformer_forward.9} parent=1 // pred_fallthru
      _
    %v30 = vld [vmem:[%s0] sm:$0xff]
    %v31 = vld [vmem:[%s0 + $0x8] sm:$0xff]
    %v32 = vpack.c.bf16 %v31, %v30
    %v33 = vld [vmem:[#allocation2] sm:$0xf]
    %v34 = vld [vmem:[#allocation2 + $0x4] sm:$0xf]
    %v35 = vld [vmem:[#allocation2 + $0x8] sm:$0xf]
    %v36 = vld [vmem:[#allocation2 + $0xc] sm:$0xf]
    %v37 = vld [vmem:[#allocation2 + $0x10] sm:$0xf]
    %v38 = vld [vmem:[#allocation2 + $0x14] sm:$0xf]
    %v39 = vld [vmem:[#allocation2 + $0x18] sm:$0xf]
    %v40 = vld [vmem:[#allocation2 + $0x1c] sm:$0xf]
    %v41 = vld [vmem:[#allocation2 + $0x20] sm:$0xf]
    %v42 = vld [vmem:[#allocation2 + $0x24] sm:$0xf]
    %v43 = vld [vmem:[#allocation2 + $0x28] sm:$0xf]
    %v44 = vld [vmem:[#allocation2 + $0x2c] sm:$0xf]
    %v45 = vld [vmem:[#allocation2 + $0x30] sm:$0xf]
    %v46 = vld [vmem:[#allocation2 + $0x34] sm:$0xf]
    %v47 = vld [vmem:[#allocation2 + $0x38] sm:$0xf]
    %v48 = vld [vmem:[#allocation2 + $0x3c] sm:$0xf]
    %v49 = vld [vmem:[%s2] sm:$0x1]
    %v51 = vperm.slane %v49, 0
    %v69 = vunpack.c.l.b16 %v33
    %v70 = vunpack.c.l.b16 %v34
    %v71 = vunpack.c.l.b16 %v35
    %v72 = vunpack.c.l.b16 %v36
    %v73 = vunpack.c.l.b16 %v37
    %v74 = vunpack.c.l.b16 %v38
    %v75 = vunpack.c.l.b16 %v39
    %v76 = vunpack.c.l.b16 %v40
    %v77 = vunpack.c.l.b16 %v41
    %v78 = vunpack.c.l.b16 %v42
    %v79 = vunpack.c.l.b16 %v43
    %v80 = vunpack.c.l.b16 %v44
    %v81 = vunpack.c.l.b16 %v45
    %v82 = vunpack.c.l.b16 %v46
    %v83 = vunpack.c.l.b16 %v47
    %v84 = vunpack.c.l.b16 %v48
    %v85 = vpack.c.b16 %v70, %v69
    %v86 = vpack.c.b16 %v72, %v71
    %v87 = vpack.c.b16 %v74, %v73
    %v88 = vpack.c.b16 %v76, %v75
    %v89 = vpack.c.b16 %v78, %v77
    %v90 = vpack.c.b16 %v80, %v79
    %v91 = vpack.c.b16 %v82, %v81
    %v92 = vpack.c.b16 %v84, %v83
    %101 = vmatpush.bf16.msra.mxu0 %v92
    %102 = vmatpush.bf16.msra.mxu0 %v91
    %103 = vmatpush.bf16.msra.mxu0 %v90
    %104 = vmatpush.bf16.msra.mxu0 %v89
    %105 = vmatpush.bf16.msra.mxu0 %v88
    %106 = vmatpush.bf16.msra.mxu0 %v87
    %107 = vmatpush.bf16.msra.mxu0 %v86
    %108 = vmatpush.bf16.msra.mxu0 %v85
    %109 = vmatmul.bf16.gmra.mxu0 %v32
    %v110 = vpop.f32.mrf.mxu0
    %v111 = vadd.f32 %v51, %v110
    %v112 = vpop.f32.mrf.mxu0
    %v113 = vadd.f32 %v51, %v112
    %114 = vdwg.mxu0
    %115 = vst [vmem:[%s3] sm:$0xff] %v111
    %116 = vst [vmem:[%s3 + $0x8] sm:$0xff] %v113
    // Predicated region
    $region18: #{transformer_forward.9} parent=1 // pred_check
      _
    $region19: #{transformer_forward.9} parent=1 // pred_check_branch
      %118 = sbr.rel (0) target = $region21
    $region20: #{transformer_forward.9} parent=1 // pred_region
      _
    $region21: #{transformer_forward.9} parent=1 // pred_fallthru
      _
    // Predicated region
    $region22: #{transformer_forward.9} parent=1 // pred_check
      _
    $region23: #{transformer_forward.9} parent=1 // pred_check_branch
      %120 = sbr.rel (0) target = $region25
    $region24: #{transformer_forward.9} parent=1 // pred_region
      _
    $region25: #{transformer_forward.9} parent=1 // pred_fallthru
      _
    %121 = vsyncpa [#allocation3], 1

</llo_original>
